<compile_context>
chip_gen: v7x
topology: tpu7x:2x2x1
jax: 0.10.0
libtpu: 0.0.40
codegen_flags: <defaults>
</compile_context>

<pallas_src>
import jax
import jax.numpy as jnp
from jax import lax
from jax.experimental import pallas as pl
from jax.experimental.pallas import tpu as pltpu

_EPS = 1e-5  # nn.BatchNorm2d default eps


def _conv3x3_bn(x_ref, w_ref, g_ref, b_ref, xp_ref, pat_ref):
    """3x3 'same' conv (single im2col MXU matmul) + BatchNorm2d (training stats).

    x_ref  : (N, H, W, Cin)       unpadded input (f32 or bf16)
    w_ref  : (9*Cin, TCout) bf16  im2col weights for this Cout block
    g_ref  : (1, TCout) f32       BN gamma slice
    b_ref  : (1, TCout) f32       BN beta slice
    xp_ref : (N, H+2, W+2, Cin)   f32 VMEM scratch (zero halo)
    pat_ref: (N*H*W, 9*Cin) bf16  VMEM scratch (im2col patch matrix)
    Returns normalized activations, shape (N*H*W, TCout), f32.
    """
    N, Hp, Wp, C = xp_ref.shape
    H, W = Hp - 2, Wp - 2
    M = N * H * W

    # In-kernel pad=1 halo: zero-fill scratch, copy the interior, then lay out
    # the 9-tap im2col patch matrix (bf16, feeds the MXU directly).
    xp_ref[...] = jnp.zeros_like(xp_ref)
    xp_ref[:, 1:H + 1, 1:W + 1, :] = x_ref[...].astype(xp_ref.dtype)
    for t in range(9):
        dy, dx = t // 3, t % 3
        pat_ref[:, t * C:(t + 1) * C] = (
            xp_ref[:, dy:dy + H, dx:dx + W, :]
            .reshape(M, C).astype(pat_ref.dtype))

    # One matmul over the full K = 9*C contraction; f32 accumulation on the MXU.
    acc = jnp.dot(pat_ref[...], w_ref[...], preferred_element_type=jnp.float32)

    # BatchNorm2d, training-mode biased batch stats over (N,H,W), streamed as
    # per-channel sum / sum-of-squares (no full-size centered temporary).
    inv_m = jnp.float32(1.0 / M)
    mean = jnp.sum(acc, axis=0, keepdims=True) * inv_m                 # (1, TC)
    var = jnp.sum(acc * acc, axis=0, keepdims=True) * inv_m - mean * mean
    scale = g_ref[...] * lax.rsqrt(var + _EPS)
    shift = b_ref[...] - mean * scale
    return acc * scale + shift
    # TODO(synk): running_mean/running_var buffer updates (a training side effect
    # with no effect on the returned tensor) are not modeled.


def _block1_kernel(x_ref, w_ref, g_ref, b_ref, a_ref, o_ref, xp_ref, pat_ref):
    # conv -> BN -> PReLU (single shared alpha from SMEM)
    y = _conv3x3_bn(x_ref, w_ref, g_ref, b_ref, xp_ref, pat_ref)
    a = a_ref[0]                                    # scalar read from SMEM
    o_ref[...] = jnp.where(y > 0, y, y * a).astype(o_ref.dtype)


def _block2_kernel(h_ref, w_ref, g_ref, b_ref, res_ref, o_ref, xp_ref, pat_ref):
    # conv -> BN -> residual add (no activation)
    y = _conv3x3_bn(h_ref, w_ref, g_ref, b_ref, xp_ref, pat_ref)
    o_ref[...] = (res_ref[...].astype(jnp.float32) + y).astype(o_ref.dtype)


def residual_block(x_nchw, params):
    N, C, H, W = x_nchw.shape
    M = N * H * W

    # Cout tiling: BN stats are per-channel, so Cout blocks are independent.
    tc = C if C <= 128 else 128
    assert C % tc == 0
    grid = (C // tc,)

    # Interface glue: PyTorch hands us NCHW; put channels on the lane dim.
    x = jnp.transpose(x_nchw, (0, 2, 3, 1)).astype(jnp.float32)    # NHWC
    x2d = x.reshape(M, C)                                          # free view (residual)

    cparams = pltpu.CompilerParams(dimension_semantics=("parallel",))
    scratch = [pltpu.VMEM((N, H + 2, W + 2, C), jnp.float32),      # padded input
               pltpu.VMEM((M, 9 * C), jnp.bfloat16)]               # im2col patches

    x_spec = pl.BlockSpec((N, H, W, C), lambda j: (0, 0, 0, 0))    # resident input
    w_spec = pl.BlockSpec((9 * C, tc), lambda j: (0, j))
    v_spec = pl.BlockSpec((1, tc), lambda j: (0, j))               # gamma / beta
    m_spec = pl.BlockSpec((M, tc), lambda j: (0, j))               # (M, C) activations
    a_spec = pl.BlockSpec(memory_space=pltpu.MemorySpace.SMEM)     # PReLU alpha (1,)

    # ConvBlock 1: conv -> BN -> PReLU ; intermediate stored as bf16 on HBM.
    h1 = pl.pallas_call(
        _block1_kernel,
        out_shape=jax.ShapeDtypeStruct((M, C), jnp.bfloat16),
        grid_spec=pltpu.PrefetchScalarGridSpec(
            num_scalar_prefetch=0, grid=grid,
            in_specs=[x_spec, w_spec, v_spec, v_spec, a_spec],
            out_specs=m_spec,
            scratch_shapes=scratch),
        compiler_params=cparams,
    )(x, params["w1"], params["g1"], params["b1"], params["a1"])

    # ConvBlock 2: conv -> BN -> + residual.  h1 re-enters as (N,H,W,C) via a
    # metadata-only reshape; the pad=1 halo is rebuilt in-kernel (no jnp.pad pass).
    y = pl.pallas_call(
        _block2_kernel,
        out_shape=jax.ShapeDtypeStruct((M, C), jnp.float32),
        grid_spec=pltpu.PrefetchScalarGridSpec(
            num_scalar_prefetch=0, grid=grid,
            in_specs=[x_spec, w_spec, v_spec, v_spec, m_spec],
            out_specs=m_spec,
            scratch_shapes=scratch),
        compiler_params=cparams,
    )(h1.reshape(N, H, W, C), params["w2"], params["g2"], params["b2"], x2d)

    return jnp.transpose(y.reshape(N, H, W, C), (0, 3, 1, 2))       # back to NCHW


# ---------------- pure-JAX reference (PyTorch semantics, f32) ----------------
def _ref_conv(x, w_oihw):
    return lax.conv_general_dilated(
        x, w_oihw, window_strides=(1, 1), padding=((1, 1), (1, 1)),
        dimension_numbers=("NCHW", "OIHW", "NCHW"))


def _ref_bn(x, g, b):
    mean = jnp.mean(x, axis=(0, 2, 3), keepdims=True)
    var = jnp.mean((x - mean) ** 2, axis=(0, 2, 3), keepdims=True)
    return (x - mean) * lax.rsqrt(var + _EPS) * g.reshape(1, -1, 1, 1) + b.reshape(1, -1, 1, 1)


def residual_block_ref(x, w1, g1, b1, a1, w2, g2, b2):
    h = _ref_bn(_ref_conv(x, w1), g1, b1)
    h = jnp.where(h > 0, h, a1 * h)
    y = _ref_bn(_ref_conv(h, w2), g2, b2)
    return x + y


def _torch_w_to_im2col(w_oihw):
    # (O, I, 3, 3) -> (9*I, O); row index = (dy*3 + dx)*I + i, matching the
    # in-kernel patch layout.
    O, I = w_oihw.shape[0], w_oihw.shape[1]
    return jnp.transpose(w_oihw, (2, 3, 1, 0)).reshape(9 * I, O)


if __name__ == "__main__":
    key = jax.random.PRNGKey(0)
    N, C, H, W = 2, 4, 16, 16

    k = jax.random.split(key, 7)
    x = jax.random.normal(k[0], (N, C, H, W), jnp.float32)

    w1_oihw = 0.1 * jax.random.normal(k[1], (C, C, 3, 3), jnp.float32)
    w2_oihw = 0.1 * jax.random.normal(k[2], (C, C, 3, 3), jnp.float32)
    g1 = 1.0 + 0.1 * jax.random.normal(k[3], (C,), jnp.float32)   # BN weight
    b1 = 0.1 * jax.random.normal(k[4], (C,), jnp.float32)         # BN bias
    g2 = 1.0 + 0.1 * jax.random.normal(k[5], (C,), jnp.float32)
    b2 = 0.1 * jax.random.normal(k[6], (C,), jnp.float32)
    a1 = jnp.float32(0.25)                                        # PReLU default init

    params = dict(
        w1=_torch_w_to_im2col(w1_oihw).astype(jnp.bfloat16),      # bf16 MXU weights
        g1=g1.reshape(1, C), b1=b1.reshape(1, C),
        a1=jnp.full((1,), a1, jnp.float32),
        w2=_torch_w_to_im2col(w2_oihw).astype(jnp.bfloat16),
        g2=g2.reshape(1, C), b2=b2.reshape(1, C),
    )

    out = jax.jit(residual_block)(x, params)
    out = jax.block_until_ready(out)

    ref = residual_block_ref(x, w1_oihw, g1, b1, a1, w2_oihw, g2, b2)
    assert out.shape == (N, C, H, W)
    # bf16 MXU operands + bf16 intermediate activation (per perf review) ->
    # looser tolerance than the pure-f32 reference.
    err = float(jnp.max(jnp.abs(out - ref)))
    assert err < 6e-2, err

    print("KERNEL_OK")
</pallas_src>

<mosaic_0001>
module attributes {stable_mosaic.version = 11 : i64} {
  func.func @_block1_kernel(%arg0: i32, %arg1: memref<2x16x16x4xf32, #tpu.memory_space<vmem>>, %arg2: memref<36x4xbf16, #tpu.memory_space<vmem>>, %arg3: memref<1x4xf32, #tpu.memory_space<vmem>>, %arg4: memref<1x4xf32, #tpu.memory_space<vmem>>, %arg5: memref<1xf32, #tpu.memory_space<smem>>, %arg6: memref<512x4xbf16, #tpu.memory_space<vmem>>, %arg7: memref<2x18x18x4xf32, #tpu.memory_space<vmem>>, %arg8: memref<512x36xbf16, #tpu.memory_space<vmem>>) attributes {dimension_semantics = [#tpu.dimension_semantics<parallel>], iteration_bounds = array<i64: 1>, scalar_prefetch = 0 : i64, scratch_operands = 2 : i64, tpu.core_type = #tpu.core_type<tc>, window_params = [{pipeline_mode = #tpu.pipeline_mode<synchronous>, transform_indices = @transform_0, window_bounds = array<i64: 2, 16, 16, 4>}, {transform_indices = @transform_1, window_bounds = array<i64: 36, 4>}, {transform_indices = @transform_2, window_bounds = array<i64: 1, 4>}, {transform_indices = @transform_3, window_bounds = array<i64: 1, 4>}, {transform_indices = @transform_4, window_bounds = array<i64: 1>}, {transform_indices = @transform_5, window_bounds = array<i64: 512, 4>}]} {
    %cst = arith.constant 0.000000e+00 : f32
    %0 = vector.broadcast %cst : f32 to vector<2x18x18x4xf32>
    %c0 = arith.constant 0 : index
    %c0_0 = arith.constant 0 : index
    %c0_1 = arith.constant 0 : index
    %c0_2 = arith.constant 0 : index
    %1 = vector.load %arg7[%c0, %c0_0, %c0_1, %c0_2] : memref<2x18x18x4xf32, #tpu.memory_space<vmem>>, vector<2x18x18x4xf32>
    tpu.vector_store %arg7[%c0, %c0_0, %c0_1, %c0_2], %0 {strides = array<i32>} : memref<2x18x18x4xf32, #tpu.memory_space<vmem>>, vector<2x18x18x4xf32>,
    %c0_3 = arith.constant 0 : index
    %c0_4 = arith.constant 0 : index
    %c0_5 = arith.constant 0 : index
    %c0_6 = arith.constant 0 : index
    %2 = vector.load %arg1[%c0_3, %c0_4, %c0_5, %c0_6] : memref<2x16x16x4xf32, #tpu.memory_space<vmem>>, vector<2x16x16x4xf32>
    %c0_7 = arith.constant 0 : index
    %c1 = arith.constant 1 : index
    %c1_8 = arith.constant 1 : index
    %c0_9 = arith.constant 0 : index
    %3 = vector.load %arg7[%c0_7, %c1, %c1_8, %c0_9] : memref<2x18x18x4xf32, #tpu.memory_space<vmem>>, vector<2x16x16x4xf32>
    tpu.vector_store %arg7[%c0_7, %c1, %c1_8, %c0_9], %2 {strides = array<i32>} : memref<2x18x18x4xf32, #tpu.memory_space<vmem>>, vector<2x16x16x4xf32>,
    %c0_10 = arith.constant 0 : index
    %c0_11 = arith.constant 0 : index
    %c0_12 = arith.constant 0 : index
    %c0_13 = arith.constant 0 : index
    %4 = vector.load %arg7[%c0_10, %c0_11, %c0_12, %c0_13] : memref<2x18x18x4xf32, #tpu.memory_space<vmem>>, vector<2x16x16x4xf32>
    %5 = vector.shape_cast %4 : vector<2x16x16x4xf32> to vector<512x4xf32>
    %6 = arith.truncf %5 : vector<512x4xf32> to vector<512x4xbf16>
    %c0_14 = arith.constant 0 : index
    %c0_15 = arith.constant 0 : index
    %7 = vector.load %arg8[%c0_14, %c0_15] : memref<512x36xbf16, #tpu.memory_space<vmem>>, vector<512x4xbf16>
    tpu.vector_store %arg8[%c0_14, %c0_15], %6 {strides = array<i32>} : memref<512x36xbf16, #tpu.memory_space<vmem>>, vector<512x4xbf16>,
    %c0_16 = arith.constant 0 : index
    %c0_17 = arith.constant 0 : index
    %c1_18 = arith.constant 1 : index
    %c0_19 = arith.constant 0 : index
    %8 = vector.load %arg7[%c0_16, %c0_17, %c1_18, %c0_19] : memref<2x18x18x4xf32, #tpu.memory_space<vmem>>, vector<2x16x16x4xf32>
    %9 = vector.shape_cast %8 : vector<2x16x16x4xf32> to vector<512x4xf32>
    %10 = arith.truncf %9 : vector<512x4xf32> to vector<512x4xbf16>
    %c0_20 = arith.constant 0 : index
    %c4 = arith.constant 4 : index
    %11 = vector.load %arg8[%c0_20, %c4] : memref<512x36xbf16, #tpu.memory_space<vmem>>, vector<512x4xbf16>
    tpu.vector_store %arg8[%c0_20, %c4], %10 {strides = array<i32>} : memref<512x36xbf16, #tpu.memory_space<vmem>>, vector<512x4xbf16>,
    %c0_21 = arith.constant 0 : index
    %c0_22 = arith.constant 0 : index
    %c2 = arith.constant 2 : index
    %c0_23 = arith.constant 0 : index
    %12 = vector.load %arg7[%c0_21, %c0_22, %c2, %c0_23] : memref<2x18x18x4xf32, #tpu.memory_space<vmem>>, vector<2x16x16x4xf32>
    %13 = vector.shape_cast %12 : vector<2x16x16x4xf32> to vector<512x4xf32>
    %14 = arith.truncf %13 : vector<512x4xf32> to vector<512x4xbf16>
    %c0_24 = arith.constant 0 : index
    %c8 = arith.constant 8 : index
    %15 = vector.load %arg8[%c0_24, %c8] : memref<512x36xbf16, #tpu.memory_space<vmem>>, vector<512x4xbf16>
    tpu.vector_store %arg8[%c0_24, %c8], %14 {strides = array<i32>} : memref<512x36xbf16, #tpu.memory_space<vmem>>, vector<512x4xbf16>,
    %c0_25 = arith.constant 0 : index
    %c1_26 = arith.constant 1 : index
    %c0_27 = arith.constant 0 : index
    %c0_28 = arith.constant 0 : index
    %16 = vector.load %arg7[%c0_25, %c1_26, %c0_27, %c0_28] : memref<2x18x18x4xf32, #tpu.memory_space<vmem>>, vector<2x16x16x4xf32>
    %17 = vector.shape_cast %16 : vector<2x16x16x4xf32> to vector<512x4xf32>
    %18 = arith.truncf %17 : vector<512x4xf32> to vector<512x4xbf16>
    %c0_29 = arith.constant 0 : index
    %c12 = arith.constant 12 : index
    %19 = vector.load %arg8[%c0_29, %c12] : memref<512x36xbf16, #tpu.memory_space<vmem>>, vector<512x4xbf16>
    tpu.vector_store %arg8[%c0_29, %c12], %18 {strides = array<i32>} : memref<512x36xbf16, #tpu.memory_space<vmem>>, vector<512x4xbf16>,
    %c0_30 = arith.constant 0 : index
    %c1_31 = arith.constant 1 : index
    %c1_32 = arith.constant 1 : index
    %c0_33 = arith.constant 0 : index
    %20 = vector.load %arg7[%c0_30, %c1_31, %c1_32, %c0_33] : memref<2x18x18x4xf32, #tpu.memory_space<vmem>>, vector<2x16x16x4xf32>
    %21 = vector.shape_cast %20 : vector<2x16x16x4xf32> to vector<512x4xf32>
    %22 = arith.truncf %21 : vector<512x4xf32> to vector<512x4xbf16>
    %c0_34 = arith.constant 0 : index
    %c16 = arith.constant 16 : index
    %23 = vector.load %arg8[%c0_34, %c16] : memref<512x36xbf16, #tpu.memory_space<vmem>>, vector<512x4xbf16>
    tpu.vector_store %arg8[%c0_34, %c16], %22 {strides = array<i32>} : memref<512x36xbf16, #tpu.memory_space<vmem>>, vector<512x4xbf16>,
    %c0_35 = arith.constant 0 : index
    %c1_36 = arith.constant 1 : index
    %c2_37 = arith.constant 2 : index
    %c0_38 = arith.constant 0 : index
    %24 = vector.load %arg7[%c0_35, %c1_36, %c2_37, %c0_38] : memref<2x18x18x4xf32, #tpu.memory_space<vmem>>, vector<2x16x16x4xf32>
    %25 = vector.shape_cast %24 : vector<2x16x16x4xf32> to vector<512x4xf32>
    %26 = arith.truncf %25 : vector<512x4xf32> to vector<512x4xbf16>
    %c0_39 = arith.constant 0 : index
    %c20 = arith.constant 20 : index
    %27 = vector.load %arg8[%c0_39, %c20] : memref<512x36xbf16, #tpu.memory_space<vmem>>, vector<512x4xbf16>
    tpu.vector_store %arg8[%c0_39, %c20], %26 {strides = array<i32>} : memref<512x36xbf16, #tpu.memory_space<vmem>>, vector<512x4xbf16>,
    %c0_40 = arith.constant 0 : index
    %c2_41 = arith.constant 2 : index
    %c0_42 = arith.constant 0 : index
    %c0_43 = arith.constant 0 : index
    %28 = vector.load %arg7[%c0_40, %c2_41, %c0_42, %c0_43] : memref<2x18x18x4xf32, #tpu.memory_space<vmem>>, vector<2x16x16x4xf32>
    %29 = vector.shape_cast %28 : vector<2x16x16x4xf32> to vector<512x4xf32>
    %30 = arith.truncf %29 : vector<512x4xf32> to vector<512x4xbf16>
    %c0_44 = arith.constant 0 : index
    %c24 = arith.constant 24 : index
    %31 = vector.load %arg8[%c0_44, %c24] : memref<512x36xbf16, #tpu.memory_space<vmem>>, vector<512x4xbf16>
    tpu.vector_store %arg8[%c0_44, %c24], %30 {strides = array<i32>} : memref<512x36xbf16, #tpu.memory_space<vmem>>, vector<512x4xbf16>,
    %c0_45 = arith.constant 0 : index
    %c2_46 = arith.constant 2 : index
    %c1_47 = arith.constant 1 : index
    %c0_48 = arith.constant 0 : index
    %32 = vector.load %arg7[%c0_45, %c2_46, %c1_47, %c0_48] : memref<2x18x18x4xf32, #tpu.memory_space<vmem>>, vector<2x16x16x4xf32>
    %33 = vector.shape_cast %32 : vector<2x16x16x4xf32> to vector<512x4xf32>
    %34 = arith.truncf %33 : vector<512x4xf32> to vector<512x4xbf16>
    %c0_49 = arith.constant 0 : index
    %c28 = arith.constant 28 : index
    %35 = vector.load %arg8[%c0_49, %c28] : memref<512x36xbf16, #tpu.memory_space<vmem>>, vector<512x4xbf16>
    tpu.vector_store %arg8[%c0_49, %c28], %34 {strides = array<i32>} : memref<512x36xbf16, #tpu.memory_space<vmem>>, vector<512x4xbf16>,
    %c0_50 = arith.constant 0 : index
    %c2_51 = arith.constant 2 : index
    %c2_52 = arith.constant 2 : index
    %c0_53 = arith.constant 0 : index
    %36 = vector.load %arg7[%c0_50, %c2_51, %c2_52, %c0_53] : memref<2x18x18x4xf32, #tpu.memory_space<vmem>>, vector<2x16x16x4xf32>
    %37 = vector.shape_cast %36 : vector<2x16x16x4xf32> to vector<512x4xf32>
    %38 = arith.truncf %37 : vector<512x4xf32> to vector<512x4xbf16>
    %c0_54 = arith.constant 0 : index
    %c32 = arith.constant 32 : index
    %39 = vector.load %arg8[%c0_54, %c32] : memref<512x36xbf16, #tpu.memory_space<vmem>>, vector<512x4xbf16>
    tpu.vector_store %arg8[%c0_54, %c32], %38 {strides = array<i32>} : memref<512x36xbf16, #tpu.memory_space<vmem>>, vector<512x4xbf16>,
    %c0_55 = arith.constant 0 : index
    %c0_56 = arith.constant 0 : index
    %40 = vector.load %arg8[%c0_55, %c0_56] : memref<512x36xbf16, #tpu.memory_space<vmem>>, vector<512x36xbf16>
    %c0_57 = arith.constant 0 : index
    %c0_58 = arith.constant 0 : index
    %41 = vector.load %arg2[%c0_57, %c0_58] : memref<36x4xbf16, #tpu.memory_space<vmem>>, vector<36x4xbf16>
    %cst_59 = arith.constant dense<0.000000e+00> : vector<512x4xf32>
    %42 = tpu.matmul %40, %41, %cst_59 {dimension_numbers = #tpu.dot_dimension_numbers<[1], [0], [0], [1], [0, 0, 1, 1], [], []>} : vector<512x36xbf16>, vector<36x4xbf16>, vector<512x4xf32> -> vector<512x4xf32>
    %cst_60 = arith.constant dense<0.000000e+00> : vector<4xf32>
    %43 = vector.multi_reduction <add>, %42, %cst_60 [0] : vector<512x4xf32> to vector<4xf32>
    %44 = vector.shape_cast %43 : vector<4xf32> to vector<1x4xf32>
    %cst_61 = arith.constant 0.001953125 : f32
    %45 = vector.broadcast %cst_61 : f32 to vector<1x4xf32>
    %46 = arith.mulf %44, %45 : vector<1x4xf32>
    %47 = arith.mulf %42, %42 : vector<512x4xf32>
    %cst_62 = arith.constant dense<0.000000e+00> : vector<4xf32>
    %48 = vector.multi_reduction <add>, %47, %cst_62 [0] : vector<512x4xf32> to vector<4xf32>
    %49 = vector.shape_cast %48 : vector<4xf32> to vector<1x4xf32>
    %cst_63 = arith.constant 0.001953125 : f32
    %50 = vector.broadcast %cst_63 : f32 to vector<1x4xf32>
    %51 = arith.mulf %49, %50 : vector<1x4xf32>
    %52 = arith.mulf %46, %46 : vector<1x4xf32>
    %53 = arith.subf %51, %52 : vector<1x4xf32>
    %c0_64 = arith.constant 0 : index
    %c0_65 = arith.constant 0 : index
    %54 = vector.load %arg3[%c0_64, %c0_65] : memref<1x4xf32, #tpu.memory_space<vmem>>, vector<1x4xf32>
    %cst_66 = arith.constant 9.99999974E-6 : f32
    %55 = vector.broadcast %cst_66 : f32 to vector<1x4xf32>
    %56 = arith.addf %53, %55 : vector<1x4xf32>
    %57 = math.rsqrt %56 : vector<1x4xf32>
    %58 = arith.mulf %54, %57 : vector<1x4xf32>
    %c0_67 = arith.constant 0 : index
    %c0_68 = arith.constant 0 : index
    %59 = vector.load %arg4[%c0_67, %c0_68] : memref<1x4xf32, #tpu.memory_space<vmem>>, vector<1x4xf32>
    %60 = arith.mulf %46, %58 : vector<1x4xf32>
    %61 = arith.subf %59, %60 : vector<1x4xf32>
    %62 = vector.broadcast %58 : vector<1x4xf32> to vector<512x4xf32>
    %63 = arith.mulf %42, %62 : vector<512x4xf32>
    %64 = vector.broadcast %61 : vector<1x4xf32> to vector<512x4xf32>
    %65 = arith.addf %63, %64 : vector<512x4xf32>
    %c0_69 = arith.constant 0 : index
    %66 = memref.load %arg5[%c0_69] : memref<1xf32, #tpu.memory_space<smem>>
    %cst_70 = arith.constant 0.000000e+00 : f32
    %67 = vector.broadcast %cst_70 : f32 to vector<512x4xf32>
    %68 = arith.cmpf ogt, %65, %67 : vector<512x4xf32>
    %69 = vector.broadcast %66 : f32 to vector<512x4xf32>
    %70 = arith.mulf %65, %69 : vector<512x4xf32>
    %71 = arith.select %68, %65, %70 : vector<512x4xi1>, vector<512x4xf32>
    %72 = arith.truncf %71 : vector<512x4xf32> to vector<512x4xbf16>
    %c0_71 = arith.constant 0 : index
    %c0_72 = arith.constant 0 : index
    %73 = vector.load %arg6[%c0_71, %c0_72] : memref<512x4xbf16, #tpu.memory_space<vmem>>, vector<512x4xbf16>
    tpu.vector_store %arg6[%c0_71, %c0_72], %72 {strides = array<i32>} : memref<512x4xbf16, #tpu.memory_space<vmem>>, vector<512x4xbf16>,
    return
  }
  func.func @transform_0(%arg0: i32) -> (i32, i32, i32, i32) {
    %c0_i32 = arith.constant 0 : i32
    %c0_i32_0 = arith.constant 0 : i32
    %c0_i32_1 = arith.constant 0 : i32
    %c0_i32_2 = arith.constant 0 : i32
    %c0_i32_3 = arith.constant 0 : i32
    return %c0_i32, %c0_i32_0, %c0_i32_1, %c0_i32_2 : i32, i32, i32, i32
  }
  func.func @transform_1(%arg0: i32) -> (i32, i32) {
    %c0_i32 = arith.constant 0 : i32
    %c0_i32_0 = arith.constant 0 : i32
    return %c0_i32, %arg0 : i32, i32
  }
  func.func @transform_2(%arg0: i32) -> (i32, i32) {
    %c0_i32 = arith.constant 0 : i32
    %c0_i32_0 = arith.constant 0 : i32
    return %c0_i32, %arg0 : i32, i32
  }
  func.func @transform_3(%arg0: i32) -> (i32, i32) {
    %c0_i32 = arith.constant 0 : i32
    %c0_i32_0 = arith.constant 0 : i32
    return %c0_i32, %arg0 : i32, i32
  }
  func.func @transform_4(%arg0: i32) -> i32 {
    %c0_i32 = arith.constant 0 : i32
    %c0_i32_0 = arith.constant 0 : i32
    return %c0_i32 : i32
  }
  func.func @transform_5(%arg0: i32) -> (i32, i32) {
    %c0_i32 = arith.constant 0 : i32
    %c0_i32_0 = arith.constant 0 : i32
    return %c0_i32, %arg0 : i32, i32
  }
}

module attributes {stable_mosaic.version = 11 : i64} {
  func.func @_block2_kernel(%arg0: i32, %arg1: memref<2x16x16x4xbf16, #tpu.memory_space<vmem>>, %arg2: memref<36x4xbf16, #tpu.memory_space<vmem>>, %arg3: memref<1x4xf32, #tpu.memory_space<vmem>>, %arg4: memref<1x4xf32, #tpu.memory_space<vmem>>, %arg5: memref<512x4xf32, #tpu.memory_space<vmem>>, %arg6: memref<512x4xf32, #tpu.memory_space<vmem>>, %arg7: memref<2x18x18x4xf32, #tpu.memory_space<vmem>>, %arg8: memref<512x36xbf16, #tpu.memory_space<vmem>>) attributes {dimension_semantics = [#tpu.dimension_semantics<parallel>], iteration_bounds = array<i64: 1>, scalar_prefetch = 0 : i64, scratch_operands = 2 : i64, tpu.core_type = #tpu.core_type<tc>, window_params = [{pipeline_mode = #tpu.pipeline_mode<synchronous>, transform_indices = @transform_0, window_bounds = array<i64: 2, 16, 16, 4>}, {transform_indices = @transform_1, window_bounds = array<i64: 36, 4>}, {transform_indices = @transform_2, window_bounds = array<i64: 1, 4>}, {transform_indices = @transform_3, window_bounds = array<i64: 1, 4>}, {transform_indices = @transform_4, window_bounds = array<i64: 512, 4>}, {transform_indices = @transform_5, window_bounds = array<i64: 512, 4>}]} {
    %cst = arith.constant 0.000000e+00 : f32
    %0 = vector.broadcast %cst : f32 to vector<2x18x18x4xf32>
    %c0 = arith.constant 0 : index
    %c0_0 = arith.constant 0 : index
    %c0_1 = arith.constant 0 : index
    %c0_2 = arith.constant 0 : index
    %1 = vector.load %arg7[%c0, %c0_0, %c0_1, %c0_2] : memref<2x18x18x4xf32, #tpu.memory_space<vmem>>, vector<2x18x18x4xf32>
    tpu.vector_store %arg7[%c0, %c0_0, %c0_1, %c0_2], %0 {strides = array<i32>} : memref<2x18x18x4xf32, #tpu.memory_space<vmem>>, vector<2x18x18x4xf32>,
    %c0_3 = arith.constant 0 : index
    %c0_4 = arith.constant 0 : index
    %c0_5 = arith.constant 0 : index
    %c0_6 = arith.constant 0 : index
    %2 = vector.load %arg1[%c0_3, %c0_4, %c0_5, %c0_6] : memref<2x16x16x4xbf16, #tpu.memory_space<vmem>>, vector<2x16x16x4xbf16>
    %3 = arith.extf %2 : vector<2x16x16x4xbf16> to vector<2x16x16x4xf32>
    %c0_7 = arith.constant 0 : index
    %c1 = arith.constant 1 : index
    %c1_8 = arith.constant 1 : index
    %c0_9 = arith.constant 0 : index
    %4 = vector.load %arg7[%c0_7, %c1, %c1_8, %c0_9] : memref<2x18x18x4xf32, #tpu.memory_space<vmem>>, vector<2x16x16x4xf32>
    tpu.vector_store %arg7[%c0_7, %c1, %c1_8, %c0_9], %3 {strides = array<i32>} : memref<2x18x18x4xf32, #tpu.memory_space<vmem>>, vector<2x16x16x4xf32>,
    %c0_10 = arith.constant 0 : index
    %c0_11 = arith.constant 0 : index
    %c0_12 = arith.constant 0 : index
    %c0_13 = arith.constant 0 : index
    %5 = vector.load %arg7[%c0_10, %c0_11, %c0_12, %c0_13] : memref<2x18x18x4xf32, #tpu.memory_space<vmem>>, vector<2x16x16x4xf32>
    %6 = vector.shape_cast %5 : vector<2x16x16x4xf32> to vector<512x4xf32>
    %7 = arith.truncf %6 : vector<512x4xf32> to vector<512x4xbf16>
    %c0_14 = arith.constant 0 : index
    %c0_15 = arith.constant 0 : index
    %8 = vector.load %arg8[%c0_14, %c0_15] : memref<512x36xbf16, #tpu.memory_space<vmem>>, vector<512x4xbf16>
    tpu.vector_store %arg8[%c0_14, %c0_15], %7 {strides = array<i32>} : memref<512x36xbf16, #tpu.memory_space<vmem>>, vector<512x4xbf16>,
    %c0_16 = arith.constant 0 : index
    %c0_17 = arith.constant 0 : index
    %c1_18 = arith.constant 1 : index
    %c0_19 = arith.constant 0 : index
    %9 = vector.load %arg7[%c0_16, %c0_17, %c1_18, %c0_19] : memref<2x18x18x4xf32, #tpu.memory_space<vmem>>, vector<2x16x16x4xf32>
    %10 = vector.shape_cast %9 : vector<2x16x16x4xf32> to vector<512x4xf32>
    %11 = arith.truncf %10 : vector<512x4xf32> to vector<512x4xbf16>
    %c0_20 = arith.constant 0 : index
    %c4 = arith.constant 4 : index
    %12 = vector.load %arg8[%c0_20, %c4] : memref<512x36xbf16, #tpu.memory_space<vmem>>, vector<512x4xbf16>
    tpu.vector_store %arg8[%c0_20, %c4], %11 {strides = array<i32>} : memref<512x36xbf16, #tpu.memory_space<vmem>>, vector<512x4xbf16>,
    %c0_21 = arith.constant 0 : index
    %c0_22 = arith.constant 0 : index
    %c2 = arith.constant 2 : index
    %c0_23 = arith.constant 0 : index
    %13 = vector.load %arg7[%c0_21, %c0_22, %c2, %c0_23] : memref<2x18x18x4xf32, #tpu.memory_space<vmem>>, vector<2x16x16x4xf32>
    %14 = vector.shape_cast %13 : vector<2x16x16x4xf32> to vector<512x4xf32>
    %15 = arith.truncf %14 : vector<512x4xf32> to vector<512x4xbf16>
    %c0_24 = arith.constant 0 : index
    %c8 = arith.constant 8 : index
    %16 = vector.load %arg8[%c0_24, %c8] : memref<512x36xbf16, #tpu.memory_space<vmem>>, vector<512x4xbf16>
    tpu.vector_store %arg8[%c0_24, %c8], %15 {strides = array<i32>} : memref<512x36xbf16, #tpu.memory_space<vmem>>, vector<512x4xbf16>,
    %c0_25 = arith.constant 0 : index
    %c1_26 = arith.constant 1 : index
    %c0_27 = arith.constant 0 : index
    %c0_28 = arith.constant 0 : index
    %17 = vector.load %arg7[%c0_25, %c1_26, %c0_27, %c0_28] : memref<2x18x18x4xf32, #tpu.memory_space<vmem>>, vector<2x16x16x4xf32>
    %18 = vector.shape_cast %17 : vector<2x16x16x4xf32> to vector<512x4xf32>
    %19 = arith.truncf %18 : vector<512x4xf32> to vector<512x4xbf16>
    %c0_29 = arith.constant 0 : index
    %c12 = arith.constant 12 : index
    %20 = vector.load %arg8[%c0_29, %c12] : memref<512x36xbf16, #tpu.memory_space<vmem>>, vector<512x4xbf16>
    tpu.vector_store %arg8[%c0_29, %c12], %19 {strides = array<i32>} : memref<512x36xbf16, #tpu.memory_space<vmem>>, vector<512x4xbf16>,
    %c0_30 = arith.constant 0 : index
    %c1_31 = arith.constant 1 : index
    %c1_32 = arith.constant 1 : index
    %c0_33 = arith.constant 0 : index
    %21 = vector.load %arg7[%c0_30, %c1_31, %c1_32, %c0_33] : memref<2x18x18x4xf32, #tpu.memory_space<vmem>>, vector<2x16x16x4xf32>
    %22 = vector.shape_cast %21 : vector<2x16x16x4xf32> to vector<512x4xf32>
    %23 = arith.truncf %22 : vector<512x4xf32> to vector<512x4xbf16>
    %c0_34 = arith.constant 0 : index
    %c16 = arith.constant 16 : index
    %24 = vector.load %arg8[%c0_34, %c16] : memref<512x36xbf16, #tpu.memory_space<vmem>>, vector<512x4xbf16>
    tpu.vector_store %arg8[%c0_34, %c16], %23 {strides = array<i32>} : memref<512x36xbf16, #tpu.memory_space<vmem>>, vector<512x4xbf16>,
    %c0_35 = arith.constant 0 : index
    %c1_36 = arith.constant 1 : index
    %c2_37 = arith.constant 2 : index
    %c0_38 = arith.constant 0 : index
    %25 = vector.load %arg7[%c0_35, %c1_36, %c2_37, %c0_38] : memref<2x18x18x4xf32, #tpu.memory_space<vmem>>, vector<2x16x16x4xf32>
    %26 = vector.shape_cast %25 : vector<2x16x16x4xf32> to vector<512x4xf32>
    %27 = arith.truncf %26 : vector<512x4xf32> to vector<512x4xbf16>
    %c0_39 = arith.constant 0 : index
    %c20 = arith.constant 20 : index
    %28 = vector.load %arg8[%c0_39, %c20] : memref<512x36xbf16, #tpu.memory_space<vmem>>, vector<512x4xbf16>
    tpu.vector_store %arg8[%c0_39, %c20], %27 {strides = array<i32>} : memref<512x36xbf16, #tpu.memory_space<vmem>>, vector<512x4xbf16>,
    %c0_40 = arith.constant 0 : index
    %c2_41 = arith.constant 2 : index
    %c0_42 = arith.constant 0 : index
    %c0_43 = arith.constant 0 : index
    %29 = vector.load %arg7[%c0_40, %c2_41, %c0_42, %c0_43] : memref<2x18x18x4xf32, #tpu.memory_space<vmem>>, vector<2x16x16x4xf32>
    %30 = vector.shape_cast %29 : vector<2x16x16x4xf32> to vector<512x4xf32>
    %31 = arith.truncf %30 : vector<512x4xf32> to vector<512x4xbf16>
    %c0_44 = arith.constant 0 : index
    %c24 = arith.constant 24 : index
    %32 = vector.load %arg8[%c0_44, %c24] : memref<512x36xbf16, #tpu.memory_space<vmem>>, vector<512x4xbf16>
    tpu.vector_store %arg8[%c0_44, %c24], %31 {strides = array<i32>} : memref<512x36xbf16, #tpu.memory_space<vmem>>, vector<512x4xbf16>,
    %c0_45 = arith.constant 0 : index
    %c2_46 = arith.constant 2 : index
    %c1_47 = arith.constant 1 : index
    %c0_48 = arith.constant 0 : index
    %33 = vector.load %arg7[%c0_45, %c2_46, %c1_47, %c0_48] : memref<2x18x18x4xf32, #tpu.memory_space<vmem>>, vector<2x16x16x4xf32>
    %34 = vector.shape_cast %33 : vector<2x16x16x4xf32> to vector<512x4xf32>
    %35 = arith.truncf %34 : vector<512x4xf32> to vector<512x4xbf16>
    %c0_49 = arith.constant 0 : index
    %c28 = arith.constant 28 : index
    %36 = vector.load %arg8[%c0_49, %c28] : memref<512x36xbf16, #tpu.memory_space<vmem>>, vector<512x4xbf16>
    tpu.vector_store %arg8[%c0_49, %c28], %35 {strides = array<i32>} : memref<512x36xbf16, #tpu.memory_space<vmem>>, vector<512x4xbf16>,
    %c0_50 = arith.constant 0 : index
    %c2_51 = arith.constant 2 : index
    %c2_52 = arith.constant 2 : index
    %c0_53 = arith.constant 0 : index
    %37 = vector.load %arg7[%c0_50, %c2_51, %c2_52, %c0_53] : memref<2x18x18x4xf32, #tpu.memory_space<vmem>>, vector<2x16x16x4xf32>
    %38 = vector.shape_cast %37 : vector<2x16x16x4xf32> to vector<512x4xf32>
    %39 = arith.truncf %38 : vector<512x4xf32> to vector<512x4xbf16>
    %c0_54 = arith.constant 0 : index
    %c32 = arith.constant 32 : index
    %40 = vector.load %arg8[%c0_54, %c32] : memref<512x36xbf16, #tpu.memory_space<vmem>>, vector<512x4xbf16>
    tpu.vector_store %arg8[%c0_54, %c32], %39 {strides = array<i32>} : memref<512x36xbf16, #tpu.memory_space<vmem>>, vector<512x4xbf16>,
    %c0_55 = arith.constant 0 : index
    %c0_56 = arith.constant 0 : index
    %41 = vector.load %arg8[%c0_55, %c0_56] : memref<512x36xbf16, #tpu.memory_space<vmem>>, vector<512x36xbf16>
    %c0_57 = arith.constant 0 : index
    %c0_58 = arith.constant 0 : index
    %42 = vector.load %arg2[%c0_57, %c0_58] : memref<36x4xbf16, #tpu.memory_space<vmem>>, vector<36x4xbf16>
    %cst_59 = arith.constant dense<0.000000e+00> : vector<512x4xf32>
    %43 = tpu.matmul %41, %42, %cst_59 {dimension_numbers = #tpu.dot_dimension_numbers<[1], [0], [0], [1], [0, 0, 1, 1], [], []>} : vector<512x36xbf16>, vector<36x4xbf16>, vector<512x4xf32> -> vector<512x4xf32>
    %cst_60 = arith.constant dense<0.000000e+00> : vector<4xf32>
    %44 = vector.multi_reduction <add>, %43, %cst_60 [0] : vector<512x4xf32> to vector<4xf32>
    %45 = vector.shape_cast %44 : vector<4xf32> to vector<1x4xf32>
    %cst_61 = arith.constant 0.001953125 : f32
    %46 = vector.broadcast %cst_61 : f32 to vector<1x4xf32>
    %47 = arith.mulf %45, %46 : vector<1x4xf32>
    %48 = arith.mulf %43, %43 : vector<512x4xf32>
    %cst_62 = arith.constant dense<0.000000e+00> : vector<4xf32>
    %49 = vector.multi_reduction <add>, %48, %cst_62 [0] : vector<512x4xf32> to vector<4xf32>
    %50 = vector.shape_cast %49 : vector<4xf32> to vector<1x4xf32>
    %cst_63 = arith.constant 0.001953125 : f32
    %51 = vector.broadcast %cst_63 : f32 to vector<1x4xf32>
    %52 = arith.mulf %50, %51 : vector<1x4xf32>
    %53 = arith.mulf %47, %47 : vector<1x4xf32>
    %54 = arith.subf %52, %53 : vector<1x4xf32>
    %c0_64 = arith.constant 0 : index
    %c0_65 = arith.constant 0 : index
    %55 = vector.load %arg3[%c0_64, %c0_65] : memref<1x4xf32, #tpu.memory_space<vmem>>, vector<1x4xf32>
    %cst_66 = arith.constant 9.99999974E-6 : f32
    %56 = vector.broadcast %cst_66 : f32 to vector<1x4xf32>
    %57 = arith.addf %54, %56 : vector<1x4xf32>
    %58 = math.rsqrt %57 : vector<1x4xf32>
    %59 = arith.mulf %55, %58 : vector<1x4xf32>
    %c0_67 = arith.constant 0 : index
    %c0_68 = arith.constant 0 : index
    %60 = vector.load %arg4[%c0_67, %c0_68] : memref<1x4xf32, #tpu.memory_space<vmem>>, vector<1x4xf32>
    %61 = arith.mulf %47, %59 : vector<1x4xf32>
    %62 = arith.subf %60, %61 : vector<1x4xf32>
    %63 = vector.broadcast %59 : vector<1x4xf32> to vector<512x4xf32>
    %64 = arith.mulf %43, %63 : vector<512x4xf32>
    %65 = vector.broadcast %62 : vector<1x4xf32> to vector<512x4xf32>
    %66 = arith.addf %64, %65 : vector<512x4xf32>
    %c0_69 = arith.constant 0 : index
    %c0_70 = arith.constant 0 : index
    %67 = vector.load %arg5[%c0_69, %c0_70] : memref<512x4xf32, #tpu.memory_space<vmem>>, vector<512x4xf32>
    %68 = arith.addf %67, %66 : vector<512x4xf32>
    %c0_71 = arith.constant 0 : index
    %c0_72 = arith.constant 0 : index
    %69 = vector.load %arg6[%c0_71, %c0_72] : memref<512x4xf32, #tpu.memory_space<vmem>>, vector<512x4xf32>
    tpu.vector_store %arg6[%c0_71, %c0_72], %68 {strides = array<i32>} : memref<512x4xf32, #tpu.memory_space<vmem>>, vector<512x4xf32>,
    return
  }
  func.func @transform_0(%arg0: i32) -> (i32, i32, i32, i32) {
    %c0_i32 = arith.constant 0 : i32
    %c0_i32_0 = arith.constant 0 : i32
    %c0_i32_1 = arith.constant 0 : i32
    %c0_i32_2 = arith.constant 0 : i32
    %c0_i32_3 = arith.constant 0 : i32
    return %c0_i32, %c0_i32_0, %c0_i32_1, %c0_i32_2 : i32, i32, i32, i32
  }
  func.func @transform_1(%arg0: i32) -> (i32, i32) {
    %c0_i32 = arith.constant 0 : i32
    %c0_i32_0 = arith.constant 0 : i32
    return %c0_i32, %arg0 : i32, i32
  }
  func.func @transform_2(%arg0: i32) -> (i32, i32) {
    %c0_i32 = arith.constant 0 : i32
    %c0_i32_0 = arith.constant 0 : i32
    return %c0_i32, %arg0 : i32, i32
  }
  func.func @transform_3(%arg0: i32) -> (i32, i32) {
    %c0_i32 = arith.constant 0 : i32
    %c0_i32_0 = arith.constant 0 : i32
    return %c0_i32, %arg0 : i32, i32
  }
  func.func @transform_4(%arg0: i32) -> (i32, i32) {
    %c0_i32 = arith.constant 0 : i32
    %c0_i32_0 = arith.constant 0 : i32
    return %c0_i32, %arg0 : i32, i32
  }
  func.func @transform_5(%arg0: i32) -> (i32, i32) {
    %c0_i32 = arith.constant 0 : i32
    %c0_i32_0 = arith.constant 0 : i32
    return %c0_i32, %arg0 : i32, i32
  }
}

</mosaic_0001>

<llo_original>
// kernel: residual_block.2
$region0: #{residual_block.2}
  #allocation0 [shape = 'u32[]', space=smem, size = 0x4, offset = 0x4, fixed_abs, tag = 'smem constant byte address 0x4 - core index']
  #allocation1 [shape = 'u32[144,128]{1,0:T(1,128)}', space=vmem, size = 0x12000, scoped, tag = 'internal scratch']
  #allocation2 [shape = 'f32[2,18,18,4]{3,2,1,0:T(8,128)}', space=vmem, size = 0x6c000, scoped, tag = 'scratch operand']
  #allocation3 [shape = 'bf16[512,36]{1,0:T(16,128)(2,1)}', space=vmem, size = 0x20000, scoped, tag = 'scratch operand']
  #allocation4 [shape = 'f32[1]{0:T(128)S(6)}', space=smem, size = 0x200, scoped, tag = 'scoped memory for residual_block.2']
  %s0 = inlined_call_operand.vmem [shape: f32[2,16,16,4], index: 0, kind: input, shape index: {}]
  %s1 = inlined_call_operand.vmem [shape: bf16[36,4], index: 1, kind: input, shape index: {}]
  %s2 = inlined_call_operand.vmem [shape: f32[1,4], index: 2, kind: input, shape index: {}]
  %s3 = inlined_call_operand.vmem [shape: f32[1,4], index: 3, kind: input, shape index: {}]
  %s4 = inlined_call_operand.<no memory space> [shape: f32[1], index: 4, kind: input, shape index: {}]
  %s5 = inlined_call_operand.vmem [shape: bf16[512,4], index: 5, kind: output, shape index: {}]
  %s6 = sld [smem:[#allocation0]]
  $region30: #{residual_block.2} parent=0
    _
  %s8 = ssub.s32 1, %s6
  %s9 = scalar_select 0, %s8, %s6
  %10 = sst [smem:[#allocation4]] %s4
  // Predicated region
  $region2: #{residual_block.2} parent=0 // pred_check
    _
  $region3: #{residual_block.2} parent=0 // pred_check_branch
    %12 = sbr.rel (0) target = $region5
  $region4: #{residual_block.2} parent=0 // pred_region
    _
  $region5: #{residual_block.2} parent=0 // pred_fallthru
    _
  // Predicated region
  $region6: #{residual_block.2} parent=0 // pred_check
    _
  $region7: #{residual_block.2} parent=0 // pred_check_branch
    %14 = sbr.rel (0) target = $region9
  $region8: #{residual_block.2} parent=0 // pred_region
    _
  $region9: #{residual_block.2} parent=0 // pred_fallthru
    _
  // Predicated region
  $region10: #{residual_block.2} parent=0 // pred_check
    _
  $region11: #{residual_block.2} parent=0 // pred_check_branch
    %16 = sbr.rel (0) target = $region13
  $region12: #{residual_block.2} parent=0 // pred_region
    _
  $region13: #{residual_block.2} parent=0 // pred_fallthru
    _
  // Predicated region
  $region14: #{residual_block.2} parent=0 // pred_check
    _
  $region15: #{residual_block.2} parent=0 // pred_check_branch
    %18 = sbr.rel (0) target = $region17
  $region16: #{residual_block.2} parent=0 // pred_region
    _
  $region17: #{residual_block.2} parent=0 // pred_fallthru
    _
  // Predicated region
  $region18: #{residual_block.2} parent=0 // pred_check
    _
  $region19: #{residual_block.2} parent=0 // pred_check_branch
    %20 = sbr.rel (0) target = $region21
  $region20: #{residual_block.2} parent=0 // pred_region
    _
  $region21: #{residual_block.2} parent=0 // pred_fallthru
    _
  %vm22 = vcmask 31744
  %23 = vst.msk [vmem:[#allocation2] sm:$0xff] %vm22, 0.0
  %24 = vst.msk [vmem:[#allocation2 + $0x8] sm:$0xff] %vm22, 0.0
  %vm25 = vcmask 25600
  %26 = vst.msk [vmem:[#allocation2 + $0x10] sm:$0x3] %vm25, 0.0
  %27 = vst.msk [vmem:[#allocation2 + $0x18] sm:$0xff] %vm22, 0.0
  %28 = vst.msk [vmem:[#allocation2 + $0x20] sm:$0xff] %vm22, 0.0
  %29 = vst.msk [vmem:[#allocation2 + $0x28] sm:$0x3] %vm25, 0.0
  %30 = vst.msk [vmem:[#allocation2 + $0x30] sm:$0xff] %vm22, 0.0
  %31 = vst.msk [vmem:[#allocation2 + $0x38] sm:$0xff] %vm22, 0.0
  %32 = vst.msk [vmem:[#allocation2 + $0x40] sm:$0x3] %vm25, 0.0
  %33 = vst.msk [vmem:[#allocation2 + $0x48] sm:$0xff] %vm22, 0.0
  %34 = vst.msk [vmem:[#allocation2 + $0x50] sm:$0xff] %vm22, 0.0
  %35 = vst.msk [vmem:[#allocation2 + $0x58] sm:$0x3] %vm25, 0.0
  %36 = vst.msk [vmem:[#allocation2 + $0x60] sm:$0xff] %vm22, 0.0
  %37 = vst.msk [vmem:[#allocation2 + $0x68] sm:$0xff] %vm22, 0.0
  %38 = vst.msk [vmem:[#allocation2 + $0x70] sm:$0x3] %vm25, 0.0
  %39 = vst.msk [vmem:[#allocation2 + $0x78] sm:$0xff] %vm22, 0.0
  %40 = vst.msk [vmem:[#allocation2 + $0x80] sm:$0xff] %vm22, 0.0
  %41 = vst.msk [vmem:[#allocation2 + $0x88] sm:$0x3] %vm25, 0.0
  %42 = vst.msk [vmem:[#allocation2 + $0x90] sm:$0xff] %vm22, 0.0
  %43 = vst.msk [vmem:[#allocation2 + $0x98] sm:$0xff] %vm22, 0.0
  %44 = vst.msk [vmem:[#allocation2 + $0xa0] sm:$0x3] %vm25, 0.0
  %45 = vst.msk [vmem:[#allocation2 + $0xa8] sm:$0xff] %vm22, 0.0
  %46 = vst.msk [vmem:[#allocation2 + $0xb0] sm:$0xff] %vm22, 0.0
  %47 = vst.msk [vmem:[#allocation2 + $0xb8] sm:$0x3] %vm25, 0.0
  %48 = vst.msk [vmem:[#allocation2 + $0xc0] sm:$0xff] %vm22, 0.0
  %49 = vst.msk [vmem:[#allocation2 + $0xc8] sm:$0xff] %vm22, 0.0
  %50 = vst.msk [vmem:[#allocation2 + $0xd0] sm:$0x3] %vm25, 0.0
  %51 = vst.msk [vmem:[#allocation2 + $0xd8] sm:$0xff] %vm22, 0.0
  %52 = vst.msk [vmem:[#allocation2 + $0xe0] sm:$0xff] %vm22, 0.0
  %53 = vst.msk [vmem:[#allocation2 + $0xe8] sm:$0x3] %vm25, 0.0
  %54 = vst.msk [vmem:[#allocation2 + $0xf0] sm:$0xff] %vm22, 0.0
  %55 = vst.msk [vmem:[#allocation2 + $0xf8] sm:$0xff] %vm22, 0.0
  %56 = vst.msk [vmem:[#allocation2 + $0x100] sm:$0x3] %vm25, 0.0
  %57 = vst.msk [vmem:[#allocation2 + $0x108] sm:$0xff] %vm22, 0.0
  %58 = vst.msk [vmem:[#allocation2 + $0x110] sm:$0xff] %vm22, 0.0
  %59 = vst.msk [vmem:[#allocation2 + $0x118] sm:$0x3] %vm25, 0.0
  %60 = vst.msk [vmem:[#allocation2 + $0x120] sm:$0xff] %vm22, 0.0
  %61 = vst.msk [vmem:[#allocation2 + $0x128] sm:$0xff] %vm22, 0.0
  %62 = vst.msk [vmem:[#allocation2 + $0x130] sm:$0x3] %vm25, 0.0
  %63 = vst.msk [vmem:[#allocation2 + $0x138] sm:$0xff] %vm22, 0.0
  %64 = vst.msk [vmem:[#allocation2 + $0x140] sm:$0xff] %vm22, 0.0
  %65 = vst.msk [vmem:[#allocation2 + $0x148] sm:$0x3] %vm25, 0.0
  %66 = vst.msk [vmem:[#allocation2 + $0x150] sm:$0xff] %vm22, 0.0
  %67 = vst.msk [vmem:[#allocation2 + $0x158] sm:$0xff] %vm22, 0.0
  %68 = vst.msk [vmem:[#allocation2 + $0x160] sm:$0x3] %vm25, 0.0
  %69 = vst.msk [vmem:[#allocation2 + $0x168] sm:$0xff] %vm22, 0.0
  %70 = vst.msk [vmem:[#allocation2 + $0x170] sm:$0xff] %vm22, 0.0
  %71 = vst.msk [vmem:[#allocation2 + $0x178] sm:$0x3] %vm25, 0.0
  %72 = vst.msk [vmem:[#allocation2 + $0x180] sm:$0xff] %vm22, 0.0
  %73 = vst.msk [vmem:[#allocation2 + $0x188] sm:$0xff] %vm22, 0.0
  %74 = vst.msk [vmem:[#allocation2 + $0x190] sm:$0x3] %vm25, 0.0
  %75 = vst.msk [vmem:[#allocation2 + $0x198] sm:$0xff] %vm22, 0.0
  %76 = vst.msk [vmem:[#allocation2 + $0x1a0] sm:$0xff] %vm22, 0.0
  %77 = vst.msk [vmem:[#allocation2 + $0x1a8] sm:$0x3] %vm25, 0.0
  %78 = vst.msk [vmem:[#allocation2 + $0x1b0] sm:$0xff] %vm22, 0.0
  %79 = vst.msk [vmem:[#allocation2 + $0x1b8] sm:$0xff] %vm22, 0.0
  %80 = vst.msk [vmem:[#allocation2 + $0x1c0] sm:$0x3] %vm25, 0.0
  %81 = vst.msk [vmem:[#allocation2 + $0x1c8] sm:$0xff] %vm22, 0.0
  %82 = vst.msk [vmem:[#allocation2 + $0x1d0] sm:$0xff] %vm22, 0.0
  %83 = vst.msk [vmem:[#allocation2 + $0x1d8] sm:$0x3] %vm25, 0.0
  %84 = vst.msk [vmem:[#allocation2 + $0x1e0] sm:$0xff] %vm22, 0.0
  %85 = vst.msk [vmem:[#allocation2 + $0x1e8] sm:$0xff] %vm22, 0.0
  %86 = vst.msk [vmem:[#allocation2 + $0x1f0] sm:$0x3] %vm25, 0.0
  %87 = vst.msk [vmem:[#allocation2 + $0x1f8] sm:$0xff] %vm22, 0.0
  %88 = vst.msk [vmem:[#allocation2 + $0x200] sm:$0xff] %vm22, 0.0
  %89 = vst.msk [vmem:[#allocation2 + $0x208] sm:$0x3] %vm25, 0.0
  %90 = vst.msk [vmem:[#allocation2 + $0x210] sm:$0xff] %vm22, 0.0
  %91 = vst.msk [vmem:[#allocation2 + $0x218] sm:$0xff] %vm22, 0.0
  %92 = vst.msk [vmem:[#allocation2 + $0x220] sm:$0x3] %vm25, 0.0
  %93 = vst.msk [vmem:[#allocation2 + $0x228] sm:$0xff] %vm22, 0.0
  %94 = vst.msk [vmem:[#allocation2 + $0x230] sm:$0xff] %vm22, 0.0
  %95 = vst.msk [vmem:[#allocation2 + $0x238] sm:$0x3] %vm25, 0.0
  %96 = vst.msk [vmem:[#allocation2 + $0x240] sm:$0xff] %vm22, 0.0
  %97 = vst.msk [vmem:[#allocation2 + $0x248] sm:$0xff] %vm22, 0.0
  %98 = vst.msk [vmem:[#allocation2 + $0x250] sm:$0x3] %vm25, 0.0
  %99 = vst.msk [vmem:[#allocation2 + $0x258] sm:$0xff] %vm22, 0.0
  %100 = vst.msk [vmem:[#allocation2 + $0x260] sm:$0xff] %vm22, 0.0
  %101 = vst.msk [vmem:[#allocation2 + $0x268] sm:$0x3] %vm25, 0.0
  %102 = vst.msk [vmem:[#allocation2 + $0x270] sm:$0xff] %vm22, 0.0
  %103 = vst.msk [vmem:[#allocation2 + $0x278] sm:$0xff] %vm22, 0.0
  %104 = vst.msk [vmem:[#allocation2 + $0x280] sm:$0x3] %vm25, 0.0
  %105 = vst.msk [vmem:[#allocation2 + $0x288] sm:$0xff] %vm22, 0.0
  %106 = vst.msk [vmem:[#allocation2 + $0x290] sm:$0xff] %vm22, 0.0
  %107 = vst.msk [vmem:[#allocation2 + $0x298] sm:$0x3] %vm25, 0.0
  %108 = vst.msk [vmem:[#allocation2 + $0x2a0] sm:$0xff] %vm22, 0.0
  %109 = vst.msk [vmem:[#allocation2 + $0x2a8] sm:$0xff] %vm22, 0.0
  %110 = vst.msk [vmem:[#allocation2 + $0x2b0] sm:$0x3] %vm25, 0.0
  %111 = vst.msk [vmem:[#allocation2 + $0x2b8] sm:$0xff] %vm22, 0.0
  %112 = vst.msk [vmem:[#allocation2 + $0x2c0] sm:$0xff] %vm22, 0.0
  %113 = vst.msk [vmem:[#allocation2 + $0x2c8] sm:$0x3] %vm25, 0.0
  %114 = vst.msk [vmem:[#allocation2 + $0x2d0] sm:$0xff] %vm22, 0.0
  %115 = vst.msk [vmem:[#allocation2 + $0x2d8] sm:$0xff] %vm22, 0.0
  %116 = vst.msk [vmem:[#allocation2 + $0x2e0] sm:$0x3] %vm25, 0.0
  %117 = vst.msk [vmem:[#allocation2 + $0x2e8] sm:$0xff] %vm22, 0.0
  %118 = vst.msk [vmem:[#allocation2 + $0x2f0] sm:$0xff] %vm22, 0.0
  %119 = vst.msk [vmem:[#allocation2 + $0x2f8] sm:$0x3] %vm25, 0.0
  %120 = vst.msk [vmem:[#allocation2 + $0x300] sm:$0xff] %vm22, 0.0
  %121 = vst.msk [vmem:[#allocation2 + $0x308] sm:$0xff] %vm22, 0.0
  %122 = vst.msk [vmem:[#allocation2 + $0x310] sm:$0x3] %vm25, 0.0
  %123 = vst.msk [vmem:[#allocation2 + $0x318] sm:$0xff] %vm22, 0.0
  %124 = vst.msk [vmem:[#allocation2 + $0x320] sm:$0xff] %vm22, 0.0
  %125 = vst.msk [vmem:[#allocation2 + $0x328] sm:$0x3] %vm25, 0.0
  %126 = vst.msk [vmem:[#allocation2 + $0x330] sm:$0xff] %vm22, 0.0
  %127 = vst.msk [vmem:[#allocation2 + $0x338] sm:$0xff] %vm22, 0.0
  %128 = vst.msk [vmem:[#allocation2 + $0x340] sm:$0x3] %vm25, 0.0
  %129 = vst.msk [vmem:[#allocation2 + $0x348] sm:$0xff] %vm22, 0.0
  %130 = vst.msk [vmem:[#allocation2 + $0x350] sm:$0xff] %vm22, 0.0
  %131 = vst.msk [vmem:[#allocation2 + $0x358] sm:$0x3] %vm25, 0.0
  %v132 = vld [vmem:[%s0] sm:$0xff]
  %v133 = vld [vmem:[%s0 + $0x8] sm:$0xff]
  %v134 = vld [vmem:[%s0 + $0x10] sm:$0xff]
  %v135 = vld [vmem:[%s0 + $0x18] sm:$0xff]
  %v136 = vld [vmem:[%s0 + $0x20] sm:$0xff]
  %v137 = vld [vmem:[%s0 + $0x28] sm:$0xff]
  %v138 = vld [vmem:[%s0 + $0x30] sm:$0xff]
  %v139 = vld [vmem:[%s0 + $0x38] sm:$0xff]
  %v140 = vld [vmem:[%s0 + $0x40] sm:$0xff]
  %v141 = vld [vmem:[%s0 + $0x48] sm:$0xff]
  %v142 = vld [vmem:[%s0 + $0x50] sm:$0xff]
  %v143 = vld [vmem:[%s0 + $0x58] sm:$0xff]
  %v144 = vld [vmem:[%s0 + $0x60] sm:$0xff]
  %v145 = vld [vmem:[%s0 + $0x68] sm:$0xff]
  %v146 = vld [vmem:[%s0 + $0x70] sm:$0xff]
  %v147 = vld [vmem:[%s0 + $0x78] sm:$0xff]
  %v148 = vld [vmem:[%s0 + $0x80] sm:$0xff]
  %v149 = vld [vmem:[%s0 + $0x88] sm:$0xff]
  %v150 = vld [vmem:[%s0 + $0x90] sm:$0xff]
  %v151 = vld [vmem:[%s0 + $0x98] sm:$0xff]
  %v152 = vld [vmem:[%s0 + $0xa0] sm:$0xff]
  %v153 = vld [vmem:[%s0 + $0xa8] sm:$0xff]
  %v154 = vld [vmem:[%s0 + $0xb0] sm:$0xff]
  %v155 = vld [vmem:[%s0 + $0xb8] sm:$0xff]
  %v156 = vld [vmem:[%s0 + $0xc0] sm:$0xff]
  %v157 = vld [vmem:[%s0 + $0xc8] sm:$0xff]
  %v158 = vld [vmem:[%s0 + $0xd0] sm:$0xff]
  %v159 = vld [vmem:[%s0 + $0xd8] sm:$0xff]
  %v160 = vld [vmem:[%s0 + $0xe0] sm:$0xff]
  %v161 = vld [vmem:[%s0 + $0xe8] sm:$0xff]
  %v162 = vld [vmem:[%s0 + $0xf0] sm:$0xff]
  %v163 = vld [vmem:[%s0 + $0xf8] sm:$0xff]
  %v164 = vld [vmem:[%s0 + $0x100] sm:$0xff]
  %v165 = vld [vmem:[%s0 + $0x108] sm:$0xff]
  %v166 = vld [vmem:[%s0 + $0x110] sm:$0xff]
  %v167 = vld [vmem:[%s0 + $0x118] sm:$0xff]
  %v168 = vld [vmem:[%s0 + $0x120] sm:$0xff]
  %v169 = vld [vmem:[%s0 + $0x128] sm:$0xff]
  %v170 = vld [vmem:[%s0 + $0x130] sm:$0xff]
  %v171 = vld [vmem:[%s0 + $0x138] sm:$0xff]
  %v172 = vld [vmem:[%s0 + $0x140] sm:$0xff]
  %v173 = vld [vmem:[%s0 + $0x148] sm:$0xff]
  %v174 = vld [vmem:[%s0 + $0x150] sm:$0xff]
  %v175 = vld [vmem:[%s0 + $0x158] sm:$0xff]
  %v176 = vld [vmem:[%s0 + $0x160] sm:$0xff]
  %v177 = vld [vmem:[%s0 + $0x168] sm:$0xff]
  %v178 = vld [vmem:[%s0 + $0x170] sm:$0xff]
  %v179 = vld [vmem:[%s0 + $0x178] sm:$0xff]
  %v180 = vld [vmem:[%s0 + $0x180] sm:$0xff]
  %v181 = vld [vmem:[%s0 + $0x188] sm:$0xff]
  %v182 = vld [vmem:[%s0 + $0x190] sm:$0xff]
  %v183 = vld [vmem:[%s0 + $0x198] sm:$0xff]
  %v184 = vld [vmem:[%s0 + $0x1a0] sm:$0xff]
  %v185 = vld [vmem:[%s0 + $0x1a8] sm:$0xff]
  %v186 = vld [vmem:[%s0 + $0x1b0] sm:$0xff]
  %v187 = vld [vmem:[%s0 + $0x1b8] sm:$0xff]
  %v188 = vld [vmem:[%s0 + $0x1c0] sm:$0xff]
  %v189 = vld [vmem:[%s0 + $0x1c8] sm:$0xff]
  %v190 = vld [vmem:[%s0 + $0x1d0] sm:$0xff]
  %v191 = vld [vmem:[%s0 + $0x1d8] sm:$0xff]
  %v192 = vld [vmem:[%s0 + $0x1e0] sm:$0xff]
  %v193 = vld [vmem:[%s0 + $0x1e8] sm:$0xff]
  %v194 = vld [vmem:[%s0 + $0x1f0] sm:$0xff]
  %v195 = vld [vmem:[%s0 + $0x1f8] sm:$0xff]
  %s196 = scalar_lea.vmem [#allocation2], 24
  %197 = vst.msk [vmem:[%s196 + $0x1] sm:$0xff] %vm22, %v132
  %198 = vst.msk [vmem:[%s196 + $0x9] sm:$0xff] %vm22, %v133
  %199 = vst.msk [vmem:[%s196 + $0x19] sm:$0xff] %vm22, %v134
  %200 = vst.msk [vmem:[%s196 + $0x21] sm:$0xff] %vm22, %v135
  %201 = vst.msk [vmem:[%s196 + $0x31] sm:$0xff] %vm22, %v136
  %202 = vst.msk [vmem:[%s196 + $0x39] sm:$0xff] %vm22, %v137
  %203 = vst.msk [vmem:[%s196 + $0x49] sm:$0xff] %vm22, %v138
  %204 = vst.msk [vmem:[%s196 + $0x51] sm:$0xff] %vm22, %v139
  %205 = vst.msk [vmem:[%s196 + $0x61] sm:$0xff] %vm22, %v140
  %206 = vst.msk [vmem:[%s196 + $0x69] sm:$0xff] %vm22, %v141
  %207 = vst.msk [vmem:[%s196 + $0x79] sm:$0xff] %vm22, %v142
  %208 = vst.msk [vmem:[%s196 + $0x81] sm:$0xff] %vm22, %v143
  %209 = vst.msk [vmem:[%s196 + $0x91] sm:$0xff] %vm22, %v144
  %210 = vst.msk [vmem:[%s196 + $0x99] sm:$0xff] %vm22, %v145
  %211 = vst.msk [vmem:[%s196 + $0xa9] sm:$0xff] %vm22, %v146
  %212 = vst.msk [vmem:[%s196 + $0xb1] sm:$0xff] %vm22, %v147
  %213 = vst.msk [vmem:[%s196 + $0xc1] sm:$0xff] %vm22, %v148
  %214 = vst.msk [vmem:[%s196 + $0xc9] sm:$0xff] %vm22, %v149
  %215 = vst.msk [vmem:[%s196 + $0xd9] sm:$0xff] %vm22, %v150
  %216 = vst.msk [vmem:[%s196 + $0xe1] sm:$0xff] %vm22, %v151
  %217 = vst.msk [vmem:[%s196 + $0xf1] sm:$0xff] %vm22, %v152
  %218 = vst.msk [vmem:[%s196 + $0xf9] sm:$0xff] %vm22, %v153
  %219 = vst.msk [vmem:[%s196 + $0x109] sm:$0xff] %vm22, %v154
  %220 = vst.msk [vmem:[%s196 + $0x111] sm:$0xff] %vm22, %v155
  %221 = vst.msk [vmem:[%s196 + $0x121] sm:$0xff] %vm22, %v156
  %222 = vst.msk [vmem:[%s196 + $0x129] sm:$0xff] %vm22, %v157
  %223 = vst.msk [vmem:[%s196 + $0x139] sm:$0xff] %vm22, %v158
  %224 = vst.msk [vmem:[%s196 + $0x141] sm:$0xff] %vm22, %v159
  %225 = vst.msk [vmem:[%s196 + $0x151] sm:$0xff] %vm22, %v160
  %226 = vst.msk [vmem:[%s196 + $0x159] sm:$0xff] %vm22, %v161
  %227 = vst.msk [vmem:[%s196 + $0x169] sm:$0xff] %vm22, %v162
  %228 = vst.msk [vmem:[%s196 + $0x171] sm:$0xff] %vm22, %v163
  %229 = vst.msk [vmem:[%s196 + $0x1b1] sm:$0xff] %vm22, %v164
  %230 = vst.msk [vmem:[%s196 + $0x1b9] sm:$0xff] %vm22, %v165
  %231 = vst.msk [vmem:[%s196 + $0x1c9] sm:$0xff] %vm22, %v166
  %232 = vst.msk [vmem:[%s196 + $0x1d1] sm:$0xff] %vm22, %v167
  %233 = vst.msk [vmem:[%s196 + $0x1e1] sm:$0xff] %vm22, %v168
  %234 = vst.msk [vmem:[%s196 + $0x1e9] sm:$0xff] %vm22, %v169
  %235 = vst.msk [vmem:[%s196 + $0x1f9] sm:$0xff] %vm22, %v170
  %236 = vst.msk [vmem:[%s196 + $0x201] sm:$0xff] %vm22, %v171
  %237 = vst.msk [vmem:[%s196 + $0x211] sm:$0xff] %vm22, %v172
  %238 = vst.msk [vmem:[%s196 + $0x219] sm:$0xff] %vm22, %v173
  %239 = vst.msk [vmem:[%s196 + $0x229] sm:$0xff] %vm22, %v174
  %240 = vst.msk [vmem:[%s196 + $0x231] sm:$0xff] %vm22, %v175
  %241 = vst.msk [vmem:[%s196 + $0x241] sm:$0xff] %vm22, %v176
  %242 = vst.msk [vmem:[%s196 + $0x249] sm:$0xff] %vm22, %v177
  %243 = vst.msk [vmem:[%s196 + $0x259] sm:$0xff] %vm22, %v178
  %244 = vst.msk [vmem:[%s196 + $0x261] sm:$0xff] %vm22, %v179
  %245 = vst.msk [vmem:[%s196 + $0x271] sm:$0xff] %vm22, %v180
  %246 = vst.msk [vmem:[%s196 + $0x279] sm:$0xff] %vm22, %v181
  %247 = vst.msk [vmem:[%s196 + $0x289] sm:$0xff] %vm22, %v182
  %248 = vst.msk [vmem:[%s196 + $0x291] sm:$0xff] %vm22, %v183
  %249 = vst.msk [vmem:[%s196 + $0x2a1] sm:$0xff] %vm22, %v184
  %250 = vst.msk [vmem:[%s196 + $0x2a9] sm:$0xff] %vm22, %v185
  %251 = vst.msk [vmem:[%s196 + $0x2b9] sm:$0xff] %vm22, %v186
  %252 = vst.msk [vmem:[%s196 + $0x2c1] sm:$0xff] %vm22, %v187
  %253 = vst.msk [vmem:[%s196 + $0x2d1] sm:$0xff] %vm22, %v188
  %254 = vst.msk [vmem:[%s196 + $0x2d9] sm:$0xff] %vm22, %v189
  %255 = vst.msk [vmem:[%s196 + $0x2e9] sm:$0xff] %vm22, %v190
  %256 = vst.msk [vmem:[%s196 + $0x2f1] sm:$0xff] %vm22, %v191
  %257 = vst.msk [vmem:[%s196 + $0x301] sm:$0xff] %vm22, %v192
  %258 = vst.msk [vmem:[%s196 + $0x309] sm:$0xff] %vm22, %v193
  %259 = vst.msk [vmem:[%s196 + $0x319] sm:$0xff] %vm22, %v194
  %260 = vst.msk [vmem:[%s196 + $0x321] sm:$0xff] %vm22, %v195
  %v261 = vld [vmem:[#allocation2] sm:$0xff]
  %v262 = vld [vmem:[#allocation2 + $0x8] sm:$0xff]
  %v263 = vld [vmem:[#allocation2 + $0x18] sm:$0xff]
  %v264 = vld [vmem:[#allocation2 + $0x20] sm:$0xff]
  %v265 = vld [vmem:[#allocation2 + $0x30] sm:$0xff]
  %v266 = vld [vmem:[#allocation2 + $0x38] sm:$0xff]
  %v267 = vld [vmem:[#allocation2 + $0x48] sm:$0xff]
  %v268 = vld [vmem:[#allocation2 + $0x50] sm:$0xff]
  %v269 = vld [vmem:[#allocation2 + $0x60] sm:$0xff]
  %v270 = vld [vmem:[#allocation2 + $0x68] sm:$0xff]
  %v271 = vld [vmem:[#allocation2 + $0x78] sm:$0xff]
  %v272 = vld [vmem:[#allocation2 + $0x80] sm:$0xff]
  %v273 = vld [vmem:[#allocation2 + $0x90] sm:$0xff]
  %v274 = vld [vmem:[#allocation2 + $0x98] sm:$0xff]
  %v275 = vld [vmem:[#allocation2 + $0xa8] sm:$0xff]
  %v276 = vld [vmem:[#allocation2 + $0xb0] sm:$0xff]
  %v277 = vld [vmem:[#allocation2 + $0xc0] sm:$0xff]
  %v278 = vld [vmem:[#allocation2 + $0xc8] sm:$0xff]
  %v279 = vld [vmem:[#allocation2 + $0xd8] sm:$0xff]
  %v280 = vld [vmem:[#allocation2 + $0xe0] sm:$0xff]
  %v281 = vld [vmem:[#allocation2 + $0xf0] sm:$0xff]
  %v282 = vld [vmem:[#allocation2 + $0xf8] sm:$0xff]
  %v283 = vld [vmem:[#allocation2 + $0x108] sm:$0xff]
  %v284 = vld [vmem:[#allocation2 + $0x110] sm:$0xff]
  %v285 = vld [vmem:[#allocation2 + $0x120] sm:$0xff]
  %v286 = vld [vmem:[#allocation2 + $0x128] sm:$0xff]
  %v287 = vld [vmem:[#allocation2 + $0x138] sm:$0xff]
  %v288 = vld [vmem:[#allocation2 + $0x140] sm:$0xff]
  %v289 = vld [vmem:[#allocation2 + $0x150] sm:$0xff]
  %v290 = vld [vmem:[#allocation2 + $0x158] sm:$0xff]
  %v291 = vld [vmem:[#allocation2 + $0x168] sm:$0xff]
  %v292 = vld [vmem:[#allocation2 + $0x170] sm:$0xff]
  %v293 = vld [vmem:[#allocation2 + $0x1b0] sm:$0xff]
  %v294 = vld [vmem:[#allocation2 + $0x1b8] sm:$0xff]
  %v295 = vld [vmem:[#allocation2 + $0x1c8] sm:$0xff]
  %v296 = vld [vmem:[#allocation2 + $0x1d0] sm:$0xff]
  %v297 = vld [vmem:[#allocation2 + $0x1e0] sm:$0xff]
  %v298 = vld [vmem:[#allocation2 + $0x1e8] sm:$0xff]
  %v299 = vld [vmem:[#allocation2 + $0x1f8] sm:$0xff]
  %v300 = vld [vmem:[#allocation2 + $0x200] sm:$0xff]
  %v301 = vld [vmem:[#allocation2 + $0x210] sm:$0xff]
  %v302 = vld [vmem:[#allocation2 + $0x218] sm:$0xff]
  %v303 = vld [vmem:[#allocation2 + $0x228] sm:$0xff]
  %v304 = vld [vmem:[#allocation2 + $0x230] sm:$0xff]
  %v305 = vld [vmem:[#allocation2 + $0x240] sm:$0xff]
  %v306 = vld [vmem:[#allocation2 + $0x248] sm:$0xff]
  %v307 = vld [vmem:[#allocation2 + $0x258] sm:$0xff]
  %v308 = vld [vmem:[#allocation2 + $0x260] sm:$0xff]
  %v309 = vld [vmem:[#allocation2 + $0x270] sm:$0xff]
  %v310 = vld [vmem:[#allocation2 + $0x278] sm:$0xff]
  %v311 = vld [vmem:[#allocation2 + $0x288] sm:$0xff]
  %v312 = vld [vmem:[#allocation2 + $0x290] sm:$0xff]
  %v313 = vld [vmem:[#allocation2 + $0x2a0] sm:$0xff]
  %v314 = vld [vmem:[#allocation2 + $0x2a8] sm:$0xff]
  %v315 = vld [vmem:[#allocation2 + $0x2b8] sm:$0xff]
  %v316 = vld [vmem:[#allocation2 + $0x2c0] sm:$0xff]
  %v317 = vld [vmem:[#allocation2 + $0x2d0] sm:$0xff]
  %v318 = vld [vmem:[#allocation2 + $0x2d8] sm:$0xff]
  %v319 = vld [vmem:[#allocation2 + $0x2e8] sm:$0xff]
  %v320 = vld [vmem:[#allocation2 + $0x2f0] sm:$0xff]
  %v321 = vld [vmem:[#allocation2 + $0x300] sm:$0xff]
  %v322 = vld [vmem:[#allocation2 + $0x308] sm:$0xff]
  %v323 = vld [vmem:[#allocation2 + $0x318] sm:$0xff]
  %v324 = vld [vmem:[#allocation2 + $0x320] sm:$0xff]
  %v325 = vpack.c.bf16 %v262, %v261
  %v326 = vpack.c.bf16 %v264, %v263
  %v327 = vpack.c.bf16 %v266, %v265
  %v328 = vpack.c.bf16 %v268, %v267
  %v329 = vpack.c.bf16 %v270, %v269
  %v330 = vpack.c.bf16 %v272, %v271
  %v331 = vpack.c.bf16 %v274, %v273
  %v332 = vpack.c.bf16 %v276, %v275
  %v333 = vpack.c.bf16 %v278, %v277
  %v334 = vpack.c.bf16 %v280, %v279
  %v335 = vpack.c.bf16 %v282, %v281
  %v336 = vpack.c.bf16 %v284, %v283
  %v337 = vpack.c.bf16 %v286, %v285
  %v338 = vpack.c.bf16 %v288, %v287
  %v339 = vpack.c.bf16 %v290, %v289
  %v340 = vpack.c.bf16 %v292, %v291
  %v341 = vpack.c.bf16 %v294, %v293
  %v342 = vpack.c.bf16 %v296, %v295
  %v343 = vpack.c.bf16 %v298, %v297
  %v344 = vpack.c.bf16 %v300, %v299
  %v345 = vpack.c.bf16 %v302, %v301
  %v346 = vpack.c.bf16 %v304, %v303
  %v347 = vpack.c.bf16 %v306, %v305
  %v348 = vpack.c.bf16 %v308, %v307
  %v349 = vpack.c.bf16 %v310, %v309
  %v350 = vpack.c.bf16 %v312, %v311
  %v351 = vpack.c.bf16 %v314, %v313
  %v352 = vpack.c.bf16 %v316, %v315
  %v353 = vpack.c.bf16 %v318, %v317
  %v354 = vpack.c.bf16 %v320, %v319
  %v355 = vpack.c.bf16 %v322, %v321
  %v356 = vpack.c.bf16 %v324, %v323
  %357 = vst.msk [vmem:[#allocation3] sm:$0xff] %vm22, %v325
  %358 = vst.msk [vmem:[#allocation3 + $0x8] sm:$0xff] %vm22, %v326
  %359 = vst.msk [vmem:[#allocation3 + $0x10] sm:$0xff] %vm22, %v327
  %360 = vst.msk [vmem:[#allocation3 + $0x18] sm:$0xff] %vm22, %v328
  %361 = vst.msk [vmem:[#allocation3 + $0x20] sm:$0xff] %vm22, %v329
  %362 = vst.msk [vmem:[#allocation3 + $0x28] sm:$0xff] %vm22, %v330
  %363 = vst.msk [vmem:[#allocation3 + $0x30] sm:$0xff] %vm22, %v331
  %364 = vst.msk [vmem:[#allocation3 + $0x38] sm:$0xff] %vm22, %v332
  %365 = vst.msk [vmem:[#allocation3 + $0x40] sm:$0xff] %vm22, %v333
  %366 = vst.msk [vmem:[#allocation3 + $0x48] sm:$0xff] %vm22, %v334
  %367 = vst.msk [vmem:[#allocation3 + $0x50] sm:$0xff] %vm22, %v335
  %368 = vst.msk [vmem:[#allocation3 + $0x58] sm:$0xff] %vm22, %v336
  %369 = vst.msk [vmem:[#allocation3 + $0x60] sm:$0xff] %vm22, %v337
  %370 = vst.msk [vmem:[#allocation3 + $0x68] sm:$0xff] %vm22, %v338
  %371 = vst.msk [vmem:[#allocation3 + $0x70] sm:$0xff] %vm22, %v339
  %372 = vst.msk [vmem:[#allocation3 + $0x78] sm:$0xff] %vm22, %v340
  %373 = vst.msk [vmem:[#allocation3 + $0x80] sm:$0xff] %vm22, %v341
  %374 = vst.msk [vmem:[#allocation3 + $0x88] sm:$0xff] %vm22, %v342
  %375 = vst.msk [vmem:[#allocation3 + $0x90] sm:$0xff] %vm22, %v343
  %376 = vst.msk [vmem:[#allocation3 + $0x98] sm:$0xff] %vm22, %v344
  %377 = vst.msk [vmem:[#allocation3 + $0xa0] sm:$0xff] %vm22, %v345
  %378 = vst.msk [vmem:[#allocation3 + $0xa8] sm:$0xff] %vm22, %v346
  %379 = vst.msk [vmem:[#allocation3 + $0xb0] sm:$0xff] %vm22, %v347
  %380 = vst.msk [vmem:[#allocation3 + $0xb8] sm:$0xff] %vm22, %v348
  %381 = vst.msk [vmem:[#allocation3 + $0xc0] sm:$0xff] %vm22, %v349
  %382 = vst.msk [vmem:[#allocation3 + $0xc8] sm:$0xff] %vm22, %v350
  %383 = vst.msk [vmem:[#allocation3 + $0xd0] sm:$0xff] %vm22, %v351
  %384 = vst.msk [vmem:[#allocation3 + $0xd8] sm:$0xff] %vm22, %v352
  %385 = vst.msk [vmem:[#allocation3 + $0xe0] sm:$0xff] %vm22, %v353
  %386 = vst.msk [vmem:[#allocation3 + $0xe8] sm:$0xff] %vm22, %v354
  %387 = vst.msk [vmem:[#allocation3 + $0xf0] sm:$0xff] %vm22, %v355
  %388 = vst.msk [vmem:[#allocation3 + $0xf8] sm:$0xff] %vm22, %v356
  %v389 = vld [vmem:[#allocation2 + $0x1] sm:$0xff]
  %v390 = vld [vmem:[#allocation2 + $0x9] sm:$0xff]
  %v391 = vld [vmem:[#allocation2 + $0x19] sm:$0xff]
  %v392 = vld [vmem:[#allocation2 + $0x21] sm:$0xff]
  %v393 = vld [vmem:[#allocation2 + $0x31] sm:$0xff]
  %v394 = vld [vmem:[#allocation2 + $0x39] sm:$0xff]
  %v395 = vld [vmem:[#allocation2 + $0x49] sm:$0xff]
  %v396 = vld [vmem:[#allocation2 + $0x51] sm:$0xff]
  %v397 = vld [vmem:[#allocation2 + $0x61] sm:$0xff]
  %v398 = vld [vmem:[#allocation2 + $0x69] sm:$0xff]
  %v399 = vld [vmem:[#allocation2 + $0x79] sm:$0xff]
  %v400 = vld [vmem:[#allocation2 + $0x81] sm:$0xff]
  %v401 = vld [vmem:[#allocation2 + $0x91] sm:$0xff]
  %v402 = vld [vmem:[#allocation2 + $0x99] sm:$0xff]
  %v403 = vld [vmem:[#allocation2 + $0xa9] sm:$0xff]
  %v404 = vld [vmem:[#allocation2 + $0xb1] sm:$0xff]
  %v405 = vld [vmem:[#allocation2 + $0xc1] sm:$0xff]
  %v406 = vld [vmem:[#allocation2 + $0xc9] sm:$0xff]
  %v407 = vld [vmem:[#allocation2 + $0xd9] sm:$0xff]
  %v408 = vld [vmem:[#allocation2 + $0xe1] sm:$0xff]
  %v409 = vld [vmem:[#allocation2 + $0xf1] sm:$0xff]
  %v410 = vld [vmem:[#allocation2 + $0xf9] sm:$0xff]
  %v411 = vld [vmem:[#allocation2 + $0x109] sm:$0xff]
  %v412 = vld [vmem:[#allocation2 + $0x111] sm:$0xff]
  %v413 = vld [vmem:[#allocation2 + $0x121] sm:$0xff]
  %v414 = vld [vmem:[#allocation2 + $0x129] sm:$0xff]
  %v415 = vld [vmem:[#allocation2 + $0x139] sm:$0xff]
  %v416 = vld [vmem:[#allocation2 + $0x141] sm:$0xff]
  %v417 = vld [vmem:[#allocation2 + $0x151] sm:$0xff]
  %v418 = vld [vmem:[#allocation2 + $0x159] sm:$0xff]
  %v419 = vld [vmem:[#allocation2 + $0x169] sm:$0xff]
  %v420 = vld [vmem:[#allocation2 + $0x171] sm:$0xff]
  %v421 = vld [vmem:[#allocation2 + $0x1b1] sm:$0xff]
  %v422 = vld [vmem:[#allocation2 + $0x1b9] sm:$0xff]
  %v423 = vld [vmem:[#allocation2 + $0x1c9] sm:$0xff]
  %v424 = vld [vmem:[#allocation2 + $0x1d1] sm:$0xff]
  %v425 = vld [vmem:[#allocation2 + $0x1e1] sm:$0xff]
  %v426 = vld [vmem:[#allocation2 + $0x1e9] sm:$0xff]
  %v427 = vld [vmem:[#allocation2 + $0x1f9] sm:$0xff]
  %v428 = vld [vmem:[#allocation2 + $0x201] sm:$0xff]
  %v429 = vld [vmem:[#allocation2 + $0x211] sm:$0xff]
  %v430 = vld [vmem:[#allocation2 + $0x219] sm:$0xff]
  %v431 = vld [vmem:[#allocation2 + $0x229] sm:$0xff]
  %v432 = vld [vmem:[#allocation2 + $0x231] sm:$0xff]
  %v433 = vld [vmem:[#allocation2 + $0x241] sm:$0xff]
  %v434 = vld [vmem:[#allocation2 + $0x249] sm:$0xff]
  %v435 = vld [vmem:[#allocation2 + $0x259] sm:$0xff]
  %v436 = vld [vmem:[#allocation2 + $0x261] sm:$0xff]
  %v437 = vld [vmem:[#allocation2 + $0x271] sm:$0xff]
  %v438 = vld [vmem:[#allocation2 + $0x279] sm:$0xff]
  %v439 = vld [vmem:[#allocation2 + $0x289] sm:$0xff]
  %v440 = vld [vmem:[#allocation2 + $0x291] sm:$0xff]
  %v441 = vld [vmem:[#allocation2 + $0x2a1] sm:$0xff]
  %v442 = vld [vmem:[#allocation2 + $0x2a9] sm:$0xff]
  %v443 = vld [vmem:[#allocation2 + $0x2b9] sm:$0xff]
  %v444 = vld [vmem:[#allocation2 + $0x2c1] sm:$0xff]
  %v445 = vld [vmem:[#allocation2 + $0x2d1] sm:$0xff]
  %v446 = vld [vmem:[#allocation2 + $0x2d9] sm:$0xff]
  %v447 = vld [vmem:[#allocation2 + $0x2e9] sm:$0xff]
  %v448 = vld [vmem:[#allocation2 + $0x2f1] sm:$0xff]
  %v449 = vld [vmem:[#allocation2 + $0x301] sm:$0xff]
  %v450 = vld [vmem:[#allocation2 + $0x309] sm:$0xff]
  %v451 = vld [vmem:[#allocation2 + $0x319] sm:$0xff]
  %v452 = vld [vmem:[#allocation2 + $0x321] sm:$0xff]
  %v453 = vpack.c.bf16 %v390, %v389
  %v454 = vpack.c.bf16 %v392, %v391
  %v455 = vpack.c.bf16 %v394, %v393
  %v456 = vpack.c.bf16 %v396, %v395
  %v457 = vpack.c.bf16 %v398, %v397
  %v458 = vpack.c.bf16 %v400, %v399
  %v459 = vpack.c.bf16 %v402, %v401
  %v460 = vpack.c.bf16 %v404, %v403
  %v461 = vpack.c.bf16 %v406, %v405
  %v462 = vpack.c.bf16 %v408, %v407
  %v463 = vpack.c.bf16 %v410, %v409
  %v464 = vpack.c.bf16 %v412, %v411
  %v465 = vpack.c.bf16 %v414, %v413
  %v466 = vpack.c.bf16 %v416, %v415
  %v467 = vpack.c.bf16 %v418, %v417
  %v468 = vpack.c.bf16 %v420, %v419
  %v469 = vpack.c.bf16 %v422, %v421
  %v470 = vpack.c.bf16 %v424, %v423
  %v471 = vpack.c.bf16 %v426, %v425
  %v472 = vpack.c.bf16 %v428, %v427
  %v473 = vpack.c.bf16 %v430, %v429
  %v474 = vpack.c.bf16 %v432, %v431
  %v475 = vpack.c.bf16 %v434, %v433
  %v476 = vpack.c.bf16 %v436, %v435
  %v477 = vpack.c.bf16 %v438, %v437
  %v478 = vpack.c.bf16 %v440, %v439
  %v479 = vpack.c.bf16 %v442, %v441
  %v480 = vpack.c.bf16 %v444, %v443
  %v481 = vpack.c.bf16 %v446, %v445
  %v482 = vpack.c.bf16 %v448, %v447
  %v483 = vpack.c.bf16 %v450, %v449
  %v484 = vpack.c.bf16 %v452, %v451
  %517 = vrot.lane.b32.xlu0 %v453, 4
  %v518 = vpop.permute.xlu0 %517
  %519 = vrot.lane.b32.xlu0 %v454, 4
  %v520 = vpop.permute.xlu0 %519
  %521 = vrot.lane.b32.xlu0 %v455, 4
  %v522 = vpop.permute.xlu0 %521
  %523 = vrot.lane.b32.xlu0 %v456, 4
  %v524 = vpop.permute.xlu0 %523
  %525 = vrot.lane.b32.xlu0 %v457, 4
  %v526 = vpop.permute.xlu0 %525
  %527 = vrot.lane.b32.xlu0 %v458, 4
  %v528 = vpop.permute.xlu0 %527
  %529 = vrot.lane.b32.xlu0 %v459, 4
  %v530 = vpop.permute.xlu0 %529
  %531 = vrot.lane.b32.xlu0 %v460, 4
  %v532 = vpop.permute.xlu0 %531
  %533 = vrot.lane.b32.xlu0 %v461, 4
  %v534 = vpop.permute.xlu0 %533
  %535 = vrot.lane.b32.xlu0 %v462, 4
  %v536 = vpop.permute.xlu0 %535
  %537 = vrot.lane.b32.xlu0 %v463, 4
  %v538 = vpop.permute.xlu0 %537
  %539 = vrot.lane.b32.xlu0 %v464, 4
  %v540 = vpop.permute.xlu0 %539
  %541 = vrot.lane.b32.xlu0 %v465, 4
  %v542 = vpop.permute.xlu0 %541
  %543 = vrot.lane.b32.xlu0 %v466, 4
  %v544 = vpop.permute.xlu0 %543
  %545 = vrot.lane.b32.xlu0 %v467, 4
  %v546 = vpop.permute.xlu0 %545
  %547 = vrot.lane.b32.xlu0 %v468, 4
  %v548 = vpop.permute.xlu0 %547
  %549 = vrot.lane.b32.xlu0 %v469, 4
  %v550 = vpop.permute.xlu0 %549
  %551 = vrot.lane.b32.xlu0 %v470, 4
  %v552 = vpop.permute.xlu0 %551
  %553 = vrot.lane.b32.xlu0 %v471, 4
  %v554 = vpop.permute.xlu0 %553
  %555 = vrot.lane.b32.xlu0 %v472, 4
  %v556 = vpop.permute.xlu0 %555
  %557 = vrot.lane.b32.xlu0 %v473, 4
  %v558 = vpop.permute.xlu0 %557
  %559 = vrot.lane.b32.xlu0 %v474, 4
  %v560 = vpop.permute.xlu0 %559
  %561 = vrot.lane.b32.xlu0 %v475, 4
  %v562 = vpop.permute.xlu0 %561
  %563 = vrot.lane.b32.xlu0 %v476, 4
  %v564 = vpop.permute.xlu0 %563
  %565 = vrot.lane.b32.xlu0 %v477, 4
  %v566 = vpop.permute.xlu0 %565
  %567 = vrot.lane.b32.xlu0 %v478, 4
  %v568 = vpop.permute.xlu0 %567
  %569 = vrot.lane.b32.xlu0 %v479, 4
  %v570 = vpop.permute.xlu0 %569
  %571 = vrot.lane.b32.xlu0 %v480, 4
  %v572 = vpop.permute.xlu0 %571
  %573 = vrot.lane.b32.xlu0 %v481, 4
  %v574 = vpop.permute.xlu0 %573
  %575 = vrot.lane.b32.xlu0 %v482, 4
  %v576 = vpop.permute.xlu0 %575
  %577 = vrot.lane.b32.xlu0 %v483, 4
  %v578 = vpop.permute.xlu0 %577
  %579 = vrot.lane.b32.xlu0 %v484, 4
  %v580 = vpop.permute.xlu0 %579
  %vm613 = vcmask 64544
  %614 = vst.msk [vmem:[#allocation3] sm:$0xff] %vm613, %v518
  %615 = vst.msk [vmem:[#allocation3 + $0x8] sm:$0xff] %vm613, %v520
  %616 = vst.msk [vmem:[#allocation3 + $0x10] sm:$0xff] %vm613, %v522
  %617 = vst.msk [vmem:[#allocation3 + $0x18] sm:$0xff] %vm613, %v524
  %618 = vst.msk [vmem:[#allocation3 + $0x20] sm:$0xff] %vm613, %v526
  %619 = vst.msk [vmem:[#allocation3 + $0x28] sm:$0xff] %vm613, %v528
  %620 = vst.msk [vmem:[#allocation3 + $0x30] sm:$0xff] %vm613, %v530
  %621 = vst.msk [vmem:[#allocation3 + $0x38] sm:$0xff] %vm613, %v532
  %622 = vst.msk [vmem:[#allocation3 + $0x40] sm:$0xff] %vm613, %v534
  %623 = vst.msk [vmem:[#allocation3 + $0x48] sm:$0xff] %vm613, %v536
  %624 = vst.msk [vmem:[#allocation3 + $0x50] sm:$0xff] %vm613, %v538
  %625 = vst.msk [vmem:[#allocation3 + $0x58] sm:$0xff] %vm613, %v540
  %626 = vst.msk [vmem:[#allocation3 + $0x60] sm:$0xff] %vm613, %v542
  %627 = vst.msk [vmem:[#allocation3 + $0x68] sm:$0xff] %vm613, %v544
  %628 = vst.msk [vmem:[#allocation3 + $0x70] sm:$0xff] %vm613, %v546
  %629 = vst.msk [vmem:[#allocation3 + $0x78] sm:$0xff] %vm613, %v548
  %630 = vst.msk [vmem:[#allocation3 + $0x80] sm:$0xff] %vm613, %v550
  %631 = vst.msk [vmem:[#allocation3 + $0x88] sm:$0xff] %vm613, %v552
  %632 = vst.msk [vmem:[#allocation3 + $0x90] sm:$0xff] %vm613, %v554
  %633 = vst.msk [vmem:[#allocation3 + $0x98] sm:$0xff] %vm613, %v556
  %634 = vst.msk [vmem:[#allocation3 + $0xa0] sm:$0xff] %vm613, %v558
  %635 = vst.msk [vmem:[#allocation3 + $0xa8] sm:$0xff] %vm613, %v560
  %636 = vst.msk [vmem:[#allocation3 + $0xb0] sm:$0xff] %vm613, %v562
  %637 = vst.msk [vmem:[#allocation3 + $0xb8] sm:$0xff] %vm613, %v564
  %638 = vst.msk [vmem:[#allocation3 + $0xc0] sm:$0xff] %vm613, %v566
  %639 = vst.msk [vmem:[#allocation3 + $0xc8] sm:$0xff] %vm613, %v568
  %640 = vst.msk [vmem:[#allocation3 + $0xd0] sm:$0xff] %vm613, %v570
  %641 = vst.msk [vmem:[#allocation3 + $0xd8] sm:$0xff] %vm613, %v572
  %642 = vst.msk [vmem:[#allocation3 + $0xe0] sm:$0xff] %vm613, %v574
  %643 = vst.msk [vmem:[#allocation3 + $0xe8] sm:$0xff] %vm613, %v576
  %644 = vst.msk [vmem:[#allocation3 + $0xf0] sm:$0xff] %vm613, %v578
  %645 = vst.msk [vmem:[#allocation3 + $0xf8] sm:$0xff] %vm613, %v580
  %v646 = vld [vmem:[#allocation2 + $0x2] sm:$0xff]
  %v647 = vld [vmem:[#allocation2 + $0xa] sm:$0xff]
  %v648 = vld [vmem:[#allocation2 + $0x1a] sm:$0xff]
  %v649 = vld [vmem:[#allocation2 + $0x22] sm:$0xff]
  %v650 = vld [vmem:[#allocation2 + $0x32] sm:$0xff]
  %v651 = vld [vmem:[#allocation2 + $0x3a] sm:$0xff]
  %v652 = vld [vmem:[#allocation2 + $0x4a] sm:$0xff]
  %v653 = vld [vmem:[#allocation2 + $0x52] sm:$0xff]
  %v654 = vld [vmem:[#allocation2 + $0x62] sm:$0xff]
  %v655 = vld [vmem:[#allocation2 + $0x6a] sm:$0xff]
  %v656 = vld [vmem:[#allocation2 + $0x7a] sm:$0xff]
  %v657 = vld [vmem:[#allocation2 + $0x82] sm:$0xff]
  %v658 = vld [vmem:[#allocation2 + $0x92] sm:$0xff]
  %v659 = vld [vmem:[#allocation2 + $0x9a] sm:$0xff]
  %v660 = vld [vmem:[#allocation2 + $0xaa] sm:$0xff]
  %v661 = vld [vmem:[#allocation2 + $0xb2] sm:$0xff]
  %v662 = vld [vmem:[#allocation2 + $0xc2] sm:$0xff]
  %v663 = vld [vmem:[#allocation2 + $0xca] sm:$0xff]
  %v664 = vld [vmem:[#allocation2 + $0xda] sm:$0xff]
  %v665 = vld [vmem:[#allocation2 + $0xe2] sm:$0xff]
  %v666 = vld [vmem:[#allocation2 + $0xf2] sm:$0xff]
  %v667 = vld [vmem:[#allocation2 + $0xfa] sm:$0xff]
  %v668 = vld [vmem:[#allocation2 + $0x10a] sm:$0xff]
  %v669 = vld [vmem:[#allocation2 + $0x112] sm:$0xff]
  %v670 = vld [vmem:[#allocation2 + $0x122] sm:$0xff]
  %v671 = vld [vmem:[#allocation2 + $0x12a] sm:$0xff]
  %v672 = vld [vmem:[#allocation2 + $0x13a] sm:$0xff]
  %v673 = vld [vmem:[#allocation2 + $0x142] sm:$0xff]
  %v674 = vld [vmem:[#allocation2 + $0x152] sm:$0xff]
  %v675 = vld [vmem:[#allocation2 + $0x15a] sm:$0xff]
  %v676 = vld [vmem:[#allocation2 + $0x16a] sm:$0xff]
  %v677 = vld [vmem:[#allocation2 + $0x172] sm:$0xff]
  %v678 = vld [vmem:[#allocation2 + $0x1b2] sm:$0xff]
  %v679 = vld [vmem:[#allocation2 + $0x1ba] sm:$0xff]
  %v680 = vld [vmem:[#allocation2 + $0x1ca] sm:$0xff]
  %v681 = vld [vmem:[#allocation2 + $0x1d2] sm:$0xff]
  %v682 = vld [vmem:[#allocation2 + $0x1e2] sm:$0xff]
  %v683 = vld [vmem:[#allocation2 + $0x1ea] sm:$0xff]
  %v684 = vld [vmem:[#allocation2 + $0x1fa] sm:$0xff]
  %v685 = vld [vmem:[#allocation2 + $0x202] sm:$0xff]
  %v686 = vld [vmem:[#allocation2 + $0x212] sm:$0xff]
  %v687 = vld [vmem:[#allocation2 + $0x21a] sm:$0xff]
  %v688 = vld [vmem:[#allocation2 + $0x22a] sm:$0xff]
  %v689 = vld [vmem:[#allocation2 + $0x232] sm:$0xff]
  %v690 = vld [vmem:[#allocation2 + $0x242] sm:$0xff]
  %v691 = vld [vmem:[#allocation2 + $0x24a] sm:$0xff]
  %v692 = vld [vmem:[#allocation2 + $0x25a] sm:$0xff]
  %v693 = vld [vmem:[#allocation2 + $0x262] sm:$0xff]
  %v694 = vld [vmem:[#allocation2 + $0x272] sm:$0xff]
  %v695 = vld [vmem:[#allocation2 + $0x27a] sm:$0xff]
  %v696 = vld [vmem:[#allocation2 + $0x28a] sm:$0xff]
  %v697 = vld [vmem:[#allocation2 + $0x292] sm:$0xff]
  %v698 = vld [vmem:[#allocation2 + $0x2a2] sm:$0xff]
  %v699 = vld [vmem:[#allocation2 + $0x2aa] sm:$0xff]
  %v700 = vld [vmem:[#allocation2 + $0x2ba] sm:$0xff]
  %v701 = vld [vmem:[#allocation2 + $0x2c2] sm:$0xff]
  %v702 = vld [vmem:[#allocation2 + $0x2d2] sm:$0xff]
  %v703 = vld [vmem:[#allocation2 + $0x2da] sm:$0xff]
  %v704 = vld [vmem:[#allocation2 + $0x2ea] sm:$0xff]
  %v705 = vld [vmem:[#allocation2 + $0x2f2] sm:$0xff]
  %v706 = vld [vmem:[#allocation2 + $0x302] sm:$0xff]
  %v707 = vld [vmem:[#allocation2 + $0x30a] sm:$0xff]
  %v708 = vld [vmem:[#allocation2 + $0x31a] sm:$0xff]
  %v709 = vld [vmem:[#allocation2 + $0x322] sm:$0xff]
  %v710 = vpack.c.bf16 %v647, %v646
  %v711 = vpack.c.bf16 %v649, %v648
  %v712 = vpack.c.bf16 %v651, %v650
  %v713 = vpack.c.bf16 %v653, %v652
  %v714 = vpack.c.bf16 %v655, %v654
  %v715 = vpack.c.bf16 %v657, %v656
  %v716 = vpack.c.bf16 %v659, %v658
  %v717 = vpack.c.bf16 %v661, %v660
  %v718 = vpack.c.bf16 %v663, %v662
  %v719 = vpack.c.bf16 %v665, %v664
  %v720 = vpack.c.bf16 %v667, %v666
  %v721 = vpack.c.bf16 %v669, %v668
  %v722 = vpack.c.bf16 %v671, %v670
  %v723 = vpack.c.bf16 %v673, %v672
  %v724 = vpack.c.bf16 %v675, %v674
  %v725 = vpack.c.bf16 %v677, %v676
  %v726 = vpack.c.bf16 %v679, %v678
  %v727 = vpack.c.bf16 %v681, %v680
  %v728 = vpack.c.bf16 %v683, %v682
  %v729 = vpack.c.bf16 %v685, %v684
  %v730 = vpack.c.bf16 %v687, %v686
  %v731 = vpack.c.bf16 %v689, %v688
  %v732 = vpack.c.bf16 %v691, %v690
  %v733 = vpack.c.bf16 %v693, %v692
  %v734 = vpack.c.bf16 %v695, %v694
  %v735 = vpack.c.bf16 %v697, %v696
  %v736 = vpack.c.bf16 %v699, %v698
  %v737 = vpack.c.bf16 %v701, %v700
  %v738 = vpack.c.bf16 %v703, %v702
  %v739 = vpack.c.bf16 %v705, %v704
  %v740 = vpack.c.bf16 %v707, %v706
  %v741 = vpack.c.bf16 %v709, %v708
  %774 = vrot.lane.b32.xlu0 %v710, 8
  %v775 = vpop.permute.xlu0 %774
  %776 = vrot.lane.b32.xlu0 %v711, 8
  %v777 = vpop.permute.xlu0 %776
  %778 = vrot.lane.b32.xlu0 %v712, 8
  %v779 = vpop.permute.xlu0 %778
  %780 = vrot.lane.b32.xlu0 %v713, 8
  %v781 = vpop.permute.xlu0 %780
  %782 = vrot.lane.b32.xlu0 %v714, 8
  %v783 = vpop.permute.xlu0 %782
  %784 = vrot.lane.b32.xlu0 %v715, 8
  %v785 = vpop.permute.xlu0 %784
  %786 = vrot.lane.b32.xlu0 %v716, 8
  %v787 = vpop.permute.xlu0 %786
  %788 = vrot.lane.b32.xlu0 %v717, 8
  %v789 = vpop.permute.xlu0 %788
  %790 = vrot.lane.b32.xlu0 %v718, 8
  %v791 = vpop.permute.xlu0 %790
  %792 = vrot.lane.b32.xlu0 %v719, 8
  %v793 = vpop.permute.xlu0 %792
  %794 = vrot.lane.b32.xlu0 %v720, 8
  %v795 = vpop.permute.xlu0 %794
  %796 = vrot.lane.b32.xlu0 %v721, 8
  %v797 = vpop.permute.xlu0 %796
  %798 = vrot.lane.b32.xlu0 %v722, 8
  %v799 = vpop.permute.xlu0 %798
  %800 = vrot.lane.b32.xlu0 %v723, 8
  %v801 = vpop.permute.xlu0 %800
  %802 = vrot.lane.b32.xlu0 %v724, 8
  %v803 = vpop.permute.xlu0 %802
  %804 = vrot.lane.b32.xlu0 %v725, 8
  %v805 = vpop.permute.xlu0 %804
  %806 = vrot.lane.b32.xlu0 %v726, 8
  %v807 = vpop.permute.xlu0 %806
  %808 = vrot.lane.b32.xlu0 %v727, 8
  %v809 = vpop.permute.xlu0 %808
  %810 = vrot.lane.b32.xlu0 %v728, 8
  %v811 = vpop.permute.xlu0 %810
  %812 = vrot.lane.b32.xlu0 %v729, 8
  %v813 = vpop.permute.xlu0 %812
  %814 = vrot.lane.b32.xlu0 %v730, 8
  %v815 = vpop.permute.xlu0 %814
  %816 = vrot.lane.b32.xlu0 %v731, 8
  %v817 = vpop.permute.xlu0 %816
  %818 = vrot.lane.b32.xlu0 %v732, 8
  %v819 = vpop.permute.xlu0 %818
  %820 = vrot.lane.b32.xlu0 %v733, 8
  %v821 = vpop.permute.xlu0 %820
  %822 = vrot.lane.b32.xlu0 %v734, 8
  %v823 = vpop.permute.xlu0 %822
  %824 = vrot.lane.b32.xlu0 %v735, 8
  %v825 = vpop.permute.xlu0 %824
  %826 = vrot.lane.b32.xlu0 %v736, 8
  %v827 = vpop.permute.xlu0 %826
  %828 = vrot.lane.b32.xlu0 %v737, 8
  %v829 = vpop.permute.xlu0 %828
  %830 = vrot.lane.b32.xlu0 %v738, 8
  %v831 = vpop.permute.xlu0 %830
  %832 = vrot.lane.b32.xlu0 %v739, 8
  %v833 = vpop.permute.xlu0 %832
  %834 = vrot.lane.b32.xlu0 %v740, 8
  %v835 = vpop.permute.xlu0 %834
  %836 = vrot.lane.b32.xlu0 %v741, 8
  %v837 = vpop.permute.xlu0 %836
  %vm870 = vcmask 97344
  %871 = vst.msk [vmem:[#allocation3] sm:$0xff] %vm870, %v775
  %872 = vst.msk [vmem:[#allocation3 + $0x8] sm:$0xff] %vm870, %v777
  %873 = vst.msk [vmem:[#allocation3 + $0x10] sm:$0xff] %vm870, %v779
  %874 = vst.msk [vmem:[#allocation3 + $0x18] sm:$0xff] %vm870, %v781
  %875 = vst.msk [vmem:[#allocation3 + $0x20] sm:$0xff] %vm870, %v783
  %876 = vst.msk [vmem:[#allocation3 + $0x28] sm:$0xff] %vm870, %v785
  %877 = vst.msk [vmem:[#allocation3 + $0x30] sm:$0xff] %vm870, %v787
  %878 = vst.msk [vmem:[#allocation3 + $0x38] sm:$0xff] %vm870, %v789
  %879 = vst.msk [vmem:[#allocation3 + $0x40] sm:$0xff] %vm870, %v791
  %880 = vst.msk [vmem:[#allocation3 + $0x48] sm:$0xff] %vm870, %v793
  %881 = vst.msk [vmem:[#allocation3 + $0x50] sm:$0xff] %vm870, %v795
  %882 = vst.msk [vmem:[#allocation3 + $0x58] sm:$0xff] %vm870, %v797
  %883 = vst.msk [vmem:[#allocation3 + $0x60] sm:$0xff] %vm870, %v799
  %884 = vst.msk [vmem:[#allocation3 + $0x68] sm:$0xff] %vm870, %v801
  %885 = vst.msk [vmem:[#allocation3 + $0x70] sm:$0xff] %vm870, %v803
  %886 = vst.msk [vmem:[#allocation3 + $0x78] sm:$0xff] %vm870, %v805
  %887 = vst.msk [vmem:[#allocation3 + $0x80] sm:$0xff] %vm870, %v807
  %888 = vst.msk [vmem:[#allocation3 + $0x88] sm:$0xff] %vm870, %v809
  %889 = vst.msk [vmem:[#allocation3 + $0x90] sm:$0xff] %vm870, %v811
  %890 = vst.msk [vmem:[#allocation3 + $0x98] sm:$0xff] %vm870, %v813
  %891 = vst.msk [vmem:[#allocation3 + $0xa0] sm:$0xff] %vm870, %v815
  %892 = vst.msk [vmem:[#allocation3 + $0xa8] sm:$0xff] %vm870, %v817
  %893 = vst.msk [vmem:[#allocation3 + $0xb0] sm:$0xff] %vm870, %v819
  %894 = vst.msk [vmem:[#allocation3 + $0xb8] sm:$0xff] %vm870, %v821
  %895 = vst.msk [vmem:[#allocation3 + $0xc0] sm:$0xff] %vm870, %v823
  %896 = vst.msk [vmem:[#allocation3 + $0xc8] sm:$0xff] %vm870, %v825
  %897 = vst.msk [vmem:[#allocation3 + $0xd0] sm:$0xff] %vm870, %v827
  %898 = vst.msk [vmem:[#allocation3 + $0xd8] sm:$0xff] %vm870, %v829
  %899 = vst.msk [vmem:[#allocation3 + $0xe0] sm:$0xff] %vm870, %v831
  %900 = vst.msk [vmem:[#allocation3 + $0xe8] sm:$0xff] %vm870, %v833
  %901 = vst.msk [vmem:[#allocation3 + $0xf0] sm:$0xff] %vm870, %v835
  %902 = vst.msk [vmem:[#allocation3 + $0xf8] sm:$0xff] %vm870, %v837
  %v903 = vld [vmem:[%s196] sm:$0xff]
  %v904 = vld [vmem:[%s196 + $0x8] sm:$0xff]
  %v905 = vld [vmem:[%s196 + $0x18] sm:$0xff]
  %v906 = vld [vmem:[%s196 + $0x20] sm:$0xff]
  %v907 = vld [vmem:[%s196 + $0x30] sm:$0xff]
  %v908 = vld [vmem:[%s196 + $0x38] sm:$0xff]
  %v909 = vld [vmem:[%s196 + $0x48] sm:$0xff]
  %v910 = vld [vmem:[%s196 + $0x50] sm:$0xff]
  %v911 = vld [vmem:[%s196 + $0x60] sm:$0xff]
  %v912 = vld [vmem:[%s196 + $0x68] sm:$0xff]
  %v913 = vld [vmem:[%s196 + $0x78] sm:$0xff]
  %v914 = vld [vmem:[%s196 + $0x80] sm:$0xff]
  %v915 = vld [vmem:[%s196 + $0x90] sm:$0xff]
  %v916 = vld [vmem:[%s196 + $0x98] sm:$0xff]
  %v917 = vld [vmem:[%s196 + $0xa8] sm:$0xff]
  %v918 = vld [vmem:[%s196 + $0xb0] sm:$0xff]
  %v919 = vld [vmem:[%s196 + $0xc0] sm:$0xff]
  %v920 = vld [vmem:[%s196 + $0xc8] sm:$0xff]
  %v921 = vld [vmem:[%s196 + $0xd8] sm:$0xff]
  %v922 = vld [vmem:[%s196 + $0xe0] sm:$0xff]
  %v923 = vld [vmem:[%s196 + $0xf0] sm:$0xff]
  %v924 = vld [vmem:[%s196 + $0xf8] sm:$0xff]
  %v925 = vld [vmem:[%s196 + $0x108] sm:$0xff]
  %v926 = vld [vmem:[%s196 + $0x110] sm:$0xff]
  %v927 = vld [vmem:[%s196 + $0x120] sm:$0xff]
  %v928 = vld [vmem:[%s196 + $0x128] sm:$0xff]
  %v929 = vld [vmem:[%s196 + $0x138] sm:$0xff]
  %v930 = vld [vmem:[%s196 + $0x140] sm:$0xff]
  %v931 = vld [vmem:[%s196 + $0x150] sm:$0xff]
  %v932 = vld [vmem:[%s196 + $0x158] sm:$0xff]
  %v933 = vld [vmem:[%s196 + $0x168] sm:$0xff]
  %v934 = vld [vmem:[%s196 + $0x170] sm:$0xff]
  %v935 = vld [vmem:[%s196 + $0x1b0] sm:$0xff]
  %v936 = vld [vmem:[%s196 + $0x1b8] sm:$0xff]
  %v937 = vld [vmem:[%s196 + $0x1c8] sm:$0xff]
  %v938 = vld [vmem:[%s196 + $0x1d0] sm:$0xff]
  %v939 = vld [vmem:[%s196 + $0x1e0] sm:$0xff]
  %v940 = vld [vmem:[%s196 + $0x1e8] sm:$0xff]
  %v941 = vld [vmem:[%s196 + $0x1f8] sm:$0xff]
  %v942 = vld [vmem:[%s196 + $0x200] sm:$0xff]
  %v943 = vld [vmem:[%s196 + $0x210] sm:$0xff]
  %v944 = vld [vmem:[%s196 + $0x218] sm:$0xff]
  %v945 = vld [vmem:[%s196 + $0x228] sm:$0xff]
  %v946 = vld [vmem:[%s196 + $0x230] sm:$0xff]
  %v947 = vld [vmem:[%s196 + $0x240] sm:$0xff]
  %v948 = vld [vmem:[%s196 + $0x248] sm:$0xff]
  %v949 = vld [vmem:[%s196 + $0x258] sm:$0xff]
  %v950 = vld [vmem:[%s196 + $0x260] sm:$0xff]
  %v951 = vld [vmem:[%s196 + $0x270] sm:$0xff]
  %v952 = vld [vmem:[%s196 + $0x278] sm:$0xff]
  %v953 = vld [vmem:[%s196 + $0x288] sm:$0xff]
  %v954 = vld [vmem:[%s196 + $0x290] sm:$0xff]
  %v955 = vld [vmem:[%s196 + $0x2a0] sm:$0xff]
  %v956 = vld [vmem:[%s196 + $0x2a8] sm:$0xff]
  %v957 = vld [vmem:[%s196 + $0x2b8] sm:$0xff]
  %v958 = vld [vmem:[%s196 + $0x2c0] sm:$0xff]
  %v959 = vld [vmem:[%s196 + $0x2d0] sm:$0xff]
  %v960 = vld [vmem:[%s196 + $0x2d8] sm:$0xff]
  %v961 = vld [vmem:[%s196 + $0x2e8] sm:$0xff]
  %v962 = vld [vmem:[%s196 + $0x2f0] sm:$0xff]
  %v963 = vld [vmem:[%s196 + $0x300] sm:$0xff]
  %v964 = vld [vmem:[%s196 + $0x308] sm:$0xff]
  %v965 = vld [vmem:[%s196 + $0x318] sm:$0xff]
  %v966 = vld [vmem:[%s196 + $0x320] sm:$0xff]
  %v967 = vpack.c.bf16 %v904, %v903
  %v968 = vpack.c.bf16 %v906, %v905
  %v969 = vpack.c.bf16 %v908, %v907
  %v970 = vpack.c.bf16 %v910, %v909
  %v971 = vpack.c.bf16 %v912, %v911
  %v972 = vpack.c.bf16 %v914, %v913
  %v973 = vpack.c.bf16 %v916, %v915
  %v974 = vpack.c.bf16 %v918, %v917
  %v975 = vpack.c.bf16 %v920, %v919
  %v976 = vpack.c.bf16 %v922, %v921
  %v977 = vpack.c.bf16 %v924, %v923
  %v978 = vpack.c.bf16 %v926, %v925
  %v979 = vpack.c.bf16 %v928, %v927
  %v980 = vpack.c.bf16 %v930, %v929
  %v981 = vpack.c.bf16 %v932, %v931
  %v982 = vpack.c.bf16 %v934, %v933
  %v983 = vpack.c.bf16 %v936, %v935
  %v984 = vpack.c.bf16 %v938, %v937
  %v985 = vpack.c.bf16 %v940, %v939
  %v986 = vpack.c.bf16 %v942, %v941
  %v987 = vpack.c.bf16 %v944, %v943
  %v988 = vpack.c.bf16 %v946, %v945
  %v989 = vpack.c.bf16 %v948, %v947
  %v990 = vpack.c.bf16 %v950, %v949
  %v991 = vpack.c.bf16 %v952, %v951
  %v992 = vpack.c.bf16 %v954, %v953
  %v993 = vpack.c.bf16 %v956, %v955
  %v994 = vpack.c.bf16 %v958, %v957
  %v995 = vpack.c.bf16 %v960, %v959
  %v996 = vpack.c.bf16 %v962, %v961
  %v997 = vpack.c.bf16 %v964, %v963
  %v998 = vpack.c.bf16 %v966, %v965
  %1031 = vrot.lane.b32.xlu0 %v967, 12
  %v1032 = vpop.permute.xlu0 %1031
  %1033 = vrot.lane.b32.xlu0 %v968, 12
  %v1034 = vpop.permute.xlu0 %1033
  %1035 = vrot.lane.b32.xlu0 %v969, 12
  %v1036 = vpop.permute.xlu0 %1035
  %1037 = vrot.lane.b32.xlu0 %v970, 12
  %v1038 = vpop.permute.xlu0 %1037
  %1039 = vrot.lane.b32.xlu0 %v971, 12
  %v1040 = vpop.permute.xlu0 %1039
  %1041 = vrot.lane.b32.xlu0 %v972, 12
  %v1042 = vpop.permute.xlu0 %1041
  %1043 = vrot.lane.b32.xlu0 %v973, 12
  %v1044 = vpop.permute.xlu0 %1043
  %1045 = vrot.lane.b32.xlu0 %v974, 12
  %v1046 = vpop.permute.xlu0 %1045
  %1047 = vrot.lane.b32.xlu0 %v975, 12
  %v1048 = vpop.permute.xlu0 %1047
  %1049 = vrot.lane.b32.xlu0 %v976, 12
  %v1050 = vpop.permute.xlu0 %1049
  %1051 = vrot.lane.b32.xlu0 %v977, 12
  %v1052 = vpop.permute.xlu0 %1051
  %1053 = vrot.lane.b32.xlu0 %v978, 12
  %v1054 = vpop.permute.xlu0 %1053
  %1055 = vrot.lane.b32.xlu0 %v979, 12
  %v1056 = vpop.permute.xlu0 %1055
  %1057 = vrot.lane.b32.xlu0 %v980, 12
  %v1058 = vpop.permute.xlu0 %1057
  %1059 = vrot.lane.b32.xlu0 %v981, 12
  %v1060 = vpop.permute.xlu0 %1059
  %1061 = vrot.lane.b32.xlu0 %v982, 12
  %v1062 = vpop.permute.xlu0 %1061
  %1063 = vrot.lane.b32.xlu0 %v983, 12
  %v1064 = vpop.permute.xlu0 %1063
  %1065 = vrot.lane.b32.xlu0 %v984, 12
  %v1066 = vpop.permute.xlu0 %1065
  %1067 = vrot.lane.b32.xlu0 %v985, 12
  %v1068 = vpop.permute.xlu0 %1067
  %1069 = vrot.lane.b32.xlu0 %v986, 12
  %v1070 = vpop.permute.xlu0 %1069
  %1071 = vrot.lane.b32.xlu0 %v987, 12
  %v1072 = vpop.permute.xlu0 %1071
  %1073 = vrot.lane.b32.xlu0 %v988, 12
  %v1074 = vpop.permute.xlu0 %1073
  %1075 = vrot.lane.b32.xlu0 %v989, 12
  %v1076 = vpop.permute.xlu0 %1075
  %1077 = vrot.lane.b32.xlu0 %v990, 12
  %v1078 = vpop.permute.xlu0 %1077
  %1079 = vrot.lane.b32.xlu0 %v991, 12
  %v1080 = vpop.permute.xlu0 %1079
  %1081 = vrot.lane.b32.xlu0 %v992, 12
  %v1082 = vpop.permute.xlu0 %1081
  %1083 = vrot.lane.b32.xlu0 %v993, 12
  %v1084 = vpop.permute.xlu0 %1083
  %1085 = vrot.lane.b32.xlu0 %v994, 12
  %v1086 = vpop.permute.xlu0 %1085
  %1087 = vrot.lane.b32.xlu0 %v995, 12
  %v1088 = vpop.permute.xlu0 %1087
  %1089 = vrot.lane.b32.xlu0 %v996, 12
  %v1090 = vpop.permute.xlu0 %1089
  %1091 = vrot.lane.b32.xlu0 %v997, 12
  %v1092 = vpop.permute.xlu0 %1091
  %1093 = vrot.lane.b32.xlu0 %v998, 12
  %v1094 = vpop.permute.xlu0 %1093
  %vm1127 = vcmask 130144
  %1128 = vst.msk [vmem:[#allocation3] sm:$0xff] %vm1127, %v1032
  %1129 = vst.msk [vmem:[#allocation3 + $0x8] sm:$0xff] %vm1127, %v1034
  %1130 = vst.msk [vmem:[#allocation3 + $0x10] sm:$0xff] %vm1127, %v1036
  %1131 = vst.msk [vmem:[#allocation3 + $0x18] sm:$0xff] %vm1127, %v1038
  %1132 = vst.msk [vmem:[#allocation3 + $0x20] sm:$0xff] %vm1127, %v1040
  %1133 = vst.msk [vmem:[#allocation3 + $0x28] sm:$0xff] %vm1127, %v1042
  %1134 = vst.msk [vmem:[#allocation3 + $0x30] sm:$0xff] %vm1127, %v1044
  %1135 = vst.msk [vmem:[#allocation3 + $0x38] sm:$0xff] %vm1127, %v1046
  %1136 = vst.msk [vmem:[#allocation3 + $0x40] sm:$0xff] %vm1127, %v1048
  %1137 = vst.msk [vmem:[#allocation3 + $0x48] sm:$0xff] %vm1127, %v1050
  %1138 = vst.msk [vmem:[#allocation3 + $0x50] sm:$0xff] %vm1127, %v1052
  %1139 = vst.msk [vmem:[#allocation3 + $0x58] sm:$0xff] %vm1127, %v1054
  %1140 = vst.msk [vmem:[#allocation3 + $0x60] sm:$0xff] %vm1127, %v1056
  %1141 = vst.msk [vmem:[#allocation3 + $0x68] sm:$0xff] %vm1127, %v1058
  %1142 = vst.msk [vmem:[#allocation3 + $0x70] sm:$0xff] %vm1127, %v1060
  %1143 = vst.msk [vmem:[#allocation3 + $0x78] sm:$0xff] %vm1127, %v1062
  %1144 = vst.msk [vmem:[#allocation3 + $0x80] sm:$0xff] %vm1127, %v1064
  %1145 = vst.msk [vmem:[#allocation3 + $0x88] sm:$0xff] %vm1127, %v1066
  %1146 = vst.msk [vmem:[#allocation3 + $0x90] sm:$0xff] %vm1127, %v1068
  %1147 = vst.msk [vmem:[#allocation3 + $0x98] sm:$0xff] %vm1127, %v1070
  %1148 = vst.msk [vmem:[#allocation3 + $0xa0] sm:$0xff] %vm1127, %v1072
  %1149 = vst.msk [vmem:[#allocation3 + $0xa8] sm:$0xff] %vm1127, %v1074
  %1150 = vst.msk [vmem:[#allocation3 + $0xb0] sm:$0xff] %vm1127, %v1076
  %1151 = vst.msk [vmem:[#allocation3 + $0xb8] sm:$0xff] %vm1127, %v1078
  %1152 = vst.msk [vmem:[#allocation3 + $0xc0] sm:$0xff] %vm1127, %v1080
  %1153 = vst.msk [vmem:[#allocation3 + $0xc8] sm:$0xff] %vm1127, %v1082
  %1154 = vst.msk [vmem:[#allocation3 + $0xd0] sm:$0xff] %vm1127, %v1084
  %1155 = vst.msk [vmem:[#allocation3 + $0xd8] sm:$0xff] %vm1127, %v1086
  %1156 = vst.msk [vmem:[#allocation3 + $0xe0] sm:$0xff] %vm1127, %v1088
  %1157 = vst.msk [vmem:[#allocation3 + $0xe8] sm:$0xff] %vm1127, %v1090
  %1158 = vst.msk [vmem:[#allocation3 + $0xf0] sm:$0xff] %vm1127, %v1092
  %1159 = vst.msk [vmem:[#allocation3 + $0xf8] sm:$0xff] %vm1127, %v1094
  %v1160 = vld [vmem:[%s196 + $0x1] sm:$0xff]
  %v1161 = vld [vmem:[%s196 + $0x9] sm:$0xff]
  %v1162 = vld [vmem:[%s196 + $0x19] sm:$0xff]
  %v1163 = vld [vmem:[%s196 + $0x21] sm:$0xff]
  %v1164 = vld [vmem:[%s196 + $0x31] sm:$0xff]
  %v1165 = vld [vmem:[%s196 + $0x39] sm:$0xff]
  %v1166 = vld [vmem:[%s196 + $0x49] sm:$0xff]
  %v1167 = vld [vmem:[%s196 + $0x51] sm:$0xff]
  %v1168 = vld [vmem:[%s196 + $0x61] sm:$0xff]
  %v1169 = vld [vmem:[%s196 + $0x69] sm:$0xff]
  %v1170 = vld [vmem:[%s196 + $0x79] sm:$0xff]
  %v1171 = vld [vmem:[%s196 + $0x81] sm:$0xff]
  %v1172 = vld [vmem:[%s196 + $0x91] sm:$0xff]
  %v1173 = vld [vmem:[%s196 + $0x99] sm:$0xff]
  %v1174 = vld [vmem:[%s196 + $0xa9] sm:$0xff]
  %v1175 = vld [vmem:[%s196 + $0xb1] sm:$0xff]
  %v1176 = vld [vmem:[%s196 + $0xc1] sm:$0xff]
  %v1177 = vld [vmem:[%s196 + $0xc9] sm:$0xff]
  %v1178 = vld [vmem:[%s196 + $0xd9] sm:$0xff]
  %v1179 = vld [vmem:[%s196 + $0xe1] sm:$0xff]
  %v1180 = vld [vmem:[%s196 + $0xf1] sm:$0xff]
  %v1181 = vld [vmem:[%s196 + $0xf9] sm:$0xff]
  %v1182 = vld [vmem:[%s196 + $0x109] sm:$0xff]
  %v1183 = vld [vmem:[%s196 + $0x111] sm:$0xff]
  %v1184 = vld [vmem:[%s196 + $0x121] sm:$0xff]
  %v1185 = vld [vmem:[%s196 + $0x129] sm:$0xff]
  %v1186 = vld [vmem:[%s196 + $0x139] sm:$0xff]
  %v1187 = vld [vmem:[%s196 + $0x141] sm:$0xff]
  %v1188 = vld [vmem:[%s196 + $0x151] sm:$0xff]
  %v1189 = vld [vmem:[%s196 + $0x159] sm:$0xff]
  %v1190 = vld [vmem:[%s196 + $0x169] sm:$0xff]
  %v1191 = vld [vmem:[%s196 + $0x171] sm:$0xff]
  %v1192 = vld [vmem:[%s196 + $0x1b1] sm:$0xff]
  %v1193 = vld [vmem:[%s196 + $0x1b9] sm:$0xff]
  %v1194 = vld [vmem:[%s196 + $0x1c9] sm:$0xff]
  %v1195 = vld [vmem:[%s196 + $0x1d1] sm:$0xff]
  %v1196 = vld [vmem:[%s196 + $0x1e1] sm:$0xff]
  %v1197 = vld [vmem:[%s196 + $0x1e9] sm:$0xff]
  %v1198 = vld [vmem:[%s196 + $0x1f9] sm:$0xff]
  %v1199 = vld [vmem:[%s196 + $0x201] sm:$0xff]
  %v1200 = vld [vmem:[%s196 + $0x211] sm:$0xff]
  %v1201 = vld [vmem:[%s196 + $0x219] sm:$0xff]
  %v1202 = vld [vmem:[%s196 + $0x229] sm:$0xff]
  %v1203 = vld [vmem:[%s196 + $0x231] sm:$0xff]
  %v1204 = vld [vmem:[%s196 + $0x241] sm:$0xff]
  %v1205 = vld [vmem:[%s196 + $0x249] sm:$0xff]
  %v1206 = vld [vmem:[%s196 + $0x259] sm:$0xff]
  %v1207 = vld [vmem:[%s196 + $0x261] sm:$0xff]
  %v1208 = vld [vmem:[%s196 + $0x271] sm:$0xff]
  %v1209 = vld [vmem:[%s196 + $0x279] sm:$0xff]
  %v1210 = vld [vmem:[%s196 + $0x289] sm:$0xff]
  %v1211 = vld [vmem:[%s196 + $0x291] sm:$0xff]
  %v1212 = vld [vmem:[%s196 + $0x2a1] sm:$0xff]
  %v1213 = vld [vmem:[%s196 + $0x2a9] sm:$0xff]
  %v1214 = vld [vmem:[%s196 + $0x2b9] sm:$0xff]
  %v1215 = vld [vmem:[%s196 + $0x2c1] sm:$0xff]
  %v1216 = vld [vmem:[%s196 + $0x2d1] sm:$0xff]
  %v1217 = vld [vmem:[%s196 + $0x2d9] sm:$0xff]
  %v1218 = vld [vmem:[%s196 + $0x2e9] sm:$0xff]
  %v1219 = vld [vmem:[%s196 + $0x2f1] sm:$0xff]
  %v1220 = vld [vmem:[%s196 + $0x301] sm:$0xff]
  %v1221 = vld [vmem:[%s196 + $0x309] sm:$0xff]
  %v1222 = vld [vmem:[%s196 + $0x319] sm:$0xff]
  %v1223 = vld [vmem:[%s196 + $0x321] sm:$0xff]
  %v1224 = vpack.c.bf16 %v1161, %v1160
  %v1225 = vpack.c.bf16 %v1163, %v1162
  %v1226 = vpack.c.bf16 %v1165, %v1164
  %v1227 = vpack.c.bf16 %v1167, %v1166
  %v1228 = vpack.c.bf16 %v1169, %v1168
  %v1229 = vpack.c.bf16 %v1171, %v1170
  %v1230 = vpack.c.bf16 %v1173, %v1172
  %v1231 = vpack.c.bf16 %v1175, %v1174
  %v1232 = vpack.c.bf16 %v1177, %v1176
  %v1233 = vpack.c.bf16 %v1179, %v1178
  %v1234 = vpack.c.bf16 %v1181, %v1180
  %v1235 = vpack.c.bf16 %v1183, %v1182
  %v1236 = vpack.c.bf16 %v1185, %v1184
  %v1237 = vpack.c.bf16 %v1187, %v1186
  %v1238 = vpack.c.bf16 %v1189, %v1188
  %v1239 = vpack.c.bf16 %v1191, %v1190
  %v1240 = vpack.c.bf16 %v1193, %v1192
  %v1241 = vpack.c.bf16 %v1195, %v1194
  %v1242 = vpack.c.bf16 %v1197, %v1196
  %v1243 = vpack.c.bf16 %v1199, %v1198
  %v1244 = vpack.c.bf16 %v1201, %v1200
  %v1245 = vpack.c.bf16 %v1203, %v1202
  %v1246 = vpack.c.bf16 %v1205, %v1204
  %v1247 = vpack.c.bf16 %v1207, %v1206
  %v1248 = vpack.c.bf16 %v1209, %v1208
  %v1249 = vpack.c.bf16 %v1211, %v1210
  %v1250 = vpack.c.bf16 %v1213, %v1212
  %v1251 = vpack.c.bf16 %v1215, %v1214
  %v1252 = vpack.c.bf16 %v1217, %v1216
  %v1253 = vpack.c.bf16 %v1219, %v1218
  %v1254 = vpack.c.bf16 %v1221, %v1220
  %v1255 = vpack.c.bf16 %v1223, %v1222
  %1288 = vrot.lane.b32.xlu0 %v1224, 16
  %v1289 = vpop.permute.xlu0 %1288
  %1290 = vrot.lane.b32.xlu0 %v1225, 16
  %v1291 = vpop.permute.xlu0 %1290
  %1292 = vrot.lane.b32.xlu0 %v1226, 16
  %v1293 = vpop.permute.xlu0 %1292
  %1294 = vrot.lane.b32.xlu0 %v1227, 16
  %v1295 = vpop.permute.xlu0 %1294
  %1296 = vrot.lane.b32.xlu0 %v1228, 16
  %v1297 = vpop.permute.xlu0 %1296
  %1298 = vrot.lane.b32.xlu0 %v1229, 16
  %v1299 = vpop.permute.xlu0 %1298
  %1300 = vrot.lane.b32.xlu0 %v1230, 16
  %v1301 = vpop.permute.xlu0 %1300
  %1302 = vrot.lane.b32.xlu0 %v1231, 16
  %v1303 = vpop.permute.xlu0 %1302
  %1304 = vrot.lane.b32.xlu0 %v1232, 16
  %v1305 = vpop.permute.xlu0 %1304
  %1306 = vrot.lane.b32.xlu0 %v1233, 16
  %v1307 = vpop.permute.xlu0 %1306
  %1308 = vrot.lane.b32.xlu0 %v1234, 16
  %v1309 = vpop.permute.xlu0 %1308
  %1310 = vrot.lane.b32.xlu0 %v1235, 16
  %v1311 = vpop.permute.xlu0 %1310
  %1312 = vrot.lane.b32.xlu0 %v1236, 16
  %v1313 = vpop.permute.xlu0 %1312
  %1314 = vrot.lane.b32.xlu0 %v1237, 16
  %v1315 = vpop.permute.xlu0 %1314
  %1316 = vrot.lane.b32.xlu0 %v1238, 16
  %v1317 = vpop.permute.xlu0 %1316
  %1318 = vrot.lane.b32.xlu0 %v1239, 16
  %v1319 = vpop.permute.xlu0 %1318
  %1320 = vrot.lane.b32.xlu0 %v1240, 16
  %v1321 = vpop.permute.xlu0 %1320
  %1322 = vrot.lane.b32.xlu0 %v1241, 16
  %v1323 = vpop.permute.xlu0 %1322
  %1324 = vrot.lane.b32.xlu0 %v1242, 16
  %v1325 = vpop.permute.xlu0 %1324
  %1326 = vrot.lane.b32.xlu0 %v1243, 16
  %v1327 = vpop.permute.xlu0 %1326
  %1328 = vrot.lane.b32.xlu0 %v1244, 16
  %v1329 = vpop.permute.xlu0 %1328
  %1330 = vrot.lane.b32.xlu0 %v1245, 16
  %v1331 = vpop.permute.xlu0 %1330
  %1332 = vrot.lane.b32.xlu0 %v1246, 16
  %v1333 = vpop.permute.xlu0 %1332
  %1334 = vrot.lane.b32.xlu0 %v1247, 16
  %v1335 = vpop.permute.xlu0 %1334
  %1336 = vrot.lane.b32.xlu0 %v1248, 16
  %v1337 = vpop.permute.xlu0 %1336
  %1338 = vrot.lane.b32.xlu0 %v1249, 16
  %v1339 = vpop.permute.xlu0 %1338
  %1340 = vrot.lane.b32.xlu0 %v1250, 16
  %v1341 = vpop.permute.xlu0 %1340
  %1342 = vrot.lane.b32.xlu0 %v1251, 16
  %v1343 = vpop.permute.xlu0 %1342
  %1344 = vrot.lane.b32.xlu0 %v1252, 16
  %v1345 = vpop.permute.xlu0 %1344
  %1346 = vrot.lane.b32.xlu0 %v1253, 16
  %v1347 = vpop.permute.xlu0 %1346
  %1348 = vrot.lane.b32.xlu0 %v1254, 16
  %v1349 = vpop.permute.xlu0 %1348
  %1350 = vrot.lane.b32.xlu0 %v1255, 16
  %v1351 = vpop.permute.xlu0 %1350
  %vm1384 = vcmask 162944
  %1385 = vst.msk [vmem:[#allocation3] sm:$0xff] %vm1384, %v1289
  %1386 = vst.msk [vmem:[#allocation3 + $0x8] sm:$0xff] %vm1384, %v1291
  %1387 = vst.msk [vmem:[#allocation3 + $0x10] sm:$0xff] %vm1384, %v1293
  %1388 = vst.msk [vmem:[#allocation3 + $0x18] sm:$0xff] %vm1384, %v1295
  %1389 = vst.msk [vmem:[#allocation3 + $0x20] sm:$0xff] %vm1384, %v1297
  %1390 = vst.msk [vmem:[#allocation3 + $0x28] sm:$0xff] %vm1384, %v1299
  %1391 = vst.msk [vmem:[#allocation3 + $0x30] sm:$0xff] %vm1384, %v1301
  %1392 = vst.msk [vmem:[#allocation3 + $0x38] sm:$0xff] %vm1384, %v1303
  %1393 = vst.msk [vmem:[#allocation3 + $0x40] sm:$0xff] %vm1384, %v1305
  %1394 = vst.msk [vmem:[#allocation3 + $0x48] sm:$0xff] %vm1384, %v1307
  %1395 = vst.msk [vmem:[#allocation3 + $0x50] sm:$0xff] %vm1384, %v1309
  %1396 = vst.msk [vmem:[#allocation3 + $0x58] sm:$0xff] %vm1384, %v1311
  %1397 = vst.msk [vmem:[#allocation3 + $0x60] sm:$0xff] %vm1384, %v1313
  %1398 = vst.msk [vmem:[#allocation3 + $0x68] sm:$0xff] %vm1384, %v1315
  %1399 = vst.msk [vmem:[#allocation3 + $0x70] sm:$0xff] %vm1384, %v1317
  %1400 = vst.msk [vmem:[#allocation3 + $0x78] sm:$0xff] %vm1384, %v1319
  %1401 = vst.msk [vmem:[#allocation3 + $0x80] sm:$0xff] %vm1384, %v1321
  %1402 = vst.msk [vmem:[#allocation3 + $0x88] sm:$0xff] %vm1384, %v1323
  %1403 = vst.msk [vmem:[#allocation3 + $0x90] sm:$0xff] %vm1384, %v1325
  %1404 = vst.msk [vmem:[#allocation3 + $0x98] sm:$0xff] %vm1384, %v1327
  %1405 = vst.msk [vmem:[#allocation3 + $0xa0] sm:$0xff] %vm1384, %v1329
  %1406 = vst.msk [vmem:[#allocation3 + $0xa8] sm:$0xff] %vm1384, %v1331
  %1407 = vst.msk [vmem:[#allocation3 + $0xb0] sm:$0xff] %vm1384, %v1333
  %1408 = vst.msk [vmem:[#allocation3 + $0xb8] sm:$0xff] %vm1384, %v1335
  %1409 = vst.msk [vmem:[#allocation3 + $0xc0] sm:$0xff] %vm1384, %v1337
  %1410 = vst.msk [vmem:[#allocation3 + $0xc8] sm:$0xff] %vm1384, %v1339
  %1411 = vst.msk [vmem:[#allocation3 + $0xd0] sm:$0xff] %vm1384, %v1341
  %1412 = vst.msk [vmem:[#allocation3 + $0xd8] sm:$0xff] %vm1384, %v1343
  %1413 = vst.msk [vmem:[#allocation3 + $0xe0] sm:$0xff] %vm1384, %v1345
  %1414 = vst.msk [vmem:[#allocation3 + $0xe8] sm:$0xff] %vm1384, %v1347
  %1415 = vst.msk [vmem:[#allocation3 + $0xf0] sm:$0xff] %vm1384, %v1349
  %1416 = vst.msk [vmem:[#allocation3 + $0xf8] sm:$0xff] %vm1384, %v1351
  %v1417 = vld [vmem:[%s196 + $0x2] sm:$0xff]
  %v1418 = vld [vmem:[%s196 + $0xa] sm:$0xff]
  %v1419 = vld [vmem:[%s196 + $0x1a] sm:$0xff]
  %v1420 = vld [vmem:[%s196 + $0x22] sm:$0xff]
  %v1421 = vld [vmem:[%s196 + $0x32] sm:$0xff]
  %v1422 = vld [vmem:[%s196 + $0x3a] sm:$0xff]
  %v1423 = vld [vmem:[%s196 + $0x4a] sm:$0xff]
  %v1424 = vld [vmem:[%s196 + $0x52] sm:$0xff]
  %v1425 = vld [vmem:[%s196 + $0x62] sm:$0xff]
  %v1426 = vld [vmem:[%s196 + $0x6a] sm:$0xff]
  %v1427 = vld [vmem:[%s196 + $0x7a] sm:$0xff]
  %v1428 = vld [vmem:[%s196 + $0x82] sm:$0xff]
  %v1429 = vld [vmem:[%s196 + $0x92] sm:$0xff]
  %v1430 = vld [vmem:[%s196 + $0x9a] sm:$0xff]
  %v1431 = vld [vmem:[%s196 + $0xaa] sm:$0xff]
  %v1432 = vld [vmem:[%s196 + $0xb2] sm:$0xff]
  %v1433 = vld [vmem:[%s196 + $0xc2] sm:$0xff]
  %v1434 = vld [vmem:[%s196 + $0xca] sm:$0xff]
  %v1435 = vld [vmem:[%s196 + $0xda] sm:$0xff]
  %v1436 = vld [vmem:[%s196 + $0xe2] sm:$0xff]
  %v1437 = vld [vmem:[%s196 + $0xf2] sm:$0xff]
  %v1438 = vld [vmem:[%s196 + $0xfa] sm:$0xff]
  %v1439 = vld [vmem:[%s196 + $0x10a] sm:$0xff]
  %v1440 = vld [vmem:[%s196 + $0x112] sm:$0xff]
  %v1441 = vld [vmem:[%s196 + $0x122] sm:$0xff]
  %v1442 = vld [vmem:[%s196 + $0x12a] sm:$0xff]
  %v1443 = vld [vmem:[%s196 + $0x13a] sm:$0xff]
  %v1444 = vld [vmem:[%s196 + $0x142] sm:$0xff]
  %v1445 = vld [vmem:[%s196 + $0x152] sm:$0xff]
  %v1446 = vld [vmem:[%s196 + $0x15a] sm:$0xff]
  %v1447 = vld [vmem:[%s196 + $0x16a] sm:$0xff]
  %v1448 = vld [vmem:[%s196 + $0x172] sm:$0xff]
  %v1449 = vld [vmem:[%s196 + $0x1b2] sm:$0xff]
  %v1450 = vld [vmem:[%s196 + $0x1ba] sm:$0xff]
  %v1451 = vld [vmem:[%s196 + $0x1ca] sm:$0xff]
  %v1452 = vld [vmem:[%s196 + $0x1d2] sm:$0xff]
  %v1453 = vld [vmem:[%s196 + $0x1e2] sm:$0xff]
  %v1454 = vld [vmem:[%s196 + $0x1ea] sm:$0xff]
  %v1455 = vld [vmem:[%s196 + $0x1fa] sm:$0xff]
  %v1456 = vld [vmem:[%s196 + $0x202] sm:$0xff]
  %v1457 = vld [vmem:[%s196 + $0x212] sm:$0xff]
  %v1458 = vld [vmem:[%s196 + $0x21a] sm:$0xff]
  %v1459 = vld [vmem:[%s196 + $0x22a] sm:$0xff]
  %v1460 = vld [vmem:[%s196 + $0x232] sm:$0xff]
  %v1461 = vld [vmem:[%s196 + $0x242] sm:$0xff]
  %v1462 = vld [vmem:[%s196 + $0x24a] sm:$0xff]
  %v1463 = vld [vmem:[%s196 + $0x25a] sm:$0xff]
  %v1464 = vld [vmem:[%s196 + $0x262] sm:$0xff]
  %v1465 = vld [vmem:[%s196 + $0x272] sm:$0xff]
  %v1466 = vld [vmem:[%s196 + $0x27a] sm:$0xff]
  %v1467 = vld [vmem:[%s196 + $0x28a] sm:$0xff]
  %v1468 = vld [vmem:[%s196 + $0x292] sm:$0xff]
  %v1469 = vld [vmem:[%s196 + $0x2a2] sm:$0xff]
  %v1470 = vld [vmem:[%s196 + $0x2aa] sm:$0xff]
  %v1471 = vld [vmem:[%s196 + $0x2ba] sm:$0xff]
  %v1472 = vld [vmem:[%s196 + $0x2c2] sm:$0xff]
  %v1473 = vld [vmem:[%s196 + $0x2d2] sm:$0xff]
  %v1474 = vld [vmem:[%s196 + $0x2da] sm:$0xff]
  %v1475 = vld [vmem:[%s196 + $0x2ea] sm:$0xff]
  %v1476 = vld [vmem:[%s196 + $0x2f2] sm:$0xff]
  %v1477 = vld [vmem:[%s196 + $0x302] sm:$0xff]
  %v1478 = vld [vmem:[%s196 + $0x30a] sm:$0xff]
  %v1479 = vld [vmem:[%s196 + $0x31a] sm:$0xff]
  %v1480 = vld [vmem:[%s196 + $0x322] sm:$0xff]
  %v1481 = vpack.c.bf16 %v1418, %v1417
  %v1482 = vpack.c.bf16 %v1420, %v1419
  %v1483 = vpack.c.bf16 %v1422, %v1421
  %v1484 = vpack.c.bf16 %v1424, %v1423
  %v1485 = vpack.c.bf16 %v1426, %v1425
  %v1486 = vpack.c.bf16 %v1428, %v1427
  %v1487 = vpack.c.bf16 %v1430, %v1429
  %v1488 = vpack.c.bf16 %v1432, %v1431
  %v1489 = vpack.c.bf16 %v1434, %v1433
  %v1490 = vpack.c.bf16 %v1436, %v1435
  %v1491 = vpack.c.bf16 %v1438, %v1437
  %v1492 = vpack.c.bf16 %v1440, %v1439
  %v1493 = vpack.c.bf16 %v1442, %v1441
  %v1494 = vpack.c.bf16 %v1444, %v1443
  %v1495 = vpack.c.bf16 %v1446, %v1445
  %v1496 = vpack.c.bf16 %v1448, %v1447
  %v1497 = vpack.c.bf16 %v1450, %v1449
  %v1498 = vpack.c.bf16 %v1452, %v1451
  %v1499 = vpack.c.bf16 %v1454, %v1453
  %v1500 = vpack.c.bf16 %v1456, %v1455
  %v1501 = vpack.c.bf16 %v1458, %v1457
  %v1502 = vpack.c.bf16 %v1460, %v1459
  %v1503 = vpack.c.bf16 %v1462, %v1461
  %v1504 = vpack.c.bf16 %v1464, %v1463
  %v1505 = vpack.c.bf16 %v1466, %v1465
  %v1506 = vpack.c.bf16 %v1468, %v1467
  %v1507 = vpack.c.bf16 %v1470, %v1469
  %v1508 = vpack.c.bf16 %v1472, %v1471
  %v1509 = vpack.c.bf16 %v1474, %v1473
  %v1510 = vpack.c.bf16 %v1476, %v1475
  %v1511 = vpack.c.bf16 %v1478, %v1477
  %v1512 = vpack.c.bf16 %v1480, %v1479
  %1545 = vrot.lane.b32.xlu0 %v1481, 20
  %v1546 = vpop.permute.xlu0 %1545
  %1547 = vrot.lane.b32.xlu0 %v1482, 20
  %v1548 = vpop.permute.xlu0 %1547
  %1549 = vrot.lane.b32.xlu0 %v1483, 20
  %v1550 = vpop.permute.xlu0 %1549
  %1551 = vrot.lane.b32.xlu0 %v1484, 20
  %v1552 = vpop.permute.xlu0 %1551
  %1553 = vrot.lane.b32.xlu0 %v1485, 20
  %v1554 = vpop.permute.xlu0 %1553
  %1555 = vrot.lane.b32.xlu0 %v1486, 20
  %v1556 = vpop.permute.xlu0 %1555
  %1557 = vrot.lane.b32.xlu0 %v1487, 20
  %v1558 = vpop.permute.xlu0 %1557
  %1559 = vrot.lane.b32.xlu0 %v1488, 20
  %v1560 = vpop.permute.xlu0 %1559
  %1561 = vrot.lane.b32.xlu0 %v1489, 20
  %v1562 = vpop.permute.xlu0 %1561
  %1563 = vrot.lane.b32.xlu0 %v1490, 20
  %v1564 = vpop.permute.xlu0 %1563
  %1565 = vrot.lane.b32.xlu0 %v1491, 20
  %v1566 = vpop.permute.xlu0 %1565
  %1567 = vrot.lane.b32.xlu0 %v1492, 20
  %v1568 = vpop.permute.xlu0 %1567
  %1569 = vrot.lane.b32.xlu0 %v1493, 20
  %v1570 = vpop.permute.xlu0 %1569
  %1571 = vrot.lane.b32.xlu0 %v1494, 20
  %v1572 = vpop.permute.xlu0 %1571
  %1573 = vrot.lane.b32.xlu0 %v1495, 20
  %v1574 = vpop.permute.xlu0 %1573
  %1575 = vrot.lane.b32.xlu0 %v1496, 20
  %v1576 = vpop.permute.xlu0 %1575
  %1577 = vrot.lane.b32.xlu0 %v1497, 20
  %v1578 = vpop.permute.xlu0 %1577
  %1579 = vrot.lane.b32.xlu0 %v1498, 20
  %v1580 = vpop.permute.xlu0 %1579
  %1581 = vrot.lane.b32.xlu0 %v1499, 20
  %v1582 = vpop.permute.xlu0 %1581
  %1583 = vrot.lane.b32.xlu0 %v1500, 20
  %v1584 = vpop.permute.xlu0 %1583
  %1585 = vrot.lane.b32.xlu0 %v1501, 20
  %v1586 = vpop.permute.xlu0 %1585
  %1587 = vrot.lane.b32.xlu0 %v1502, 20
  %v1588 = vpop.permute.xlu0 %1587
  %1589 = vrot.lane.b32.xlu0 %v1503, 20
  %v1590 = vpop.permute.xlu0 %1589
  %1591 = vrot.lane.b32.xlu0 %v1504, 20
  %v1592 = vpop.permute.xlu0 %1591
  %1593 = vrot.lane.b32.xlu0 %v1505, 20
  %v1594 = vpop.permute.xlu0 %1593
  %1595 = vrot.lane.b32.xlu0 %v1506, 20
  %v1596 = vpop.permute.xlu0 %1595
  %1597 = vrot.lane.b32.xlu0 %v1507, 20
  %v1598 = vpop.permute.xlu0 %1597
  %1599 = vrot.lane.b32.xlu0 %v1508, 20
  %v1600 = vpop.permute.xlu0 %1599
  %1601 = vrot.lane.b32.xlu0 %v1509, 20
  %v1602 = vpop.permute.xlu0 %1601
  %1603 = vrot.lane.b32.xlu0 %v1510, 20
  %v1604 = vpop.permute.xlu0 %1603
  %1605 = vrot.lane.b32.xlu0 %v1511, 20
  %v1606 = vpop.permute.xlu0 %1605
  %1607 = vrot.lane.b32.xlu0 %v1512, 20
  %v1608 = vpop.permute.xlu0 %1607
  %vm1641 = vcmask 195744
  %1642 = vst.msk [vmem:[#allocation3] sm:$0xff] %vm1641, %v1546
  %1643 = vst.msk [vmem:[#allocation3 + $0x8] sm:$0xff] %vm1641, %v1548
  %1644 = vst.msk [vmem:[#allocation3 + $0x10] sm:$0xff] %vm1641, %v1550
  %1645 = vst.msk [vmem:[#allocation3 + $0x18] sm:$0xff] %vm1641, %v1552
  %1646 = vst.msk [vmem:[#allocation3 + $0x20] sm:$0xff] %vm1641, %v1554
  %1647 = vst.msk [vmem:[#allocation3 + $0x28] sm:$0xff] %vm1641, %v1556
  %1648 = vst.msk [vmem:[#allocation3 + $0x30] sm:$0xff] %vm1641, %v1558
  %1649 = vst.msk [vmem:[#allocation3 + $0x38] sm:$0xff] %vm1641, %v1560
  %1650 = vst.msk [vmem:[#allocation3 + $0x40] sm:$0xff] %vm1641, %v1562
  %1651 = vst.msk [vmem:[#allocation3 + $0x48] sm:$0xff] %vm1641, %v1564
  %1652 = vst.msk [vmem:[#allocation3 + $0x50] sm:$0xff] %vm1641, %v1566
  %1653 = vst.msk [vmem:[#allocation3 + $0x58] sm:$0xff] %vm1641, %v1568
  %1654 = vst.msk [vmem:[#allocation3 + $0x60] sm:$0xff] %vm1641, %v1570
  %1655 = vst.msk [vmem:[#allocation3 + $0x68] sm:$0xff] %vm1641, %v1572
  %1656 = vst.msk [vmem:[#allocation3 + $0x70] sm:$0xff] %vm1641, %v1574
  %1657 = vst.msk [vmem:[#allocation3 + $0x78] sm:$0xff] %vm1641, %v1576
  %1658 = vst.msk [vmem:[#allocation3 + $0x80] sm:$0xff] %vm1641, %v1578
  %1659 = vst.msk [vmem:[#allocation3 + $0x88] sm:$0xff] %vm1641, %v1580
  %1660 = vst.msk [vmem:[#allocation3 + $0x90] sm:$0xff] %vm1641, %v1582
  %1661 = vst.msk [vmem:[#allocation3 + $0x98] sm:$0xff] %vm1641, %v1584
  %1662 = vst.msk [vmem:[#allocation3 + $0xa0] sm:$0xff] %vm1641, %v1586
  %1663 = vst.msk [vmem:[#allocation3 + $0xa8] sm:$0xff] %vm1641, %v1588
  %1664 = vst.msk [vmem:[#allocation3 + $0xb0] sm:$0xff] %vm1641, %v1590
  %1665 = vst.msk [vmem:[#allocation3 + $0xb8] sm:$0xff] %vm1641, %v1592
  %1666 = vst.msk [vmem:[#allocation3 + $0xc0] sm:$0xff] %vm1641, %v1594
  %1667 = vst.msk [vmem:[#allocation3 + $0xc8] sm:$0xff] %vm1641, %v1596
  %1668 = vst.msk [vmem:[#allocation3 + $0xd0] sm:$0xff] %vm1641, %v1598
  %1669 = vst.msk [vmem:[#allocation3 + $0xd8] sm:$0xff] %vm1641, %v1600
  %1670 = vst.msk [vmem:[#allocation3 + $0xe0] sm:$0xff] %vm1641, %v1602
  %1671 = vst.msk [vmem:[#allocation3 + $0xe8] sm:$0xff] %vm1641, %v1604
  %1672 = vst.msk [vmem:[#allocation3 + $0xf0] sm:$0xff] %vm1641, %v1606
  %1673 = vst.msk [vmem:[#allocation3 + $0xf8] sm:$0xff] %vm1641, %v1608
  %s1674 = scalar_lea.vmem [#allocation2], 48
  %v1675 = vld [vmem:[%s1674] sm:$0xff]
  %v1676 = vld [vmem:[%s1674 + $0x8] sm:$0xff]
  %v1677 = vld [vmem:[%s1674 + $0x18] sm:$0xff]
  %v1678 = vld [vmem:[%s1674 + $0x20] sm:$0xff]
  %v1679 = vld [vmem:[%s1674 + $0x30] sm:$0xff]
  %v1680 = vld [vmem:[%s1674 + $0x38] sm:$0xff]
  %v1681 = vld [vmem:[%s1674 + $0x48] sm:$0xff]
  %v1682 = vld [vmem:[%s1674 + $0x50] sm:$0xff]
  %v1683 = vld [vmem:[%s1674 + $0x60] sm:$0xff]
  %v1684 = vld [vmem:[%s1674 + $0x68] sm:$0xff]
  %v1685 = vld [vmem:[%s1674 + $0x78] sm:$0xff]
  %v1686 = vld [vmem:[%s1674 + $0x80] sm:$0xff]
  %v1687 = vld [vmem:[%s1674 + $0x90] sm:$0xff]
  %v1688 = vld [vmem:[%s1674 + $0x98] sm:$0xff]
  %v1689 = vld [vmem:[%s1674 + $0xa8] sm:$0xff]
  %v1690 = vld [vmem:[%s1674 + $0xb0] sm:$0xff]
  %v1691 = vld [vmem:[%s1674 + $0xc0] sm:$0xff]
  %v1692 = vld [vmem:[%s1674 + $0xc8] sm:$0xff]
  %v1693 = vld [vmem:[%s1674 + $0xd8] sm:$0xff]
  %v1694 = vld [vmem:[%s1674 + $0xe0] sm:$0xff]
  %v1695 = vld [vmem:[%s1674 + $0xf0] sm:$0xff]
  %v1696 = vld [vmem:[%s1674 + $0xf8] sm:$0xff]
  %v1697 = vld [vmem:[%s1674 + $0x108] sm:$0xff]
  %v1698 = vld [vmem:[%s1674 + $0x110] sm:$0xff]
  %v1699 = vld [vmem:[%s1674 + $0x120] sm:$0xff]
  %v1700 = vld [vmem:[%s1674 + $0x128] sm:$0xff]
  %v1701 = vld [vmem:[%s1674 + $0x138] sm:$0xff]
  %v1702 = vld [vmem:[%s1674 + $0x140] sm:$0xff]
  %v1703 = vld [vmem:[%s1674 + $0x150] sm:$0xff]
  %v1704 = vld [vmem:[%s1674 + $0x158] sm:$0xff]
  %v1705 = vld [vmem:[%s1674 + $0x168] sm:$0xff]
  %v1706 = vld [vmem:[%s1674 + $0x170] sm:$0xff]
  %v1707 = vld [vmem:[%s1674 + $0x1b0] sm:$0xff]
  %v1708 = vld [vmem:[%s1674 + $0x1b8] sm:$0xff]
  %v1709 = vld [vmem:[%s1674 + $0x1c8] sm:$0xff]
  %v1710 = vld [vmem:[%s1674 + $0x1d0] sm:$0xff]
  %v1711 = vld [vmem:[%s1674 + $0x1e0] sm:$0xff]
  %v1712 = vld [vmem:[%s1674 + $0x1e8] sm:$0xff]
  %v1713 = vld [vmem:[%s1674 + $0x1f8] sm:$0xff]
  %v1714 = vld [vmem:[%s1674 + $0x200] sm:$0xff]
  %v1715 = vld [vmem:[%s1674 + $0x210] sm:$0xff]
  %v1716 = vld [vmem:[%s1674 + $0x218] sm:$0xff]
  %v1717 = vld [vmem:[%s1674 + $0x228] sm:$0xff]
  %v1718 = vld [vmem:[%s1674 + $0x230] sm:$0xff]
  %v1719 = vld [vmem:[%s1674 + $0x240] sm:$0xff]
  %v1720 = vld [vmem:[%s1674 + $0x248] sm:$0xff]
  %v1721 = vld [vmem:[%s1674 + $0x258] sm:$0xff]
  %v1722 = vld [vmem:[%s1674 + $0x260] sm:$0xff]
  %v1723 = vld [vmem:[%s1674 + $0x270] sm:$0xff]
  %v1724 = vld [vmem:[%s1674 + $0x278] sm:$0xff]
  %v1725 = vld [vmem:[%s1674 + $0x288] sm:$0xff]
  %v1726 = vld [vmem:[%s1674 + $0x290] sm:$0xff]
  %v1727 = vld [vmem:[%s1674 + $0x2a0] sm:$0xff]
  %v1728 = vld [vmem:[%s1674 + $0x2a8] sm:$0xff]
  %v1729 = vld [vmem:[%s1674 + $0x2b8] sm:$0xff]
  %v1730 = vld [vmem:[%s1674 + $0x2c0] sm:$0xff]
  %v1731 = vld [vmem:[%s1674 + $0x2d0] sm:$0xff]
  %v1732 = vld [vmem:[%s1674 + $0x2d8] sm:$0xff]
  %v1733 = vld [vmem:[%s1674 + $0x2e8] sm:$0xff]
  %v1734 = vld [vmem:[%s1674 + $0x2f0] sm:$0xff]
  %v1735 = vld [vmem:[%s1674 + $0x300] sm:$0xff]
  %v1736 = vld [vmem:[%s1674 + $0x308] sm:$0xff]
  %v1737 = vld [vmem:[%s1674 + $0x318] sm:$0xff]
  %v1738 = vld [vmem:[%s1674 + $0x320] sm:$0xff]
  %v1739 = vpack.c.bf16 %v1676, %v1675
  %v1740 = vpack.c.bf16 %v1678, %v1677
  %v1741 = vpack.c.bf16 %v1680, %v1679
  %v1742 = vpack.c.bf16 %v1682, %v1681
  %v1743 = vpack.c.bf16 %v1684, %v1683
  %v1744 = vpack.c.bf16 %v1686, %v1685
  %v1745 = vpack.c.bf16 %v1688, %v1687
  %v1746 = vpack.c.bf16 %v1690, %v1689
  %v1747 = vpack.c.bf16 %v1692, %v1691
  %v1748 = vpack.c.bf16 %v1694, %v1693
  %v1749 = vpack.c.bf16 %v1696, %v1695
  %v1750 = vpack.c.bf16 %v1698, %v1697
  %v1751 = vpack.c.bf16 %v1700, %v1699
  %v1752 = vpack.c.bf16 %v1702, %v1701
  %v1753 = vpack.c.bf16 %v1704, %v1703
  %v1754 = vpack.c.bf16 %v1706, %v1705
  %v1755 = vpack.c.bf16 %v1708, %v1707
  %v1756 = vpack.c.bf16 %v1710, %v1709
  %v1757 = vpack.c.bf16 %v1712, %v1711
  %v1758 = vpack.c.bf16 %v1714, %v1713
  %v1759 = vpack.c.bf16 %v1716, %v1715
  %v1760 = vpack.c.bf16 %v1718, %v1717
  %v1761 = vpack.c.bf16 %v1720, %v1719
  %v1762 = vpack.c.bf16 %v1722, %v1721
  %v1763 = vpack.c.bf16 %v1724, %v1723
  %v1764 = vpack.c.bf16 %v1726, %v1725
  %v1765 = vpack.c.bf16 %v1728, %v1727
  %v1766 = vpack.c.bf16 %v1730, %v1729
  %v1767 = vpack.c.bf16 %v1732, %v1731
  %v1768 = vpack.c.bf16 %v1734, %v1733
  %v1769 = vpack.c.bf16 %v1736, %v1735
  %v1770 = vpack.c.bf16 %v1738, %v1737
  %1803 = vrot.lane.b32.xlu0 %v1739, 24
  %v1804 = vpop.permute.xlu0 %1803
  %1805 = vrot.lane.b32.xlu0 %v1740, 24
  %v1806 = vpop.permute.xlu0 %1805
  %1807 = vrot.lane.b32.xlu0 %v1741, 24
  %v1808 = vpop.permute.xlu0 %1807
  %1809 = vrot.lane.b32.xlu0 %v1742, 24
  %v1810 = vpop.permute.xlu0 %1809
  %1811 = vrot.lane.b32.xlu0 %v1743, 24
  %v1812 = vpop.permute.xlu0 %1811
  %1813 = vrot.lane.b32.xlu0 %v1744, 24
  %v1814 = vpop.permute.xlu0 %1813
  %1815 = vrot.lane.b32.xlu0 %v1745, 24
  %v1816 = vpop.permute.xlu0 %1815
  %1817 = vrot.lane.b32.xlu0 %v1746, 24
  %v1818 = vpop.permute.xlu0 %1817
  %1819 = vrot.lane.b32.xlu0 %v1747, 24
  %v1820 = vpop.permute.xlu0 %1819
  %1821 = vrot.lane.b32.xlu0 %v1748, 24
  %v1822 = vpop.permute.xlu0 %1821
  %1823 = vrot.lane.b32.xlu0 %v1749, 24
  %v1824 = vpop.permute.xlu0 %1823
  %1825 = vrot.lane.b32.xlu0 %v1750, 24
  %v1826 = vpop.permute.xlu0 %1825
  %1827 = vrot.lane.b32.xlu0 %v1751, 24
  %v1828 = vpop.permute.xlu0 %1827
  %1829 = vrot.lane.b32.xlu0 %v1752, 24
  %v1830 = vpop.permute.xlu0 %1829
  %1831 = vrot.lane.b32.xlu0 %v1753, 24
  %v1832 = vpop.permute.xlu0 %1831
  %1833 = vrot.lane.b32.xlu0 %v1754, 24
  %v1834 = vpop.permute.xlu0 %1833
  %1835 = vrot.lane.b32.xlu0 %v1755, 24
  %v1836 = vpop.permute.xlu0 %1835
  %1837 = vrot.lane.b32.xlu0 %v1756, 24
  %v1838 = vpop.permute.xlu0 %1837
  %1839 = vrot.lane.b32.xlu0 %v1757, 24
  %v1840 = vpop.permute.xlu0 %1839
  %1841 = vrot.lane.b32.xlu0 %v1758, 24
  %v1842 = vpop.permute.xlu0 %1841
  %1843 = vrot.lane.b32.xlu0 %v1759, 24
  %v1844 = vpop.permute.xlu0 %1843
  %1845 = vrot.lane.b32.xlu0 %v1760, 24
  %v1846 = vpop.permute.xlu0 %1845
  %1847 = vrot.lane.b32.xlu0 %v1761, 24
  %v1848 = vpop.permute.xlu0 %1847
  %1849 = vrot.lane.b32.xlu0 %v1762, 24
  %v1850 = vpop.permute.xlu0 %1849
  %1851 = vrot.lane.b32.xlu0 %v1763, 24
  %v1852 = vpop.permute.xlu0 %1851
  %1853 = vrot.lane.b32.xlu0 %v1764, 24
  %v1854 = vpop.permute.xlu0 %1853
  %1855 = vrot.lane.b32.xlu0 %v1765, 24
  %v1856 = vpop.permute.xlu0 %1855
  %1857 = vrot.lane.b32.xlu0 %v1766, 24
  %v1858 = vpop.permute.xlu0 %1857
  %1859 = vrot.lane.b32.xlu0 %v1767, 24
  %v1860 = vpop.permute.xlu0 %1859
  %1861 = vrot.lane.b32.xlu0 %v1768, 24
  %v1862 = vpop.permute.xlu0 %1861
  %1863 = vrot.lane.b32.xlu0 %v1769, 24
  %v1864 = vpop.permute.xlu0 %1863
  %1865 = vrot.lane.b32.xlu0 %v1770, 24
  %v1866 = vpop.permute.xlu0 %1865
  %vm1899 = vcmask 228544
  %1900 = vst.msk [vmem:[#allocation3] sm:$0xff] %vm1899, %v1804
  %1901 = vst.msk [vmem:[#allocation3 + $0x8] sm:$0xff] %vm1899, %v1806
  %1902 = vst.msk [vmem:[#allocation3 + $0x10] sm:$0xff] %vm1899, %v1808
  %1903 = vst.msk [vmem:[#allocation3 + $0x18] sm:$0xff] %vm1899, %v1810
  %1904 = vst.msk [vmem:[#allocation3 + $0x20] sm:$0xff] %vm1899, %v1812
  %1905 = vst.msk [vmem:[#allocation3 + $0x28] sm:$0xff] %vm1899, %v1814
  %1906 = vst.msk [vmem:[#allocation3 + $0x30] sm:$0xff] %vm1899, %v1816
  %1907 = vst.msk [vmem:[#allocation3 + $0x38] sm:$0xff] %vm1899, %v1818
  %1908 = vst.msk [vmem:[#allocation3 + $0x40] sm:$0xff] %vm1899, %v1820
  %1909 = vst.msk [vmem:[#allocation3 + $0x48] sm:$0xff] %vm1899, %v1822
  %1910 = vst.msk [vmem:[#allocation3 + $0x50] sm:$0xff] %vm1899, %v1824
  %1911 = vst.msk [vmem:[#allocation3 + $0x58] sm:$0xff] %vm1899, %v1826
  %1912 = vst.msk [vmem:[#allocation3 + $0x60] sm:$0xff] %vm1899, %v1828
  %1913 = vst.msk [vmem:[#allocation3 + $0x68] sm:$0xff] %vm1899, %v1830
  %1914 = vst.msk [vmem:[#allocation3 + $0x70] sm:$0xff] %vm1899, %v1832
  %1915 = vst.msk [vmem:[#allocation3 + $0x78] sm:$0xff] %vm1899, %v1834
  %1916 = vst.msk [vmem:[#allocation3 + $0x80] sm:$0xff] %vm1899, %v1836
  %1917 = vst.msk [vmem:[#allocation3 + $0x88] sm:$0xff] %vm1899, %v1838
  %1918 = vst.msk [vmem:[#allocation3 + $0x90] sm:$0xff] %vm1899, %v1840
  %1919 = vst.msk [vmem:[#allocation3 + $0x98] sm:$0xff] %vm1899, %v1842
  %1920 = vst.msk [vmem:[#allocation3 + $0xa0] sm:$0xff] %vm1899, %v1844
  %1921 = vst.msk [vmem:[#allocation3 + $0xa8] sm:$0xff] %vm1899, %v1846
  %1922 = vst.msk [vmem:[#allocation3 + $0xb0] sm:$0xff] %vm1899, %v1848
  %1923 = vst.msk [vmem:[#allocation3 + $0xb8] sm:$0xff] %vm1899, %v1850
  %1924 = vst.msk [vmem:[#allocation3 + $0xc0] sm:$0xff] %vm1899, %v1852
  %1925 = vst.msk [vmem:[#allocation3 + $0xc8] sm:$0xff] %vm1899, %v1854
  %1926 = vst.msk [vmem:[#allocation3 + $0xd0] sm:$0xff] %vm1899, %v1856
  %1927 = vst.msk [vmem:[#allocation3 + $0xd8] sm:$0xff] %vm1899, %v1858
  %1928 = vst.msk [vmem:[#allocation3 + $0xe0] sm:$0xff] %vm1899, %v1860
  %1929 = vst.msk [vmem:[#allocation3 + $0xe8] sm:$0xff] %vm1899, %v1862
  %1930 = vst.msk [vmem:[#allocation3 + $0xf0] sm:$0xff] %vm1899, %v1864
  %1931 = vst.msk [vmem:[#allocation3 + $0xf8] sm:$0xff] %vm1899, %v1866
  %v1932 = vld [vmem:[%s1674 + $0x1] sm:$0xff]
  %v1933 = vld [vmem:[%s1674 + $0x9] sm:$0xff]
  %v1934 = vld [vmem:[%s1674 + $0x19] sm:$0xff]
  %v1935 = vld [vmem:[%s1674 + $0x21] sm:$0xff]
  %v1936 = vld [vmem:[%s1674 + $0x31] sm:$0xff]
  %v1937 = vld [vmem:[%s1674 + $0x39] sm:$0xff]
  %v1938 = vld [vmem:[%s1674 + $0x49] sm:$0xff]
  %v1939 = vld [vmem:[%s1674 + $0x51] sm:$0xff]
  %v1940 = vld [vmem:[%s1674 + $0x61] sm:$0xff]
  %v1941 = vld [vmem:[%s1674 + $0x69] sm:$0xff]
  %v1942 = vld [vmem:[%s1674 + $0x79] sm:$0xff]
  %v1943 = vld [vmem:[%s1674 + $0x81] sm:$0xff]
  %v1944 = vld [vmem:[%s1674 + $0x91] sm:$0xff]
  %v1945 = vld [vmem:[%s1674 + $0x99] sm:$0xff]
  %v1946 = vld [vmem:[%s1674 + $0xa9] sm:$0xff]
  %v1947 = vld [vmem:[%s1674 + $0xb1] sm:$0xff]
  %v1948 = vld [vmem:[%s1674 + $0xc1] sm:$0xff]
  %v1949 = vld [vmem:[%s1674 + $0xc9] sm:$0xff]
  %v1950 = vld [vmem:[%s1674 + $0xd9] sm:$0xff]
  %v1951 = vld [vmem:[%s1674 + $0xe1] sm:$0xff]
  %v1952 = vld [vmem:[%s1674 + $0xf1] sm:$0xff]
  %v1953 = vld [vmem:[%s1674 + $0xf9] sm:$0xff]
  %v1954 = vld [vmem:[%s1674 + $0x109] sm:$0xff]
  %v1955 = vld [vmem:[%s1674 + $0x111] sm:$0xff]
  %v1956 = vld [vmem:[%s1674 + $0x121] sm:$0xff]
  %v1957 = vld [vmem:[%s1674 + $0x129] sm:$0xff]
  %v1958 = vld [vmem:[%s1674 + $0x139] sm:$0xff]
  %v1959 = vld [vmem:[%s1674 + $0x141] sm:$0xff]
  %v1960 = vld [vmem:[%s1674 + $0x151] sm:$0xff]
  %v1961 = vld [vmem:[%s1674 + $0x159] sm:$0xff]
  %v1962 = vld [vmem:[%s1674 + $0x169] sm:$0xff]
  %v1963 = vld [vmem:[%s1674 + $0x171] sm:$0xff]
  %v1964 = vld [vmem:[%s1674 + $0x1b1] sm:$0xff]
  %v1965 = vld [vmem:[%s1674 + $0x1b9] sm:$0xff]
  %v1966 = vld [vmem:[%s1674 + $0x1c9] sm:$0xff]
  %v1967 = vld [vmem:[%s1674 + $0x1d1] sm:$0xff]
  %v1968 = vld [vmem:[%s1674 + $0x1e1] sm:$0xff]
  %v1969 = vld [vmem:[%s1674 + $0x1e9] sm:$0xff]
  %v1970 = vld [vmem:[%s1674 + $0x1f9] sm:$0xff]
  %v1971 = vld [vmem:[%s1674 + $0x201] sm:$0xff]
  %v1972 = vld [vmem:[%s1674 + $0x211] sm:$0xff]
  %v1973 = vld [vmem:[%s1674 + $0x219] sm:$0xff]
  %v1974 = vld [vmem:[%s1674 + $0x229] sm:$0xff]
  %v1975 = vld [vmem:[%s1674 + $0x231] sm:$0xff]
  %v1976 = vld [vmem:[%s1674 + $0x241] sm:$0xff]
  %v1977 = vld [vmem:[%s1674 + $0x249] sm:$0xff]
  %v1978 = vld [vmem:[%s1674 + $0x259] sm:$0xff]
  %v1979 = vld [vmem:[%s1674 + $0x261] sm:$0xff]
  %v1980 = vld [vmem:[%s1674 + $0x271] sm:$0xff]
  %v1981 = vld [vmem:[%s1674 + $0x279] sm:$0xff]
  %v1982 = vld [vmem:[%s1674 + $0x289] sm:$0xff]
  %v1983 = vld [vmem:[%s1674 + $0x291] sm:$0xff]
  %v1984 = vld [vmem:[%s1674 + $0x2a1] sm:$0xff]
  %v1985 = vld [vmem:[%s1674 + $0x2a9] sm:$0xff]
  %v1986 = vld [vmem:[%s1674 + $0x2b9] sm:$0xff]
  %v1987 = vld [vmem:[%s1674 + $0x2c1] sm:$0xff]
  %v1988 = vld [vmem:[%s1674 + $0x2d1] sm:$0xff]
  %v1989 = vld [vmem:[%s1674 + $0x2d9] sm:$0xff]
  %v1990 = vld [vmem:[%s1674 + $0x2e9] sm:$0xff]
  %v1991 = vld [vmem:[%s1674 + $0x2f1] sm:$0xff]
  %v1992 = vld [vmem:[%s1674 + $0x301] sm:$0xff]
  %v1993 = vld [vmem:[%s1674 + $0x309] sm:$0xff]
  %v1994 = vld [vmem:[%s1674 + $0x319] sm:$0xff]
  %v1995 = vld [vmem:[%s1674 + $0x321] sm:$0xff]
  %v1996 = vpack.c.bf16 %v1933, %v1932
  %v1997 = vpack.c.bf16 %v1935, %v1934
  %v1998 = vpack.c.bf16 %v1937, %v1936
  %v1999 = vpack.c.bf16 %v1939, %v1938
  %v2000 = vpack.c.bf16 %v1941, %v1940
  %v2001 = vpack.c.bf16 %v1943, %v1942
  %v2002 = vpack.c.bf16 %v1945, %v1944
  %v2003 = vpack.c.bf16 %v1947, %v1946
  %v2004 = vpack.c.bf16 %v1949, %v1948
  %v2005 = vpack.c.bf16 %v1951, %v1950
  %v2006 = vpack.c.bf16 %v1953, %v1952
  %v2007 = vpack.c.bf16 %v1955, %v1954
  %v2008 = vpack.c.bf16 %v1957, %v1956
  %v2009 = vpack.c.bf16 %v1959, %v1958
  %v2010 = vpack.c.bf16 %v1961, %v1960
  %v2011 = vpack.c.bf16 %v1963, %v1962
  %v2012 = vpack.c.bf16 %v1965, %v1964
  %v2013 = vpack.c.bf16 %v1967, %v1966
  %v2014 = vpack.c.bf16 %v1969, %v1968
  %v2015 = vpack.c.bf16 %v1971, %v1970
  %v2016 = vpack.c.bf16 %v1973, %v1972
  %v2017 = vpack.c.bf16 %v1975, %v1974
  %v2018 = vpack.c.bf16 %v1977, %v1976
  %v2019 = vpack.c.bf16 %v1979, %v1978
  %v2020 = vpack.c.bf16 %v1981, %v1980
  %v2021 = vpack.c.bf16 %v1983, %v1982
  %v2022 = vpack.c.bf16 %v1985, %v1984
  %v2023 = vpack.c.bf16 %v1987, %v1986
  %v2024 = vpack.c.bf16 %v1989, %v1988
  %v2025 = vpack.c.bf16 %v1991, %v1990
  %v2026 = vpack.c.bf16 %v1993, %v1992
  %v2027 = vpack.c.bf16 %v1995, %v1994
  %2060 = vrot.lane.b32.xlu0 %v1996, 28
  %v2061 = vpop.permute.xlu0 %2060
  %2062 = vrot.lane.b32.xlu0 %v1997, 28
  %v2063 = vpop.permute.xlu0 %2062
  %2064 = vrot.lane.b32.xlu0 %v1998, 28
  %v2065 = vpop.permute.xlu0 %2064
  %2066 = vrot.lane.b32.xlu0 %v1999, 28
  %v2067 = vpop.permute.xlu0 %2066
  %2068 = vrot.lane.b32.xlu0 %v2000, 28
  %v2069 = vpop.permute.xlu0 %2068
  %2070 = vrot.lane.b32.xlu0 %v2001, 28
  %v2071 = vpop.permute.xlu0 %2070
  %2072 = vrot.lane.b32.xlu0 %v2002, 28
  %v2073 = vpop.permute.xlu0 %2072
  %2074 = vrot.lane.b32.xlu0 %v2003, 28
  %v2075 = vpop.permute.xlu0 %2074
  %2076 = vrot.lane.b32.xlu0 %v2004, 28
  %v2077 = vpop.permute.xlu0 %2076
  %2078 = vrot.lane.b32.xlu0 %v2005, 28
  %v2079 = vpop.permute.xlu0 %2078
  %2080 = vrot.lane.b32.xlu0 %v2006, 28
  %v2081 = vpop.permute.xlu0 %2080
  %2082 = vrot.lane.b32.xlu0 %v2007, 28
  %v2083 = vpop.permute.xlu0 %2082
  %2084 = vrot.lane.b32.xlu0 %v2008, 28
  %v2085 = vpop.permute.xlu0 %2084
  %2086 = vrot.lane.b32.xlu0 %v2009, 28
  %v2087 = vpop.permute.xlu0 %2086
  %2088 = vrot.lane.b32.xlu0 %v2010, 28
  %v2089 = vpop.permute.xlu0 %2088
  %2090 = vrot.lane.b32.xlu0 %v2011, 28
  %v2091 = vpop.permute.xlu0 %2090
  %2092 = vrot.lane.b32.xlu0 %v2012, 28
  %v2093 = vpop.permute.xlu0 %2092
  %2094 = vrot.lane.b32.xlu0 %v2013, 28
  %v2095 = vpop.permute.xlu0 %2094
  %2096 = vrot.lane.b32.xlu0 %v2014, 28
  %v2097 = vpop.permute.xlu0 %2096
  %2098 = vrot.lane.b32.xlu0 %v2015, 28
  %v2099 = vpop.permute.xlu0 %2098
  %2100 = vrot.lane.b32.xlu0 %v2016, 28
  %v2101 = vpop.permute.xlu0 %2100
  %2102 = vrot.lane.b32.xlu0 %v2017, 28
  %v2103 = vpop.permute.xlu0 %2102
  %2104 = vrot.lane.b32.xlu0 %v2018, 28
  %v2105 = vpop.permute.xlu0 %2104
  %2106 = vrot.lane.b32.xlu0 %v2019, 28
  %v2107 = vpop.permute.xlu0 %2106
  %2108 = vrot.lane.b32.xlu0 %v2020, 28
  %v2109 = vpop.permute.xlu0 %2108
  %2110 = vrot.lane.b32.xlu0 %v2021, 28
  %v2111 = vpop.permute.xlu0 %2110
  %2112 = vrot.lane.b32.xlu0 %v2022, 28
  %v2113 = vpop.permute.xlu0 %2112
  %2114 = vrot.lane.b32.xlu0 %v2023, 28
  %v2115 = vpop.permute.xlu0 %2114
  %2116 = vrot.lane.b32.xlu0 %v2024, 28
  %v2117 = vpop.permute.xlu0 %2116
  %2118 = vrot.lane.b32.xlu0 %v2025, 28
  %v2119 = vpop.permute.xlu0 %2118
  %2120 = vrot.lane.b32.xlu0 %v2026, 28
  %v2121 = vpop.permute.xlu0 %2120
  %2122 = vrot.lane.b32.xlu0 %v2027, 28
  %v2123 = vpop.permute.xlu0 %2122
  %vm2156 = vcmask 261344
  %2157 = vst.msk [vmem:[#allocation3] sm:$0xff] %vm2156, %v2061
  %2158 = vst.msk [vmem:[#allocation3 + $0x8] sm:$0xff] %vm2156, %v2063
  %2159 = vst.msk [vmem:[#allocation3 + $0x10] sm:$0xff] %vm2156, %v2065
  %2160 = vst.msk [vmem:[#allocation3 + $0x18] sm:$0xff] %vm2156, %v2067
  %2161 = vst.msk [vmem:[#allocation3 + $0x20] sm:$0xff] %vm2156, %v2069
  %2162 = vst.msk [vmem:[#allocation3 + $0x28] sm:$0xff] %vm2156, %v2071
  %2163 = vst.msk [vmem:[#allocation3 + $0x30] sm:$0xff] %vm2156, %v2073
  %2164 = vst.msk [vmem:[#allocation3 + $0x38] sm:$0xff] %vm2156, %v2075
  %2165 = vst.msk [vmem:[#allocation3 + $0x40] sm:$0xff] %vm2156, %v2077
  %2166 = vst.msk [vmem:[#allocation3 + $0x48] sm:$0xff] %vm2156, %v2079
  %2167 = vst.msk [vmem:[#allocation3 + $0x50] sm:$0xff] %vm2156, %v2081
  %2168 = vst.msk [vmem:[#allocation3 + $0x58] sm:$0xff] %vm2156, %v2083
  %2169 = vst.msk [vmem:[#allocation3 + $0x60] sm:$0xff] %vm2156, %v2085
  %2170 = vst.msk [vmem:[#allocation3 + $0x68] sm:$0xff] %vm2156, %v2087
  %2171 = vst.msk [vmem:[#allocation3 + $0x70] sm:$0xff] %vm2156, %v2089
  %2172 = vst.msk [vmem:[#allocation3 + $0x78] sm:$0xff] %vm2156, %v2091
  %2173 = vst.msk [vmem:[#allocation3 + $0x80] sm:$0xff] %vm2156, %v2093
  %2174 = vst.msk [vmem:[#allocation3 + $0x88] sm:$0xff] %vm2156, %v2095
  %2175 = vst.msk [vmem:[#allocation3 + $0x90] sm:$0xff] %vm2156, %v2097
  %2176 = vst.msk [vmem:[#allocation3 + $0x98] sm:$0xff] %vm2156, %v2099
  %2177 = vst.msk [vmem:[#allocation3 + $0xa0] sm:$0xff] %vm2156, %v2101
  %2178 = vst.msk [vmem:[#allocation3 + $0xa8] sm:$0xff] %vm2156, %v2103
  %2179 = vst.msk [vmem:[#allocation3 + $0xb0] sm:$0xff] %vm2156, %v2105
  %2180 = vst.msk [vmem:[#allocation3 + $0xb8] sm:$0xff] %vm2156, %v2107
  %2181 = vst.msk [vmem:[#allocation3 + $0xc0] sm:$0xff] %vm2156, %v2109
  %2182 = vst.msk [vmem:[#allocation3 + $0xc8] sm:$0xff] %vm2156, %v2111
  %2183 = vst.msk [vmem:[#allocation3 + $0xd0] sm:$0xff] %vm2156, %v2113
  %2184 = vst.msk [vmem:[#allocation3 + $0xd8] sm:$0xff] %vm2156, %v2115
  %2185 = vst.msk [vmem:[#allocation3 + $0xe0] sm:$0xff] %vm2156, %v2117
  %2186 = vst.msk [vmem:[#allocation3 + $0xe8] sm:$0xff] %vm2156, %v2119
  %2187 = vst.msk [vmem:[#allocation3 + $0xf0] sm:$0xff] %vm2156, %v2121
  %2188 = vst.msk [vmem:[#allocation3 + $0xf8] sm:$0xff] %vm2156, %v2123
  %v2189 = vld [vmem:[%s1674 + $0x2] sm:$0xff]
  %v2190 = vld [vmem:[%s1674 + $0xa] sm:$0xff]
  %v2191 = vld [vmem:[%s1674 + $0x1a] sm:$0xff]
  %v2192 = vld [vmem:[%s1674 + $0x22] sm:$0xff]
  %v2193 = vld [vmem:[%s1674 + $0x32] sm:$0xff]
  %v2194 = vld [vmem:[%s1674 + $0x3a] sm:$0xff]
  %v2195 = vld [vmem:[%s1674 + $0x4a] sm:$0xff]
  %v2196 = vld [vmem:[%s1674 + $0x52] sm:$0xff]
  %v2197 = vld [vmem:[%s1674 + $0x62] sm:$0xff]
  %v2198 = vld [vmem:[%s1674 + $0x6a] sm:$0xff]
  %v2199 = vld [vmem:[%s1674 + $0x7a] sm:$0xff]
  %v2200 = vld [vmem:[%s1674 + $0x82] sm:$0xff]
  %v2201 = vld [vmem:[%s1674 + $0x92] sm:$0xff]
  %v2202 = vld [vmem:[%s1674 + $0x9a] sm:$0xff]
  %v2203 = vld [vmem:[%s1674 + $0xaa] sm:$0xff]
  %v2204 = vld [vmem:[%s1674 + $0xb2] sm:$0xff]
  %v2205 = vld [vmem:[%s1674 + $0xc2] sm:$0xff]
  %v2206 = vld [vmem:[%s1674 + $0xca] sm:$0xff]
  %v2207 = vld [vmem:[%s1674 + $0xda] sm:$0xff]
  %v2208 = vld [vmem:[%s1674 + $0xe2] sm:$0xff]
  %v2209 = vld [vmem:[%s1674 + $0xf2] sm:$0xff]
  %v2210 = vld [vmem:[%s1674 + $0xfa] sm:$0xff]
  %v2211 = vld [vmem:[%s1674 + $0x10a] sm:$0xff]
  %v2212 = vld [vmem:[%s1674 + $0x112] sm:$0xff]
  %v2213 = vld [vmem:[%s1674 + $0x122] sm:$0xff]
  %v2214 = vld [vmem:[%s1674 + $0x12a] sm:$0xff]
  %v2215 = vld [vmem:[%s1674 + $0x13a] sm:$0xff]
  %v2216 = vld [vmem:[%s1674 + $0x142] sm:$0xff]
  %v2217 = vld [vmem:[%s1674 + $0x152] sm:$0xff]
  %v2218 = vld [vmem:[%s1674 + $0x15a] sm:$0xff]
  %v2219 = vld [vmem:[%s1674 + $0x16a] sm:$0xff]
  %v2220 = vld [vmem:[%s1674 + $0x172] sm:$0xff]
  %v2221 = vld [vmem:[%s1674 + $0x1b2] sm:$0xff]
  %v2222 = vld [vmem:[%s1674 + $0x1ba] sm:$0xff]
  %v2223 = vld [vmem:[%s1674 + $0x1ca] sm:$0xff]
  %v2224 = vld [vmem:[%s1674 + $0x1d2] sm:$0xff]
  %v2225 = vld [vmem:[%s1674 + $0x1e2] sm:$0xff]
  %v2226 = vld [vmem:[%s1674 + $0x1ea] sm:$0xff]
  %v2227 = vld [vmem:[%s1674 + $0x1fa] sm:$0xff]
  %v2228 = vld [vmem:[%s1674 + $0x202] sm:$0xff]
  %v2229 = vld [vmem:[%s1674 + $0x212] sm:$0xff]
  %v2230 = vld [vmem:[%s1674 + $0x21a] sm:$0xff]
  %v2231 = vld [vmem:[%s1674 + $0x22a] sm:$0xff]
  %v2232 = vld [vmem:[%s1674 + $0x232] sm:$0xff]
  %v2233 = vld [vmem:[%s1674 + $0x242] sm:$0xff]
  %v2234 = vld [vmem:[%s1674 + $0x24a] sm:$0xff]
  %v2235 = vld [vmem:[%s1674 + $0x25a] sm:$0xff]
  %v2236 = vld [vmem:[%s1674 + $0x262] sm:$0xff]
  %v2237 = vld [vmem:[%s1674 + $0x272] sm:$0xff]
  %v2238 = vld [vmem:[%s1674 + $0x27a] sm:$0xff]
  %v2239 = vld [vmem:[%s1674 + $0x28a] sm:$0xff]
  %v2240 = vld [vmem:[%s1674 + $0x292] sm:$0xff]
  %v2241 = vld [vmem:[%s1674 + $0x2a2] sm:$0xff]
  %v2242 = vld [vmem:[%s1674 + $0x2aa] sm:$0xff]
  %v2243 = vld [vmem:[%s1674 + $0x2ba] sm:$0xff]
  %v2244 = vld [vmem:[%s1674 + $0x2c2] sm:$0xff]
  %v2245 = vld [vmem:[%s1674 + $0x2d2] sm:$0xff]
  %v2246 = vld [vmem:[%s1674 + $0x2da] sm:$0xff]
  %v2247 = vld [vmem:[%s1674 + $0x2ea] sm:$0xff]
  %v2248 = vld [vmem:[%s1674 + $0x2f2] sm:$0xff]
  %v2249 = vld [vmem:[%s1674 + $0x302] sm:$0xff]
  %v2250 = vld [vmem:[%s1674 + $0x30a] sm:$0xff]
  %v2251 = vld [vmem:[%s1674 + $0x31a] sm:$0xff]
  %v2252 = vld [vmem:[%s1674 + $0x322] sm:$0xff]
  %v2253 = vpack.c.bf16 %v2190, %v2189
  %v2254 = vpack.c.bf16 %v2192, %v2191
  %v2255 = vpack.c.bf16 %v2194, %v2193
  %v2256 = vpack.c.bf16 %v2196, %v2195
  %v2257 = vpack.c.bf16 %v2198, %v2197
  %v2258 = vpack.c.bf16 %v2200, %v2199
  %v2259 = vpack.c.bf16 %v2202, %v2201
  %v2260 = vpack.c.bf16 %v2204, %v2203
  %v2261 = vpack.c.bf16 %v2206, %v2205
  %v2262 = vpack.c.bf16 %v2208, %v2207
  %v2263 = vpack.c.bf16 %v2210, %v2209
  %v2264 = vpack.c.bf16 %v2212, %v2211
  %v2265 = vpack.c.bf16 %v2214, %v2213
  %v2266 = vpack.c.bf16 %v2216, %v2215
  %v2267 = vpack.c.bf16 %v2218, %v2217
  %v2268 = vpack.c.bf16 %v2220, %v2219
  %v2269 = vpack.c.bf16 %v2222, %v2221
  %v2270 = vpack.c.bf16 %v2224, %v2223
  %v2271 = vpack.c.bf16 %v2226, %v2225
  %v2272 = vpack.c.bf16 %v2228, %v2227
  %v2273 = vpack.c.bf16 %v2230, %v2229
  %v2274 = vpack.c.bf16 %v2232, %v2231
  %v2275 = vpack.c.bf16 %v2234, %v2233
  %v2276 = vpack.c.bf16 %v2236, %v2235
  %v2277 = vpack.c.bf16 %v2238, %v2237
  %v2278 = vpack.c.bf16 %v2240, %v2239
  %v2279 = vpack.c.bf16 %v2242, %v2241
  %v2280 = vpack.c.bf16 %v2244, %v2243
  %v2281 = vpack.c.bf16 %v2246, %v2245
  %v2282 = vpack.c.bf16 %v2248, %v2247
  %v2283 = vpack.c.bf16 %v2250, %v2249
  %v2284 = vpack.c.bf16 %v2252, %v2251
  %2317 = vrot.lane.b32.xlu0 %v2253, 32
  %v2318 = vpop.permute.xlu0 %2317
  %2319 = vrot.lane.b32.xlu0 %v2254, 32
  %v2320 = vpop.permute.xlu0 %2319
  %2321 = vrot.lane.b32.xlu0 %v2255, 32
  %v2322 = vpop.permute.xlu0 %2321
  %2323 = vrot.lane.b32.xlu0 %v2256, 32
  %v2324 = vpop.permute.xlu0 %2323
  %2325 = vrot.lane.b32.xlu0 %v2257, 32
  %v2326 = vpop.permute.xlu0 %2325
  %2327 = vrot.lane.b32.xlu0 %v2258, 32
  %v2328 = vpop.permute.xlu0 %2327
  %2329 = vrot.lane.b32.xlu0 %v2259, 32
  %v2330 = vpop.permute.xlu0 %2329
  %2331 = vrot.lane.b32.xlu0 %v2260, 32
  %v2332 = vpop.permute.xlu0 %2331
  %2333 = vrot.lane.b32.xlu0 %v2261, 32
  %v2334 = vpop.permute.xlu0 %2333
  %2335 = vrot.lane.b32.xlu0 %v2262, 32
  %v2336 = vpop.permute.xlu0 %2335
  %2337 = vrot.lane.b32.xlu0 %v2263, 32
  %v2338 = vpop.permute.xlu0 %2337
  %2339 = vrot.lane.b32.xlu0 %v2264, 32
  %v2340 = vpop.permute.xlu0 %2339
  %2341 = vrot.lane.b32.xlu0 %v2265, 32
  %v2342 = vpop.permute.xlu0 %2341
  %2343 = vrot.lane.b32.xlu0 %v2266, 32
  %v2344 = vpop.permute.xlu0 %2343
  %2345 = vrot.lane.b32.xlu0 %v2267, 32
  %v2346 = vpop.permute.xlu0 %2345
  %2347 = vrot.lane.b32.xlu0 %v2268, 32
  %v2348 = vpop.permute.xlu0 %2347
  %2349 = vrot.lane.b32.xlu0 %v2269, 32
  %v2350 = vpop.permute.xlu0 %2349
  %2351 = vrot.lane.b32.xlu0 %v2270, 32
  %v2352 = vpop.permute.xlu0 %2351
  %2353 = vrot.lane.b32.xlu0 %v2271, 32
  %v2354 = vpop.permute.xlu0 %2353
  %2355 = vrot.lane.b32.xlu0 %v2272, 32
  %v2356 = vpop.permute.xlu0 %2355
  %2357 = vrot.lane.b32.xlu0 %v2273, 32
  %v2358 = vpop.permute.xlu0 %2357
  %2359 = vrot.lane.b32.xlu0 %v2274, 32
  %v2360 = vpop.permute.xlu0 %2359
  %2361 = vrot.lane.b32.xlu0 %v2275, 32
  %v2362 = vpop.permute.xlu0 %2361
  %2363 = vrot.lane.b32.xlu0 %v2276, 32
  %v2364 = vpop.permute.xlu0 %2363
  %2365 = vrot.lane.b32.xlu0 %v2277, 32
  %v2366 = vpop.permute.xlu0 %2365
  %2367 = vrot.lane.b32.xlu0 %v2278, 32
  %v2368 = vpop.permute.xlu0 %2367
  %2369 = vrot.lane.b32.xlu0 %v2279, 32
  %v2370 = vpop.permute.xlu0 %2369
  %2371 = vrot.lane.b32.xlu0 %v2280, 32
  %v2372 = vpop.permute.xlu0 %2371
  %2373 = vrot.lane.b32.xlu0 %v2281, 32
  %v2374 = vpop.permute.xlu0 %2373
  %2375 = vrot.lane.b32.xlu0 %v2282, 32
  %v2376 = vpop.permute.xlu0 %2375
  %2377 = vrot.lane.b32.xlu0 %v2283, 32
  %v2378 = vpop.permute.xlu0 %2377
  %2379 = vrot.lane.b32.xlu0 %v2284, 32
  %v2380 = vpop.permute.xlu0 %2379
  %vm2413 = vcmask 294144
  %2414 = vst.msk [vmem:[#allocation3] sm:$0xff] %vm2413, %v2318
  %2415 = vst.msk [vmem:[#allocation3 + $0x8] sm:$0xff] %vm2413, %v2320
  %2416 = vst.msk [vmem:[#allocation3 + $0x10] sm:$0xff] %vm2413, %v2322
  %2417 = vst.msk [vmem:[#allocation3 + $0x18] sm:$0xff] %vm2413, %v2324
  %2418 = vst.msk [vmem:[#allocation3 + $0x20] sm:$0xff] %vm2413, %v2326
  %2419 = vst.msk [vmem:[#allocation3 + $0x28] sm:$0xff] %vm2413, %v2328
  %2420 = vst.msk [vmem:[#allocation3 + $0x30] sm:$0xff] %vm2413, %v2330
  %2421 = vst.msk [vmem:[#allocation3 + $0x38] sm:$0xff] %vm2413, %v2332
  %2422 = vst.msk [vmem:[#allocation3 + $0x40] sm:$0xff] %vm2413, %v2334
  %2423 = vst.msk [vmem:[#allocation3 + $0x48] sm:$0xff] %vm2413, %v2336
  %2424 = vst.msk [vmem:[#allocation3 + $0x50] sm:$0xff] %vm2413, %v2338
  %2425 = vst.msk [vmem:[#allocation3 + $0x58] sm:$0xff] %vm2413, %v2340
  %2426 = vst.msk [vmem:[#allocation3 + $0x60] sm:$0xff] %vm2413, %v2342
  %2427 = vst.msk [vmem:[#allocation3 + $0x68] sm:$0xff] %vm2413, %v2344
  %2428 = vst.msk [vmem:[#allocation3 + $0x70] sm:$0xff] %vm2413, %v2346
  %2429 = vst.msk [vmem:[#allocation3 + $0x78] sm:$0xff] %vm2413, %v2348
  %2430 = vst.msk [vmem:[#allocation3 + $0x80] sm:$0xff] %vm2413, %v2350
  %2431 = vst.msk [vmem:[#allocation3 + $0x88] sm:$0xff] %vm2413, %v2352
  %2432 = vst.msk [vmem:[#allocation3 + $0x90] sm:$0xff] %vm2413, %v2354
  %2433 = vst.msk [vmem:[#allocation3 + $0x98] sm:$0xff] %vm2413, %v2356
  %2434 = vst.msk [vmem:[#allocation3 + $0xa0] sm:$0xff] %vm2413, %v2358
  %2435 = vst.msk [vmem:[#allocation3 + $0xa8] sm:$0xff] %vm2413, %v2360
  %2436 = vst.msk [vmem:[#allocation3 + $0xb0] sm:$0xff] %vm2413, %v2362
  %2437 = vst.msk [vmem:[#allocation3 + $0xb8] sm:$0xff] %vm2413, %v2364
  %2438 = vst.msk [vmem:[#allocation3 + $0xc0] sm:$0xff] %vm2413, %v2366
  %2439 = vst.msk [vmem:[#allocation3 + $0xc8] sm:$0xff] %vm2413, %v2368
  %2440 = vst.msk [vmem:[#allocation3 + $0xd0] sm:$0xff] %vm2413, %v2370
  %2441 = vst.msk [vmem:[#allocation3 + $0xd8] sm:$0xff] %vm2413, %v2372
  %2442 = vst.msk [vmem:[#allocation3 + $0xe0] sm:$0xff] %vm2413, %v2374
  %2443 = vst.msk [vmem:[#allocation3 + $0xe8] sm:$0xff] %vm2413, %v2376
  %2444 = vst.msk [vmem:[#allocation3 + $0xf0] sm:$0xff] %vm2413, %v2378
  %2445 = vst.msk [vmem:[#allocation3 + $0xf8] sm:$0xff] %vm2413, %v2380
  %v2446 = vld [vmem:[#allocation3] sm:$0xff]
  %v2447 = vld [vmem:[#allocation3 + $0x8] sm:$0xff]
  %v2448 = vld [vmem:[#allocation3 + $0x10] sm:$0xff]
  %v2449 = vld [vmem:[#allocation3 + $0x18] sm:$0xff]
  %v2450 = vld [vmem:[#allocation3 + $0x20] sm:$0xff]
  %v2451 = vld [vmem:[#allocation3 + $0x28] sm:$0xff]
  %v2452 = vld [vmem:[#allocation3 + $0x30] sm:$0xff]
  %v2453 = vld [vmem:[#allocation3 + $0x38] sm:$0xff]
  %v2454 = vld [vmem:[#allocation3 + $0x40] sm:$0xff]
  %v2455 = vld [vmem:[#allocation3 + $0x48] sm:$0xff]
  %v2456 = vld [vmem:[#allocation3 + $0x50] sm:$0xff]
  %v2457 = vld [vmem:[#allocation3 + $0x58] sm:$0xff]
  %v2458 = vld [vmem:[#allocation3 + $0x60] sm:$0xff]
  %v2459 = vld [vmem:[#allocation3 + $0x68] sm:$0xff]
  %v2460 = vld [vmem:[#allocation3 + $0x70] sm:$0xff]
  %v2461 = vld [vmem:[#allocation3 + $0x78] sm:$0xff]
  %v2462 = vld [vmem:[#allocation3 + $0x80] sm:$0xff]
  %v2463 = vld [vmem:[#allocation3 + $0x88] sm:$0xff]
  %v2464 = vld [vmem:[#allocation3 + $0x90] sm:$0xff]
  %v2465 = vld [vmem:[#allocation3 + $0x98] sm:$0xff]
  %v2466 = vld [vmem:[#allocation3 + $0xa0] sm:$0xff]
  %v2467 = vld [vmem:[#allocation3 + $0xa8] sm:$0xff]
  %v2468 = vld [vmem:[#allocation3 + $0xb0] sm:$0xff]
  %v2469 = vld [vmem:[#allocation3 + $0xb8] sm:$0xff]
  %v2470 = vld [vmem:[#allocation3 + $0xc0] sm:$0xff]
  %v2471 = vld [vmem:[#allocation3 + $0xc8] sm:$0xff]
  %v2472 = vld [vmem:[#allocation3 + $0xd0] sm:$0xff]
  %v2473 = vld [vmem:[#allocation3 + $0xd8] sm:$0xff]
  %v2474 = vld [vmem:[#allocation3 + $0xe0] sm:$0xff]
  %v2475 = vld [vmem:[#allocation3 + $0xe8] sm:$0xff]
  %v2476 = vld [vmem:[#allocation3 + $0xf0] sm:$0xff]
  %v2477 = vld [vmem:[#allocation3 + $0xf8] sm:$0xff]
  %v2478 = vld [vmem:[%s1] sm:$0xf]
  %v2479 = vld [vmem:[%s1 + $0x4] sm:$0xf]
  %v2480 = vld [vmem:[%s1 + $0x8] sm:$0xf]
  %v2481 = vld [vmem:[%s1 + $0xc] sm:$0xf]
  %v2482 = vld [vmem:[%s1 + $0x10] sm:$0x3]
  %v2488 = vunpack.c.l.b16 %v2478
  %v2489 = vunpack.c.l.b16 %v2479
  %v2490 = vunpack.c.l.b16 %v2480
  %v2491 = vunpack.c.l.b16 %v2481
  %v2492 = vunpack.c.l.b16 %v2482
  %v2493 = vpack.c.b16 %v2489, %v2488
  %v2494 = vpack.c.b16 %v2491, %v2490
  %v2495 = vpack.c.b16 %v2492, %v2492
  %vm2498 = vcmask 293888
  %v2500 = vsel %vm2498, %v2446, 0
  %v2503 = vsel %vm2498, %v2447, 0
  %v2506 = vsel %vm2498, %v2448, 0
  %v2509 = vsel %vm2498, %v2449, 0
  %v2512 = vsel %vm2498, %v2450, 0
  %v2515 = vsel %vm2498, %v2451, 0
  %v2518 = vsel %vm2498, %v2452, 0
  %v2521 = vsel %vm2498, %v2453, 0
  %v2524 = vsel %vm2498, %v2454, 0
  %v2527 = vsel %vm2498, %v2455, 0
  %v2530 = vsel %vm2498, %v2456, 0
  %v2533 = vsel %vm2498, %v2457, 0
  %v2536 = vsel %vm2498, %v2458, 0
  %v2539 = vsel %vm2498, %v2459, 0
  %v2542 = vsel %vm2498, %v2460, 0
  %v2545 = vsel %vm2498, %v2461, 0
  %v2548 = vsel %vm2498, %v2462, 0
  %v2551 = vsel %vm2498, %v2463, 0
  %v2554 = vsel %vm2498, %v2464, 0
  %v2557 = vsel %vm2498, %v2465, 0
  %v2560 = vsel %vm2498, %v2466, 0
  %v2563 = vsel %vm2498, %v2467, 0
  %v2566 = vsel %vm2498, %v2468, 0
  %v2569 = vsel %vm2498, %v2469, 0
  %v2572 = vsel %vm2498, %v2470, 0
  %v2575 = vsel %vm2498, %v2471, 0
  %v2578 = vsel %vm2498, %v2472, 0
  %v2581 = vsel %vm2498, %v2473, 0
  %v2584 = vsel %vm2498, %v2474, 0
  %v2587 = vsel %vm2498, %v2475, 0
  %v2590 = vsel %vm2498, %v2476, 0
  %v2593 = vsel %vm2498, %v2477, 0
  %vm2595 = vcmask 1041408
  %v2597 = vsel %vm2595, %v2495, 0
  %2599 = vmatprep.subr.bf16.mxu0 0
  %2600 = vmatpush1.bf16.msra.mxu0 %v2493
  %2601 = vmatprep.subr.bf16.mxu0 0
  %2602 = vmatpush1.bf16.msra.mxu0 %v2494
  %2603 = vmatprep.subr.bf16.mxu0 0
  %2604 = vmatpush1.bf16.msra.mxu0 %v2597
  %2605 = vmatprep.subr.bf16.mxu0 0
  %2606 = vmatpush1.bf16.msra.mxu0 0
  %2607 = vmatprep.subr.bf16.mxu0 0
  %2608 = vmatpush1.bf16.msra.mxu0 0
  %2609 = vmatprep.subr.bf16.mxu0 0
  %2610 = vmatpush1.bf16.msra.mxu0 0
  %2611 = vmatprep.subr.bf16.mxu0 0
  %2612 = vmatpush1.bf16.msra.mxu0 0
  %2613 = vmatprep.subr.bf16.mxu0 0
  %2614 = vmatpush1.bf16.msra.mxu0 0
  %2615 = vmatprep.subr.bf16.mxu0 0
  %2616 = vmatpush1.bf16.msra.mxu0 0
  %2617 = vmatprep.subr.bf16.mxu0 0
  %2618 = vmatpush1.bf16.msra.mxu0 0
  %2619 = vmatprep.subr.bf16.mxu0 0
  %2620 = vmatpush1.bf16.msra.mxu0 0
  %2621 = vmatprep.subr.bf16.mxu0 0
  %2622 = vmatpush1.bf16.msra.mxu0 0
  %2623 = vmatprep.subr.bf16.mxu0 0
  %2624 = vmatpush1.bf16.msra.mxu0 0
  %2625 = vmatprep.subr.bf16.mxu0 0
  %2626 = vmatpush1.bf16.msra.mxu0 0
  %2627 = vmatprep.subr.bf16.mxu0 0
  %2628 = vmatpush1.bf16.msra.mxu0 0
  %2629 = vmatprep.subr.bf16.mxu0 0
  %2630 = vmatpush1.bf16.msra.mxu0 0
  %2631 = vmatprep.mubr.bf16.mxu0 0
  %2632 = vmatmul.mubr.bf16.gmra.mrb[0].mxu0 %v2500
  %v2633 = vpop.f32.mrb[0].mxu0
  %v2634 = vadd.f32 0.0, %v2633
  %v2635 = vpop.f32.mrb[0].mxu0
  %v2636 = vpop.f32.mrb[0].mxu0
  %v2637 = vadd.f32 0.0, %v2636
  %v2638 = vpop.f32.mrb[0].mxu0
  %2639 = vmatprep.mubr.bf16.mxu0 0
  %2640 = vmatmul.mubr.bf16.gmra.mrb[0].mxu0 %v2503
  %v2641 = vpop.f32.mrb[0].mxu0
  %v2642 = vadd.f32 0.0, %v2641
  %v2643 = vpop.f32.mrb[0].mxu0
  %v2644 = vpop.f32.mrb[0].mxu0
  %v2645 = vadd.f32 0.0, %v2644
  %v2646 = vpop.f32.mrb[0].mxu0
  %2647 = vmatprep.mubr.bf16.mxu0 0
  %2648 = vmatmul.mubr.bf16.gmra.mrb[0].mxu0 %v2506
  %v2649 = vpop.f32.mrb[0].mxu0
  %v2650 = vadd.f32 0.0, %v2649
  %v2651 = vpop.f32.mrb[0].mxu0
  %v2652 = vpop.f32.mrb[0].mxu0
  %v2653 = vadd.f32 0.0, %v2652
  %v2654 = vpop.f32.mrb[0].mxu0
  %2655 = vmatprep.mubr.bf16.mxu0 0
  %2656 = vmatmul.mubr.bf16.gmra.mrb[0].mxu0 %v2509
  %v2657 = vpop.f32.mrb[0].mxu0
  %v2658 = vadd.f32 0.0, %v2657
  %v2659 = vpop.f32.mrb[0].mxu0
  %v2660 = vpop.f32.mrb[0].mxu0
  %v2661 = vadd.f32 0.0, %v2660
  %v2662 = vpop.f32.mrb[0].mxu0
  %2663 = vmatprep.mubr.bf16.mxu0 0
  %2664 = vmatmul.mubr.bf16.gmra.mrb[0].mxu0 %v2512
  %v2665 = vpop.f32.mrb[0].mxu0
  %v2666 = vadd.f32 0.0, %v2665
  %v2667 = vpop.f32.mrb[0].mxu0
  %v2668 = vpop.f32.mrb[0].mxu0
  %v2669 = vadd.f32 0.0, %v2668
  %v2670 = vpop.f32.mrb[0].mxu0
  %2671 = vmatprep.mubr.bf16.mxu0 0
  %2672 = vmatmul.mubr.bf16.gmra.mrb[0].mxu0 %v2515
  %v2673 = vpop.f32.mrb[0].mxu0
  %v2674 = vadd.f32 0.0, %v2673
  %v2675 = vpop.f32.mrb[0].mxu0
  %v2676 = vpop.f32.mrb[0].mxu0
  %v2677 = vadd.f32 0.0, %v2676
  %v2678 = vpop.f32.mrb[0].mxu0
  %2679 = vmatprep.mubr.bf16.mxu0 0
  %2680 = vmatmul.mubr.bf16.gmra.mrb[0].mxu0 %v2518
  %v2681 = vpop.f32.mrb[0].mxu0
  %v2682 = vadd.f32 0.0, %v2681
  %v2683 = vpop.f32.mrb[0].mxu0
  %v2684 = vpop.f32.mrb[0].mxu0
  %v2685 = vadd.f32 0.0, %v2684
  %v2686 = vpop.f32.mrb[0].mxu0
  %2687 = vmatprep.mubr.bf16.mxu0 0
  %2688 = vmatmul.mubr.bf16.gmra.mrb[0].mxu0 %v2521
  %v2689 = vpop.f32.mrb[0].mxu0
  %v2690 = vadd.f32 0.0, %v2689
  %v2691 = vpop.f32.mrb[0].mxu0
  %v2692 = vpop.f32.mrb[0].mxu0
  %v2693 = vadd.f32 0.0, %v2692
  %v2694 = vpop.f32.mrb[0].mxu0
  %2695 = vmatprep.mubr.bf16.mxu0 0
  %2696 = vmatmul.mubr.bf16.gmra.mrb[0].mxu0 %v2524
  %v2697 = vpop.f32.mrb[0].mxu0
  %v2698 = vadd.f32 0.0, %v2697
  %v2699 = vpop.f32.mrb[0].mxu0
  %v2700 = vpop.f32.mrb[0].mxu0
  %v2701 = vadd.f32 0.0, %v2700
  %v2702 = vpop.f32.mrb[0].mxu0
  %2703 = vmatprep.mubr.bf16.mxu0 0
  %2704 = vmatmul.mubr.bf16.gmra.mrb[0].mxu0 %v2527
  %v2705 = vpop.f32.mrb[0].mxu0
  %v2706 = vadd.f32 0.0, %v2705
  %v2707 = vpop.f32.mrb[0].mxu0
  %v2708 = vpop.f32.mrb[0].mxu0
  %v2709 = vadd.f32 0.0, %v2708
  %v2710 = vpop.f32.mrb[0].mxu0
  %2711 = vmatprep.mubr.bf16.mxu0 0
  %2712 = vmatmul.mubr.bf16.gmra.mrb[0].mxu0 %v2530
  %v2713 = vpop.f32.mrb[0].mxu0
  %v2714 = vadd.f32 0.0, %v2713
  %v2715 = vpop.f32.mrb[0].mxu0
  %v2716 = vpop.f32.mrb[0].mxu0
  %v2717 = vadd.f32 0.0, %v2716
  %v2718 = vpop.f32.mrb[0].mxu0
  %2719 = vmatprep.mubr.bf16.mxu0 0
  %2720 = vmatmul.mubr.bf16.gmra.mrb[0].mxu0 %v2533
  %v2721 = vpop.f32.mrb[0].mxu0
  %v2722 = vadd.f32 0.0, %v2721
  %v2723 = vpop.f32.mrb[0].mxu0
  %v2724 = vpop.f32.mrb[0].mxu0
  %v2725 = vadd.f32 0.0, %v2724
  %v2726 = vpop.f32.mrb[0].mxu0
  %2727 = vmatprep.mubr.bf16.mxu0 0
  %2728 = vmatmul.mubr.bf16.gmra.mrb[0].mxu0 %v2536
  %v2729 = vpop.f32.mrb[0].mxu0
  %v2730 = vadd.f32 0.0, %v2729
  %v2731 = vpop.f32.mrb[0].mxu0
  %v2732 = vpop.f32.mrb[0].mxu0
  %v2733 = vadd.f32 0.0, %v2732
  %v2734 = vpop.f32.mrb[0].mxu0
  %2735 = vmatprep.mubr.bf16.mxu0 0
  %2736 = vmatmul.mubr.bf16.gmra.mrb[0].mxu0 %v2539
  %v2737 = vpop.f32.mrb[0].mxu0
  %v2738 = vadd.f32 0.0, %v2737
  %v2739 = vpop.f32.mrb[0].mxu0
  %v2740 = vpop.f32.mrb[0].mxu0
  %v2741 = vadd.f32 0.0, %v2740
  %v2742 = vpop.f32.mrb[0].mxu0
  %2743 = vmatprep.mubr.bf16.mxu0 0
  %2744 = vmatmul.mubr.bf16.gmra.mrb[0].mxu0 %v2542
  %v2745 = vpop.f32.mrb[0].mxu0
  %v2746 = vadd.f32 0.0, %v2745
  %v2747 = vpop.f32.mrb[0].mxu0
  %v2748 = vpop.f32.mrb[0].mxu0
  %v2749 = vadd.f32 0.0, %v2748
  %v2750 = vpop.f32.mrb[0].mxu0
  %2751 = vmatprep.mubr.bf16.mxu0 0
  %2752 = vmatmul.mubr.bf16.gmra.mrb[0].mxu0 %v2545
  %v2753 = vpop.f32.mrb[0].mxu0
  %v2754 = vadd.f32 0.0, %v2753
  %v2755 = vpop.f32.mrb[0].mxu0
  %v2756 = vpop.f32.mrb[0].mxu0
  %v2757 = vadd.f32 0.0, %v2756
  %v2758 = vpop.f32.mrb[0].mxu0
  %2759 = vmatprep.mubr.bf16.mxu0 0
  %2760 = vmatmul.mubr.bf16.gmra.mrb[0].mxu0 %v2548
  %v2761 = vpop.f32.mrb[0].mxu0
  %v2762 = vadd.f32 0.0, %v2761
  %v2763 = vpop.f32.mrb[0].mxu0
  %v2764 = vpop.f32.mrb[0].mxu0
  %v2765 = vadd.f32 0.0, %v2764
  %v2766 = vpop.f32.mrb[0].mxu0
  %2767 = vmatprep.mubr.bf16.mxu0 0
  %2768 = vmatmul.mubr.bf16.gmra.mrb[0].mxu0 %v2551
  %v2769 = vpop.f32.mrb[0].mxu0
  %v2770 = vadd.f32 0.0, %v2769
  %v2771 = vpop.f32.mrb[0].mxu0
  %v2772 = vpop.f32.mrb[0].mxu0
  %v2773 = vadd.f32 0.0, %v2772
  %v2774 = vpop.f32.mrb[0].mxu0
  %2775 = vmatprep.mubr.bf16.mxu0 0
  %2776 = vmatmul.mubr.bf16.gmra.mrb[0].mxu0 %v2554
  %v2777 = vpop.f32.mrb[0].mxu0
  %v2778 = vadd.f32 0.0, %v2777
  %v2779 = vpop.f32.mrb[0].mxu0
  %v2780 = vpop.f32.mrb[0].mxu0
  %v2781 = vadd.f32 0.0, %v2780
  %v2782 = vpop.f32.mrb[0].mxu0
  %2783 = vmatprep.mubr.bf16.mxu0 0
  %2784 = vmatmul.mubr.bf16.gmra.mrb[0].mxu0 %v2557
  %v2785 = vpop.f32.mrb[0].mxu0
  %v2786 = vadd.f32 0.0, %v2785
  %v2787 = vpop.f32.mrb[0].mxu0
  %v2788 = vpop.f32.mrb[0].mxu0
  %v2789 = vadd.f32 0.0, %v2788
  %v2790 = vpop.f32.mrb[0].mxu0
  %2791 = vmatprep.mubr.bf16.mxu0 0
  %2792 = vmatmul.mubr.bf16.gmra.mrb[0].mxu0 %v2560
  %v2793 = vpop.f32.mrb[0].mxu0
  %v2794 = vadd.f32 0.0, %v2793
  %v2795 = vpop.f32.mrb[0].mxu0
  %v2796 = vpop.f32.mrb[0].mxu0
  %v2797 = vadd.f32 0.0, %v2796
  %v2798 = vpop.f32.mrb[0].mxu0
  %2799 = vmatprep.mubr.bf16.mxu0 0
  %2800 = vmatmul.mubr.bf16.gmra.mrb[0].mxu0 %v2563
  %v2801 = vpop.f32.mrb[0].mxu0
  %v2802 = vadd.f32 0.0, %v2801
  %v2803 = vpop.f32.mrb[0].mxu0
  %v2804 = vpop.f32.mrb[0].mxu0
  %v2805 = vadd.f32 0.0, %v2804
  %v2806 = vpop.f32.mrb[0].mxu0
  %2807 = vmatprep.mubr.bf16.mxu0 0
  %2808 = vmatmul.mubr.bf16.gmra.mrb[0].mxu0 %v2566
  %v2809 = vpop.f32.mrb[0].mxu0
  %v2810 = vadd.f32 0.0, %v2809
  %v2811 = vpop.f32.mrb[0].mxu0
  %v2812 = vpop.f32.mrb[0].mxu0
  %v2813 = vadd.f32 0.0, %v2812
  %v2814 = vpop.f32.mrb[0].mxu0
  %2815 = vmatprep.mubr.bf16.mxu0 0
  %2816 = vmatmul.mubr.bf16.gmra.mrb[0].mxu0 %v2569
  %v2817 = vpop.f32.mrb[0].mxu0
  %v2818 = vadd.f32 0.0, %v2817
  %v2819 = vpop.f32.mrb[0].mxu0
  %v2820 = vpop.f32.mrb[0].mxu0
  %v2821 = vadd.f32 0.0, %v2820
  %v2822 = vpop.f32.mrb[0].mxu0
  %2823 = vmatprep.mubr.bf16.mxu0 0
  %2824 = vmatmul.mubr.bf16.gmra.mrb[0].mxu0 %v2572
  %v2825 = vpop.f32.mrb[0].mxu0
  %v2826 = vadd.f32 0.0, %v2825
  %v2827 = vpop.f32.mrb[0].mxu0
  %v2828 = vpop.f32.mrb[0].mxu0
  %v2829 = vadd.f32 0.0, %v2828
  %v2830 = vpop.f32.mrb[0].mxu0
  %2831 = vmatprep.mubr.bf16.mxu0 0
  %2832 = vmatmul.mubr.bf16.gmra.mrb[0].mxu0 %v2575
  %v2833 = vpop.f32.mrb[0].mxu0
  %v2834 = vadd.f32 0.0, %v2833
  %v2835 = vpop.f32.mrb[0].mxu0
  %v2836 = vpop.f32.mrb[0].mxu0
  %v2837 = vadd.f32 0.0, %v2836
  %v2838 = vpop.f32.mrb[0].mxu0
  %2839 = vmatprep.mubr.bf16.mxu0 0
  %2840 = vmatmul.mubr.bf16.gmra.mrb[0].mxu0 %v2578
  %v2841 = vpop.f32.mrb[0].mxu0
  %v2842 = vadd.f32 0.0, %v2841
  %v2843 = vpop.f32.mrb[0].mxu0
  %v2844 = vpop.f32.mrb[0].mxu0
  %v2845 = vadd.f32 0.0, %v2844
  %v2846 = vpop.f32.mrb[0].mxu0
  %2847 = vmatprep.mubr.bf16.mxu0 0
  %2848 = vmatmul.mubr.bf16.gmra.mrb[0].mxu0 %v2581
  %v2849 = vpop.f32.mrb[0].mxu0
  %v2850 = vadd.f32 0.0, %v2849
  %v2851 = vpop.f32.mrb[0].mxu0
  %v2852 = vpop.f32.mrb[0].mxu0
  %v2853 = vadd.f32 0.0, %v2852
  %v2854 = vpop.f32.mrb[0].mxu0
  %2855 = vmatprep.mubr.bf16.mxu0 0
  %2856 = vmatmul.mubr.bf16.gmra.mrb[0].mxu0 %v2584
  %v2857 = vpop.f32.mrb[0].mxu0
  %v2858 = vadd.f32 0.0, %v2857
  %v2859 = vpop.f32.mrb[0].mxu0
  %v2860 = vpop.f32.mrb[0].mxu0
  %v2861 = vadd.f32 0.0, %v2860
  %v2862 = vpop.f32.mrb[0].mxu0
  %2863 = vmatprep.mubr.bf16.mxu0 0
  %2864 = vmatmul.mubr.bf16.gmra.mrb[0].mxu0 %v2587
  %v2865 = vpop.f32.mrb[0].mxu0
  %v2866 = vadd.f32 0.0, %v2865
  %v2867 = vpop.f32.mrb[0].mxu0
  %v2868 = vpop.f32.mrb[0].mxu0
  %v2869 = vadd.f32 0.0, %v2868
  %v2870 = vpop.f32.mrb[0].mxu0
  %2871 = vmatprep.mubr.bf16.mxu0 0
  %2872 = vmatmul.mubr.bf16.gmra.mrb[0].mxu0 %v2590
  %v2873 = vpop.f32.mrb[0].mxu0
  %v2874 = vadd.f32 0.0, %v2873
  %v2875 = vpop.f32.mrb[0].mxu0
  %v2876 = vpop.f32.mrb[0].mxu0
  %v2877 = vadd.f32 0.0, %v2876
  %v2878 = vpop.f32.mrb[0].mxu0
  %2879 = vmatprep.mubr.bf16.mxu0 0
  %2880 = vmatmul.mubr.bf16.gmra.mrb[0].mxu0 %v2593
  %v2881 = vpop.f32.mrb[0].mxu0
  %v2882 = vadd.f32 0.0, %v2881
  %v2883 = vpop.f32.mrb[0].mxu0
  %v2884 = vpop.f32.mrb[0].mxu0
  %v2885 = vadd.f32 0.0, %v2884
  %v2886 = vpop.f32.mrb[0].mxu0
  %2887 = vdwg.mxu0
  %v2888 = vsel %vm22, %v2634, 0.0
  %v2889 = vsel %vm22, %v2637, 0.0
  %v2890 = vadd.f32 %v2888, %v2889
  %v2891 = vsel %vm22, %v2642, 0.0
  %v2892 = vadd.f32 %v2890, %v2891
  %v2893 = vsel %vm22, %v2645, 0.0
  %v2894 = vadd.f32 %v2892, %v2893
  %v2895 = vsel %vm22, %v2650, 0.0
  %v2896 = vadd.f32 %v2894, %v2895
  %v2897 = vsel %vm22, %v2653, 0.0
  %v2898 = vadd.f32 %v2896, %v2897
  %v2899 = vsel %vm22, %v2658, 0.0
  %v2900 = vadd.f32 %v2898, %v2899
  %v2901 = vsel %vm22, %v2661, 0.0
  %v2902 = vadd.f32 %v2900, %v2901
  %v2903 = vsel %vm22, %v2666, 0.0
  %v2904 = vadd.f32 %v2902, %v2903
  %v2905 = vsel %vm22, %v2669, 0.0
  %v2906 = vadd.f32 %v2904, %v2905
  %v2907 = vsel %vm22, %v2674, 0.0
  %v2908 = vadd.f32 %v2906, %v2907
  %v2909 = vsel %vm22, %v2677, 0.0
  %v2910 = vadd.f32 %v2908, %v2909
  %v2911 = vsel %vm22, %v2682, 0.0
  %v2912 = vadd.f32 %v2910, %v2911
  %v2913 = vsel %vm22, %v2685, 0.0
  %v2914 = vadd.f32 %v2912, %v2913
  %v2915 = vsel %vm22, %v2690, 0.0
  %v2916 = vadd.f32 %v2914, %v2915
  %v2917 = vsel %vm22, %v2693, 0.0
  %v2918 = vadd.f32 %v2916, %v2917
  %v2919 = vsel %vm22, %v2698, 0.0
  %v2920 = vadd.f32 %v2918, %v2919
  %v2921 = vsel %vm22, %v2701, 0.0
  %v2922 = vadd.f32 %v2920, %v2921
  %v2923 = vsel %vm22, %v2706, 0.0
  %v2924 = vadd.f32 %v2922, %v2923
  %v2925 = vsel %vm22, %v2709, 0.0
  %v2926 = vadd.f32 %v2924, %v2925
  %v2927 = vsel %vm22, %v2714, 0.0
  %v2928 = vadd.f32 %v2926, %v2927
  %v2929 = vsel %vm22, %v2717, 0.0
  %v2930 = vadd.f32 %v2928, %v2929
  %v2931 = vsel %vm22, %v2722, 0.0
  %v2932 = vadd.f32 %v2930, %v2931
  %v2933 = vsel %vm22, %v2725, 0.0
  %v2934 = vadd.f32 %v2932, %v2933
  %v2935 = vsel %vm22, %v2730, 0.0
  %v2936 = vadd.f32 %v2934, %v2935
  %v2937 = vsel %vm22, %v2733, 0.0
  %v2938 = vadd.f32 %v2936, %v2937
  %v2939 = vsel %vm22, %v2738, 0.0
  %v2940 = vadd.f32 %v2938, %v2939
  %v2941 = vsel %vm22, %v2741, 0.0
  %v2942 = vadd.f32 %v2940, %v2941
  %v2943 = vsel %vm22, %v2746, 0.0
  %v2944 = vadd.f32 %v2942, %v2943
  %v2945 = vsel %vm22, %v2749, 0.0
  %v2946 = vadd.f32 %v2944, %v2945
  %v2947 = vsel %vm22, %v2754, 0.0
  %v2948 = vadd.f32 %v2946, %v2947
  %v2949 = vsel %vm22, %v2757, 0.0
  %v2950 = vadd.f32 %v2948, %v2949
  %v2951 = vsel %vm22, %v2762, 0.0
  %v2952 = vadd.f32 %v2950, %v2951
  %v2953 = vsel %vm22, %v2765, 0.0
  %v2954 = vadd.f32 %v2952, %v2953
  %v2955 = vsel %vm22, %v2770, 0.0
  %v2956 = vadd.f32 %v2954, %v2955
  %v2957 = vsel %vm22, %v2773, 0.0
  %v2958 = vadd.f32 %v2956, %v2957
  %v2959 = vsel %vm22, %v2778, 0.0
  %v2960 = vadd.f32 %v2958, %v2959
  %v2961 = vsel %vm22, %v2781, 0.0
  %v2962 = vadd.f32 %v2960, %v2961
  %v2963 = vsel %vm22, %v2786, 0.0
  %v2964 = vadd.f32 %v2962, %v2963
  %v2965 = vsel %vm22, %v2789, 0.0
  %v2966 = vadd.f32 %v2964, %v2965
  %v2967 = vsel %vm22, %v2794, 0.0
  %v2968 = vadd.f32 %v2966, %v2967
  %v2969 = vsel %vm22, %v2797, 0.0
  %v2970 = vadd.f32 %v2968, %v2969
  %v2971 = vsel %vm22, %v2802, 0.0
  %v2972 = vadd.f32 %v2970, %v2971
  %v2973 = vsel %vm22, %v2805, 0.0
  %v2974 = vadd.f32 %v2972, %v2973
  %v2975 = vsel %vm22, %v2810, 0.0
  %v2976 = vadd.f32 %v2974, %v2975
  %v2977 = vsel %vm22, %v2813, 0.0
  %v2978 = vadd.f32 %v2976, %v2977
  %v2979 = vsel %vm22, %v2818, 0.0
  %v2980 = vadd.f32 %v2978, %v2979
  %v2981 = vsel %vm22, %v2821, 0.0
  %v2982 = vadd.f32 %v2980, %v2981
  %v2983 = vsel %vm22, %v2826, 0.0
  %v2984 = vadd.f32 %v2982, %v2983
  %v2985 = vsel %vm22, %v2829, 0.0
  %v2986 = vadd.f32 %v2984, %v2985
  %v2987 = vsel %vm22, %v2834, 0.0
  %v2988 = vadd.f32 %v2986, %v2987
  %v2989 = vsel %vm22, %v2837, 0.0
  %v2990 = vadd.f32 %v2988, %v2989
  %v2991 = vsel %vm22, %v2842, 0.0
  %v2992 = vadd.f32 %v2990, %v2991
  %v2993 = vsel %vm22, %v2845, 0.0
  %v2994 = vadd.f32 %v2992, %v2993
  %v2995 = vsel %vm22, %v2850, 0.0
  %v2996 = vadd.f32 %v2994, %v2995
  %v2997 = vsel %vm22, %v2853, 0.0
  %v2998 = vadd.f32 %v2996, %v2997
  %v2999 = vsel %vm22, %v2858, 0.0
  %v3000 = vadd.f32 %v2998, %v2999
  %v3001 = vsel %vm22, %v2861, 0.0
  %v3002 = vadd.f32 %v3000, %v3001
  %v3003 = vsel %vm22, %v2866, 0.0
  %v3004 = vadd.f32 %v3002, %v3003
  %v3005 = vsel %vm22, %v2869, 0.0
  %v3006 = vadd.f32 %v3004, %v3005
  %v3007 = vsel %vm22, %v2874, 0.0
  %v3008 = vadd.f32 %v3006, %v3007
  %v3009 = vsel %vm22, %v2877, 0.0
  %v3010 = vadd.f32 %v3008, %v3009
  %v3011 = vsel %vm22, %v2882, 0.0
  %v3012 = vadd.f32 %v3010, %v3011
  %v3013 = vsel %vm22, %v2885, 0.0
  %v3014 = vadd.f32 %v3012, %v3013
  %v3015 = vrot.slane %v3014, 4
  %v3016 = vadd.f32 %v3014, %v3015
  %v3017 = vrot.slane %v3016, 2
  %v3018 = vadd.f32 %v3016, %v3017
  %v3019 = vrot.slane %v3018, 1
  %v3020 = vadd.f32 %v3018, %v3019
  %v3021 = vmul.f32 %v3020, 0.001953125
  %v3022 = vmul.f32 %v2634, %v2634
  %v3023 = vmul.f32 %v2637, %v2637
  %v3024 = vmul.f32 %v2642, %v2642
  %v3025 = vmul.f32 %v2645, %v2645
  %v3026 = vmul.f32 %v2650, %v2650
  %v3027 = vmul.f32 %v2653, %v2653
  %v3028 = vmul.f32 %v2658, %v2658
  %v3029 = vmul.f32 %v2661, %v2661
  %v3030 = vmul.f32 %v2666, %v2666
  %v3031 = vmul.f32 %v2669, %v2669
  %v3032 = vmul.f32 %v2674, %v2674
  %v3033 = vmul.f32 %v2677, %v2677
  %v3034 = vmul.f32 %v2682, %v2682
  %v3035 = vmul.f32 %v2685, %v2685
  %v3036 = vmul.f32 %v2690, %v2690
  %v3037 = vmul.f32 %v2693, %v2693
  %v3038 = vmul.f32 %v2698, %v2698
  %v3039 = vmul.f32 %v2701, %v2701
  %v3040 = vmul.f32 %v2706, %v2706
  %v3041 = vmul.f32 %v2709, %v2709
  %v3042 = vmul.f32 %v2714, %v2714
  %v3043 = vmul.f32 %v2717, %v2717
  %v3044 = vmul.f32 %v2722, %v2722
  %v3045 = vmul.f32 %v2725, %v2725
  %v3046 = vmul.f32 %v2730, %v2730
  %v3047 = vmul.f32 %v2733, %v2733
  %v3048 = vmul.f32 %v2738, %v2738
  %v3049 = vmul.f32 %v2741, %v2741
  %v3050 = vmul.f32 %v2746, %v2746
  %v3051 = vmul.f32 %v2749, %v2749
  %v3052 = vmul.f32 %v2754, %v2754
  %v3053 = vmul.f32 %v2757, %v2757
  %v3054 = vmul.f32 %v2762, %v2762
  %v3055 = vmul.f32 %v2765, %v2765
  %v3056 = vmul.f32 %v2770, %v2770
  %v3057 = vmul.f32 %v2773, %v2773
  %v3058 = vmul.f32 %v2778, %v2778
  %v3059 = vmul.f32 %v2781, %v2781
  %v3060 = vmul.f32 %v2786, %v2786
  %v3061 = vmul.f32 %v2789, %v2789
  %v3062 = vmul.f32 %v2794, %v2794
  %v3063 = vmul.f32 %v2797, %v2797
  %v3064 = vmul.f32 %v2802, %v2802
  %v3065 = vmul.f32 %v2805, %v2805
  %v3066 = vmul.f32 %v2810, %v2810
  %v3067 = vmul.f32 %v2813, %v2813
  %v3068 = vmul.f32 %v2818, %v2818
  %v3069 = vmul.f32 %v2821, %v2821
  %v3070 = vmul.f32 %v2826, %v2826
  %v3071 = vmul.f32 %v2829, %v2829
  %v3072 = vmul.f32 %v2834, %v2834
  %v3073 = vmul.f32 %v2837, %v2837
  %v3074 = vmul.f32 %v2842, %v2842
  %v3075 = vmul.f32 %v2845, %v2845
  %v3076 = vmul.f32 %v2850, %v2850
  %v3077 = vmul.f32 %v2853, %v2853
  %v3078 = vmul.f32 %v2858, %v2858
  %v3079 = vmul.f32 %v2861, %v2861
  %v3080 = vmul.f32 %v2866, %v2866
  %v3081 = vmul.f32 %v2869, %v2869
  %v3082 = vmul.f32 %v2874, %v2874
  %v3083 = vmul.f32 %v2877, %v2877
  %v3084 = vmul.f32 %v2882, %v2882
  %v3085 = vmul.f32 %v2885, %v2885
  %v3086 = vsel %vm22, %v3022, 0.0
  %v3087 = vsel %vm22, %v3023, 0.0
  %v3088 = vadd.f32 %v3086, %v3087
  %v3089 = vsel %vm22, %v3024, 0.0
  %v3090 = vadd.f32 %v3088, %v3089
  %v3091 = vsel %vm22, %v3025, 0.0
  %v3092 = vadd.f32 %v3090, %v3091
  %v3093 = vsel %vm22, %v3026, 0.0
  %v3094 = vadd.f32 %v3092, %v3093
  %v3095 = vsel %vm22, %v3027, 0.0
  %v3096 = vadd.f32 %v3094, %v3095
  %v3097 = vsel %vm22, %v3028, 0.0
  %v3098 = vadd.f32 %v3096, %v3097
  %v3099 = vsel %vm22, %v3029, 0.0
  %v3100 = vadd.f32 %v3098, %v3099
  %v3101 = vsel %vm22, %v3030, 0.0
  %v3102 = vadd.f32 %v3100, %v3101
  %v3103 = vsel %vm22, %v3031, 0.0
  %v3104 = vadd.f32 %v3102, %v3103
  %v3105 = vsel %vm22, %v3032, 0.0
  %v3106 = vadd.f32 %v3104, %v3105
  %v3107 = vsel %vm22, %v3033, 0.0
  %v3108 = vadd.f32 %v3106, %v3107
  %v3109 = vsel %vm22, %v3034, 0.0
  %v3110 = vadd.f32 %v3108, %v3109
  %v3111 = vsel %vm22, %v3035, 0.0
  %v3112 = vadd.f32 %v3110, %v3111
  %v3113 = vsel %vm22, %v3036, 0.0
  %v3114 = vadd.f32 %v3112, %v3113
  %v3115 = vsel %vm22, %v3037, 0.0
  %v3116 = vadd.f32 %v3114, %v3115
  %v3117 = vsel %vm22, %v3038, 0.0
  %v3118 = vadd.f32 %v3116, %v3117
  %v3119 = vsel %vm22, %v3039, 0.0
  %v3120 = vadd.f32 %v3118, %v3119
  %v3121 = vsel %vm22, %v3040, 0.0
  %v3122 = vadd.f32 %v3120, %v3121
  %v3123 = vsel %vm22, %v3041, 0.0
  %v3124 = vadd.f32 %v3122, %v3123
  %v3125 = vsel %vm22, %v3042, 0.0
  %v3126 = vadd.f32 %v3124, %v3125
  %v3127 = vsel %vm22, %v3043, 0.0
  %v3128 = vadd.f32 %v3126, %v3127
  %v3129 = vsel %vm22, %v3044, 0.0
  %v3130 = vadd.f32 %v3128, %v3129
  %v3131 = vsel %vm22, %v3045, 0.0
  %v3132 = vadd.f32 %v3130, %v3131
  %v3133 = vsel %vm22, %v3046, 0.0
  %v3134 = vadd.f32 %v3132, %v3133
  %v3135 = vsel %vm22, %v3047, 0.0
  %v3136 = vadd.f32 %v3134, %v3135
  %v3137 = vsel %vm22, %v3048, 0.0
  %v3138 = vadd.f32 %v3136, %v3137
  %v3139 = vsel %vm22, %v3049, 0.0
  %v3140 = vadd.f32 %v3138, %v3139
  %v3141 = vsel %vm22, %v3050, 0.0
  %v3142 = vadd.f32 %v3140, %v3141
  %v3143 = vsel %vm22, %v3051, 0.0
  %v3144 = vadd.f32 %v3142, %v3143
  %v3145 = vsel %vm22, %v3052, 0.0
  %v3146 = vadd.f32 %v3144, %v3145
  %v3147 = vsel %vm22, %v3053, 0.0
  %v3148 = vadd.f32 %v3146, %v3147
  %v3149 = vsel %vm22, %v3054, 0.0
  %v3150 = vadd.f32 %v3148, %v3149
  %v3151 = vsel %vm22, %v3055, 0.0
  %v3152 = vadd.f32 %v3150, %v3151
  %v3153 = vsel %vm22, %v3056, 0.0
  %v3154 = vadd.f32 %v3152, %v3153
  %v3155 = vsel %vm22, %v3057, 0.0
  %v3156 = vadd.f32 %v3154, %v3155
  %v3157 = vsel %vm22, %v3058, 0.0
  %v3158 = vadd.f32 %v3156, %v3157
  %v3159 = vsel %vm22, %v3059, 0.0
  %v3160 = vadd.f32 %v3158, %v3159
  %v3161 = vsel %vm22, %v3060, 0.0
  %v3162 = vadd.f32 %v3160, %v3161
  %v3163 = vsel %vm22, %v3061, 0.0
  %v3164 = vadd.f32 %v3162, %v3163
  %v3165 = vsel %vm22, %v3062, 0.0
  %v3166 = vadd.f32 %v3164, %v3165
  %v3167 = vsel %vm22, %v3063, 0.0
  %v3168 = vadd.f32 %v3166, %v3167
  %v3169 = vsel %vm22, %v3064, 0.0
  %v3170 = vadd.f32 %v3168, %v3169
  %v3171 = vsel %vm22, %v3065, 0.0
  %v3172 = vadd.f32 %v3170, %v3171
  %v3173 = vsel %vm22, %v3066, 0.0
  %v3174 = vadd.f32 %v3172, %v3173
  %v3175 = vsel %vm22, %v3067, 0.0
  %v3176 = vadd.f32 %v3174, %v3175
  %v3177 = vsel %vm22, %v3068, 0.0
  %v3178 = vadd.f32 %v3176, %v3177
  %v3179 = vsel %vm22, %v3069, 0.0
  %v3180 = vadd.f32 %v3178, %v3179
  %v3181 = vsel %vm22, %v3070, 0.0
  %v3182 = vadd.f32 %v3180, %v3181
  %v3183 = vsel %vm22, %v3071, 0.0
  %v3184 = vadd.f32 %v3182, %v3183
  %v3185 = vsel %vm22, %v3072, 0.0
  %v3186 = vadd.f32 %v3184, %v3185
  %v3187 = vsel %vm22, %v3073, 0.0
  %v3188 = vadd.f32 %v3186, %v3187
  %v3189 = vsel %vm22, %v3074, 0.0
  %v3190 = vadd.f32 %v3188, %v3189
  %v3191 = vsel %vm22, %v3075, 0.0
  %v3192 = vadd.f32 %v3190, %v3191
  %v3193 = vsel %vm22, %v3076, 0.0
  %v3194 = vadd.f32 %v3192, %v3193
  %v3195 = vsel %vm22, %v3077, 0.0
  %v3196 = vadd.f32 %v3194, %v3195
  %v3197 = vsel %vm22, %v3078, 0.0
  %v3198 = vadd.f32 %v3196, %v3197
  %v3199 = vsel %vm22, %v3079, 0.0
  %v3200 = vadd.f32 %v3198, %v3199
  %v3201 = vsel %vm22, %v3080, 0.0
  %v3202 = vadd.f32 %v3200, %v3201
  %v3203 = vsel %vm22, %v3081, 0.0
  %v3204 = vadd.f32 %v3202, %v3203
  %v3205 = vsel %vm22, %v3082, 0.0
  %v3206 = vadd.f32 %v3204, %v3205
  %v3207 = vsel %vm22, %v3083, 0.0
  %v3208 = vadd.f32 %v3206, %v3207
  %v3209 = vsel %vm22, %v3084, 0.0
  %v3210 = vadd.f32 %v3208, %v3209
  %v3211 = vsel %vm22, %v3085, 0.0
  %v3212 = vadd.f32 %v3210, %v3211
  %v3213 = vrot.slane %v3212, 4
  %v3214 = vadd.f32 %v3212, %v3213
  %v3215 = vrot.slane %v3214, 2
  %v3216 = vadd.f32 %v3214, %v3215
  %v3217 = vrot.slane %v3216, 1
  %v3218 = vadd.f32 %v3216, %v3217
  %v3219 = vmul.f32 %v3218, 0.001953125
  %v3220 = vmul.f32 %v3021, %v3021
  %v3221 = vsub.f32 %v3219, %v3220
  %v3222 = vld [vmem:[%s2] sm:$0x1]
  %v3223 = vadd.f32 %v3221, 1e-05
  %v3224 = vrsqrt.pop %v3223
  %v3225 = vmul.f32 %v3222, %v3224
  %v3226 = vld [vmem:[%s3] sm:$0x1]
  %v3227 = vmul.f32 %v3021, %v3225
  %v3228 = vsub.f32 %v3226, %v3227
  %v3230 = vlaneseq
  %v3231 = vshrl.u32 %v3230, 7
  %v3232 = vsub.s32 0, %v3231
  %v3233 = vrot.slane %v3225, %v3232
  %v3235 = vmul.f32 %v2634, %v3233
  %v3236 = vmul.f32 %v2637, %v3233
  %v3237 = vmul.f32 %v2642, %v3233
  %v3238 = vmul.f32 %v2645, %v3233
  %v3239 = vmul.f32 %v2650, %v3233
  %v3240 = vmul.f32 %v2653, %v3233
  %v3241 = vmul.f32 %v2658, %v3233
  %v3242 = vmul.f32 %v2661, %v3233
  %v3243 = vmul.f32 %v2666, %v3233
  %v3244 = vmul.f32 %v2669, %v3233
  %v3245 = vmul.f32 %v2674, %v3233
  %v3246 = vmul.f32 %v2677, %v3233
  %v3247 = vmul.f32 %v2682, %v3233
  %v3248 = vmul.f32 %v2685, %v3233
  %v3249 = vmul.f32 %v2690, %v3233
  %v3250 = vmul.f32 %v2693, %v3233
  %v3251 = vmul.f32 %v2698, %v3233
  %v3252 = vmul.f32 %v2701, %v3233
  %v3253 = vmul.f32 %v2706, %v3233
  %v3254 = vmul.f32 %v2709, %v3233
  %v3255 = vmul.f32 %v2714, %v3233
  %v3256 = vmul.f32 %v2717, %v3233
  %v3257 = vmul.f32 %v2722, %v3233
  %v3258 = vmul.f32 %v2725, %v3233
  %v3259 = vmul.f32 %v2730, %v3233
  %v3260 = vmul.f32 %v2733, %v3233
  %v3261 = vmul.f32 %v2738, %v3233
  %v3262 = vmul.f32 %v2741, %v3233
  %v3263 = vmul.f32 %v2746, %v3233
  %v3264 = vmul.f32 %v2749, %v3233
  %v3265 = vmul.f32 %v2754, %v3233
  %v3266 = vmul.f32 %v2757, %v3233
  %v3267 = vmul.f32 %v2762, %v3233
  %v3268 = vmul.f32 %v2765, %v3233
  %v3269 = vmul.f32 %v2770, %v3233
  %v3270 = vmul.f32 %v2773, %v3233
  %v3271 = vmul.f32 %v2778, %v3233
  %v3272 = vmul.f32 %v2781, %v3233
  %v3273 = vmul.f32 %v2786, %v3233
  %v3274 = vmul.f32 %v2789, %v3233
  %v3275 = vmul.f32 %v2794, %v3233
  %v3276 = vmul.f32 %v2797, %v3233
  %v3277 = vmul.f32 %v2802, %v3233
  %v3278 = vmul.f32 %v2805, %v3233
  %v3279 = vmul.f32 %v2810, %v3233
  %v3280 = vmul.f32 %v2813, %v3233
  %v3281 = vmul.f32 %v2818, %v3233
  %v3282 = vmul.f32 %v2821, %v3233
  %v3283 = vmul.f32 %v2826, %v3233
  %v3284 = vmul.f32 %v2829, %v3233
  %v3285 = vmul.f32 %v2834, %v3233
  %v3286 = vmul.f32 %v2837, %v3233
  %v3287 = vmul.f32 %v2842, %v3233
  %v3288 = vmul.f32 %v2845, %v3233
  %v3289 = vmul.f32 %v2850, %v3233
  %v3290 = vmul.f32 %v2853, %v3233
  %v3291 = vmul.f32 %v2858, %v3233
  %v3292 = vmul.f32 %v2861, %v3233
  %v3293 = vmul.f32 %v2866, %v3233
  %v3294 = vmul.f32 %v2869, %v3233
  %v3295 = vmul.f32 %v2874, %v3233
  %v3296 = vmul.f32 %v2877, %v3233
  %v3297 = vmul.f32 %v2882, %v3233
  %v3298 = vmul.f32 %v2885, %v3233
  %v3300 = vlaneseq
  %v3301 = vshrl.u32 %v3300, 7
  %v3302 = vsub.s32 0, %v3301
  %v3303 = vrot.slane %v3228, %v3302
  %v3305 = vadd.f32 %v3235, %v3303
  %v3306 = vadd.f32 %v3236, %v3303
  %v3307 = vadd.f32 %v3237, %v3303
  %v3308 = vadd.f32 %v3238, %v3303
  %v3309 = vadd.f32 %v3239, %v3303
  %v3310 = vadd.f32 %v3240, %v3303
  %v3311 = vadd.f32 %v3241, %v3303
  %v3312 = vadd.f32 %v3242, %v3303
  %v3313 = vadd.f32 %v3243, %v3303
  %v3314 = vadd.f32 %v3244, %v3303
  %v3315 = vadd.f32 %v3245, %v3303
  %v3316 = vadd.f32 %v3246, %v3303
  %v3317 = vadd.f32 %v3247, %v3303
  %v3318 = vadd.f32 %v3248, %v3303
  %v3319 = vadd.f32 %v3249, %v3303
  %v3320 = vadd.f32 %v3250, %v3303
  %v3321 = vadd.f32 %v3251, %v3303
  %v3322 = vadd.f32 %v3252, %v3303
  %v3323 = vadd.f32 %v3253, %v3303
  %v3324 = vadd.f32 %v3254, %v3303
  %v3325 = vadd.f32 %v3255, %v3303
  %v3326 = vadd.f32 %v3256, %v3303
  %v3327 = vadd.f32 %v3257, %v3303
  %v3328 = vadd.f32 %v3258, %v3303
  %v3329 = vadd.f32 %v3259, %v3303
  %v3330 = vadd.f32 %v3260, %v3303
  %v3331 = vadd.f32 %v3261, %v3303
  %v3332 = vadd.f32 %v3262, %v3303
  %v3333 = vadd.f32 %v3263, %v3303
  %v3334 = vadd.f32 %v3264, %v3303
  %v3335 = vadd.f32 %v3265, %v3303
  %v3336 = vadd.f32 %v3266, %v3303
  %v3337 = vadd.f32 %v3267, %v3303
  %v3338 = vadd.f32 %v3268, %v3303
  %v3339 = vadd.f32 %v3269, %v3303
  %v3340 = vadd.f32 %v3270, %v3303
  %v3341 = vadd.f32 %v3271, %v3303
  %v3342 = vadd.f32 %v3272, %v3303
  %v3343 = vadd.f32 %v3273, %v3303
  %v3344 = vadd.f32 %v3274, %v3303
  %v3345 = vadd.f32 %v3275, %v3303
  %v3346 = vadd.f32 %v3276, %v3303
  %v3347 = vadd.f32 %v3277, %v3303
  %v3348 = vadd.f32 %v3278, %v3303
  %v3349 = vadd.f32 %v3279, %v3303
  %v3350 = vadd.f32 %v3280, %v3303
  %v3351 = vadd.f32 %v3281, %v3303
  %v3352 = vadd.f32 %v3282, %v3303
  %v3353 = vadd.f32 %v3283, %v3303
  %v3354 = vadd.f32 %v3284, %v3303
  %v3355 = vadd.f32 %v3285, %v3303
  %v3356 = vadd.f32 %v3286, %v3303
  %v3357 = vadd.f32 %v3287, %v3303
  %v3358 = vadd.f32 %v3288, %v3303
  %v3359 = vadd.f32 %v3289, %v3303
  %v3360 = vadd.f32 %v3290, %v3303
  %v3361 = vadd.f32 %v3291, %v3303
  %v3362 = vadd.f32 %v3292, %v3303
  %v3363 = vadd.f32 %v3293, %v3303
  %v3364 = vadd.f32 %v3294, %v3303
  %v3365 = vadd.f32 %v3295, %v3303
  %v3366 = vadd.f32 %v3296, %v3303
  %v3367 = vadd.f32 %v3297, %v3303
  %v3368 = vadd.f32 %v3298, %v3303
  %s3369 = sld [smem:[#allocation4]]
  %vm3370 = vcmp.gt.f32.partialorder %v3305, 0.0
  %vm3371 = vcmp.gt.f32.partialorder %v3306, 0.0
  %vm3372 = vcmp.gt.f32.partialorder %v3307, 0.0
  %vm3373 = vcmp.gt.f32.partialorder %v3308, 0.0
  %vm3374 = vcmp.gt.f32.partialorder %v3309, 0.0
  %vm3375 = vcmp.gt.f32.partialorder %v3310, 0.0
  %vm3376 = vcmp.gt.f32.partialorder %v3311, 0.0
  %vm3377 = vcmp.gt.f32.partialorder %v3312, 0.0
  %vm3378 = vcmp.gt.f32.partialorder %v3313, 0.0
  %vm3379 = vcmp.gt.f32.partialorder %v3314, 0.0
  %vm3380 = vcmp.gt.f32.partialorder %v3315, 0.0
  %vm3381 = vcmp.gt.f32.partialorder %v3316, 0.0
  %vm3382 = vcmp.gt.f32.partialorder %v3317, 0.0
  %vm3383 = vcmp.gt.f32.partialorder %v3318, 0.0
  %vm3384 = vcmp.gt.f32.partialorder %v3319, 0.0
  %vm3385 = vcmp.gt.f32.partialorder %v3320, 0.0
  %vm3386 = vcmp.gt.f32.partialorder %v3321, 0.0
  %vm3387 = vcmp.gt.f32.partialorder %v3322, 0.0
  %vm3388 = vcmp.gt.f32.partialorder %v3323, 0.0
  %vm3389 = vcmp.gt.f32.partialorder %v3324, 0.0
  %vm3390 = vcmp.gt.f32.partialorder %v3325, 0.0
  %vm3391 = vcmp.gt.f32.partialorder %v3326, 0.0
  %vm3392 = vcmp.gt.f32.partialorder %v3327, 0.0
  %vm3393 = vcmp.gt.f32.partialorder %v3328, 0.0
  %vm3394 = vcmp.gt.f32.partialorder %v3329, 0.0
  %vm3395 = vcmp.gt.f32.partialorder %v3330, 0.0
  %vm3396 = vcmp.gt.f32.partialorder %v3331, 0.0
  %vm3397 = vcmp.gt.f32.partialorder %v3332, 0.0
  %vm3398 = vcmp.gt.f32.partialorder %v3333, 0.0
  %vm3399 = vcmp.gt.f32.partialorder %v3334, 0.0
  %vm3400 = vcmp.gt.f32.partialorder %v3335, 0.0
  %vm3401 = vcmp.gt.f32.partialorder %v3336, 0.0
  %vm3402 = vcmp.gt.f32.partialorder %v3337, 0.0
  %vm3403 = vcmp.gt.f32.partialorder %v3338, 0.0
  %vm3404 = vcmp.gt.f32.partialorder %v3339, 0.0
  %vm3405 = vcmp.gt.f32.partialorder %v3340, 0.0
  %vm3406 = vcmp.gt.f32.partialorder %v3341, 0.0
  %vm3407 = vcmp.gt.f32.partialorder %v3342, 0.0
  %vm3408 = vcmp.gt.f32.partialorder %v3343, 0.0
  %vm3409 = vcmp.gt.f32.partialorder %v3344, 0.0
  %vm3410 = vcmp.gt.f32.partialorder %v3345, 0.0
  %vm3411 = vcmp.gt.f32.partialorder %v3346, 0.0
  %vm3412 = vcmp.gt.f32.partialorder %v3347, 0.0
  %vm3413 = vcmp.gt.f32.partialorder %v3348, 0.0
  %vm3414 = vcmp.gt.f32.partialorder %v3349, 0.0
  %vm3415 = vcmp.gt.f32.partialorder %v3350, 0.0
  %vm3416 = vcmp.gt.f32.partialorder %v3351, 0.0
  %vm3417 = vcmp.gt.f32.partialorder %v3352, 0.0
  %vm3418 = vcmp.gt.f32.partialorder %v3353, 0.0
  %vm3419 = vcmp.gt.f32.partialorder %v3354, 0.0
  %vm3420 = vcmp.gt.f32.partialorder %v3355, 0.0
  %vm3421 = vcmp.gt.f32.partialorder %v3356, 0.0
  %vm3422 = vcmp.gt.f32.partialorder %v3357, 0.0
  %vm3423 = vcmp.gt.f32.partialorder %v3358, 0.0
  %vm3424 = vcmp.gt.f32.partialorder %v3359, 0.0
  %vm3425 = vcmp.gt.f32.partialorder %v3360, 0.0
  %vm3426 = vcmp.gt.f32.partialorder %v3361, 0.0
  %vm3427 = vcmp.gt.f32.partialorder %v3362, 0.0
  %vm3428 = vcmp.gt.f32.partialorder %v3363, 0.0
  %vm3429 = vcmp.gt.f32.partialorder %v3364, 0.0
  %vm3430 = vcmp.gt.f32.partialorder %v3365, 0.0
  %vm3431 = vcmp.gt.f32.partialorder %v3366, 0.0
  %vm3432 = vcmp.gt.f32.partialorder %v3367, 0.0
  %vm3433 = vcmp.gt.f32.partialorder %v3368, 0.0
  %v3434 = vstv %s3369
  %v3435 = vmul.f32 %v3305, %v3434
  %v3436 = vmul.f32 %v3306, %v3434
  %v3437 = vmul.f32 %v3307, %v3434
  %v3438 = vmul.f32 %v3308, %v3434
  %v3439 = vmul.f32 %v3309, %v3434
  %v3440 = vmul.f32 %v3310, %v3434
  %v3441 = vmul.f32 %v3311, %v3434
  %v3442 = vmul.f32 %v3312, %v3434
  %v3443 = vmul.f32 %v3313, %v3434
  %v3444 = vmul.f32 %v3314, %v3434
  %v3445 = vmul.f32 %v3315, %v3434
  %v3446 = vmul.f32 %v3316, %v3434
  %v3447 = vmul.f32 %v3317, %v3434
  %v3448 = vmul.f32 %v3318, %v3434
  %v3449 = vmul.f32 %v3319, %v3434
  %v3450 = vmul.f32 %v3320, %v3434
  %v3451 = vmul.f32 %v3321, %v3434
  %v3452 = vmul.f32 %v3322, %v3434
  %v3453 = vmul.f32 %v3323, %v3434
  %v3454 = vmul.f32 %v3324, %v3434
  %v3455 = vmul.f32 %v3325, %v3434
  %v3456 = vmul.f32 %v3326, %v3434
  %v3457 = vmul.f32 %v3327, %v3434
  %v3458 = vmul.f32 %v3328, %v3434
  %v3459 = vmul.f32 %v3329, %v3434
  %v3460 = vmul.f32 %v3330, %v3434
  %v3461 = vmul.f32 %v3331, %v3434
  %v3462 = vmul.f32 %v3332, %v3434
  %v3463 = vmul.f32 %v3333, %v3434
  %v3464 = vmul.f32 %v3334, %v3434
  %v3465 = vmul.f32 %v3335, %v3434
  %v3466 = vmul.f32 %v3336, %v3434
  %v3467 = vmul.f32 %v3337, %v3434
  %v3468 = vmul.f32 %v3338, %v3434
  %v3469 = vmul.f32 %v3339, %v3434
  %v3470 = vmul.f32 %v3340, %v3434
  %v3471 = vmul.f32 %v3341, %v3434
  %v3472 = vmul.f32 %v3342, %v3434
  %v3473 = vmul.f32 %v3343, %v3434
  %v3474 = vmul.f32 %v3344, %v3434
  %v3475 = vmul.f32 %v3345, %v3434
  %v3476 = vmul.f32 %v3346, %v3434
  %v3477 = vmul.f32 %v3347, %v3434
  %v3478 = vmul.f32 %v3348, %v3434
  %v3479 = vmul.f32 %v3349, %v3434
  %v3480 = vmul.f32 %v3350, %v3434
  %v3481 = vmul.f32 %v3351, %v3434
  %v3482 = vmul.f32 %v3352, %v3434
  %v3483 = vmul.f32 %v3353, %v3434
  %v3484 = vmul.f32 %v3354, %v3434
  %v3485 = vmul.f32 %v3355, %v3434
  %v3486 = vmul.f32 %v3356, %v3434
  %v3487 = vmul.f32 %v3357, %v3434
  %v3488 = vmul.f32 %v3358, %v3434
  %v3489 = vmul.f32 %v3359, %v3434
  %v3490 = vmul.f32 %v3360, %v3434
  %v3491 = vmul.f32 %v3361, %v3434
  %v3492 = vmul.f32 %v3362, %v3434
  %v3493 = vmul.f32 %v3363, %v3434
  %v3494 = vmul.f32 %v3364, %v3434
  %v3495 = vmul.f32 %v3365, %v3434
  %v3496 = vmul.f32 %v3366, %v3434
  %v3497 = vmul.f32 %v3367, %v3434
  %v3498 = vmul.f32 %v3368, %v3434
  %v3499 = vsel %vm3370, %v3305, %v3435
  %v3500 = vsel %vm3371, %v3306, %v3436
  %v3501 = vsel %vm3372, %v3307, %v3437
  %v3502 = vsel %vm3373, %v3308, %v3438
  %v3503 = vsel %vm3374, %v3309, %v3439
  %v3504 = vsel %vm3375, %v3310, %v3440
  %v3505 = vsel %vm3376, %v3311, %v3441
  %v3506 = vsel %vm3377, %v3312, %v3442
  %v3507 = vsel %vm3378, %v3313, %v3443
  %v3508 = vsel %vm3379, %v3314, %v3444
  %v3509 = vsel %vm3380, %v3315, %v3445
  %v3510 = vsel %vm3381, %v3316, %v3446
  %v3511 = vsel %vm3382, %v3317, %v3447
  %v3512 = vsel %vm3383, %v3318, %v3448
  %v3513 = vsel %vm3384, %v3319, %v3449
  %v3514 = vsel %vm3385, %v3320, %v3450
  %v3515 = vsel %vm3386, %v3321, %v3451
  %v3516 = vsel %vm3387, %v3322, %v3452
  %v3517 = vsel %vm3388, %v3323, %v3453
  %v3518 = vsel %vm3389, %v3324, %v3454
  %v3519 = vsel %vm3390, %v3325, %v3455
  %v3520 = vsel %vm3391, %v3326, %v3456
  %v3521 = vsel %vm3392, %v3327, %v3457
  %v3522 = vsel %vm3393, %v3328, %v3458
  %v3523 = vsel %vm3394, %v3329, %v3459
  %v3524 = vsel %vm3395, %v3330, %v3460
  %v3525 = vsel %vm3396, %v3331, %v3461
  %v3526 = vsel %vm3397, %v3332, %v3462
  %v3527 = vsel %vm3398, %v3333, %v3463
  %v3528 = vsel %vm3399, %v3334, %v3464
  %v3529 = vsel %vm3400, %v3335, %v3465
  %v3530 = vsel %vm3401, %v3336, %v3466
  %v3531 = vsel %vm3402, %v3337, %v3467
  %v3532 = vsel %vm3403, %v3338, %v3468
  %v3533 = vsel %vm3404, %v3339, %v3469
  %v3534 = vsel %vm3405, %v3340, %v3470
  %v3535 = vsel %vm3406, %v3341, %v3471
  %v3536 = vsel %vm3407, %v3342, %v3472
  %v3537 = vsel %vm3408, %v3343, %v3473
  %v3538 = vsel %vm3409, %v3344, %v3474
  %v3539 = vsel %vm3410, %v3345, %v3475
  %v3540 = vsel %vm3411, %v3346, %v3476
  %v3541 = vsel %vm3412, %v3347, %v3477
  %v3542 = vsel %vm3413, %v3348, %v3478
  %v3543 = vsel %vm3414, %v3349, %v3479
  %v3544 = vsel %vm3415, %v3350, %v3480
  %v3545 = vsel %vm3416, %v3351, %v3481
  %v3546 = vsel %vm3417, %v3352, %v3482
  %v3547 = vsel %vm3418, %v3353, %v3483
  %v3548 = vsel %vm3419, %v3354, %v3484
  %v3549 = vsel %vm3420, %v3355, %v3485
  %v3550 = vsel %vm3421, %v3356, %v3486
  %v3551 = vsel %vm3422, %v3357, %v3487
  %v3552 = vsel %vm3423, %v3358, %v3488
  %v3553 = vsel %vm3424, %v3359, %v3489
  %v3554 = vsel %vm3425, %v3360, %v3490
  %v3555 = vsel %vm3426, %v3361, %v3491
  %v3556 = vsel %vm3427, %v3362, %v3492
  %v3557 = vsel %vm3428, %v3363, %v3493
  %v3558 = vsel %vm3429, %v3364, %v3494
  %v3559 = vsel %vm3430, %v3365, %v3495
  %v3560 = vsel %vm3431, %v3366, %v3496
  %v3561 = vsel %vm3432, %v3367, %v3497
  %v3562 = vsel %vm3433, %v3368, %v3498
  %v3563 = vpack.c.bf16 %v3500, %v3499
  %v3564 = vpack.c.bf16 %v3502, %v3501
  %v3565 = vpack.c.bf16 %v3504, %v3503
  %v3566 = vpack.c.bf16 %v3506, %v3505
  %v3567 = vpack.c.bf16 %v3508, %v3507
  %v3568 = vpack.c.bf16 %v3510, %v3509
  %v3569 = vpack.c.bf16 %v3512, %v3511
  %v3570 = vpack.c.bf16 %v3514, %v3513
  %v3571 = vpack.c.bf16 %v3516, %v3515
  %v3572 = vpack.c.bf16 %v3518, %v3517
  %v3573 = vpack.c.bf16 %v3520, %v3519
  %v3574 = vpack.c.bf16 %v3522, %v3521
  %v3575 = vpack.c.bf16 %v3524, %v3523
  %v3576 = vpack.c.bf16 %v3526, %v3525
  %v3577 = vpack.c.bf16 %v3528, %v3527
  %v3578 = vpack.c.bf16 %v3530, %v3529
  %v3579 = vpack.c.bf16 %v3532, %v3531
  %v3580 = vpack.c.bf16 %v3534, %v3533
  %v3581 = vpack.c.bf16 %v3536, %v3535
  %v3582 = vpack.c.bf16 %v3538, %v3537
  %v3583 = vpack.c.bf16 %v3540, %v3539
  %v3584 = vpack.c.bf16 %v3542, %v3541
  %v3585 = vpack.c.bf16 %v3544, %v3543
  %v3586 = vpack.c.bf16 %v3546, %v3545
  %v3587 = vpack.c.bf16 %v3548, %v3547
  %v3588 = vpack.c.bf16 %v3550, %v3549
  %v3589 = vpack.c.bf16 %v3552, %v3551
  %v3590 = vpack.c.bf16 %v3554, %v3553
  %v3591 = vpack.c.bf16 %v3556, %v3555
  %v3592 = vpack.c.bf16 %v3558, %v3557
  %v3593 = vpack.c.bf16 %v3560, %v3559
  %v3594 = vpack.c.bf16 %v3562, %v3561
  %v3627 = vunpack.c.l.b16 %v3563
  %v3628 = vunpack.c.h.b16 %v3563
  %v3629 = vunpack.c.l.b16 %v3564
  %v3630 = vunpack.c.h.b16 %v3564
  %v3631 = vunpack.c.l.b16 %v3565
  %v3632 = vunpack.c.h.b16 %v3565
  %v3633 = vunpack.c.l.b16 %v3566
  %v3634 = vunpack.c.h.b16 %v3566
  %v3635 = vunpack.c.l.b16 %v3567
  %v3636 = vunpack.c.h.b16 %v3567
  %v3637 = vunpack.c.l.b16 %v3568
  %v3638 = vunpack.c.h.b16 %v3568
  %v3639 = vunpack.c.l.b16 %v3569
  %v3640 = vunpack.c.h.b16 %v3569
  %v3641 = vunpack.c.l.b16 %v3570
  %v3642 = vunpack.c.h.b16 %v3570
  %v3643 = vunpack.c.l.b16 %v3571
  %v3644 = vunpack.c.h.b16 %v3571
  %v3645 = vunpack.c.l.b16 %v3572
  %v3646 = vunpack.c.h.b16 %v3572
  %v3647 = vunpack.c.l.b16 %v3573
  %v3648 = vunpack.c.h.b16 %v3573
  %v3649 = vunpack.c.l.b16 %v3574
  %v3650 = vunpack.c.h.b16 %v3574
  %v3651 = vunpack.c.l.b16 %v3575
  %v3652 = vunpack.c.h.b16 %v3575
  %v3653 = vunpack.c.l.b16 %v3576
  %v3654 = vunpack.c.h.b16 %v3576
  %v3655 = vunpack.c.l.b16 %v3577
  %v3656 = vunpack.c.h.b16 %v3577
  %v3657 = vunpack.c.l.b16 %v3578
  %v3658 = vunpack.c.h.b16 %v3578
  %v3659 = vunpack.c.l.b16 %v3579
  %v3660 = vunpack.c.h.b16 %v3579
  %v3661 = vunpack.c.l.b16 %v3580
  %v3662 = vunpack.c.h.b16 %v3580
  %v3663 = vunpack.c.l.b16 %v3581
  %v3664 = vunpack.c.h.b16 %v3581
  %v3665 = vunpack.c.l.b16 %v3582
  %v3666 = vunpack.c.h.b16 %v3582
  %v3667 = vunpack.c.l.b16 %v3583
  %v3668 = vunpack.c.h.b16 %v3583
  %v3669 = vunpack.c.l.b16 %v3584
  %v3670 = vunpack.c.h.b16 %v3584
  %v3671 = vunpack.c.l.b16 %v3585
  %v3672 = vunpack.c.h.b16 %v3585
  %v3673 = vunpack.c.l.b16 %v3586
  %v3674 = vunpack.c.h.b16 %v3586
  %v3675 = vunpack.c.l.b16 %v3587
  %v3676 = vunpack.c.h.b16 %v3587
  %v3677 = vunpack.c.l.b16 %v3588
  %v3678 = vunpack.c.h.b16 %v3588
  %v3679 = vunpack.c.l.b16 %v3589
  %v3680 = vunpack.c.h.b16 %v3589
  %v3681 = vunpack.c.l.b16 %v3590
  %v3682 = vunpack.c.h.b16 %v3590
  %v3683 = vunpack.c.l.b16 %v3591
  %v3684 = vunpack.c.h.b16 %v3591
  %v3685 = vunpack.c.l.b16 %v3592
  %v3686 = vunpack.c.h.b16 %v3592
  %v3687 = vunpack.c.l.b16 %v3593
  %v3688 = vunpack.c.h.b16 %v3593
  %v3689 = vunpack.c.l.b16 %v3594
  %v3690 = vunpack.c.h.b16 %v3594
  %v3691 = vpack.c.b16 %v3627, %v3627
  %v3692 = vpack.c.b16 %v3628, %v3628
  %v3693 = vpack.c.b16 %v3629, %v3629
  %v3694 = vpack.c.b16 %v3630, %v3630
  %v3695 = vpack.c.b16 %v3631, %v3631
  %v3696 = vpack.c.b16 %v3632, %v3632
  %v3697 = vpack.c.b16 %v3633, %v3633
  %v3698 = vpack.c.b16 %v3634, %v3634
  %v3699 = vpack.c.b16 %v3635, %v3635
  %v3700 = vpack.c.b16 %v3636, %v3636
  %v3701 = vpack.c.b16 %v3637, %v3637
  %v3702 = vpack.c.b16 %v3638, %v3638
  %v3703 = vpack.c.b16 %v3639, %v3639
  %v3704 = vpack.c.b16 %v3640, %v3640
  %v3705 = vpack.c.b16 %v3641, %v3641
  %v3706 = vpack.c.b16 %v3642, %v3642
  %v3707 = vpack.c.b16 %v3643, %v3643
  %v3708 = vpack.c.b16 %v3644, %v3644
  %v3709 = vpack.c.b16 %v3645, %v3645
  %v3710 = vpack.c.b16 %v3646, %v3646
  %v3711 = vpack.c.b16 %v3647, %v3647
  %v3712 = vpack.c.b16 %v3648, %v3648
  %v3713 = vpack.c.b16 %v3649, %v3649
  %v3714 = vpack.c.b16 %v3650, %v3650
  %v3715 = vpack.c.b16 %v3651, %v3651
  %v3716 = vpack.c.b16 %v3652, %v3652
  %v3717 = vpack.c.b16 %v3653, %v3653
  %v3718 = vpack.c.b16 %v3654, %v3654
  %v3719 = vpack.c.b16 %v3655, %v3655
  %v3720 = vpack.c.b16 %v3656, %v3656
  %v3721 = vpack.c.b16 %v3657, %v3657
  %v3722 = vpack.c.b16 %v3658, %v3658
  %v3723 = vpack.c.b16 %v3659, %v3659
  %v3724 = vpack.c.b16 %v3660, %v3660
  %v3725 = vpack.c.b16 %v3661, %v3661
  %v3726 = vpack.c.b16 %v3662, %v3662
  %v3727 = vpack.c.b16 %v3663, %v3663
  %v3728 = vpack.c.b16 %v3664, %v3664
  %v3729 = vpack.c.b16 %v3665, %v3665
  %v3730 = vpack.c.b16 %v3666, %v3666
  %v3731 = vpack.c.b16 %v3667, %v3667
  %v3732 = vpack.c.b16 %v3668, %v3668
  %v3733 = vpack.c.b16 %v3669, %v3669
  %v3734 = vpack.c.b16 %v3670, %v3670
  %v3735 = vpack.c.b16 %v3671, %v3671
  %v3736 = vpack.c.b16 %v3672, %v3672
  %v3737 = vpack.c.b16 %v3673, %v3673
  %v3738 = vpack.c.b16 %v3674, %v3674
  %v3739 = vpack.c.b16 %v3675, %v3675
  %v3740 = vpack.c.b16 %v3676, %v3676
  %v3741 = vpack.c.b16 %v3677, %v3677
  %v3742 = vpack.c.b16 %v3678, %v3678
  %v3743 = vpack.c.b16 %v3679, %v3679
  %v3744 = vpack.c.b16 %v3680, %v3680
  %v3745 = vpack.c.b16 %v3681, %v3681
  %v3746 = vpack.c.b16 %v3682, %v3682
  %v3747 = vpack.c.b16 %v3683, %v3683
  %v3748 = vpack.c.b16 %v3684, %v3684
  %v3749 = vpack.c.b16 %v3685, %v3685
  %v3750 = vpack.c.b16 %v3686, %v3686
  %v3751 = vpack.c.b16 %v3687, %v3687
  %v3752 = vpack.c.b16 %v3688, %v3688
  %v3753 = vpack.c.b16 %v3689, %v3689
  %v3754 = vpack.c.b16 %v3690, %v3690
  %vm3819 = vcmask 27648
  %3820 = vst.msk [vmem:[%s5] sm:$0xf] %vm3819, %v3691
  %3821 = vst.msk [vmem:[%s5 + $0x4] sm:$0xf] %vm3819, %v3692
  %3822 = vst.msk [vmem:[%s5 + $0x8] sm:$0xf] %vm3819, %v3693
  %3823 = vst.msk [vmem:[%s5 + $0xc] sm:$0xf] %vm3819, %v3694
  %3824 = vst.msk [vmem:[%s5 + $0x10] sm:$0xf] %vm3819, %v3695
  %3825 = vst.msk [vmem:[%s5 + $0x14] sm:$0xf] %vm3819, %v3696
  %3826 = vst.msk [vmem:[%s5 + $0x18] sm:$0xf] %vm3819, %v3697
  %3827 = vst.msk [vmem:[%s5 + $0x1c] sm:$0xf] %vm3819, %v3698
  %3828 = vst.msk [vmem:[%s5 + $0x20] sm:$0xf] %vm3819, %v3699
  %3829 = vst.msk [vmem:[%s5 + $0x24] sm:$0xf] %vm3819, %v3700
  %3830 = vst.msk [vmem:[%s5 + $0x28] sm:$0xf] %vm3819, %v3701
  %3831 = vst.msk [vmem:[%s5 + $0x2c] sm:$0xf] %vm3819, %v3702
  %3832 = vst.msk [vmem:[%s5 + $0x30] sm:$0xf] %vm3819, %v3703
  %3833 = vst.msk [vmem:[%s5 + $0x34] sm:$0xf] %vm3819, %v3704
  %3834 = vst.msk [vmem:[%s5 + $0x38] sm:$0xf] %vm3819, %v3705
  %3835 = vst.msk [vmem:[%s5 + $0x3c] sm:$0xf] %vm3819, %v3706
  %3836 = vst.msk [vmem:[%s5 + $0x40] sm:$0xf] %vm3819, %v3707
  %3837 = vst.msk [vmem:[%s5 + $0x44] sm:$0xf] %vm3819, %v3708
  %3838 = vst.msk [vmem:[%s5 + $0x48] sm:$0xf] %vm3819, %v3709
  %3839 = vst.msk [vmem:[%s5 + $0x4c] sm:$0xf] %vm3819, %v3710
  %3840 = vst.msk [vmem:[%s5 + $0x50] sm:$0xf] %vm3819, %v3711
  %3841 = vst.msk [vmem:[%s5 + $0x54] sm:$0xf] %vm3819, %v3712
  %3842 = vst.msk [vmem:[%s5 + $0x58] sm:$0xf] %vm3819, %v3713
  %3843 = vst.msk [vmem:[%s5 + $0x5c] sm:$0xf] %vm3819, %v3714
  %3844 = vst.msk [vmem:[%s5 + $0x60] sm:$0xf] %vm3819, %v3715
  %3845 = vst.msk [vmem:[%s5 + $0x64] sm:$0xf] %vm3819, %v3716
  %3846 = vst.msk [vmem:[%s5 + $0x68] sm:$0xf] %vm3819, %v3717
  %3847 = vst.msk [vmem:[%s5 + $0x6c] sm:$0xf] %vm3819, %v3718
  %3848 = vst.msk [vmem:[%s5 + $0x70] sm:$0xf] %vm3819, %v3719
  %3849 = vst.msk [vmem:[%s5 + $0x74] sm:$0xf] %vm3819, %v3720
  %3850 = vst.msk [vmem:[%s5 + $0x78] sm:$0xf] %vm3819, %v3721
  %3851 = vst.msk [vmem:[%s5 + $0x7c] sm:$0xf] %vm3819, %v3722
  %3852 = vst.msk [vmem:[%s5 + $0x80] sm:$0xf] %vm3819, %v3723
  %3853 = vst.msk [vmem:[%s5 + $0x84] sm:$0xf] %vm3819, %v3724
  %3854 = vst.msk [vmem:[%s5 + $0x88] sm:$0xf] %vm3819, %v3725
  %3855 = vst.msk [vmem:[%s5 + $0x8c] sm:$0xf] %vm3819, %v3726
  %3856 = vst.msk [vmem:[%s5 + $0x90] sm:$0xf] %vm3819, %v3727
  %3857 = vst.msk [vmem:[%s5 + $0x94] sm:$0xf] %vm3819, %v3728
  %3858 = vst.msk [vmem:[%s5 + $0x98] sm:$0xf] %vm3819, %v3729
  %3859 = vst.msk [vmem:[%s5 + $0x9c] sm:$0xf] %vm3819, %v3730
  %3860 = vst.msk [vmem:[%s5 + $0xa0] sm:$0xf] %vm3819, %v3731
  %3861 = vst.msk [vmem:[%s5 + $0xa4] sm:$0xf] %vm3819, %v3732
  %3862 = vst.msk [vmem:[%s5 + $0xa8] sm:$0xf] %vm3819, %v3733
  %3863 = vst.msk [vmem:[%s5 + $0xac] sm:$0xf] %vm3819, %v3734
  %3864 = vst.msk [vmem:[%s5 + $0xb0] sm:$0xf] %vm3819, %v3735
  %3865 = vst.msk [vmem:[%s5 + $0xb4] sm:$0xf] %vm3819, %v3736
  %3866 = vst.msk [vmem:[%s5 + $0xb8] sm:$0xf] %vm3819, %v3737
  %3867 = vst.msk [vmem:[%s5 + $0xbc] sm:$0xf] %vm3819, %v3738
  %3868 = vst.msk [vmem:[%s5 + $0xc0] sm:$0xf] %vm3819, %v3739
  %3869 = vst.msk [vmem:[%s5 + $0xc4] sm:$0xf] %vm3819, %v3740
  %3870 = vst.msk [vmem:[%s5 + $0xc8] sm:$0xf] %vm3819, %v3741
  %3871 = vst.msk [vmem:[%s5 + $0xcc] sm:$0xf] %vm3819, %v3742
  %3872 = vst.msk [vmem:[%s5 + $0xd0] sm:$0xf] %vm3819, %v3743
  %3873 = vst.msk [vmem:[%s5 + $0xd4] sm:$0xf] %vm3819, %v3744
  %3874 = vst.msk [vmem:[%s5 + $0xd8] sm:$0xf] %vm3819, %v3745
  %3875 = vst.msk [vmem:[%s5 + $0xdc] sm:$0xf] %vm3819, %v3746
  %3876 = vst.msk [vmem:[%s5 + $0xe0] sm:$0xf] %vm3819, %v3747
  %3877 = vst.msk [vmem:[%s5 + $0xe4] sm:$0xf] %vm3819, %v3748
  %3878 = vst.msk [vmem:[%s5 + $0xe8] sm:$0xf] %vm3819, %v3749
  %3879 = vst.msk [vmem:[%s5 + $0xec] sm:$0xf] %vm3819, %v3750
  %3880 = vst.msk [vmem:[%s5 + $0xf0] sm:$0xf] %vm3819, %v3751
  %3881 = vst.msk [vmem:[%s5 + $0xf4] sm:$0xf] %vm3819, %v3752
  %3882 = vst.msk [vmem:[%s5 + $0xf8] sm:$0xf] %vm3819, %v3753
  %3883 = vst.msk [vmem:[%s5 + $0xfc] sm:$0xf] %vm3819, %v3754
  // Predicated region
  $region22: #{residual_block.2} parent=0 // pred_check
    _
  $region23: #{residual_block.2} parent=0 // pred_check_branch
    %3885 = sbr.rel (0) target = $region25
  $region24: #{residual_block.2} parent=0 // pred_region
    _
  $region25: #{residual_block.2} parent=0 // pred_fallthru
    _
  // Predicated region
  $region26: #{residual_block.2} parent=0 // pred_check
    _
  $region27: #{residual_block.2} parent=0 // pred_check_branch
    %3887 = sbr.rel (0) target = $region29
  $region28: #{residual_block.2} parent=0 // pred_region
    _
  $region29: #{residual_block.2} parent=0 // pred_fallthru
    _

// kernel: residual_block.3
$region0: #{residual_block.3}
  #allocation0 [shape = 'u32[]', space=smem, size = 0x4, offset = 0x4, fixed_abs, tag = 'smem constant byte address 0x4 - core index']
  #allocation1 [shape = 'u32[144,128]{1,0:T(1,128)}', space=vmem, size = 0x12000, scoped, tag = 'internal scratch']
  #allocation2 [shape = 'f32[2,18,18,4]{3,2,1,0:T(8,128)}', space=vmem, size = 0x6c000, scoped, tag = 'scratch operand']
  #allocation3 [shape = 'bf16[512,36]{1,0:T(16,128)(2,1)}', space=vmem, size = 0x20000, scoped, tag = 'scratch operand']
  %s0 = inlined_call_operand.vmem [shape: bf16[2,16,16,4], index: 0, kind: input, shape index: {}]
  %s1 = inlined_call_operand.vmem [shape: bf16[36,4], index: 1, kind: input, shape index: {}]
  %s2 = inlined_call_operand.vmem [shape: f32[1,4], index: 2, kind: input, shape index: {}]
  %s3 = inlined_call_operand.vmem [shape: f32[1,4], index: 3, kind: input, shape index: {}]
  %s4 = inlined_call_operand.vmem [shape: f32[512,4], index: 4, kind: input, shape index: {}]
  %s5 = inlined_call_operand.vmem [shape: f32[512,4], index: 5, kind: output, shape index: {}]
  %s6 = sld [smem:[#allocation0]]
  $region30: #{residual_block.3} parent=0
    _
  %s8 = ssub.s32 1, %s6
  %s9 = scalar_select 0, %s8, %s6
  // Predicated region
  $region2: #{residual_block.3} parent=0 // pred_check
    _
  $region3: #{residual_block.3} parent=0 // pred_check_branch
    %11 = sbr.rel (0) target = $region5
  $region4: #{residual_block.3} parent=0 // pred_region
    _
  $region5: #{residual_block.3} parent=0 // pred_fallthru
    _
  // Predicated region
  $region6: #{residual_block.3} parent=0 // pred_check
    _
  $region7: #{residual_block.3} parent=0 // pred_check_branch
    %13 = sbr.rel (0) target = $region9
  $region8: #{residual_block.3} parent=0 // pred_region
    _
  $region9: #{residual_block.3} parent=0 // pred_fallthru
    _
  // Predicated region
  $region10: #{residual_block.3} parent=0 // pred_check
    _
  $region11: #{residual_block.3} parent=0 // pred_check_branch
    %15 = sbr.rel (0) target = $region13
  $region12: #{residual_block.3} parent=0 // pred_region
    _
  $region13: #{residual_block.3} parent=0 // pred_fallthru
    _
  // Predicated region
  $region14: #{residual_block.3} parent=0 // pred_check
    _
  $region15: #{residual_block.3} parent=0 // pred_check_branch
    %17 = sbr.rel (0) target = $region17
  $region16: #{residual_block.3} parent=0 // pred_region
    _
  $region17: #{residual_block.3} parent=0 // pred_fallthru
    _
  // Predicated region
  $region18: #{residual_block.3} parent=0 // pred_check
    _
  $region19: #{residual_block.3} parent=0 // pred_check_branch
    %19 = sbr.rel (0) target = $region21
  $region20: #{residual_block.3} parent=0 // pred_region
    _
  $region21: #{residual_block.3} parent=0 // pred_fallthru
    _
  %vm21 = vcmask 31744
  %22 = vst.msk [vmem:[#allocation2] sm:$0xff] %vm21, 0.0
  %23 = vst.msk [vmem:[#allocation2 + $0x8] sm:$0xff] %vm21, 0.0
  %vm24 = vcmask 25600
  %25 = vst.msk [vmem:[#allocation2 + $0x10] sm:$0x3] %vm24, 0.0
  %26 = vst.msk [vmem:[#allocation2 + $0x18] sm:$0xff] %vm21, 0.0
  %27 = vst.msk [vmem:[#allocation2 + $0x20] sm:$0xff] %vm21, 0.0
  %28 = vst.msk [vmem:[#allocation2 + $0x28] sm:$0x3] %vm24, 0.0
  %29 = vst.msk [vmem:[#allocation2 + $0x30] sm:$0xff] %vm21, 0.0
  %30 = vst.msk [vmem:[#allocation2 + $0x38] sm:$0xff] %vm21, 0.0
  %31 = vst.msk [vmem:[#allocation2 + $0x40] sm:$0x3] %vm24, 0.0
  %32 = vst.msk [vmem:[#allocation2 + $0x48] sm:$0xff] %vm21, 0.0
  %33 = vst.msk [vmem:[#allocation2 + $0x50] sm:$0xff] %vm21, 0.0
  %34 = vst.msk [vmem:[#allocation2 + $0x58] sm:$0x3] %vm24, 0.0
  %35 = vst.msk [vmem:[#allocation2 + $0x60] sm:$0xff] %vm21, 0.0
  %36 = vst.msk [vmem:[#allocation2 + $0x68] sm:$0xff] %vm21, 0.0
  %37 = vst.msk [vmem:[#allocation2 + $0x70] sm:$0x3] %vm24, 0.0
  %38 = vst.msk [vmem:[#allocation2 + $0x78] sm:$0xff] %vm21, 0.0
  %39 = vst.msk [vmem:[#allocation2 + $0x80] sm:$0xff] %vm21, 0.0
  %40 = vst.msk [vmem:[#allocation2 + $0x88] sm:$0x3] %vm24, 0.0
  %41 = vst.msk [vmem:[#allocation2 + $0x90] sm:$0xff] %vm21, 0.0
  %42 = vst.msk [vmem:[#allocation2 + $0x98] sm:$0xff] %vm21, 0.0
  %43 = vst.msk [vmem:[#allocation2 + $0xa0] sm:$0x3] %vm24, 0.0
  %44 = vst.msk [vmem:[#allocation2 + $0xa8] sm:$0xff] %vm21, 0.0
  %45 = vst.msk [vmem:[#allocation2 + $0xb0] sm:$0xff] %vm21, 0.0
  %46 = vst.msk [vmem:[#allocation2 + $0xb8] sm:$0x3] %vm24, 0.0
  %47 = vst.msk [vmem:[#allocation2 + $0xc0] sm:$0xff] %vm21, 0.0
  %48 = vst.msk [vmem:[#allocation2 + $0xc8] sm:$0xff] %vm21, 0.0
  %49 = vst.msk [vmem:[#allocation2 + $0xd0] sm:$0x3] %vm24, 0.0
  %50 = vst.msk [vmem:[#allocation2 + $0xd8] sm:$0xff] %vm21, 0.0
  %51 = vst.msk [vmem:[#allocation2 + $0xe0] sm:$0xff] %vm21, 0.0
  %52 = vst.msk [vmem:[#allocation2 + $0xe8] sm:$0x3] %vm24, 0.0
  %53 = vst.msk [vmem:[#allocation2 + $0xf0] sm:$0xff] %vm21, 0.0
  %54 = vst.msk [vmem:[#allocation2 + $0xf8] sm:$0xff] %vm21, 0.0
  %55 = vst.msk [vmem:[#allocation2 + $0x100] sm:$0x3] %vm24, 0.0
  %56 = vst.msk [vmem:[#allocation2 + $0x108] sm:$0xff] %vm21, 0.0
  %57 = vst.msk [vmem:[#allocation2 + $0x110] sm:$0xff] %vm21, 0.0
  %58 = vst.msk [vmem:[#allocation2 + $0x118] sm:$0x3] %vm24, 0.0
  %59 = vst.msk [vmem:[#allocation2 + $0x120] sm:$0xff] %vm21, 0.0
  %60 = vst.msk [vmem:[#allocation2 + $0x128] sm:$0xff] %vm21, 0.0
  %61 = vst.msk [vmem:[#allocation2 + $0x130] sm:$0x3] %vm24, 0.0
  %62 = vst.msk [vmem:[#allocation2 + $0x138] sm:$0xff] %vm21, 0.0
  %63 = vst.msk [vmem:[#allocation2 + $0x140] sm:$0xff] %vm21, 0.0
  %64 = vst.msk [vmem:[#allocation2 + $0x148] sm:$0x3] %vm24, 0.0
  %65 = vst.msk [vmem:[#allocation2 + $0x150] sm:$0xff] %vm21, 0.0
  %66 = vst.msk [vmem:[#allocation2 + $0x158] sm:$0xff] %vm21, 0.0
  %67 = vst.msk [vmem:[#allocation2 + $0x160] sm:$0x3] %vm24, 0.0
  %68 = vst.msk [vmem:[#allocation2 + $0x168] sm:$0xff] %vm21, 0.0
  %69 = vst.msk [vmem:[#allocation2 + $0x170] sm:$0xff] %vm21, 0.0
  %70 = vst.msk [vmem:[#allocation2 + $0x178] sm:$0x3] %vm24, 0.0
  %71 = vst.msk [vmem:[#allocation2 + $0x180] sm:$0xff] %vm21, 0.0
  %72 = vst.msk [vmem:[#allocation2 + $0x188] sm:$0xff] %vm21, 0.0
  %73 = vst.msk [vmem:[#allocation2 + $0x190] sm:$0x3] %vm24, 0.0
  %74 = vst.msk [vmem:[#allocation2 + $0x198] sm:$0xff] %vm21, 0.0
  %75 = vst.msk [vmem:[#allocation2 + $0x1a0] sm:$0xff] %vm21, 0.0
  %76 = vst.msk [vmem:[#allocation2 + $0x1a8] sm:$0x3] %vm24, 0.0
  %77 = vst.msk [vmem:[#allocation2 + $0x1b0] sm:$0xff] %vm21, 0.0
  %78 = vst.msk [vmem:[#allocation2 + $0x1b8] sm:$0xff] %vm21, 0.0
  %79 = vst.msk [vmem:[#allocation2 + $0x1c0] sm:$0x3] %vm24, 0.0
  %80 = vst.msk [vmem:[#allocation2 + $0x1c8] sm:$0xff] %vm21, 0.0
  %81 = vst.msk [vmem:[#allocation2 + $0x1d0] sm:$0xff] %vm21, 0.0
  %82 = vst.msk [vmem:[#allocation2 + $0x1d8] sm:$0x3] %vm24, 0.0
  %83 = vst.msk [vmem:[#allocation2 + $0x1e0] sm:$0xff] %vm21, 0.0
  %84 = vst.msk [vmem:[#allocation2 + $0x1e8] sm:$0xff] %vm21, 0.0
  %85 = vst.msk [vmem:[#allocation2 + $0x1f0] sm:$0x3] %vm24, 0.0
  %86 = vst.msk [vmem:[#allocation2 + $0x1f8] sm:$0xff] %vm21, 0.0
  %87 = vst.msk [vmem:[#allocation2 + $0x200] sm:$0xff] %vm21, 0.0
  %88 = vst.msk [vmem:[#allocation2 + $0x208] sm:$0x3] %vm24, 0.0
  %89 = vst.msk [vmem:[#allocation2 + $0x210] sm:$0xff] %vm21, 0.0
  %90 = vst.msk [vmem:[#allocation2 + $0x218] sm:$0xff] %vm21, 0.0
  %91 = vst.msk [vmem:[#allocation2 + $0x220] sm:$0x3] %vm24, 0.0
  %92 = vst.msk [vmem:[#allocation2 + $0x228] sm:$0xff] %vm21, 0.0
  %93 = vst.msk [vmem:[#allocation2 + $0x230] sm:$0xff] %vm21, 0.0
  %94 = vst.msk [vmem:[#allocation2 + $0x238] sm:$0x3] %vm24, 0.0
  %95 = vst.msk [vmem:[#allocation2 + $0x240] sm:$0xff] %vm21, 0.0
  %96 = vst.msk [vmem:[#allocation2 + $0x248] sm:$0xff] %vm21, 0.0
  %97 = vst.msk [vmem:[#allocation2 + $0x250] sm:$0x3] %vm24, 0.0
  %98 = vst.msk [vmem:[#allocation2 + $0x258] sm:$0xff] %vm21, 0.0
  %99 = vst.msk [vmem:[#allocation2 + $0x260] sm:$0xff] %vm21, 0.0
  %100 = vst.msk [vmem:[#allocation2 + $0x268] sm:$0x3] %vm24, 0.0
  %101 = vst.msk [vmem:[#allocation2 + $0x270] sm:$0xff] %vm21, 0.0
  %102 = vst.msk [vmem:[#allocation2 + $0x278] sm:$0xff] %vm21, 0.0
  %103 = vst.msk [vmem:[#allocation2 + $0x280] sm:$0x3] %vm24, 0.0
  %104 = vst.msk [vmem:[#allocation2 + $0x288] sm:$0xff] %vm21, 0.0
  %105 = vst.msk [vmem:[#allocation2 + $0x290] sm:$0xff] %vm21, 0.0
  %106 = vst.msk [vmem:[#allocation2 + $0x298] sm:$0x3] %vm24, 0.0
  %107 = vst.msk [vmem:[#allocation2 + $0x2a0] sm:$0xff] %vm21, 0.0
  %108 = vst.msk [vmem:[#allocation2 + $0x2a8] sm:$0xff] %vm21, 0.0
  %109 = vst.msk [vmem:[#allocation2 + $0x2b0] sm:$0x3] %vm24, 0.0
  %110 = vst.msk [vmem:[#allocation2 + $0x2b8] sm:$0xff] %vm21, 0.0
  %111 = vst.msk [vmem:[#allocation2 + $0x2c0] sm:$0xff] %vm21, 0.0
  %112 = vst.msk [vmem:[#allocation2 + $0x2c8] sm:$0x3] %vm24, 0.0
  %113 = vst.msk [vmem:[#allocation2 + $0x2d0] sm:$0xff] %vm21, 0.0
  %114 = vst.msk [vmem:[#allocation2 + $0x2d8] sm:$0xff] %vm21, 0.0
  %115 = vst.msk [vmem:[#allocation2 + $0x2e0] sm:$0x3] %vm24, 0.0
  %116 = vst.msk [vmem:[#allocation2 + $0x2e8] sm:$0xff] %vm21, 0.0
  %117 = vst.msk [vmem:[#allocation2 + $0x2f0] sm:$0xff] %vm21, 0.0
  %118 = vst.msk [vmem:[#allocation2 + $0x2f8] sm:$0x3] %vm24, 0.0
  %119 = vst.msk [vmem:[#allocation2 + $0x300] sm:$0xff] %vm21, 0.0
  %120 = vst.msk [vmem:[#allocation2 + $0x308] sm:$0xff] %vm21, 0.0
  %121 = vst.msk [vmem:[#allocation2 + $0x310] sm:$0x3] %vm24, 0.0
  %122 = vst.msk [vmem:[#allocation2 + $0x318] sm:$0xff] %vm21, 0.0
  %123 = vst.msk [vmem:[#allocation2 + $0x320] sm:$0xff] %vm21, 0.0
  %124 = vst.msk [vmem:[#allocation2 + $0x328] sm:$0x3] %vm24, 0.0
  %125 = vst.msk [vmem:[#allocation2 + $0x330] sm:$0xff] %vm21, 0.0
  %126 = vst.msk [vmem:[#allocation2 + $0x338] sm:$0xff] %vm21, 0.0
  %127 = vst.msk [vmem:[#allocation2 + $0x340] sm:$0x3] %vm24, 0.0
  %128 = vst.msk [vmem:[#allocation2 + $0x348] sm:$0xff] %vm21, 0.0
  %129 = vst.msk [vmem:[#allocation2 + $0x350] sm:$0xff] %vm21, 0.0
  %130 = vst.msk [vmem:[#allocation2 + $0x358] sm:$0x3] %vm24, 0.0
  %v131 = vld [vmem:[%s0] sm:$0xf]
  %v132 = vld [vmem:[%s0 + $0x4] sm:$0xf]
  %v133 = vld [vmem:[%s0 + $0x8] sm:$0xf]
  %v134 = vld [vmem:[%s0 + $0xc] sm:$0xf]
  %v135 = vld [vmem:[%s0 + $0x10] sm:$0xf]
  %v136 = vld [vmem:[%s0 + $0x14] sm:$0xf]
  %v137 = vld [vmem:[%s0 + $0x18] sm:$0xf]
  %v138 = vld [vmem:[%s0 + $0x1c] sm:$0xf]
  %v139 = vld [vmem:[%s0 + $0x20] sm:$0xf]
  %v140 = vld [vmem:[%s0 + $0x24] sm:$0xf]
  %v141 = vld [vmem:[%s0 + $0x28] sm:$0xf]
  %v142 = vld [vmem:[%s0 + $0x2c] sm:$0xf]
  %v143 = vld [vmem:[%s0 + $0x30] sm:$0xf]
  %v144 = vld [vmem:[%s0 + $0x34] sm:$0xf]
  %v145 = vld [vmem:[%s0 + $0x38] sm:$0xf]
  %v146 = vld [vmem:[%s0 + $0x3c] sm:$0xf]
  %v147 = vld [vmem:[%s0 + $0x40] sm:$0xf]
  %v148 = vld [vmem:[%s0 + $0x44] sm:$0xf]
  %v149 = vld [vmem:[%s0 + $0x48] sm:$0xf]
  %v150 = vld [vmem:[%s0 + $0x4c] sm:$0xf]
  %v151 = vld [vmem:[%s0 + $0x50] sm:$0xf]
  %v152 = vld [vmem:[%s0 + $0x54] sm:$0xf]
  %v153 = vld [vmem:[%s0 + $0x58] sm:$0xf]
  %v154 = vld [vmem:[%s0 + $0x5c] sm:$0xf]
  %v155 = vld [vmem:[%s0 + $0x60] sm:$0xf]
  %v156 = vld [vmem:[%s0 + $0x64] sm:$0xf]
  %v157 = vld [vmem:[%s0 + $0x68] sm:$0xf]
  %v158 = vld [vmem:[%s0 + $0x6c] sm:$0xf]
  %v159 = vld [vmem:[%s0 + $0x70] sm:$0xf]
  %v160 = vld [vmem:[%s0 + $0x74] sm:$0xf]
  %v161 = vld [vmem:[%s0 + $0x78] sm:$0xf]
  %v162 = vld [vmem:[%s0 + $0x7c] sm:$0xf]
  %v163 = vld [vmem:[%s0 + $0x80] sm:$0xf]
  %v164 = vld [vmem:[%s0 + $0x84] sm:$0xf]
  %v165 = vld [vmem:[%s0 + $0x88] sm:$0xf]
  %v166 = vld [vmem:[%s0 + $0x8c] sm:$0xf]
  %v167 = vld [vmem:[%s0 + $0x90] sm:$0xf]
  %v168 = vld [vmem:[%s0 + $0x94] sm:$0xf]
  %v169 = vld [vmem:[%s0 + $0x98] sm:$0xf]
  %v170 = vld [vmem:[%s0 + $0x9c] sm:$0xf]
  %v171 = vld [vmem:[%s0 + $0xa0] sm:$0xf]
  %v172 = vld [vmem:[%s0 + $0xa4] sm:$0xf]
  %v173 = vld [vmem:[%s0 + $0xa8] sm:$0xf]
  %v174 = vld [vmem:[%s0 + $0xac] sm:$0xf]
  %v175 = vld [vmem:[%s0 + $0xb0] sm:$0xf]
  %v176 = vld [vmem:[%s0 + $0xb4] sm:$0xf]
  %v177 = vld [vmem:[%s0 + $0xb8] sm:$0xf]
  %v178 = vld [vmem:[%s0 + $0xbc] sm:$0xf]
  %v179 = vld [vmem:[%s0 + $0xc0] sm:$0xf]
  %v180 = vld [vmem:[%s0 + $0xc4] sm:$0xf]
  %v181 = vld [vmem:[%s0 + $0xc8] sm:$0xf]
  %v182 = vld [vmem:[%s0 + $0xcc] sm:$0xf]
  %v183 = vld [vmem:[%s0 + $0xd0] sm:$0xf]
  %v184 = vld [vmem:[%s0 + $0xd4] sm:$0xf]
  %v185 = vld [vmem:[%s0 + $0xd8] sm:$0xf]
  %v186 = vld [vmem:[%s0 + $0xdc] sm:$0xf]
  %v187 = vld [vmem:[%s0 + $0xe0] sm:$0xf]
  %v188 = vld [vmem:[%s0 + $0xe4] sm:$0xf]
  %v189 = vld [vmem:[%s0 + $0xe8] sm:$0xf]
  %v190 = vld [vmem:[%s0 + $0xec] sm:$0xf]
  %v191 = vld [vmem:[%s0 + $0xf0] sm:$0xf]
  %v192 = vld [vmem:[%s0 + $0xf4] sm:$0xf]
  %v193 = vld [vmem:[%s0 + $0xf8] sm:$0xf]
  %v194 = vld [vmem:[%s0 + $0xfc] sm:$0xf]
  %v195 = vunpack.c.l.bf16 %v131
  %v196 = vunpack.c.l.bf16 %v132
  %v197 = vunpack.c.l.bf16 %v133
  %v198 = vunpack.c.l.bf16 %v134
  %v199 = vunpack.c.l.bf16 %v135
  %v200 = vunpack.c.l.bf16 %v136
  %v201 = vunpack.c.l.bf16 %v137
  %v202 = vunpack.c.l.bf16 %v138
  %v203 = vunpack.c.l.bf16 %v139
  %v204 = vunpack.c.l.bf16 %v140
  %v205 = vunpack.c.l.bf16 %v141
  %v206 = vunpack.c.l.bf16 %v142
  %v207 = vunpack.c.l.bf16 %v143
  %v208 = vunpack.c.l.bf16 %v144
  %v209 = vunpack.c.l.bf16 %v145
  %v210 = vunpack.c.l.bf16 %v146
  %v211 = vunpack.c.l.bf16 %v147
  %v212 = vunpack.c.l.bf16 %v148
  %v213 = vunpack.c.l.bf16 %v149
  %v214 = vunpack.c.l.bf16 %v150
  %v215 = vunpack.c.l.bf16 %v151
  %v216 = vunpack.c.l.bf16 %v152
  %v217 = vunpack.c.l.bf16 %v153
  %v218 = vunpack.c.l.bf16 %v154
  %v219 = vunpack.c.l.bf16 %v155
  %v220 = vunpack.c.l.bf16 %v156
  %v221 = vunpack.c.l.bf16 %v157
  %v222 = vunpack.c.l.bf16 %v158
  %v223 = vunpack.c.l.bf16 %v159
  %v224 = vunpack.c.l.bf16 %v160
  %v225 = vunpack.c.l.bf16 %v161
  %v226 = vunpack.c.l.bf16 %v162
  %v227 = vunpack.c.l.bf16 %v163
  %v228 = vunpack.c.l.bf16 %v164
  %v229 = vunpack.c.l.bf16 %v165
  %v230 = vunpack.c.l.bf16 %v166
  %v231 = vunpack.c.l.bf16 %v167
  %v232 = vunpack.c.l.bf16 %v168
  %v233 = vunpack.c.l.bf16 %v169
  %v234 = vunpack.c.l.bf16 %v170
  %v235 = vunpack.c.l.bf16 %v171
  %v236 = vunpack.c.l.bf16 %v172
  %v237 = vunpack.c.l.bf16 %v173
  %v238 = vunpack.c.l.bf16 %v174
  %v239 = vunpack.c.l.bf16 %v175
  %v240 = vunpack.c.l.bf16 %v176
  %v241 = vunpack.c.l.bf16 %v177
  %v242 = vunpack.c.l.bf16 %v178
  %v243 = vunpack.c.l.bf16 %v179
  %v244 = vunpack.c.l.bf16 %v180
  %v245 = vunpack.c.l.bf16 %v181
  %v246 = vunpack.c.l.bf16 %v182
  %v247 = vunpack.c.l.bf16 %v183
  %v248 = vunpack.c.l.bf16 %v184
  %v249 = vunpack.c.l.bf16 %v185
  %v250 = vunpack.c.l.bf16 %v186
  %v251 = vunpack.c.l.bf16 %v187
  %v252 = vunpack.c.l.bf16 %v188
  %v253 = vunpack.c.l.bf16 %v189
  %v254 = vunpack.c.l.bf16 %v190
  %v255 = vunpack.c.l.bf16 %v191
  %v256 = vunpack.c.l.bf16 %v192
  %v257 = vunpack.c.l.bf16 %v193
  %v258 = vunpack.c.l.bf16 %v194
  %s259 = scalar_lea.vmem [#allocation2], 24
  %260 = vst.msk [vmem:[%s259 + $0x1] sm:$0xff] %vm21, %v195
  %261 = vst.msk [vmem:[%s259 + $0x9] sm:$0xff] %vm21, %v196
  %262 = vst.msk [vmem:[%s259 + $0x19] sm:$0xff] %vm21, %v197
  %263 = vst.msk [vmem:[%s259 + $0x21] sm:$0xff] %vm21, %v198
  %264 = vst.msk [vmem:[%s259 + $0x31] sm:$0xff] %vm21, %v199
  %265 = vst.msk [vmem:[%s259 + $0x39] sm:$0xff] %vm21, %v200
  %266 = vst.msk [vmem:[%s259 + $0x49] sm:$0xff] %vm21, %v201
  %267 = vst.msk [vmem:[%s259 + $0x51] sm:$0xff] %vm21, %v202
  %268 = vst.msk [vmem:[%s259 + $0x61] sm:$0xff] %vm21, %v203
  %269 = vst.msk [vmem:[%s259 + $0x69] sm:$0xff] %vm21, %v204
  %270 = vst.msk [vmem:[%s259 + $0x79] sm:$0xff] %vm21, %v205
  %271 = vst.msk [vmem:[%s259 + $0x81] sm:$0xff] %vm21, %v206
  %272 = vst.msk [vmem:[%s259 + $0x91] sm:$0xff] %vm21, %v207
  %273 = vst.msk [vmem:[%s259 + $0x99] sm:$0xff] %vm21, %v208
  %274 = vst.msk [vmem:[%s259 + $0xa9] sm:$0xff] %vm21, %v209
  %275 = vst.msk [vmem:[%s259 + $0xb1] sm:$0xff] %vm21, %v210
  %276 = vst.msk [vmem:[%s259 + $0xc1] sm:$0xff] %vm21, %v211
  %277 = vst.msk [vmem:[%s259 + $0xc9] sm:$0xff] %vm21, %v212
  %278 = vst.msk [vmem:[%s259 + $0xd9] sm:$0xff] %vm21, %v213
  %279 = vst.msk [vmem:[%s259 + $0xe1] sm:$0xff] %vm21, %v214
  %280 = vst.msk [vmem:[%s259 + $0xf1] sm:$0xff] %vm21, %v215
  %281 = vst.msk [vmem:[%s259 + $0xf9] sm:$0xff] %vm21, %v216
  %282 = vst.msk [vmem:[%s259 + $0x109] sm:$0xff] %vm21, %v217
  %283 = vst.msk [vmem:[%s259 + $0x111] sm:$0xff] %vm21, %v218
  %284 = vst.msk [vmem:[%s259 + $0x121] sm:$0xff] %vm21, %v219
  %285 = vst.msk [vmem:[%s259 + $0x129] sm:$0xff] %vm21, %v220
  %286 = vst.msk [vmem:[%s259 + $0x139] sm:$0xff] %vm21, %v221
  %287 = vst.msk [vmem:[%s259 + $0x141] sm:$0xff] %vm21, %v222
  %288 = vst.msk [vmem:[%s259 + $0x151] sm:$0xff] %vm21, %v223
  %289 = vst.msk [vmem:[%s259 + $0x159] sm:$0xff] %vm21, %v224
  %290 = vst.msk [vmem:[%s259 + $0x169] sm:$0xff] %vm21, %v225
  %291 = vst.msk [vmem:[%s259 + $0x171] sm:$0xff] %vm21, %v226
  %292 = vst.msk [vmem:[%s259 + $0x1b1] sm:$0xff] %vm21, %v227
  %293 = vst.msk [vmem:[%s259 + $0x1b9] sm:$0xff] %vm21, %v228
  %294 = vst.msk [vmem:[%s259 + $0x1c9] sm:$0xff] %vm21, %v229
  %295 = vst.msk [vmem:[%s259 + $0x1d1] sm:$0xff] %vm21, %v230
  %296 = vst.msk [vmem:[%s259 + $0x1e1] sm:$0xff] %vm21, %v231
  %297 = vst.msk [vmem:[%s259 + $0x1e9] sm:$0xff] %vm21, %v232
  %298 = vst.msk [vmem:[%s259 + $0x1f9] sm:$0xff] %vm21, %v233
  %299 = vst.msk [vmem:[%s259 + $0x201] sm:$0xff] %vm21, %v234
  %300 = vst.msk [vmem:[%s259 + $0x211] sm:$0xff] %vm21, %v235
  %301 = vst.msk [vmem:[%s259 + $0x219] sm:$0xff] %vm21, %v236
  %302 = vst.msk [vmem:[%s259 + $0x229] sm:$0xff] %vm21, %v237
  %303 = vst.msk [vmem:[%s259 + $0x231] sm:$0xff] %vm21, %v238
  %304 = vst.msk [vmem:[%s259 + $0x241] sm:$0xff] %vm21, %v239
  %305 = vst.msk [vmem:[%s259 + $0x249] sm:$0xff] %vm21, %v240
  %306 = vst.msk [vmem:[%s259 + $0x259] sm:$0xff] %vm21, %v241
  %307 = vst.msk [vmem:[%s259 + $0x261] sm:$0xff] %vm21, %v242
  %308 = vst.msk [vmem:[%s259 + $0x271] sm:$0xff] %vm21, %v243
  %309 = vst.msk [vmem:[%s259 + $0x279] sm:$0xff] %vm21, %v244
  %310 = vst.msk [vmem:[%s259 + $0x289] sm:$0xff] %vm21, %v245
  %311 = vst.msk [vmem:[%s259 + $0x291] sm:$0xff] %vm21, %v246
  %312 = vst.msk [vmem:[%s259 + $0x2a1] sm:$0xff] %vm21, %v247
  %313 = vst.msk [vmem:[%s259 + $0x2a9] sm:$0xff] %vm21, %v248
  %314 = vst.msk [vmem:[%s259 + $0x2b9] sm:$0xff] %vm21, %v249
  %315 = vst.msk [vmem:[%s259 + $0x2c1] sm:$0xff] %vm21, %v250
  %316 = vst.msk [vmem:[%s259 + $0x2d1] sm:$0xff] %vm21, %v251
  %317 = vst.msk [vmem:[%s259 + $0x2d9] sm:$0xff] %vm21, %v252
  %318 = vst.msk [vmem:[%s259 + $0x2e9] sm:$0xff] %vm21, %v253
  %319 = vst.msk [vmem:[%s259 + $0x2f1] sm:$0xff] %vm21, %v254
  %320 = vst.msk [vmem:[%s259 + $0x301] sm:$0xff] %vm21, %v255
  %321 = vst.msk [vmem:[%s259 + $0x309] sm:$0xff] %vm21, %v256
  %322 = vst.msk [vmem:[%s259 + $0x319] sm:$0xff] %vm21, %v257
  %323 = vst.msk [vmem:[%s259 + $0x321] sm:$0xff] %vm21, %v258
  %v324 = vld [vmem:[#allocation2] sm:$0xff]
  %v325 = vld [vmem:[#allocation2 + $0x8] sm:$0xff]
  %v326 = vld [vmem:[#allocation2 + $0x18] sm:$0xff]
  %v327 = vld [vmem:[#allocation2 + $0x20] sm:$0xff]
  %v328 = vld [vmem:[#allocation2 + $0x30] sm:$0xff]
  %v329 = vld [vmem:[#allocation2 + $0x38] sm:$0xff]
  %v330 = vld [vmem:[#allocation2 + $0x48] sm:$0xff]
  %v331 = vld [vmem:[#allocation2 + $0x50] sm:$0xff]
  %v332 = vld [vmem:[#allocation2 + $0x60] sm:$0xff]
  %v333 = vld [vmem:[#allocation2 + $0x68] sm:$0xff]
  %v334 = vld [vmem:[#allocation2 + $0x78] sm:$0xff]
  %v335 = vld [vmem:[#allocation2 + $0x80] sm:$0xff]
  %v336 = vld [vmem:[#allocation2 + $0x90] sm:$0xff]
  %v337 = vld [vmem:[#allocation2 + $0x98] sm:$0xff]
  %v338 = vld [vmem:[#allocation2 + $0xa8] sm:$0xff]
  %v339 = vld [vmem:[#allocation2 + $0xb0] sm:$0xff]
  %v340 = vld [vmem:[#allocation2 + $0xc0] sm:$0xff]
  %v341 = vld [vmem:[#allocation2 + $0xc8] sm:$0xff]
  %v342 = vld [vmem:[#allocation2 + $0xd8] sm:$0xff]
  %v343 = vld [vmem:[#allocation2 + $0xe0] sm:$0xff]
  %v344 = vld [vmem:[#allocation2 + $0xf0] sm:$0xff]
  %v345 = vld [vmem:[#allocation2 + $0xf8] sm:$0xff]
  %v346 = vld [vmem:[#allocation2 + $0x108] sm:$0xff]
  %v347 = vld [vmem:[#allocation2 + $0x110] sm:$0xff]
  %v348 = vld [vmem:[#allocation2 + $0x120] sm:$0xff]
  %v349 = vld [vmem:[#allocation2 + $0x128] sm:$0xff]
  %v350 = vld [vmem:[#allocation2 + $0x138] sm:$0xff]
  %v351 = vld [vmem:[#allocation2 + $0x140] sm:$0xff]
  %v352 = vld [vmem:[#allocation2 + $0x150] sm:$0xff]
  %v353 = vld [vmem:[#allocation2 + $0x158] sm:$0xff]
  %v354 = vld [vmem:[#allocation2 + $0x168] sm:$0xff]
  %v355 = vld [vmem:[#allocation2 + $0x170] sm:$0xff]
  %v356 = vld [vmem:[#allocation2 + $0x1b0] sm:$0xff]
  %v357 = vld [vmem:[#allocation2 + $0x1b8] sm:$0xff]
  %v358 = vld [vmem:[#allocation2 + $0x1c8] sm:$0xff]
  %v359 = vld [vmem:[#allocation2 + $0x1d0] sm:$0xff]
  %v360 = vld [vmem:[#allocation2 + $0x1e0] sm:$0xff]
  %v361 = vld [vmem:[#allocation2 + $0x1e8] sm:$0xff]
  %v362 = vld [vmem:[#allocation2 + $0x1f8] sm:$0xff]
  %v363 = vld [vmem:[#allocation2 + $0x200] sm:$0xff]
  %v364 = vld [vmem:[#allocation2 + $0x210] sm:$0xff]
  %v365 = vld [vmem:[#allocation2 + $0x218] sm:$0xff]
  %v366 = vld [vmem:[#allocation2 + $0x228] sm:$0xff]
  %v367 = vld [vmem:[#allocation2 + $0x230] sm:$0xff]
  %v368 = vld [vmem:[#allocation2 + $0x240] sm:$0xff]
  %v369 = vld [vmem:[#allocation2 + $0x248] sm:$0xff]
  %v370 = vld [vmem:[#allocation2 + $0x258] sm:$0xff]
  %v371 = vld [vmem:[#allocation2 + $0x260] sm:$0xff]
  %v372 = vld [vmem:[#allocation2 + $0x270] sm:$0xff]
  %v373 = vld [vmem:[#allocation2 + $0x278] sm:$0xff]
  %v374 = vld [vmem:[#allocation2 + $0x288] sm:$0xff]
  %v375 = vld [vmem:[#allocation2 + $0x290] sm:$0xff]
  %v376 = vld [vmem:[#allocation2 + $0x2a0] sm:$0xff]
  %v377 = vld [vmem:[#allocation2 + $0x2a8] sm:$0xff]
  %v378 = vld [vmem:[#allocation2 + $0x2b8] sm:$0xff]
  %v379 = vld [vmem:[#allocation2 + $0x2c0] sm:$0xff]
  %v380 = vld [vmem:[#allocation2 + $0x2d0] sm:$0xff]
  %v381 = vld [vmem:[#allocation2 + $0x2d8] sm:$0xff]
  %v382 = vld [vmem:[#allocation2 + $0x2e8] sm:$0xff]
  %v383 = vld [vmem:[#allocation2 + $0x2f0] sm:$0xff]
  %v384 = vld [vmem:[#allocation2 + $0x300] sm:$0xff]
  %v385 = vld [vmem:[#allocation2 + $0x308] sm:$0xff]
  %v386 = vld [vmem:[#allocation2 + $0x318] sm:$0xff]
  %v387 = vld [vmem:[#allocation2 + $0x320] sm:$0xff]
  %v388 = vpack.c.bf16 %v325, %v324
  %v389 = vpack.c.bf16 %v327, %v326
  %v390 = vpack.c.bf16 %v329, %v328
  %v391 = vpack.c.bf16 %v331, %v330
  %v392 = vpack.c.bf16 %v333, %v332
  %v393 = vpack.c.bf16 %v335, %v334
  %v394 = vpack.c.bf16 %v337, %v336
  %v395 = vpack.c.bf16 %v339, %v338
  %v396 = vpack.c.bf16 %v341, %v340
  %v397 = vpack.c.bf16 %v343, %v342
  %v398 = vpack.c.bf16 %v345, %v344
  %v399 = vpack.c.bf16 %v347, %v346
  %v400 = vpack.c.bf16 %v349, %v348
  %v401 = vpack.c.bf16 %v351, %v350
  %v402 = vpack.c.bf16 %v353, %v352
  %v403 = vpack.c.bf16 %v355, %v354
  %v404 = vpack.c.bf16 %v357, %v356
  %v405 = vpack.c.bf16 %v359, %v358
  %v406 = vpack.c.bf16 %v361, %v360
  %v407 = vpack.c.bf16 %v363, %v362
  %v408 = vpack.c.bf16 %v365, %v364
  %v409 = vpack.c.bf16 %v367, %v366
  %v410 = vpack.c.bf16 %v369, %v368
  %v411 = vpack.c.bf16 %v371, %v370
  %v412 = vpack.c.bf16 %v373, %v372
  %v413 = vpack.c.bf16 %v375, %v374
  %v414 = vpack.c.bf16 %v377, %v376
  %v415 = vpack.c.bf16 %v379, %v378
  %v416 = vpack.c.bf16 %v381, %v380
  %v417 = vpack.c.bf16 %v383, %v382
  %v418 = vpack.c.bf16 %v385, %v384
  %v419 = vpack.c.bf16 %v387, %v386
  %420 = vst.msk [vmem:[#allocation3] sm:$0xff] %vm21, %v388
  %421 = vst.msk [vmem:[#allocation3 + $0x8] sm:$0xff] %vm21, %v389
  %422 = vst.msk [vmem:[#allocation3 + $0x10] sm:$0xff] %vm21, %v390
  %423 = vst.msk [vmem:[#allocation3 + $0x18] sm:$0xff] %vm21, %v391
  %424 = vst.msk [vmem:[#allocation3 + $0x20] sm:$0xff] %vm21, %v392
  %425 = vst.msk [vmem:[#allocation3 + $0x28] sm:$0xff] %vm21, %v393
  %426 = vst.msk [vmem:[#allocation3 + $0x30] sm:$0xff] %vm21, %v394
  %427 = vst.msk [vmem:[#allocation3 + $0x38] sm:$0xff] %vm21, %v395
  %428 = vst.msk [vmem:[#allocation3 + $0x40] sm:$0xff] %vm21, %v396
  %429 = vst.msk [vmem:[#allocation3 + $0x48] sm:$0xff] %vm21, %v397
  %430 = vst.msk [vmem:[#allocation3 + $0x50] sm:$0xff] %vm21, %v398
  %431 = vst.msk [vmem:[#allocation3 + $0x58] sm:$0xff] %vm21, %v399
  %432 = vst.msk [vmem:[#allocation3 + $0x60] sm:$0xff] %vm21, %v400
  %433 = vst.msk [vmem:[#allocation3 + $0x68] sm:$0xff] %vm21, %v401
  %434 = vst.msk [vmem:[#allocation3 + $0x70] sm:$0xff] %vm21, %v402
  %435 = vst.msk [vmem:[#allocation3 + $0x78] sm:$0xff] %vm21, %v403
  %436 = vst.msk [vmem:[#allocation3 + $0x80] sm:$0xff] %vm21, %v404
  %437 = vst.msk [vmem:[#allocation3 + $0x88] sm:$0xff] %vm21, %v405
  %438 = vst.msk [vmem:[#allocation3 + $0x90] sm:$0xff] %vm21, %v406
  %439 = vst.msk [vmem:[#allocation3 + $0x98] sm:$0xff] %vm21, %v407
  %440 = vst.msk [vmem:[#allocation3 + $0xa0] sm:$0xff] %vm21, %v408
  %441 = vst.msk [vmem:[#allocation3 + $0xa8] sm:$0xff] %vm21, %v409
  %442 = vst.msk [vmem:[#allocation3 + $0xb0] sm:$0xff] %vm21, %v410
  %443 = vst.msk [vmem:[#allocation3 + $0xb8] sm:$0xff] %vm21, %v411
  %444 = vst.msk [vmem:[#allocation3 + $0xc0] sm:$0xff] %vm21, %v412
  %445 = vst.msk [vmem:[#allocation3 + $0xc8] sm:$0xff] %vm21, %v413
  %446 = vst.msk [vmem:[#allocation3 + $0xd0] sm:$0xff] %vm21, %v414
  %447 = vst.msk [vmem:[#allocation3 + $0xd8] sm:$0xff] %vm21, %v415
  %448 = vst.msk [vmem:[#allocation3 + $0xe0] sm:$0xff] %vm21, %v416
  %449 = vst.msk [vmem:[#allocation3 + $0xe8] sm:$0xff] %vm21, %v417
  %450 = vst.msk [vmem:[#allocation3 + $0xf0] sm:$0xff] %vm21, %v418
  %451 = vst.msk [vmem:[#allocation3 + $0xf8] sm:$0xff] %vm21, %v419
  %v452 = vld [vmem:[#allocation2 + $0x1] sm:$0xff]
  %v453 = vld [vmem:[#allocation2 + $0x9] sm:$0xff]
  %v454 = vld [vmem:[#allocation2 + $0x19] sm:$0xff]
  %v455 = vld [vmem:[#allocation2 + $0x21] sm:$0xff]
  %v456 = vld [vmem:[#allocation2 + $0x31] sm:$0xff]
  %v457 = vld [vmem:[#allocation2 + $0x39] sm:$0xff]
  %v458 = vld [vmem:[#allocation2 + $0x49] sm:$0xff]
  %v459 = vld [vmem:[#allocation2 + $0x51] sm:$0xff]
  %v460 = vld [vmem:[#allocation2 + $0x61] sm:$0xff]
  %v461 = vld [vmem:[#allocation2 + $0x69] sm:$0xff]
  %v462 = vld [vmem:[#allocation2 + $0x79] sm:$0xff]
  %v463 = vld [vmem:[#allocation2 + $0x81] sm:$0xff]
  %v464 = vld [vmem:[#allocation2 + $0x91] sm:$0xff]
  %v465 = vld [vmem:[#allocation2 + $0x99] sm:$0xff]
  %v466 = vld [vmem:[#allocation2 + $0xa9] sm:$0xff]
  %v467 = vld [vmem:[#allocation2 + $0xb1] sm:$0xff]
  %v468 = vld [vmem:[#allocation2 + $0xc1] sm:$0xff]
  %v469 = vld [vmem:[#allocation2 + $0xc9] sm:$0xff]
  %v470 = vld [vmem:[#allocation2 + $0xd9] sm:$0xff]
  %v471 = vld [vmem:[#allocation2 + $0xe1] sm:$0xff]
  %v472 = vld [vmem:[#allocation2 + $0xf1] sm:$0xff]
  %v473 = vld [vmem:[#allocation2 + $0xf9] sm:$0xff]
  %v474 = vld [vmem:[#allocation2 + $0x109] sm:$0xff]
  %v475 = vld [vmem:[#allocation2 + $0x111] sm:$0xff]
  %v476 = vld [vmem:[#allocation2 + $0x121] sm:$0xff]
  %v477 = vld [vmem:[#allocation2 + $0x129] sm:$0xff]
  %v478 = vld [vmem:[#allocation2 + $0x139] sm:$0xff]
  %v479 = vld [vmem:[#allocation2 + $0x141] sm:$0xff]
  %v480 = vld [vmem:[#allocation2 + $0x151] sm:$0xff]
  %v481 = vld [vmem:[#allocation2 + $0x159] sm:$0xff]
  %v482 = vld [vmem:[#allocation2 + $0x169] sm:$0xff]
  %v483 = vld [vmem:[#allocation2 + $0x171] sm:$0xff]
  %v484 = vld [vmem:[#allocation2 + $0x1b1] sm:$0xff]
  %v485 = vld [vmem:[#allocation2 + $0x1b9] sm:$0xff]
  %v486 = vld [vmem:[#allocation2 + $0x1c9] sm:$0xff]
  %v487 = vld [vmem:[#allocation2 + $0x1d1] sm:$0xff]
  %v488 = vld [vmem:[#allocation2 + $0x1e1] sm:$0xff]
  %v489 = vld [vmem:[#allocation2 + $0x1e9] sm:$0xff]
  %v490 = vld [vmem:[#allocation2 + $0x1f9] sm:$0xff]
  %v491 = vld [vmem:[#allocation2 + $0x201] sm:$0xff]
  %v492 = vld [vmem:[#allocation2 + $0x211] sm:$0xff]
  %v493 = vld [vmem:[#allocation2 + $0x219] sm:$0xff]
  %v494 = vld [vmem:[#allocation2 + $0x229] sm:$0xff]
  %v495 = vld [vmem:[#allocation2 + $0x231] sm:$0xff]
  %v496 = vld [vmem:[#allocation2 + $0x241] sm:$0xff]
  %v497 = vld [vmem:[#allocation2 + $0x249] sm:$0xff]
  %v498 = vld [vmem:[#allocation2 + $0x259] sm:$0xff]
  %v499 = vld [vmem:[#allocation2 + $0x261] sm:$0xff]
  %v500 = vld [vmem:[#allocation2 + $0x271] sm:$0xff]
  %v501 = vld [vmem:[#allocation2 + $0x279] sm:$0xff]
  %v502 = vld [vmem:[#allocation2 + $0x289] sm:$0xff]
  %v503 = vld [vmem:[#allocation2 + $0x291] sm:$0xff]
  %v504 = vld [vmem:[#allocation2 + $0x2a1] sm:$0xff]
  %v505 = vld [vmem:[#allocation2 + $0x2a9] sm:$0xff]
  %v506 = vld [vmem:[#allocation2 + $0x2b9] sm:$0xff]
  %v507 = vld [vmem:[#allocation2 + $0x2c1] sm:$0xff]
  %v508 = vld [vmem:[#allocation2 + $0x2d1] sm:$0xff]
  %v509 = vld [vmem:[#allocation2 + $0x2d9] sm:$0xff]
  %v510 = vld [vmem:[#allocation2 + $0x2e9] sm:$0xff]
  %v511 = vld [vmem:[#allocation2 + $0x2f1] sm:$0xff]
  %v512 = vld [vmem:[#allocation2 + $0x301] sm:$0xff]
  %v513 = vld [vmem:[#allocation2 + $0x309] sm:$0xff]
  %v514 = vld [vmem:[#allocation2 + $0x319] sm:$0xff]
  %v515 = vld [vmem:[#allocation2 + $0x321] sm:$0xff]
  %v516 = vpack.c.bf16 %v453, %v452
  %v517 = vpack.c.bf16 %v455, %v454
  %v518 = vpack.c.bf16 %v457, %v456
  %v519 = vpack.c.bf16 %v459, %v458
  %v520 = vpack.c.bf16 %v461, %v460
  %v521 = vpack.c.bf16 %v463, %v462
  %v522 = vpack.c.bf16 %v465, %v464
  %v523 = vpack.c.bf16 %v467, %v466
  %v524 = vpack.c.bf16 %v469, %v468
  %v525 = vpack.c.bf16 %v471, %v470
  %v526 = vpack.c.bf16 %v473, %v472
  %v527 = vpack.c.bf16 %v475, %v474
  %v528 = vpack.c.bf16 %v477, %v476
  %v529 = vpack.c.bf16 %v479, %v478
  %v530 = vpack.c.bf16 %v481, %v480
  %v531 = vpack.c.bf16 %v483, %v482
  %v532 = vpack.c.bf16 %v485, %v484
  %v533 = vpack.c.bf16 %v487, %v486
  %v534 = vpack.c.bf16 %v489, %v488
  %v535 = vpack.c.bf16 %v491, %v490
  %v536 = vpack.c.bf16 %v493, %v492
  %v537 = vpack.c.bf16 %v495, %v494
  %v538 = vpack.c.bf16 %v497, %v496
  %v539 = vpack.c.bf16 %v499, %v498
  %v540 = vpack.c.bf16 %v501, %v500
  %v541 = vpack.c.bf16 %v503, %v502
  %v542 = vpack.c.bf16 %v505, %v504
  %v543 = vpack.c.bf16 %v507, %v506
  %v544 = vpack.c.bf16 %v509, %v508
  %v545 = vpack.c.bf16 %v511, %v510
  %v546 = vpack.c.bf16 %v513, %v512
  %v547 = vpack.c.bf16 %v515, %v514
  %580 = vrot.lane.b32.xlu0 %v516, 4
  %v581 = vpop.permute.xlu0 %580
  %582 = vrot.lane.b32.xlu0 %v517, 4
  %v583 = vpop.permute.xlu0 %582
  %584 = vrot.lane.b32.xlu0 %v518, 4
  %v585 = vpop.permute.xlu0 %584
  %586 = vrot.lane.b32.xlu0 %v519, 4
  %v587 = vpop.permute.xlu0 %586
  %588 = vrot.lane.b32.xlu0 %v520, 4
  %v589 = vpop.permute.xlu0 %588
  %590 = vrot.lane.b32.xlu0 %v521, 4
  %v591 = vpop.permute.xlu0 %590
  %592 = vrot.lane.b32.xlu0 %v522, 4
  %v593 = vpop.permute.xlu0 %592
  %594 = vrot.lane.b32.xlu0 %v523, 4
  %v595 = vpop.permute.xlu0 %594
  %596 = vrot.lane.b32.xlu0 %v524, 4
  %v597 = vpop.permute.xlu0 %596
  %598 = vrot.lane.b32.xlu0 %v525, 4
  %v599 = vpop.permute.xlu0 %598
  %600 = vrot.lane.b32.xlu0 %v526, 4
  %v601 = vpop.permute.xlu0 %600
  %602 = vrot.lane.b32.xlu0 %v527, 4
  %v603 = vpop.permute.xlu0 %602
  %604 = vrot.lane.b32.xlu0 %v528, 4
  %v605 = vpop.permute.xlu0 %604
  %606 = vrot.lane.b32.xlu0 %v529, 4
  %v607 = vpop.permute.xlu0 %606
  %608 = vrot.lane.b32.xlu0 %v530, 4
  %v609 = vpop.permute.xlu0 %608
  %610 = vrot.lane.b32.xlu0 %v531, 4
  %v611 = vpop.permute.xlu0 %610
  %612 = vrot.lane.b32.xlu0 %v532, 4
  %v613 = vpop.permute.xlu0 %612
  %614 = vrot.lane.b32.xlu0 %v533, 4
  %v615 = vpop.permute.xlu0 %614
  %616 = vrot.lane.b32.xlu0 %v534, 4
  %v617 = vpop.permute.xlu0 %616
  %618 = vrot.lane.b32.xlu0 %v535, 4
  %v619 = vpop.permute.xlu0 %618
  %620 = vrot.lane.b32.xlu0 %v536, 4
  %v621 = vpop.permute.xlu0 %620
  %622 = vrot.lane.b32.xlu0 %v537, 4
  %v623 = vpop.permute.xlu0 %622
  %624 = vrot.lane.b32.xlu0 %v538, 4
  %v625 = vpop.permute.xlu0 %624
  %626 = vrot.lane.b32.xlu0 %v539, 4
  %v627 = vpop.permute.xlu0 %626
  %628 = vrot.lane.b32.xlu0 %v540, 4
  %v629 = vpop.permute.xlu0 %628
  %630 = vrot.lane.b32.xlu0 %v541, 4
  %v631 = vpop.permute.xlu0 %630
  %632 = vrot.lane.b32.xlu0 %v542, 4
  %v633 = vpop.permute.xlu0 %632
  %634 = vrot.lane.b32.xlu0 %v543, 4
  %v635 = vpop.permute.xlu0 %634
  %636 = vrot.lane.b32.xlu0 %v544, 4
  %v637 = vpop.permute.xlu0 %636
  %638 = vrot.lane.b32.xlu0 %v545, 4
  %v639 = vpop.permute.xlu0 %638
  %640 = vrot.lane.b32.xlu0 %v546, 4
  %v641 = vpop.permute.xlu0 %640
  %642 = vrot.lane.b32.xlu0 %v547, 4
  %v643 = vpop.permute.xlu0 %642
  %vm676 = vcmask 64544
  %677 = vst.msk [vmem:[#allocation3] sm:$0xff] %vm676, %v581
  %678 = vst.msk [vmem:[#allocation3 + $0x8] sm:$0xff] %vm676, %v583
  %679 = vst.msk [vmem:[#allocation3 + $0x10] sm:$0xff] %vm676, %v585
  %680 = vst.msk [vmem:[#allocation3 + $0x18] sm:$0xff] %vm676, %v587
  %681 = vst.msk [vmem:[#allocation3 + $0x20] sm:$0xff] %vm676, %v589
  %682 = vst.msk [vmem:[#allocation3 + $0x28] sm:$0xff] %vm676, %v591
  %683 = vst.msk [vmem:[#allocation3 + $0x30] sm:$0xff] %vm676, %v593
  %684 = vst.msk [vmem:[#allocation3 + $0x38] sm:$0xff] %vm676, %v595
  %685 = vst.msk [vmem:[#allocation3 + $0x40] sm:$0xff] %vm676, %v597
  %686 = vst.msk [vmem:[#allocation3 + $0x48] sm:$0xff] %vm676, %v599
  %687 = vst.msk [vmem:[#allocation3 + $0x50] sm:$0xff] %vm676, %v601
  %688 = vst.msk [vmem:[#allocation3 + $0x58] sm:$0xff] %vm676, %v603
  %689 = vst.msk [vmem:[#allocation3 + $0x60] sm:$0xff] %vm676, %v605
  %690 = vst.msk [vmem:[#allocation3 + $0x68] sm:$0xff] %vm676, %v607
  %691 = vst.msk [vmem:[#allocation3 + $0x70] sm:$0xff] %vm676, %v609
  %692 = vst.msk [vmem:[#allocation3 + $0x78] sm:$0xff] %vm676, %v611
  %693 = vst.msk [vmem:[#allocation3 + $0x80] sm:$0xff] %vm676, %v613
  %694 = vst.msk [vmem:[#allocation3 + $0x88] sm:$0xff] %vm676, %v615
  %695 = vst.msk [vmem:[#allocation3 + $0x90] sm:$0xff] %vm676, %v617
  %696 = vst.msk [vmem:[#allocation3 + $0x98] sm:$0xff] %vm676, %v619
  %697 = vst.msk [vmem:[#allocation3 + $0xa0] sm:$0xff] %vm676, %v621
  %698 = vst.msk [vmem:[#allocation3 + $0xa8] sm:$0xff] %vm676, %v623
  %699 = vst.msk [vmem:[#allocation3 + $0xb0] sm:$0xff] %vm676, %v625
  %700 = vst.msk [vmem:[#allocation3 + $0xb8] sm:$0xff] %vm676, %v627
  %701 = vst.msk [vmem:[#allocation3 + $0xc0] sm:$0xff] %vm676, %v629
  %702 = vst.msk [vmem:[#allocation3 + $0xc8] sm:$0xff] %vm676, %v631
  %703 = vst.msk [vmem:[#allocation3 + $0xd0] sm:$0xff] %vm676, %v633
  %704 = vst.msk [vmem:[#allocation3 + $0xd8] sm:$0xff] %vm676, %v635
  %705 = vst.msk [vmem:[#allocation3 + $0xe0] sm:$0xff] %vm676, %v637
  %706 = vst.msk [vmem:[#allocation3 + $0xe8] sm:$0xff] %vm676, %v639
  %707 = vst.msk [vmem:[#allocation3 + $0xf0] sm:$0xff] %vm676, %v641
  %708 = vst.msk [vmem:[#allocation3 + $0xf8] sm:$0xff] %vm676, %v643
  %v709 = vld [vmem:[#allocation2 + $0x2] sm:$0xff]
  %v710 = vld [vmem:[#allocation2 + $0xa] sm:$0xff]
  %v711 = vld [vmem:[#allocation2 + $0x1a] sm:$0xff]
  %v712 = vld [vmem:[#allocation2 + $0x22] sm:$0xff]
  %v713 = vld [vmem:[#allocation2 + $0x32] sm:$0xff]
  %v714 = vld [vmem:[#allocation2 + $0x3a] sm:$0xff]
  %v715 = vld [vmem:[#allocation2 + $0x4a] sm:$0xff]
  %v716 = vld [vmem:[#allocation2 + $0x52] sm:$0xff]
  %v717 = vld [vmem:[#allocation2 + $0x62] sm:$0xff]
  %v718 = vld [vmem:[#allocation2 + $0x6a] sm:$0xff]
  %v719 = vld [vmem:[#allocation2 + $0x7a] sm:$0xff]
  %v720 = vld [vmem:[#allocation2 + $0x82] sm:$0xff]
  %v721 = vld [vmem:[#allocation2 + $0x92] sm:$0xff]
  %v722 = vld [vmem:[#allocation2 + $0x9a] sm:$0xff]
  %v723 = vld [vmem:[#allocation2 + $0xaa] sm:$0xff]
  %v724 = vld [vmem:[#allocation2 + $0xb2] sm:$0xff]
  %v725 = vld [vmem:[#allocation2 + $0xc2] sm:$0xff]
  %v726 = vld [vmem:[#allocation2 + $0xca] sm:$0xff]
  %v727 = vld [vmem:[#allocation2 + $0xda] sm:$0xff]
  %v728 = vld [vmem:[#allocation2 + $0xe2] sm:$0xff]
  %v729 = vld [vmem:[#allocation2 + $0xf2] sm:$0xff]
  %v730 = vld [vmem:[#allocation2 + $0xfa] sm:$0xff]
  %v731 = vld [vmem:[#allocation2 + $0x10a] sm:$0xff]
  %v732 = vld [vmem:[#allocation2 + $0x112] sm:$0xff]
  %v733 = vld [vmem:[#allocation2 + $0x122] sm:$0xff]
  %v734 = vld [vmem:[#allocation2 + $0x12a] sm:$0xff]
  %v735 = vld [vmem:[#allocation2 + $0x13a] sm:$0xff]
  %v736 = vld [vmem:[#allocation2 + $0x142] sm:$0xff]
  %v737 = vld [vmem:[#allocation2 + $0x152] sm:$0xff]
  %v738 = vld [vmem:[#allocation2 + $0x15a] sm:$0xff]
  %v739 = vld [vmem:[#allocation2 + $0x16a] sm:$0xff]
  %v740 = vld [vmem:[#allocation2 + $0x172] sm:$0xff]
  %v741 = vld [vmem:[#allocation2 + $0x1b2] sm:$0xff]
  %v742 = vld [vmem:[#allocation2 + $0x1ba] sm:$0xff]
  %v743 = vld [vmem:[#allocation2 + $0x1ca] sm:$0xff]
  %v744 = vld [vmem:[#allocation2 + $0x1d2] sm:$0xff]
  %v745 = vld [vmem:[#allocation2 + $0x1e2] sm:$0xff]
  %v746 = vld [vmem:[#allocation2 + $0x1ea] sm:$0xff]
  %v747 = vld [vmem:[#allocation2 + $0x1fa] sm:$0xff]
  %v748 = vld [vmem:[#allocation2 + $0x202] sm:$0xff]
  %v749 = vld [vmem:[#allocation2 + $0x212] sm:$0xff]
  %v750 = vld [vmem:[#allocation2 + $0x21a] sm:$0xff]
  %v751 = vld [vmem:[#allocation2 + $0x22a] sm:$0xff]
  %v752 = vld [vmem:[#allocation2 + $0x232] sm:$0xff]
  %v753 = vld [vmem:[#allocation2 + $0x242] sm:$0xff]
  %v754 = vld [vmem:[#allocation2 + $0x24a] sm:$0xff]
  %v755 = vld [vmem:[#allocation2 + $0x25a] sm:$0xff]
  %v756 = vld [vmem:[#allocation2 + $0x262] sm:$0xff]
  %v757 = vld [vmem:[#allocation2 + $0x272] sm:$0xff]
  %v758 = vld [vmem:[#allocation2 + $0x27a] sm:$0xff]
  %v759 = vld [vmem:[#allocation2 + $0x28a] sm:$0xff]
  %v760 = vld [vmem:[#allocation2 + $0x292] sm:$0xff]
  %v761 = vld [vmem:[#allocation2 + $0x2a2] sm:$0xff]
  %v762 = vld [vmem:[#allocation2 + $0x2aa] sm:$0xff]
  %v763 = vld [vmem:[#allocation2 + $0x2ba] sm:$0xff]
  %v764 = vld [vmem:[#allocation2 + $0x2c2] sm:$0xff]
  %v765 = vld [vmem:[#allocation2 + $0x2d2] sm:$0xff]
  %v766 = vld [vmem:[#allocation2 + $0x2da] sm:$0xff]
  %v767 = vld [vmem:[#allocation2 + $0x2ea] sm:$0xff]
  %v768 = vld [vmem:[#allocation2 + $0x2f2] sm:$0xff]
  %v769 = vld [vmem:[#allocation2 + $0x302] sm:$0xff]
  %v770 = vld [vmem:[#allocation2 + $0x30a] sm:$0xff]
  %v771 = vld [vmem:[#allocation2 + $0x31a] sm:$0xff]
  %v772 = vld [vmem:[#allocation2 + $0x322] sm:$0xff]
  %v773 = vpack.c.bf16 %v710, %v709
  %v774 = vpack.c.bf16 %v712, %v711
  %v775 = vpack.c.bf16 %v714, %v713
  %v776 = vpack.c.bf16 %v716, %v715
  %v777 = vpack.c.bf16 %v718, %v717
  %v778 = vpack.c.bf16 %v720, %v719
  %v779 = vpack.c.bf16 %v722, %v721
  %v780 = vpack.c.bf16 %v724, %v723
  %v781 = vpack.c.bf16 %v726, %v725
  %v782 = vpack.c.bf16 %v728, %v727
  %v783 = vpack.c.bf16 %v730, %v729
  %v784 = vpack.c.bf16 %v732, %v731
  %v785 = vpack.c.bf16 %v734, %v733
  %v786 = vpack.c.bf16 %v736, %v735
  %v787 = vpack.c.bf16 %v738, %v737
  %v788 = vpack.c.bf16 %v740, %v739
  %v789 = vpack.c.bf16 %v742, %v741
  %v790 = vpack.c.bf16 %v744, %v743
  %v791 = vpack.c.bf16 %v746, %v745
  %v792 = vpack.c.bf16 %v748, %v747
  %v793 = vpack.c.bf16 %v750, %v749
  %v794 = vpack.c.bf16 %v752, %v751
  %v795 = vpack.c.bf16 %v754, %v753
  %v796 = vpack.c.bf16 %v756, %v755
  %v797 = vpack.c.bf16 %v758, %v757
  %v798 = vpack.c.bf16 %v760, %v759
  %v799 = vpack.c.bf16 %v762, %v761
  %v800 = vpack.c.bf16 %v764, %v763
  %v801 = vpack.c.bf16 %v766, %v765
  %v802 = vpack.c.bf16 %v768, %v767
  %v803 = vpack.c.bf16 %v770, %v769
  %v804 = vpack.c.bf16 %v772, %v771
  %837 = vrot.lane.b32.xlu0 %v773, 8
  %v838 = vpop.permute.xlu0 %837
  %839 = vrot.lane.b32.xlu0 %v774, 8
  %v840 = vpop.permute.xlu0 %839
  %841 = vrot.lane.b32.xlu0 %v775, 8
  %v842 = vpop.permute.xlu0 %841
  %843 = vrot.lane.b32.xlu0 %v776, 8
  %v844 = vpop.permute.xlu0 %843
  %845 = vrot.lane.b32.xlu0 %v777, 8
  %v846 = vpop.permute.xlu0 %845
  %847 = vrot.lane.b32.xlu0 %v778, 8
  %v848 = vpop.permute.xlu0 %847
  %849 = vrot.lane.b32.xlu0 %v779, 8
  %v850 = vpop.permute.xlu0 %849
  %851 = vrot.lane.b32.xlu0 %v780, 8
  %v852 = vpop.permute.xlu0 %851
  %853 = vrot.lane.b32.xlu0 %v781, 8
  %v854 = vpop.permute.xlu0 %853
  %855 = vrot.lane.b32.xlu0 %v782, 8
  %v856 = vpop.permute.xlu0 %855
  %857 = vrot.lane.b32.xlu0 %v783, 8
  %v858 = vpop.permute.xlu0 %857
  %859 = vrot.lane.b32.xlu0 %v784, 8
  %v860 = vpop.permute.xlu0 %859
  %861 = vrot.lane.b32.xlu0 %v785, 8
  %v862 = vpop.permute.xlu0 %861
  %863 = vrot.lane.b32.xlu0 %v786, 8
  %v864 = vpop.permute.xlu0 %863
  %865 = vrot.lane.b32.xlu0 %v787, 8
  %v866 = vpop.permute.xlu0 %865
  %867 = vrot.lane.b32.xlu0 %v788, 8
  %v868 = vpop.permute.xlu0 %867
  %869 = vrot.lane.b32.xlu0 %v789, 8
  %v870 = vpop.permute.xlu0 %869
  %871 = vrot.lane.b32.xlu0 %v790, 8
  %v872 = vpop.permute.xlu0 %871
  %873 = vrot.lane.b32.xlu0 %v791, 8
  %v874 = vpop.permute.xlu0 %873
  %875 = vrot.lane.b32.xlu0 %v792, 8
  %v876 = vpop.permute.xlu0 %875
  %877 = vrot.lane.b32.xlu0 %v793, 8
  %v878 = vpop.permute.xlu0 %877
  %879 = vrot.lane.b32.xlu0 %v794, 8
  %v880 = vpop.permute.xlu0 %879
  %881 = vrot.lane.b32.xlu0 %v795, 8
  %v882 = vpop.permute.xlu0 %881
  %883 = vrot.lane.b32.xlu0 %v796, 8
  %v884 = vpop.permute.xlu0 %883
  %885 = vrot.lane.b32.xlu0 %v797, 8
  %v886 = vpop.permute.xlu0 %885
  %887 = vrot.lane.b32.xlu0 %v798, 8
  %v888 = vpop.permute.xlu0 %887
  %889 = vrot.lane.b32.xlu0 %v799, 8
  %v890 = vpop.permute.xlu0 %889
  %891 = vrot.lane.b32.xlu0 %v800, 8
  %v892 = vpop.permute.xlu0 %891
  %893 = vrot.lane.b32.xlu0 %v801, 8
  %v894 = vpop.permute.xlu0 %893
  %895 = vrot.lane.b32.xlu0 %v802, 8
  %v896 = vpop.permute.xlu0 %895
  %897 = vrot.lane.b32.xlu0 %v803, 8
  %v898 = vpop.permute.xlu0 %897
  %899 = vrot.lane.b32.xlu0 %v804, 8
  %v900 = vpop.permute.xlu0 %899
  %vm933 = vcmask 97344
  %934 = vst.msk [vmem:[#allocation3] sm:$0xff] %vm933, %v838
  %935 = vst.msk [vmem:[#allocation3 + $0x8] sm:$0xff] %vm933, %v840
  %936 = vst.msk [vmem:[#allocation3 + $0x10] sm:$0xff] %vm933, %v842
  %937 = vst.msk [vmem:[#allocation3 + $0x18] sm:$0xff] %vm933, %v844
  %938 = vst.msk [vmem:[#allocation3 + $0x20] sm:$0xff] %vm933, %v846
  %939 = vst.msk [vmem:[#allocation3 + $0x28] sm:$0xff] %vm933, %v848
  %940 = vst.msk [vmem:[#allocation3 + $0x30] sm:$0xff] %vm933, %v850
  %941 = vst.msk [vmem:[#allocation3 + $0x38] sm:$0xff] %vm933, %v852
  %942 = vst.msk [vmem:[#allocation3 + $0x40] sm:$0xff] %vm933, %v854
  %943 = vst.msk [vmem:[#allocation3 + $0x48] sm:$0xff] %vm933, %v856
  %944 = vst.msk [vmem:[#allocation3 + $0x50] sm:$0xff] %vm933, %v858
  %945 = vst.msk [vmem:[#allocation3 + $0x58] sm:$0xff] %vm933, %v860
  %946 = vst.msk [vmem:[#allocation3 + $0x60] sm:$0xff] %vm933, %v862
  %947 = vst.msk [vmem:[#allocation3 + $0x68] sm:$0xff] %vm933, %v864
  %948 = vst.msk [vmem:[#allocation3 + $0x70] sm:$0xff] %vm933, %v866
  %949 = vst.msk [vmem:[#allocation3 + $0x78] sm:$0xff] %vm933, %v868
  %950 = vst.msk [vmem:[#allocation3 + $0x80] sm:$0xff] %vm933, %v870
  %951 = vst.msk [vmem:[#allocation3 + $0x88] sm:$0xff] %vm933, %v872
  %952 = vst.msk [vmem:[#allocation3 + $0x90] sm:$0xff] %vm933, %v874
  %953 = vst.msk [vmem:[#allocation3 + $0x98] sm:$0xff] %vm933, %v876
  %954 = vst.msk [vmem:[#allocation3 + $0xa0] sm:$0xff] %vm933, %v878
  %955 = vst.msk [vmem:[#allocation3 + $0xa8] sm:$0xff] %vm933, %v880
  %956 = vst.msk [vmem:[#allocation3 + $0xb0] sm:$0xff] %vm933, %v882
  %957 = vst.msk [vmem:[#allocation3 + $0xb8] sm:$0xff] %vm933, %v884
  %958 = vst.msk [vmem:[#allocation3 + $0xc0] sm:$0xff] %vm933, %v886
  %959 = vst.msk [vmem:[#allocation3 + $0xc8] sm:$0xff] %vm933, %v888
  %960 = vst.msk [vmem:[#allocation3 + $0xd0] sm:$0xff] %vm933, %v890
  %961 = vst.msk [vmem:[#allocation3 + $0xd8] sm:$0xff] %vm933, %v892
  %962 = vst.msk [vmem:[#allocation3 + $0xe0] sm:$0xff] %vm933, %v894
  %963 = vst.msk [vmem:[#allocation3 + $0xe8] sm:$0xff] %vm933, %v896
  %964 = vst.msk [vmem:[#allocation3 + $0xf0] sm:$0xff] %vm933, %v898
  %965 = vst.msk [vmem:[#allocation3 + $0xf8] sm:$0xff] %vm933, %v900
  %v966 = vld [vmem:[%s259] sm:$0xff]
  %v967 = vld [vmem:[%s259 + $0x8] sm:$0xff]
  %v968 = vld [vmem:[%s259 + $0x18] sm:$0xff]
  %v969 = vld [vmem:[%s259 + $0x20] sm:$0xff]
  %v970 = vld [vmem:[%s259 + $0x30] sm:$0xff]
  %v971 = vld [vmem:[%s259 + $0x38] sm:$0xff]
  %v972 = vld [vmem:[%s259 + $0x48] sm:$0xff]
  %v973 = vld [vmem:[%s259 + $0x50] sm:$0xff]
  %v974 = vld [vmem:[%s259 + $0x60] sm:$0xff]
  %v975 = vld [vmem:[%s259 + $0x68] sm:$0xff]
  %v976 = vld [vmem:[%s259 + $0x78] sm:$0xff]
  %v977 = vld [vmem:[%s259 + $0x80] sm:$0xff]
  %v978 = vld [vmem:[%s259 + $0x90] sm:$0xff]
  %v979 = vld [vmem:[%s259 + $0x98] sm:$0xff]
  %v980 = vld [vmem:[%s259 + $0xa8] sm:$0xff]
  %v981 = vld [vmem:[%s259 + $0xb0] sm:$0xff]
  %v982 = vld [vmem:[%s259 + $0xc0] sm:$0xff]
  %v983 = vld [vmem:[%s259 + $0xc8] sm:$0xff]
  %v984 = vld [vmem:[%s259 + $0xd8] sm:$0xff]
  %v985 = vld [vmem:[%s259 + $0xe0] sm:$0xff]
  %v986 = vld [vmem:[%s259 + $0xf0] sm:$0xff]
  %v987 = vld [vmem:[%s259 + $0xf8] sm:$0xff]
  %v988 = vld [vmem:[%s259 + $0x108] sm:$0xff]
  %v989 = vld [vmem:[%s259 + $0x110] sm:$0xff]
  %v990 = vld [vmem:[%s259 + $0x120] sm:$0xff]
  %v991 = vld [vmem:[%s259 + $0x128] sm:$0xff]
  %v992 = vld [vmem:[%s259 + $0x138] sm:$0xff]
  %v993 = vld [vmem:[%s259 + $0x140] sm:$0xff]
  %v994 = vld [vmem:[%s259 + $0x150] sm:$0xff]
  %v995 = vld [vmem:[%s259 + $0x158] sm:$0xff]
  %v996 = vld [vmem:[%s259 + $0x168] sm:$0xff]
  %v997 = vld [vmem:[%s259 + $0x170] sm:$0xff]
  %v998 = vld [vmem:[%s259 + $0x1b0] sm:$0xff]
  %v999 = vld [vmem:[%s259 + $0x1b8] sm:$0xff]
  %v1000 = vld [vmem:[%s259 + $0x1c8] sm:$0xff]
  %v1001 = vld [vmem:[%s259 + $0x1d0] sm:$0xff]
  %v1002 = vld [vmem:[%s259 + $0x1e0] sm:$0xff]
  %v1003 = vld [vmem:[%s259 + $0x1e8] sm:$0xff]
  %v1004 = vld [vmem:[%s259 + $0x1f8] sm:$0xff]
  %v1005 = vld [vmem:[%s259 + $0x200] sm:$0xff]
  %v1006 = vld [vmem:[%s259 + $0x210] sm:$0xff]
  %v1007 = vld [vmem:[%s259 + $0x218] sm:$0xff]
  %v1008 = vld [vmem:[%s259 + $0x228] sm:$0xff]
  %v1009 = vld [vmem:[%s259 + $0x230] sm:$0xff]
  %v1010 = vld [vmem:[%s259 + $0x240] sm:$0xff]
  %v1011 = vld [vmem:[%s259 + $0x248] sm:$0xff]
  %v1012 = vld [vmem:[%s259 + $0x258] sm:$0xff]
  %v1013 = vld [vmem:[%s259 + $0x260] sm:$0xff]
  %v1014 = vld [vmem:[%s259 + $0x270] sm:$0xff]
  %v1015 = vld [vmem:[%s259 + $0x278] sm:$0xff]
  %v1016 = vld [vmem:[%s259 + $0x288] sm:$0xff]
  %v1017 = vld [vmem:[%s259 + $0x290] sm:$0xff]
  %v1018 = vld [vmem:[%s259 + $0x2a0] sm:$0xff]
  %v1019 = vld [vmem:[%s259 + $0x2a8] sm:$0xff]
  %v1020 = vld [vmem:[%s259 + $0x2b8] sm:$0xff]
  %v1021 = vld [vmem:[%s259 + $0x2c0] sm:$0xff]
  %v1022 = vld [vmem:[%s259 + $0x2d0] sm:$0xff]
  %v1023 = vld [vmem:[%s259 + $0x2d8] sm:$0xff]
  %v1024 = vld [vmem:[%s259 + $0x2e8] sm:$0xff]
  %v1025 = vld [vmem:[%s259 + $0x2f0] sm:$0xff]
  %v1026 = vld [vmem:[%s259 + $0x300] sm:$0xff]
  %v1027 = vld [vmem:[%s259 + $0x308] sm:$0xff]
  %v1028 = vld [vmem:[%s259 + $0x318] sm:$0xff]
  %v1029 = vld [vmem:[%s259 + $0x320] sm:$0xff]
  %v1030 = vpack.c.bf16 %v967, %v966
  %v1031 = vpack.c.bf16 %v969, %v968
  %v1032 = vpack.c.bf16 %v971, %v970
  %v1033 = vpack.c.bf16 %v973, %v972
  %v1034 = vpack.c.bf16 %v975, %v974
  %v1035 = vpack.c.bf16 %v977, %v976
  %v1036 = vpack.c.bf16 %v979, %v978
  %v1037 = vpack.c.bf16 %v981, %v980
  %v1038 = vpack.c.bf16 %v983, %v982
  %v1039 = vpack.c.bf16 %v985, %v984
  %v1040 = vpack.c.bf16 %v987, %v986
  %v1041 = vpack.c.bf16 %v989, %v988
  %v1042 = vpack.c.bf16 %v991, %v990
  %v1043 = vpack.c.bf16 %v993, %v992
  %v1044 = vpack.c.bf16 %v995, %v994
  %v1045 = vpack.c.bf16 %v997, %v996
  %v1046 = vpack.c.bf16 %v999, %v998
  %v1047 = vpack.c.bf16 %v1001, %v1000
  %v1048 = vpack.c.bf16 %v1003, %v1002
  %v1049 = vpack.c.bf16 %v1005, %v1004
  %v1050 = vpack.c.bf16 %v1007, %v1006
  %v1051 = vpack.c.bf16 %v1009, %v1008
  %v1052 = vpack.c.bf16 %v1011, %v1010
  %v1053 = vpack.c.bf16 %v1013, %v1012
  %v1054 = vpack.c.bf16 %v1015, %v1014
  %v1055 = vpack.c.bf16 %v1017, %v1016
  %v1056 = vpack.c.bf16 %v1019, %v1018
  %v1057 = vpack.c.bf16 %v1021, %v1020
  %v1058 = vpack.c.bf16 %v1023, %v1022
  %v1059 = vpack.c.bf16 %v1025, %v1024
  %v1060 = vpack.c.bf16 %v1027, %v1026
  %v1061 = vpack.c.bf16 %v1029, %v1028
  %1094 = vrot.lane.b32.xlu0 %v1030, 12
  %v1095 = vpop.permute.xlu0 %1094
  %1096 = vrot.lane.b32.xlu0 %v1031, 12
  %v1097 = vpop.permute.xlu0 %1096
  %1098 = vrot.lane.b32.xlu0 %v1032, 12
  %v1099 = vpop.permute.xlu0 %1098
  %1100 = vrot.lane.b32.xlu0 %v1033, 12
  %v1101 = vpop.permute.xlu0 %1100
  %1102 = vrot.lane.b32.xlu0 %v1034, 12
  %v1103 = vpop.permute.xlu0 %1102
  %1104 = vrot.lane.b32.xlu0 %v1035, 12
  %v1105 = vpop.permute.xlu0 %1104
  %1106 = vrot.lane.b32.xlu0 %v1036, 12
  %v1107 = vpop.permute.xlu0 %1106
  %1108 = vrot.lane.b32.xlu0 %v1037, 12
  %v1109 = vpop.permute.xlu0 %1108
  %1110 = vrot.lane.b32.xlu0 %v1038, 12
  %v1111 = vpop.permute.xlu0 %1110
  %1112 = vrot.lane.b32.xlu0 %v1039, 12
  %v1113 = vpop.permute.xlu0 %1112
  %1114 = vrot.lane.b32.xlu0 %v1040, 12
  %v1115 = vpop.permute.xlu0 %1114
  %1116 = vrot.lane.b32.xlu0 %v1041, 12
  %v1117 = vpop.permute.xlu0 %1116
  %1118 = vrot.lane.b32.xlu0 %v1042, 12
  %v1119 = vpop.permute.xlu0 %1118
  %1120 = vrot.lane.b32.xlu0 %v1043, 12
  %v1121 = vpop.permute.xlu0 %1120
  %1122 = vrot.lane.b32.xlu0 %v1044, 12
  %v1123 = vpop.permute.xlu0 %1122
  %1124 = vrot.lane.b32.xlu0 %v1045, 12
  %v1125 = vpop.permute.xlu0 %1124
  %1126 = vrot.lane.b32.xlu0 %v1046, 12
  %v1127 = vpop.permute.xlu0 %1126
  %1128 = vrot.lane.b32.xlu0 %v1047, 12
  %v1129 = vpop.permute.xlu0 %1128
  %1130 = vrot.lane.b32.xlu0 %v1048, 12
  %v1131 = vpop.permute.xlu0 %1130
  %1132 = vrot.lane.b32.xlu0 %v1049, 12
  %v1133 = vpop.permute.xlu0 %1132
  %1134 = vrot.lane.b32.xlu0 %v1050, 12
  %v1135 = vpop.permute.xlu0 %1134
  %1136 = vrot.lane.b32.xlu0 %v1051, 12
  %v1137 = vpop.permute.xlu0 %1136
  %1138 = vrot.lane.b32.xlu0 %v1052, 12
  %v1139 = vpop.permute.xlu0 %1138
  %1140 = vrot.lane.b32.xlu0 %v1053, 12
  %v1141 = vpop.permute.xlu0 %1140
  %1142 = vrot.lane.b32.xlu0 %v1054, 12
  %v1143 = vpop.permute.xlu0 %1142
  %1144 = vrot.lane.b32.xlu0 %v1055, 12
  %v1145 = vpop.permute.xlu0 %1144
  %1146 = vrot.lane.b32.xlu0 %v1056, 12
  %v1147 = vpop.permute.xlu0 %1146
  %1148 = vrot.lane.b32.xlu0 %v1057, 12
  %v1149 = vpop.permute.xlu0 %1148
  %1150 = vrot.lane.b32.xlu0 %v1058, 12
  %v1151 = vpop.permute.xlu0 %1150
  %1152 = vrot.lane.b32.xlu0 %v1059, 12
  %v1153 = vpop.permute.xlu0 %1152
  %1154 = vrot.lane.b32.xlu0 %v1060, 12
  %v1155 = vpop.permute.xlu0 %1154
  %1156 = vrot.lane.b32.xlu0 %v1061, 12
  %v1157 = vpop.permute.xlu0 %1156
  %vm1190 = vcmask 130144
  %1191 = vst.msk [vmem:[#allocation3] sm:$0xff] %vm1190, %v1095
  %1192 = vst.msk [vmem:[#allocation3 + $0x8] sm:$0xff] %vm1190, %v1097
  %1193 = vst.msk [vmem:[#allocation3 + $0x10] sm:$0xff] %vm1190, %v1099
  %1194 = vst.msk [vmem:[#allocation3 + $0x18] sm:$0xff] %vm1190, %v1101
  %1195 = vst.msk [vmem:[#allocation3 + $0x20] sm:$0xff] %vm1190, %v1103
  %1196 = vst.msk [vmem:[#allocation3 + $0x28] sm:$0xff] %vm1190, %v1105
  %1197 = vst.msk [vmem:[#allocation3 + $0x30] sm:$0xff] %vm1190, %v1107
  %1198 = vst.msk [vmem:[#allocation3 + $0x38] sm:$0xff] %vm1190, %v1109
  %1199 = vst.msk [vmem:[#allocation3 + $0x40] sm:$0xff] %vm1190, %v1111
  %1200 = vst.msk [vmem:[#allocation3 + $0x48] sm:$0xff] %vm1190, %v1113
  %1201 = vst.msk [vmem:[#allocation3 + $0x50] sm:$0xff] %vm1190, %v1115
  %1202 = vst.msk [vmem:[#allocation3 + $0x58] sm:$0xff] %vm1190, %v1117
  %1203 = vst.msk [vmem:[#allocation3 + $0x60] sm:$0xff] %vm1190, %v1119
  %1204 = vst.msk [vmem:[#allocation3 + $0x68] sm:$0xff] %vm1190, %v1121
  %1205 = vst.msk [vmem:[#allocation3 + $0x70] sm:$0xff] %vm1190, %v1123
  %1206 = vst.msk [vmem:[#allocation3 + $0x78] sm:$0xff] %vm1190, %v1125
  %1207 = vst.msk [vmem:[#allocation3 + $0x80] sm:$0xff] %vm1190, %v1127
  %1208 = vst.msk [vmem:[#allocation3 + $0x88] sm:$0xff] %vm1190, %v1129
  %1209 = vst.msk [vmem:[#allocation3 + $0x90] sm:$0xff] %vm1190, %v1131
  %1210 = vst.msk [vmem:[#allocation3 + $0x98] sm:$0xff] %vm1190, %v1133
  %1211 = vst.msk [vmem:[#allocation3 + $0xa0] sm:$0xff] %vm1190, %v1135
  %1212 = vst.msk [vmem:[#allocation3 + $0xa8] sm:$0xff] %vm1190, %v1137
  %1213 = vst.msk [vmem:[#allocation3 + $0xb0] sm:$0xff] %vm1190, %v1139
  %1214 = vst.msk [vmem:[#allocation3 + $0xb8] sm:$0xff] %vm1190, %v1141
  %1215 = vst.msk [vmem:[#allocation3 + $0xc0] sm:$0xff] %vm1190, %v1143
  %1216 = vst.msk [vmem:[#allocation3 + $0xc8] sm:$0xff] %vm1190, %v1145
  %1217 = vst.msk [vmem:[#allocation3 + $0xd0] sm:$0xff] %vm1190, %v1147
  %1218 = vst.msk [vmem:[#allocation3 + $0xd8] sm:$0xff] %vm1190, %v1149
  %1219 = vst.msk [vmem:[#allocation3 + $0xe0] sm:$0xff] %vm1190, %v1151
  %1220 = vst.msk [vmem:[#allocation3 + $0xe8] sm:$0xff] %vm1190, %v1153
  %1221 = vst.msk [vmem:[#allocation3 + $0xf0] sm:$0xff] %vm1190, %v1155
  %1222 = vst.msk [vmem:[#allocation3 + $0xf8] sm:$0xff] %vm1190, %v1157
  %v1223 = vld [vmem:[%s259 + $0x1] sm:$0xff]
  %v1224 = vld [vmem:[%s259 + $0x9] sm:$0xff]
  %v1225 = vld [vmem:[%s259 + $0x19] sm:$0xff]
  %v1226 = vld [vmem:[%s259 + $0x21] sm:$0xff]
  %v1227 = vld [vmem:[%s259 + $0x31] sm:$0xff]
  %v1228 = vld [vmem:[%s259 + $0x39] sm:$0xff]
  %v1229 = vld [vmem:[%s259 + $0x49] sm:$0xff]
  %v1230 = vld [vmem:[%s259 + $0x51] sm:$0xff]
  %v1231 = vld [vmem:[%s259 + $0x61] sm:$0xff]
  %v1232 = vld [vmem:[%s259 + $0x69] sm:$0xff]
  %v1233 = vld [vmem:[%s259 + $0x79] sm:$0xff]
  %v1234 = vld [vmem:[%s259 + $0x81] sm:$0xff]
  %v1235 = vld [vmem:[%s259 + $0x91] sm:$0xff]
  %v1236 = vld [vmem:[%s259 + $0x99] sm:$0xff]
  %v1237 = vld [vmem:[%s259 + $0xa9] sm:$0xff]
  %v1238 = vld [vmem:[%s259 + $0xb1] sm:$0xff]
  %v1239 = vld [vmem:[%s259 + $0xc1] sm:$0xff]
  %v1240 = vld [vmem:[%s259 + $0xc9] sm:$0xff]
  %v1241 = vld [vmem:[%s259 + $0xd9] sm:$0xff]
  %v1242 = vld [vmem:[%s259 + $0xe1] sm:$0xff]
  %v1243 = vld [vmem:[%s259 + $0xf1] sm:$0xff]
  %v1244 = vld [vmem:[%s259 + $0xf9] sm:$0xff]
  %v1245 = vld [vmem:[%s259 + $0x109] sm:$0xff]
  %v1246 = vld [vmem:[%s259 + $0x111] sm:$0xff]
  %v1247 = vld [vmem:[%s259 + $0x121] sm:$0xff]
  %v1248 = vld [vmem:[%s259 + $0x129] sm:$0xff]
  %v1249 = vld [vmem:[%s259 + $0x139] sm:$0xff]
  %v1250 = vld [vmem:[%s259 + $0x141] sm:$0xff]
  %v1251 = vld [vmem:[%s259 + $0x151] sm:$0xff]
  %v1252 = vld [vmem:[%s259 + $0x159] sm:$0xff]
  %v1253 = vld [vmem:[%s259 + $0x169] sm:$0xff]
  %v1254 = vld [vmem:[%s259 + $0x171] sm:$0xff]
  %v1255 = vld [vmem:[%s259 + $0x1b1] sm:$0xff]
  %v1256 = vld [vmem:[%s259 + $0x1b9] sm:$0xff]
  %v1257 = vld [vmem:[%s259 + $0x1c9] sm:$0xff]
  %v1258 = vld [vmem:[%s259 + $0x1d1] sm:$0xff]
  %v1259 = vld [vmem:[%s259 + $0x1e1] sm:$0xff]
  %v1260 = vld [vmem:[%s259 + $0x1e9] sm:$0xff]
  %v1261 = vld [vmem:[%s259 + $0x1f9] sm:$0xff]
  %v1262 = vld [vmem:[%s259 + $0x201] sm:$0xff]
  %v1263 = vld [vmem:[%s259 + $0x211] sm:$0xff]
  %v1264 = vld [vmem:[%s259 + $0x219] sm:$0xff]
  %v1265 = vld [vmem:[%s259 + $0x229] sm:$0xff]
  %v1266 = vld [vmem:[%s259 + $0x231] sm:$0xff]
  %v1267 = vld [vmem:[%s259 + $0x241] sm:$0xff]
  %v1268 = vld [vmem:[%s259 + $0x249] sm:$0xff]
  %v1269 = vld [vmem:[%s259 + $0x259] sm:$0xff]
  %v1270 = vld [vmem:[%s259 + $0x261] sm:$0xff]
  %v1271 = vld [vmem:[%s259 + $0x271] sm:$0xff]
  %v1272 = vld [vmem:[%s259 + $0x279] sm:$0xff]
  %v1273 = vld [vmem:[%s259 + $0x289] sm:$0xff]
  %v1274 = vld [vmem:[%s259 + $0x291] sm:$0xff]
  %v1275 = vld [vmem:[%s259 + $0x2a1] sm:$0xff]
  %v1276 = vld [vmem:[%s259 + $0x2a9] sm:$0xff]
  %v1277 = vld [vmem:[%s259 + $0x2b9] sm:$0xff]
  %v1278 = vld [vmem:[%s259 + $0x2c1] sm:$0xff]
  %v1279 = vld [vmem:[%s259 + $0x2d1] sm:$0xff]
  %v1280 = vld [vmem:[%s259 + $0x2d9] sm:$0xff]
  %v1281 = vld [vmem:[%s259 + $0x2e9] sm:$0xff]
  %v1282 = vld [vmem:[%s259 + $0x2f1] sm:$0xff]
  %v1283 = vld [vmem:[%s259 + $0x301] sm:$0xff]
  %v1284 = vld [vmem:[%s259 + $0x309] sm:$0xff]
  %v1285 = vld [vmem:[%s259 + $0x319] sm:$0xff]
  %v1286 = vld [vmem:[%s259 + $0x321] sm:$0xff]
  %v1287 = vpack.c.bf16 %v1224, %v1223
  %v1288 = vpack.c.bf16 %v1226, %v1225
  %v1289 = vpack.c.bf16 %v1228, %v1227
  %v1290 = vpack.c.bf16 %v1230, %v1229
  %v1291 = vpack.c.bf16 %v1232, %v1231
  %v1292 = vpack.c.bf16 %v1234, %v1233
  %v1293 = vpack.c.bf16 %v1236, %v1235
  %v1294 = vpack.c.bf16 %v1238, %v1237
  %v1295 = vpack.c.bf16 %v1240, %v1239
  %v1296 = vpack.c.bf16 %v1242, %v1241
  %v1297 = vpack.c.bf16 %v1244, %v1243
  %v1298 = vpack.c.bf16 %v1246, %v1245
  %v1299 = vpack.c.bf16 %v1248, %v1247
  %v1300 = vpack.c.bf16 %v1250, %v1249
  %v1301 = vpack.c.bf16 %v1252, %v1251
  %v1302 = vpack.c.bf16 %v1254, %v1253
  %v1303 = vpack.c.bf16 %v1256, %v1255
  %v1304 = vpack.c.bf16 %v1258, %v1257
  %v1305 = vpack.c.bf16 %v1260, %v1259
  %v1306 = vpack.c.bf16 %v1262, %v1261
  %v1307 = vpack.c.bf16 %v1264, %v1263
  %v1308 = vpack.c.bf16 %v1266, %v1265
  %v1309 = vpack.c.bf16 %v1268, %v1267
  %v1310 = vpack.c.bf16 %v1270, %v1269
  %v1311 = vpack.c.bf16 %v1272, %v1271
  %v1312 = vpack.c.bf16 %v1274, %v1273
  %v1313 = vpack.c.bf16 %v1276, %v1275
  %v1314 = vpack.c.bf16 %v1278, %v1277
  %v1315 = vpack.c.bf16 %v1280, %v1279
  %v1316 = vpack.c.bf16 %v1282, %v1281
  %v1317 = vpack.c.bf16 %v1284, %v1283
  %v1318 = vpack.c.bf16 %v1286, %v1285
  %1351 = vrot.lane.b32.xlu0 %v1287, 16
  %v1352 = vpop.permute.xlu0 %1351
  %1353 = vrot.lane.b32.xlu0 %v1288, 16
  %v1354 = vpop.permute.xlu0 %1353
  %1355 = vrot.lane.b32.xlu0 %v1289, 16
  %v1356 = vpop.permute.xlu0 %1355
  %1357 = vrot.lane.b32.xlu0 %v1290, 16
  %v1358 = vpop.permute.xlu0 %1357
  %1359 = vrot.lane.b32.xlu0 %v1291, 16
  %v1360 = vpop.permute.xlu0 %1359
  %1361 = vrot.lane.b32.xlu0 %v1292, 16
  %v1362 = vpop.permute.xlu0 %1361
  %1363 = vrot.lane.b32.xlu0 %v1293, 16
  %v1364 = vpop.permute.xlu0 %1363
  %1365 = vrot.lane.b32.xlu0 %v1294, 16
  %v1366 = vpop.permute.xlu0 %1365
  %1367 = vrot.lane.b32.xlu0 %v1295, 16
  %v1368 = vpop.permute.xlu0 %1367
  %1369 = vrot.lane.b32.xlu0 %v1296, 16
  %v1370 = vpop.permute.xlu0 %1369
  %1371 = vrot.lane.b32.xlu0 %v1297, 16
  %v1372 = vpop.permute.xlu0 %1371
  %1373 = vrot.lane.b32.xlu0 %v1298, 16
  %v1374 = vpop.permute.xlu0 %1373
  %1375 = vrot.lane.b32.xlu0 %v1299, 16
  %v1376 = vpop.permute.xlu0 %1375
  %1377 = vrot.lane.b32.xlu0 %v1300, 16
  %v1378 = vpop.permute.xlu0 %1377
  %1379 = vrot.lane.b32.xlu0 %v1301, 16
  %v1380 = vpop.permute.xlu0 %1379
  %1381 = vrot.lane.b32.xlu0 %v1302, 16
  %v1382 = vpop.permute.xlu0 %1381
  %1383 = vrot.lane.b32.xlu0 %v1303, 16
  %v1384 = vpop.permute.xlu0 %1383
  %1385 = vrot.lane.b32.xlu0 %v1304, 16
  %v1386 = vpop.permute.xlu0 %1385
  %1387 = vrot.lane.b32.xlu0 %v1305, 16
  %v1388 = vpop.permute.xlu0 %1387
  %1389 = vrot.lane.b32.xlu0 %v1306, 16
  %v1390 = vpop.permute.xlu0 %1389
  %1391 = vrot.lane.b32.xlu0 %v1307, 16
  %v1392 = vpop.permute.xlu0 %1391
  %1393 = vrot.lane.b32.xlu0 %v1308, 16
  %v1394 = vpop.permute.xlu0 %1393
  %1395 = vrot.lane.b32.xlu0 %v1309, 16
  %v1396 = vpop.permute.xlu0 %1395
  %1397 = vrot.lane.b32.xlu0 %v1310, 16
  %v1398 = vpop.permute.xlu0 %1397
  %1399 = vrot.lane.b32.xlu0 %v1311, 16
  %v1400 = vpop.permute.xlu0 %1399
  %1401 = vrot.lane.b32.xlu0 %v1312, 16
  %v1402 = vpop.permute.xlu0 %1401
  %1403 = vrot.lane.b32.xlu0 %v1313, 16
  %v1404 = vpop.permute.xlu0 %1403
  %1405 = vrot.lane.b32.xlu0 %v1314, 16
  %v1406 = vpop.permute.xlu0 %1405
  %1407 = vrot.lane.b32.xlu0 %v1315, 16
  %v1408 = vpop.permute.xlu0 %1407
  %1409 = vrot.lane.b32.xlu0 %v1316, 16
  %v1410 = vpop.permute.xlu0 %1409
  %1411 = vrot.lane.b32.xlu0 %v1317, 16
  %v1412 = vpop.permute.xlu0 %1411
  %1413 = vrot.lane.b32.xlu0 %v1318, 16
  %v1414 = vpop.permute.xlu0 %1413
  %vm1447 = vcmask 162944
  %1448 = vst.msk [vmem:[#allocation3] sm:$0xff] %vm1447, %v1352
  %1449 = vst.msk [vmem:[#allocation3 + $0x8] sm:$0xff] %vm1447, %v1354
  %1450 = vst.msk [vmem:[#allocation3 + $0x10] sm:$0xff] %vm1447, %v1356
  %1451 = vst.msk [vmem:[#allocation3 + $0x18] sm:$0xff] %vm1447, %v1358
  %1452 = vst.msk [vmem:[#allocation3 + $0x20] sm:$0xff] %vm1447, %v1360
  %1453 = vst.msk [vmem:[#allocation3 + $0x28] sm:$0xff] %vm1447, %v1362
  %1454 = vst.msk [vmem:[#allocation3 + $0x30] sm:$0xff] %vm1447, %v1364
  %1455 = vst.msk [vmem:[#allocation3 + $0x38] sm:$0xff] %vm1447, %v1366
  %1456 = vst.msk [vmem:[#allocation3 + $0x40] sm:$0xff] %vm1447, %v1368
  %1457 = vst.msk [vmem:[#allocation3 + $0x48] sm:$0xff] %vm1447, %v1370
  %1458 = vst.msk [vmem:[#allocation3 + $0x50] sm:$0xff] %vm1447, %v1372
  %1459 = vst.msk [vmem:[#allocation3 + $0x58] sm:$0xff] %vm1447, %v1374
  %1460 = vst.msk [vmem:[#allocation3 + $0x60] sm:$0xff] %vm1447, %v1376
  %1461 = vst.msk [vmem:[#allocation3 + $0x68] sm:$0xff] %vm1447, %v1378
  %1462 = vst.msk [vmem:[#allocation3 + $0x70] sm:$0xff] %vm1447, %v1380
  %1463 = vst.msk [vmem:[#allocation3 + $0x78] sm:$0xff] %vm1447, %v1382
  %1464 = vst.msk [vmem:[#allocation3 + $0x80] sm:$0xff] %vm1447, %v1384
  %1465 = vst.msk [vmem:[#allocation3 + $0x88] sm:$0xff] %vm1447, %v1386
  %1466 = vst.msk [vmem:[#allocation3 + $0x90] sm:$0xff] %vm1447, %v1388
  %1467 = vst.msk [vmem:[#allocation3 + $0x98] sm:$0xff] %vm1447, %v1390
  %1468 = vst.msk [vmem:[#allocation3 + $0xa0] sm:$0xff] %vm1447, %v1392
  %1469 = vst.msk [vmem:[#allocation3 + $0xa8] sm:$0xff] %vm1447, %v1394
  %1470 = vst.msk [vmem:[#allocation3 + $0xb0] sm:$0xff] %vm1447, %v1396
  %1471 = vst.msk [vmem:[#allocation3 + $0xb8] sm:$0xff] %vm1447, %v1398
  %1472 = vst.msk [vmem:[#allocation3 + $0xc0] sm:$0xff] %vm1447, %v1400
  %1473 = vst.msk [vmem:[#allocation3 + $0xc8] sm:$0xff] %vm1447, %v1402
  %1474 = vst.msk [vmem:[#allocation3 + $0xd0] sm:$0xff] %vm1447, %v1404
  %1475 = vst.msk [vmem:[#allocation3 + $0xd8] sm:$0xff] %vm1447, %v1406
  %1476 = vst.msk [vmem:[#allocation3 + $0xe0] sm:$0xff] %vm1447, %v1408
  %1477 = vst.msk [vmem:[#allocation3 + $0xe8] sm:$0xff] %vm1447, %v1410
  %1478 = vst.msk [vmem:[#allocation3 + $0xf0] sm:$0xff] %vm1447, %v1412
  %1479 = vst.msk [vmem:[#allocation3 + $0xf8] sm:$0xff] %vm1447, %v1414
  %v1480 = vld [vmem:[%s259 + $0x2] sm:$0xff]
  %v1481 = vld [vmem:[%s259 + $0xa] sm:$0xff]
  %v1482 = vld [vmem:[%s259 + $0x1a] sm:$0xff]
  %v1483 = vld [vmem:[%s259 + $0x22] sm:$0xff]
  %v1484 = vld [vmem:[%s259 + $0x32] sm:$0xff]
  %v1485 = vld [vmem:[%s259 + $0x3a] sm:$0xff]
  %v1486 = vld [vmem:[%s259 + $0x4a] sm:$0xff]
  %v1487 = vld [vmem:[%s259 + $0x52] sm:$0xff]
  %v1488 = vld [vmem:[%s259 + $0x62] sm:$0xff]
  %v1489 = vld [vmem:[%s259 + $0x6a] sm:$0xff]
  %v1490 = vld [vmem:[%s259 + $0x7a] sm:$0xff]
  %v1491 = vld [vmem:[%s259 + $0x82] sm:$0xff]
  %v1492 = vld [vmem:[%s259 + $0x92] sm:$0xff]
  %v1493 = vld [vmem:[%s259 + $0x9a] sm:$0xff]
  %v1494 = vld [vmem:[%s259 + $0xaa] sm:$0xff]
  %v1495 = vld [vmem:[%s259 + $0xb2] sm:$0xff]
  %v1496 = vld [vmem:[%s259 + $0xc2] sm:$0xff]
  %v1497 = vld [vmem:[%s259 + $0xca] sm:$0xff]
  %v1498 = vld [vmem:[%s259 + $0xda] sm:$0xff]
  %v1499 = vld [vmem:[%s259 + $0xe2] sm:$0xff]
  %v1500 = vld [vmem:[%s259 + $0xf2] sm:$0xff]
  %v1501 = vld [vmem:[%s259 + $0xfa] sm:$0xff]
  %v1502 = vld [vmem:[%s259 + $0x10a] sm:$0xff]
  %v1503 = vld [vmem:[%s259 + $0x112] sm:$0xff]
  %v1504 = vld [vmem:[%s259 + $0x122] sm:$0xff]
  %v1505 = vld [vmem:[%s259 + $0x12a] sm:$0xff]
  %v1506 = vld [vmem:[%s259 + $0x13a] sm:$0xff]
  %v1507 = vld [vmem:[%s259 + $0x142] sm:$0xff]
  %v1508 = vld [vmem:[%s259 + $0x152] sm:$0xff]
  %v1509 = vld [vmem:[%s259 + $0x15a] sm:$0xff]
  %v1510 = vld [vmem:[%s259 + $0x16a] sm:$0xff]
  %v1511 = vld [vmem:[%s259 + $0x172] sm:$0xff]
  %v1512 = vld [vmem:[%s259 + $0x1b2] sm:$0xff]
  %v1513 = vld [vmem:[%s259 + $0x1ba] sm:$0xff]
  %v1514 = vld [vmem:[%s259 + $0x1ca] sm:$0xff]
  %v1515 = vld [vmem:[%s259 + $0x1d2] sm:$0xff]
  %v1516 = vld [vmem:[%s259 + $0x1e2] sm:$0xff]
  %v1517 = vld [vmem:[%s259 + $0x1ea] sm:$0xff]
  %v1518 = vld [vmem:[%s259 + $0x1fa] sm:$0xff]
  %v1519 = vld [vmem:[%s259 + $0x202] sm:$0xff]
  %v1520 = vld [vmem:[%s259 + $0x212] sm:$0xff]
  %v1521 = vld [vmem:[%s259 + $0x21a] sm:$0xff]
  %v1522 = vld [vmem:[%s259 + $0x22a] sm:$0xff]
  %v1523 = vld [vmem:[%s259 + $0x232] sm:$0xff]
  %v1524 = vld [vmem:[%s259 + $0x242] sm:$0xff]
  %v1525 = vld [vmem:[%s259 + $0x24a] sm:$0xff]
  %v1526 = vld [vmem:[%s259 + $0x25a] sm:$0xff]
  %v1527 = vld [vmem:[%s259 + $0x262] sm:$0xff]
  %v1528 = vld [vmem:[%s259 + $0x272] sm:$0xff]
  %v1529 = vld [vmem:[%s259 + $0x27a] sm:$0xff]
  %v1530 = vld [vmem:[%s259 + $0x28a] sm:$0xff]
  %v1531 = vld [vmem:[%s259 + $0x292] sm:$0xff]
  %v1532 = vld [vmem:[%s259 + $0x2a2] sm:$0xff]
  %v1533 = vld [vmem:[%s259 + $0x2aa] sm:$0xff]
  %v1534 = vld [vmem:[%s259 + $0x2ba] sm:$0xff]
  %v1535 = vld [vmem:[%s259 + $0x2c2] sm:$0xff]
  %v1536 = vld [vmem:[%s259 + $0x2d2] sm:$0xff]
  %v1537 = vld [vmem:[%s259 + $0x2da] sm:$0xff]
  %v1538 = vld [vmem:[%s259 + $0x2ea] sm:$0xff]
  %v1539 = vld [vmem:[%s259 + $0x2f2] sm:$0xff]
  %v1540 = vld [vmem:[%s259 + $0x302] sm:$0xff]
  %v1541 = vld [vmem:[%s259 + $0x30a] sm:$0xff]
  %v1542 = vld [vmem:[%s259 + $0x31a] sm:$0xff]
  %v1543 = vld [vmem:[%s259 + $0x322] sm:$0xff]
  %v1544 = vpack.c.bf16 %v1481, %v1480
  %v1545 = vpack.c.bf16 %v1483, %v1482
  %v1546 = vpack.c.bf16 %v1485, %v1484
  %v1547 = vpack.c.bf16 %v1487, %v1486
  %v1548 = vpack.c.bf16 %v1489, %v1488
  %v1549 = vpack.c.bf16 %v1491, %v1490
  %v1550 = vpack.c.bf16 %v1493, %v1492
  %v1551 = vpack.c.bf16 %v1495, %v1494
  %v1552 = vpack.c.bf16 %v1497, %v1496
  %v1553 = vpack.c.bf16 %v1499, %v1498
  %v1554 = vpack.c.bf16 %v1501, %v1500
  %v1555 = vpack.c.bf16 %v1503, %v1502
  %v1556 = vpack.c.bf16 %v1505, %v1504
  %v1557 = vpack.c.bf16 %v1507, %v1506
  %v1558 = vpack.c.bf16 %v1509, %v1508
  %v1559 = vpack.c.bf16 %v1511, %v1510
  %v1560 = vpack.c.bf16 %v1513, %v1512
  %v1561 = vpack.c.bf16 %v1515, %v1514
  %v1562 = vpack.c.bf16 %v1517, %v1516
  %v1563 = vpack.c.bf16 %v1519, %v1518
  %v1564 = vpack.c.bf16 %v1521, %v1520
  %v1565 = vpack.c.bf16 %v1523, %v1522
  %v1566 = vpack.c.bf16 %v1525, %v1524
  %v1567 = vpack.c.bf16 %v1527, %v1526
  %v1568 = vpack.c.bf16 %v1529, %v1528
  %v1569 = vpack.c.bf16 %v1531, %v1530
  %v1570 = vpack.c.bf16 %v1533, %v1532
  %v1571 = vpack.c.bf16 %v1535, %v1534
  %v1572 = vpack.c.bf16 %v1537, %v1536
  %v1573 = vpack.c.bf16 %v1539, %v1538
  %v1574 = vpack.c.bf16 %v1541, %v1540
  %v1575 = vpack.c.bf16 %v1543, %v1542
  %1608 = vrot.lane.b32.xlu0 %v1544, 20
  %v1609 = vpop.permute.xlu0 %1608
  %1610 = vrot.lane.b32.xlu0 %v1545, 20
  %v1611 = vpop.permute.xlu0 %1610
  %1612 = vrot.lane.b32.xlu0 %v1546, 20
  %v1613 = vpop.permute.xlu0 %1612
  %1614 = vrot.lane.b32.xlu0 %v1547, 20
  %v1615 = vpop.permute.xlu0 %1614
  %1616 = vrot.lane.b32.xlu0 %v1548, 20
  %v1617 = vpop.permute.xlu0 %1616
  %1618 = vrot.lane.b32.xlu0 %v1549, 20
  %v1619 = vpop.permute.xlu0 %1618
  %1620 = vrot.lane.b32.xlu0 %v1550, 20
  %v1621 = vpop.permute.xlu0 %1620
  %1622 = vrot.lane.b32.xlu0 %v1551, 20
  %v1623 = vpop.permute.xlu0 %1622
  %1624 = vrot.lane.b32.xlu0 %v1552, 20
  %v1625 = vpop.permute.xlu0 %1624
  %1626 = vrot.lane.b32.xlu0 %v1553, 20
  %v1627 = vpop.permute.xlu0 %1626
  %1628 = vrot.lane.b32.xlu0 %v1554, 20
  %v1629 = vpop.permute.xlu0 %1628
  %1630 = vrot.lane.b32.xlu0 %v1555, 20
  %v1631 = vpop.permute.xlu0 %1630
  %1632 = vrot.lane.b32.xlu0 %v1556, 20
  %v1633 = vpop.permute.xlu0 %1632
  %1634 = vrot.lane.b32.xlu0 %v1557, 20
  %v1635 = vpop.permute.xlu0 %1634
  %1636 = vrot.lane.b32.xlu0 %v1558, 20
  %v1637 = vpop.permute.xlu0 %1636
  %1638 = vrot.lane.b32.xlu0 %v1559, 20
  %v1639 = vpop.permute.xlu0 %1638
  %1640 = vrot.lane.b32.xlu0 %v1560, 20
  %v1641 = vpop.permute.xlu0 %1640
  %1642 = vrot.lane.b32.xlu0 %v1561, 20
  %v1643 = vpop.permute.xlu0 %1642
  %1644 = vrot.lane.b32.xlu0 %v1562, 20
  %v1645 = vpop.permute.xlu0 %1644
  %1646 = vrot.lane.b32.xlu0 %v1563, 20
  %v1647 = vpop.permute.xlu0 %1646
  %1648 = vrot.lane.b32.xlu0 %v1564, 20
  %v1649 = vpop.permute.xlu0 %1648
  %1650 = vrot.lane.b32.xlu0 %v1565, 20
  %v1651 = vpop.permute.xlu0 %1650
  %1652 = vrot.lane.b32.xlu0 %v1566, 20
  %v1653 = vpop.permute.xlu0 %1652
  %1654 = vrot.lane.b32.xlu0 %v1567, 20
  %v1655 = vpop.permute.xlu0 %1654
  %1656 = vrot.lane.b32.xlu0 %v1568, 20
  %v1657 = vpop.permute.xlu0 %1656
  %1658 = vrot.lane.b32.xlu0 %v1569, 20
  %v1659 = vpop.permute.xlu0 %1658
  %1660 = vrot.lane.b32.xlu0 %v1570, 20
  %v1661 = vpop.permute.xlu0 %1660
  %1662 = vrot.lane.b32.xlu0 %v1571, 20
  %v1663 = vpop.permute.xlu0 %1662
  %1664 = vrot.lane.b32.xlu0 %v1572, 20
  %v1665 = vpop.permute.xlu0 %1664
  %1666 = vrot.lane.b32.xlu0 %v1573, 20
  %v1667 = vpop.permute.xlu0 %1666
  %1668 = vrot.lane.b32.xlu0 %v1574, 20
  %v1669 = vpop.permute.xlu0 %1668
  %1670 = vrot.lane.b32.xlu0 %v1575, 20
  %v1671 = vpop.permute.xlu0 %1670
  %vm1704 = vcmask 195744
  %1705 = vst.msk [vmem:[#allocation3] sm:$0xff] %vm1704, %v1609
  %1706 = vst.msk [vmem:[#allocation3 + $0x8] sm:$0xff] %vm1704, %v1611
  %1707 = vst.msk [vmem:[#allocation3 + $0x10] sm:$0xff] %vm1704, %v1613
  %1708 = vst.msk [vmem:[#allocation3 + $0x18] sm:$0xff] %vm1704, %v1615
  %1709 = vst.msk [vmem:[#allocation3 + $0x20] sm:$0xff] %vm1704, %v1617
  %1710 = vst.msk [vmem:[#allocation3 + $0x28] sm:$0xff] %vm1704, %v1619
  %1711 = vst.msk [vmem:[#allocation3 + $0x30] sm:$0xff] %vm1704, %v1621
  %1712 = vst.msk [vmem:[#allocation3 + $0x38] sm:$0xff] %vm1704, %v1623
  %1713 = vst.msk [vmem:[#allocation3 + $0x40] sm:$0xff] %vm1704, %v1625
  %1714 = vst.msk [vmem:[#allocation3 + $0x48] sm:$0xff] %vm1704, %v1627
  %1715 = vst.msk [vmem:[#allocation3 + $0x50] sm:$0xff] %vm1704, %v1629
  %1716 = vst.msk [vmem:[#allocation3 + $0x58] sm:$0xff] %vm1704, %v1631
  %1717 = vst.msk [vmem:[#allocation3 + $0x60] sm:$0xff] %vm1704, %v1633
  %1718 = vst.msk [vmem:[#allocation3 + $0x68] sm:$0xff] %vm1704, %v1635
  %1719 = vst.msk [vmem:[#allocation3 + $0x70] sm:$0xff] %vm1704, %v1637
  %1720 = vst.msk [vmem:[#allocation3 + $0x78] sm:$0xff] %vm1704, %v1639
  %1721 = vst.msk [vmem:[#allocation3 + $0x80] sm:$0xff] %vm1704, %v1641
  %1722 = vst.msk [vmem:[#allocation3 + $0x88] sm:$0xff] %vm1704, %v1643
  %1723 = vst.msk [vmem:[#allocation3 + $0x90] sm:$0xff] %vm1704, %v1645
  %1724 = vst.msk [vmem:[#allocation3 + $0x98] sm:$0xff] %vm1704, %v1647
  %1725 = vst.msk [vmem:[#allocation3 + $0xa0] sm:$0xff] %vm1704, %v1649
  %1726 = vst.msk [vmem:[#allocation3 + $0xa8] sm:$0xff] %vm1704, %v1651
  %1727 = vst.msk [vmem:[#allocation3 + $0xb0] sm:$0xff] %vm1704, %v1653
  %1728 = vst.msk [vmem:[#allocation3 + $0xb8] sm:$0xff] %vm1704, %v1655
  %1729 = vst.msk [vmem:[#allocation3 + $0xc0] sm:$0xff] %vm1704, %v1657
  %1730 = vst.msk [vmem:[#allocation3 + $0xc8] sm:$0xff] %vm1704, %v1659
  %1731 = vst.msk [vmem:[#allocation3 + $0xd0] sm:$0xff] %vm1704, %v1661
  %1732 = vst.msk [vmem:[#allocation3 + $0xd8] sm:$0xff] %vm1704, %v1663
  %1733 = vst.msk [vmem:[#allocation3 + $0xe0] sm:$0xff] %vm1704, %v1665
  %1734 = vst.msk [vmem:[#allocation3 + $0xe8] sm:$0xff] %vm1704, %v1667
  %1735 = vst.msk [vmem:[#allocation3 + $0xf0] sm:$0xff] %vm1704, %v1669
  %1736 = vst.msk [vmem:[#allocation3 + $0xf8] sm:$0xff] %vm1704, %v1671
  %s1737 = scalar_lea.vmem [#allocation2], 48
  %v1738 = vld [vmem:[%s1737] sm:$0xff]
  %v1739 = vld [vmem:[%s1737 + $0x8] sm:$0xff]
  %v1740 = vld [vmem:[%s1737 + $0x18] sm:$0xff]
  %v1741 = vld [vmem:[%s1737 + $0x20] sm:$0xff]
  %v1742 = vld [vmem:[%s1737 + $0x30] sm:$0xff]
  %v1743 = vld [vmem:[%s1737 + $0x38] sm:$0xff]
  %v1744 = vld [vmem:[%s1737 + $0x48] sm:$0xff]
  %v1745 = vld [vmem:[%s1737 + $0x50] sm:$0xff]
  %v1746 = vld [vmem:[%s1737 + $0x60] sm:$0xff]
  %v1747 = vld [vmem:[%s1737 + $0x68] sm:$0xff]
  %v1748 = vld [vmem:[%s1737 + $0x78] sm:$0xff]
  %v1749 = vld [vmem:[%s1737 + $0x80] sm:$0xff]
  %v1750 = vld [vmem:[%s1737 + $0x90] sm:$0xff]
  %v1751 = vld [vmem:[%s1737 + $0x98] sm:$0xff]
  %v1752 = vld [vmem:[%s1737 + $0xa8] sm:$0xff]
  %v1753 = vld [vmem:[%s1737 + $0xb0] sm:$0xff]
  %v1754 = vld [vmem:[%s1737 + $0xc0] sm:$0xff]
  %v1755 = vld [vmem:[%s1737 + $0xc8] sm:$0xff]
  %v1756 = vld [vmem:[%s1737 + $0xd8] sm:$0xff]
  %v1757 = vld [vmem:[%s1737 + $0xe0] sm:$0xff]
  %v1758 = vld [vmem:[%s1737 + $0xf0] sm:$0xff]
  %v1759 = vld [vmem:[%s1737 + $0xf8] sm:$0xff]
  %v1760 = vld [vmem:[%s1737 + $0x108] sm:$0xff]
  %v1761 = vld [vmem:[%s1737 + $0x110] sm:$0xff]
  %v1762 = vld [vmem:[%s1737 + $0x120] sm:$0xff]
  %v1763 = vld [vmem:[%s1737 + $0x128] sm:$0xff]
  %v1764 = vld [vmem:[%s1737 + $0x138] sm:$0xff]
  %v1765 = vld [vmem:[%s1737 + $0x140] sm:$0xff]
  %v1766 = vld [vmem:[%s1737 + $0x150] sm:$0xff]
  %v1767 = vld [vmem:[%s1737 + $0x158] sm:$0xff]
  %v1768 = vld [vmem:[%s1737 + $0x168] sm:$0xff]
  %v1769 = vld [vmem:[%s1737 + $0x170] sm:$0xff]
  %v1770 = vld [vmem:[%s1737 + $0x1b0] sm:$0xff]
  %v1771 = vld [vmem:[%s1737 + $0x1b8] sm:$0xff]
  %v1772 = vld [vmem:[%s1737 + $0x1c8] sm:$0xff]
  %v1773 = vld [vmem:[%s1737 + $0x1d0] sm:$0xff]
  %v1774 = vld [vmem:[%s1737 + $0x1e0] sm:$0xff]
  %v1775 = vld [vmem:[%s1737 + $0x1e8] sm:$0xff]
  %v1776 = vld [vmem:[%s1737 + $0x1f8] sm:$0xff]
  %v1777 = vld [vmem:[%s1737 + $0x200] sm:$0xff]
  %v1778 = vld [vmem:[%s1737 + $0x210] sm:$0xff]
  %v1779 = vld [vmem:[%s1737 + $0x218] sm:$0xff]
  %v1780 = vld [vmem:[%s1737 + $0x228] sm:$0xff]
  %v1781 = vld [vmem:[%s1737 + $0x230] sm:$0xff]
  %v1782 = vld [vmem:[%s1737 + $0x240] sm:$0xff]
  %v1783 = vld [vmem:[%s1737 + $0x248] sm:$0xff]
  %v1784 = vld [vmem:[%s1737 + $0x258] sm:$0xff]
  %v1785 = vld [vmem:[%s1737 + $0x260] sm:$0xff]
  %v1786 = vld [vmem:[%s1737 + $0x270] sm:$0xff]
  %v1787 = vld [vmem:[%s1737 + $0x278] sm:$0xff]
  %v1788 = vld [vmem:[%s1737 + $0x288] sm:$0xff]
  %v1789 = vld [vmem:[%s1737 + $0x290] sm:$0xff]
  %v1790 = vld [vmem:[%s1737 + $0x2a0] sm:$0xff]
  %v1791 = vld [vmem:[%s1737 + $0x2a8] sm:$0xff]
  %v1792 = vld [vmem:[%s1737 + $0x2b8] sm:$0xff]
  %v1793 = vld [vmem:[%s1737 + $0x2c0] sm:$0xff]
  %v1794 = vld [vmem:[%s1737 + $0x2d0] sm:$0xff]
  %v1795 = vld [vmem:[%s1737 + $0x2d8] sm:$0xff]
  %v1796 = vld [vmem:[%s1737 + $0x2e8] sm:$0xff]
  %v1797 = vld [vmem:[%s1737 + $0x2f0] sm:$0xff]
  %v1798 = vld [vmem:[%s1737 + $0x300] sm:$0xff]
  %v1799 = vld [vmem:[%s1737 + $0x308] sm:$0xff]
  %v1800 = vld [vmem:[%s1737 + $0x318] sm:$0xff]
  %v1801 = vld [vmem:[%s1737 + $0x320] sm:$0xff]
  %v1802 = vpack.c.bf16 %v1739, %v1738
  %v1803 = vpack.c.bf16 %v1741, %v1740
  %v1804 = vpack.c.bf16 %v1743, %v1742
  %v1805 = vpack.c.bf16 %v1745, %v1744
  %v1806 = vpack.c.bf16 %v1747, %v1746
  %v1807 = vpack.c.bf16 %v1749, %v1748
  %v1808 = vpack.c.bf16 %v1751, %v1750
  %v1809 = vpack.c.bf16 %v1753, %v1752
  %v1810 = vpack.c.bf16 %v1755, %v1754
  %v1811 = vpack.c.bf16 %v1757, %v1756
  %v1812 = vpack.c.bf16 %v1759, %v1758
  %v1813 = vpack.c.bf16 %v1761, %v1760
  %v1814 = vpack.c.bf16 %v1763, %v1762
  %v1815 = vpack.c.bf16 %v1765, %v1764
  %v1816 = vpack.c.bf16 %v1767, %v1766
  %v1817 = vpack.c.bf16 %v1769, %v1768
  %v1818 = vpack.c.bf16 %v1771, %v1770
  %v1819 = vpack.c.bf16 %v1773, %v1772
  %v1820 = vpack.c.bf16 %v1775, %v1774
  %v1821 = vpack.c.bf16 %v1777, %v1776
  %v1822 = vpack.c.bf16 %v1779, %v1778
  %v1823 = vpack.c.bf16 %v1781, %v1780
  %v1824 = vpack.c.bf16 %v1783, %v1782
  %v1825 = vpack.c.bf16 %v1785, %v1784
  %v1826 = vpack.c.bf16 %v1787, %v1786
  %v1827 = vpack.c.bf16 %v1789, %v1788
  %v1828 = vpack.c.bf16 %v1791, %v1790
  %v1829 = vpack.c.bf16 %v1793, %v1792
  %v1830 = vpack.c.bf16 %v1795, %v1794
  %v1831 = vpack.c.bf16 %v1797, %v1796
  %v1832 = vpack.c.bf16 %v1799, %v1798
  %v1833 = vpack.c.bf16 %v1801, %v1800
  %1866 = vrot.lane.b32.xlu0 %v1802, 24
  %v1867 = vpop.permute.xlu0 %1866
  %1868 = vrot.lane.b32.xlu0 %v1803, 24
  %v1869 = vpop.permute.xlu0 %1868
  %1870 = vrot.lane.b32.xlu0 %v1804, 24
  %v1871 = vpop.permute.xlu0 %1870
  %1872 = vrot.lane.b32.xlu0 %v1805, 24
  %v1873 = vpop.permute.xlu0 %1872
  %1874 = vrot.lane.b32.xlu0 %v1806, 24
  %v1875 = vpop.permute.xlu0 %1874
  %1876 = vrot.lane.b32.xlu0 %v1807, 24
  %v1877 = vpop.permute.xlu0 %1876
  %1878 = vrot.lane.b32.xlu0 %v1808, 24
  %v1879 = vpop.permute.xlu0 %1878
  %1880 = vrot.lane.b32.xlu0 %v1809, 24
  %v1881 = vpop.permute.xlu0 %1880
  %1882 = vrot.lane.b32.xlu0 %v1810, 24
  %v1883 = vpop.permute.xlu0 %1882
  %1884 = vrot.lane.b32.xlu0 %v1811, 24
  %v1885 = vpop.permute.xlu0 %1884
  %1886 = vrot.lane.b32.xlu0 %v1812, 24
  %v1887 = vpop.permute.xlu0 %1886
  %1888 = vrot.lane.b32.xlu0 %v1813, 24
  %v1889 = vpop.permute.xlu0 %1888
  %1890 = vrot.lane.b32.xlu0 %v1814, 24
  %v1891 = vpop.permute.xlu0 %1890
  %1892 = vrot.lane.b32.xlu0 %v1815, 24
  %v1893 = vpop.permute.xlu0 %1892
  %1894 = vrot.lane.b32.xlu0 %v1816, 24
  %v1895 = vpop.permute.xlu0 %1894
  %1896 = vrot.lane.b32.xlu0 %v1817, 24
  %v1897 = vpop.permute.xlu0 %1896
  %1898 = vrot.lane.b32.xlu0 %v1818, 24
  %v1899 = vpop.permute.xlu0 %1898
  %1900 = vrot.lane.b32.xlu0 %v1819, 24
  %v1901 = vpop.permute.xlu0 %1900
  %1902 = vrot.lane.b32.xlu0 %v1820, 24
  %v1903 = vpop.permute.xlu0 %1902
  %1904 = vrot.lane.b32.xlu0 %v1821, 24
  %v1905 = vpop.permute.xlu0 %1904
  %1906 = vrot.lane.b32.xlu0 %v1822, 24
  %v1907 = vpop.permute.xlu0 %1906
  %1908 = vrot.lane.b32.xlu0 %v1823, 24
  %v1909 = vpop.permute.xlu0 %1908
  %1910 = vrot.lane.b32.xlu0 %v1824, 24
  %v1911 = vpop.permute.xlu0 %1910
  %1912 = vrot.lane.b32.xlu0 %v1825, 24
  %v1913 = vpop.permute.xlu0 %1912
  %1914 = vrot.lane.b32.xlu0 %v1826, 24
  %v1915 = vpop.permute.xlu0 %1914
  %1916 = vrot.lane.b32.xlu0 %v1827, 24
  %v1917 = vpop.permute.xlu0 %1916
  %1918 = vrot.lane.b32.xlu0 %v1828, 24
  %v1919 = vpop.permute.xlu0 %1918
  %1920 = vrot.lane.b32.xlu0 %v1829, 24
  %v1921 = vpop.permute.xlu0 %1920
  %1922 = vrot.lane.b32.xlu0 %v1830, 24
  %v1923 = vpop.permute.xlu0 %1922
  %1924 = vrot.lane.b32.xlu0 %v1831, 24
  %v1925 = vpop.permute.xlu0 %1924
  %1926 = vrot.lane.b32.xlu0 %v1832, 24
  %v1927 = vpop.permute.xlu0 %1926
  %1928 = vrot.lane.b32.xlu0 %v1833, 24
  %v1929 = vpop.permute.xlu0 %1928
  %vm1962 = vcmask 228544
  %1963 = vst.msk [vmem:[#allocation3] sm:$0xff] %vm1962, %v1867
  %1964 = vst.msk [vmem:[#allocation3 + $0x8] sm:$0xff] %vm1962, %v1869
  %1965 = vst.msk [vmem:[#allocation3 + $0x10] sm:$0xff] %vm1962, %v1871
  %1966 = vst.msk [vmem:[#allocation3 + $0x18] sm:$0xff] %vm1962, %v1873
  %1967 = vst.msk [vmem:[#allocation3 + $0x20] sm:$0xff] %vm1962, %v1875
  %1968 = vst.msk [vmem:[#allocation3 + $0x28] sm:$0xff] %vm1962, %v1877
  %1969 = vst.msk [vmem:[#allocation3 + $0x30] sm:$0xff] %vm1962, %v1879
  %1970 = vst.msk [vmem:[#allocation3 + $0x38] sm:$0xff] %vm1962, %v1881
  %1971 = vst.msk [vmem:[#allocation3 + $0x40] sm:$0xff] %vm1962, %v1883
  %1972 = vst.msk [vmem:[#allocation3 + $0x48] sm:$0xff] %vm1962, %v1885
  %1973 = vst.msk [vmem:[#allocation3 + $0x50] sm:$0xff] %vm1962, %v1887
  %1974 = vst.msk [vmem:[#allocation3 + $0x58] sm:$0xff] %vm1962, %v1889
  %1975 = vst.msk [vmem:[#allocation3 + $0x60] sm:$0xff] %vm1962, %v1891
  %1976 = vst.msk [vmem:[#allocation3 + $0x68] sm:$0xff] %vm1962, %v1893
  %1977 = vst.msk [vmem:[#allocation3 + $0x70] sm:$0xff] %vm1962, %v1895
  %1978 = vst.msk [vmem:[#allocation3 + $0x78] sm:$0xff] %vm1962, %v1897
  %1979 = vst.msk [vmem:[#allocation3 + $0x80] sm:$0xff] %vm1962, %v1899
  %1980 = vst.msk [vmem:[#allocation3 + $0x88] sm:$0xff] %vm1962, %v1901
  %1981 = vst.msk [vmem:[#allocation3 + $0x90] sm:$0xff] %vm1962, %v1903
  %1982 = vst.msk [vmem:[#allocation3 + $0x98] sm:$0xff] %vm1962, %v1905
  %1983 = vst.msk [vmem:[#allocation3 + $0xa0] sm:$0xff] %vm1962, %v1907
  %1984 = vst.msk [vmem:[#allocation3 + $0xa8] sm:$0xff] %vm1962, %v1909
  %1985 = vst.msk [vmem:[#allocation3 + $0xb0] sm:$0xff] %vm1962, %v1911
  %1986 = vst.msk [vmem:[#allocation3 + $0xb8] sm:$0xff] %vm1962, %v1913
  %1987 = vst.msk [vmem:[#allocation3 + $0xc0] sm:$0xff] %vm1962, %v1915
  %1988 = vst.msk [vmem:[#allocation3 + $0xc8] sm:$0xff] %vm1962, %v1917
  %1989 = vst.msk [vmem:[#allocation3 + $0xd0] sm:$0xff] %vm1962, %v1919
  %1990 = vst.msk [vmem:[#allocation3 + $0xd8] sm:$0xff] %vm1962, %v1921
  %1991 = vst.msk [vmem:[#allocation3 + $0xe0] sm:$0xff] %vm1962, %v1923
  %1992 = vst.msk [vmem:[#allocation3 + $0xe8] sm:$0xff] %vm1962, %v1925
  %1993 = vst.msk [vmem:[#allocation3 + $0xf0] sm:$0xff] %vm1962, %v1927
  %1994 = vst.msk [vmem:[#allocation3 + $0xf8] sm:$0xff] %vm1962, %v1929
  %v1995 = vld [vmem:[%s1737 + $0x1] sm:$0xff]
  %v1996 = vld [vmem:[%s1737 + $0x9] sm:$0xff]
  %v1997 = vld [vmem:[%s1737 + $0x19] sm:$0xff]
  %v1998 = vld [vmem:[%s1737 + $0x21] sm:$0xff]
  %v1999 = vld [vmem:[%s1737 + $0x31] sm:$0xff]
  %v2000 = vld [vmem:[%s1737 + $0x39] sm:$0xff]
  %v2001 = vld [vmem:[%s1737 + $0x49] sm:$0xff]
  %v2002 = vld [vmem:[%s1737 + $0x51] sm:$0xff]
  %v2003 = vld [vmem:[%s1737 + $0x61] sm:$0xff]
  %v2004 = vld [vmem:[%s1737 + $0x69] sm:$0xff]
  %v2005 = vld [vmem:[%s1737 + $0x79] sm:$0xff]
  %v2006 = vld [vmem:[%s1737 + $0x81] sm:$0xff]
  %v2007 = vld [vmem:[%s1737 + $0x91] sm:$0xff]
  %v2008 = vld [vmem:[%s1737 + $0x99] sm:$0xff]
  %v2009 = vld [vmem:[%s1737 + $0xa9] sm:$0xff]
  %v2010 = vld [vmem:[%s1737 + $0xb1] sm:$0xff]
  %v2011 = vld [vmem:[%s1737 + $0xc1] sm:$0xff]
  %v2012 = vld [vmem:[%s1737 + $0xc9] sm:$0xff]
  %v2013 = vld [vmem:[%s1737 + $0xd9] sm:$0xff]
  %v2014 = vld [vmem:[%s1737 + $0xe1] sm:$0xff]
  %v2015 = vld [vmem:[%s1737 + $0xf1] sm:$0xff]
  %v2016 = vld [vmem:[%s1737 + $0xf9] sm:$0xff]
  %v2017 = vld [vmem:[%s1737 + $0x109] sm:$0xff]
  %v2018 = vld [vmem:[%s1737 + $0x111] sm:$0xff]
  %v2019 = vld [vmem:[%s1737 + $0x121] sm:$0xff]
  %v2020 = vld [vmem:[%s1737 + $0x129] sm:$0xff]
  %v2021 = vld [vmem:[%s1737 + $0x139] sm:$0xff]
  %v2022 = vld [vmem:[%s1737 + $0x141] sm:$0xff]
  %v2023 = vld [vmem:[%s1737 + $0x151] sm:$0xff]
  %v2024 = vld [vmem:[%s1737 + $0x159] sm:$0xff]
  %v2025 = vld [vmem:[%s1737 + $0x169] sm:$0xff]
  %v2026 = vld [vmem:[%s1737 + $0x171] sm:$0xff]
  %v2027 = vld [vmem:[%s1737 + $0x1b1] sm:$0xff]
  %v2028 = vld [vmem:[%s1737 + $0x1b9] sm:$0xff]
  %v2029 = vld [vmem:[%s1737 + $0x1c9] sm:$0xff]
  %v2030 = vld [vmem:[%s1737 + $0x1d1] sm:$0xff]
  %v2031 = vld [vmem:[%s1737 + $0x1e1] sm:$0xff]
  %v2032 = vld [vmem:[%s1737 + $0x1e9] sm:$0xff]
  %v2033 = vld [vmem:[%s1737 + $0x1f9] sm:$0xff]
  %v2034 = vld [vmem:[%s1737 + $0x201] sm:$0xff]
  %v2035 = vld [vmem:[%s1737 + $0x211] sm:$0xff]
  %v2036 = vld [vmem:[%s1737 + $0x219] sm:$0xff]
  %v2037 = vld [vmem:[%s1737 + $0x229] sm:$0xff]
  %v2038 = vld [vmem:[%s1737 + $0x231] sm:$0xff]
  %v2039 = vld [vmem:[%s1737 + $0x241] sm:$0xff]
  %v2040 = vld [vmem:[%s1737 + $0x249] sm:$0xff]
  %v2041 = vld [vmem:[%s1737 + $0x259] sm:$0xff]
  %v2042 = vld [vmem:[%s1737 + $0x261] sm:$0xff]
  %v2043 = vld [vmem:[%s1737 + $0x271] sm:$0xff]
  %v2044 = vld [vmem:[%s1737 + $0x279] sm:$0xff]
  %v2045 = vld [vmem:[%s1737 + $0x289] sm:$0xff]
  %v2046 = vld [vmem:[%s1737 + $0x291] sm:$0xff]
  %v2047 = vld [vmem:[%s1737 + $0x2a1] sm:$0xff]
  %v2048 = vld [vmem:[%s1737 + $0x2a9] sm:$0xff]
  %v2049 = vld [vmem:[%s1737 + $0x2b9] sm:$0xff]
  %v2050 = vld [vmem:[%s1737 + $0x2c1] sm:$0xff]
  %v2051 = vld [vmem:[%s1737 + $0x2d1] sm:$0xff]
  %v2052 = vld [vmem:[%s1737 + $0x2d9] sm:$0xff]
  %v2053 = vld [vmem:[%s1737 + $0x2e9] sm:$0xff]
  %v2054 = vld [vmem:[%s1737 + $0x2f1] sm:$0xff]
  %v2055 = vld [vmem:[%s1737 + $0x301] sm:$0xff]
  %v2056 = vld [vmem:[%s1737 + $0x309] sm:$0xff]
  %v2057 = vld [vmem:[%s1737 + $0x319] sm:$0xff]
  %v2058 = vld [vmem:[%s1737 + $0x321] sm:$0xff]
  %v2059 = vpack.c.bf16 %v1996, %v1995
  %v2060 = vpack.c.bf16 %v1998, %v1997
  %v2061 = vpack.c.bf16 %v2000, %v1999
  %v2062 = vpack.c.bf16 %v2002, %v2001
  %v2063 = vpack.c.bf16 %v2004, %v2003
  %v2064 = vpack.c.bf16 %v2006, %v2005
  %v2065 = vpack.c.bf16 %v2008, %v2007
  %v2066 = vpack.c.bf16 %v2010, %v2009
  %v2067 = vpack.c.bf16 %v2012, %v2011
  %v2068 = vpack.c.bf16 %v2014, %v2013
  %v2069 = vpack.c.bf16 %v2016, %v2015
  %v2070 = vpack.c.bf16 %v2018, %v2017
  %v2071 = vpack.c.bf16 %v2020, %v2019
  %v2072 = vpack.c.bf16 %v2022, %v2021
  %v2073 = vpack.c.bf16 %v2024, %v2023
  %v2074 = vpack.c.bf16 %v2026, %v2025
  %v2075 = vpack.c.bf16 %v2028, %v2027
  %v2076 = vpack.c.bf16 %v2030, %v2029
  %v2077 = vpack.c.bf16 %v2032, %v2031
  %v2078 = vpack.c.bf16 %v2034, %v2033
  %v2079 = vpack.c.bf16 %v2036, %v2035
  %v2080 = vpack.c.bf16 %v2038, %v2037
  %v2081 = vpack.c.bf16 %v2040, %v2039
  %v2082 = vpack.c.bf16 %v2042, %v2041
  %v2083 = vpack.c.bf16 %v2044, %v2043
  %v2084 = vpack.c.bf16 %v2046, %v2045
  %v2085 = vpack.c.bf16 %v2048, %v2047
  %v2086 = vpack.c.bf16 %v2050, %v2049
  %v2087 = vpack.c.bf16 %v2052, %v2051
  %v2088 = vpack.c.bf16 %v2054, %v2053
  %v2089 = vpack.c.bf16 %v2056, %v2055
  %v2090 = vpack.c.bf16 %v2058, %v2057
  %2123 = vrot.lane.b32.xlu0 %v2059, 28
  %v2124 = vpop.permute.xlu0 %2123
  %2125 = vrot.lane.b32.xlu0 %v2060, 28
  %v2126 = vpop.permute.xlu0 %2125
  %2127 = vrot.lane.b32.xlu0 %v2061, 28
  %v2128 = vpop.permute.xlu0 %2127
  %2129 = vrot.lane.b32.xlu0 %v2062, 28
  %v2130 = vpop.permute.xlu0 %2129
  %2131 = vrot.lane.b32.xlu0 %v2063, 28
  %v2132 = vpop.permute.xlu0 %2131
  %2133 = vrot.lane.b32.xlu0 %v2064, 28
  %v2134 = vpop.permute.xlu0 %2133
  %2135 = vrot.lane.b32.xlu0 %v2065, 28
  %v2136 = vpop.permute.xlu0 %2135
  %2137 = vrot.lane.b32.xlu0 %v2066, 28
  %v2138 = vpop.permute.xlu0 %2137
  %2139 = vrot.lane.b32.xlu0 %v2067, 28
  %v2140 = vpop.permute.xlu0 %2139
  %2141 = vrot.lane.b32.xlu0 %v2068, 28
  %v2142 = vpop.permute.xlu0 %2141
  %2143 = vrot.lane.b32.xlu0 %v2069, 28
  %v2144 = vpop.permute.xlu0 %2143
  %2145 = vrot.lane.b32.xlu0 %v2070, 28
  %v2146 = vpop.permute.xlu0 %2145
  %2147 = vrot.lane.b32.xlu0 %v2071, 28
  %v2148 = vpop.permute.xlu0 %2147
  %2149 = vrot.lane.b32.xlu0 %v2072, 28
  %v2150 = vpop.permute.xlu0 %2149
  %2151 = vrot.lane.b32.xlu0 %v2073, 28
  %v2152 = vpop.permute.xlu0 %2151
  %2153 = vrot.lane.b32.xlu0 %v2074, 28
  %v2154 = vpop.permute.xlu0 %2153
  %2155 = vrot.lane.b32.xlu0 %v2075, 28
  %v2156 = vpop.permute.xlu0 %2155
  %2157 = vrot.lane.b32.xlu0 %v2076, 28
  %v2158 = vpop.permute.xlu0 %2157
  %2159 = vrot.lane.b32.xlu0 %v2077, 28
  %v2160 = vpop.permute.xlu0 %2159
  %2161 = vrot.lane.b32.xlu0 %v2078, 28
  %v2162 = vpop.permute.xlu0 %2161
  %2163 = vrot.lane.b32.xlu0 %v2079, 28
  %v2164 = vpop.permute.xlu0 %2163
  %2165 = vrot.lane.b32.xlu0 %v2080, 28
  %v2166 = vpop.permute.xlu0 %2165
  %2167 = vrot.lane.b32.xlu0 %v2081, 28
  %v2168 = vpop.permute.xlu0 %2167
  %2169 = vrot.lane.b32.xlu0 %v2082, 28
  %v2170 = vpop.permute.xlu0 %2169
  %2171 = vrot.lane.b32.xlu0 %v2083, 28
  %v2172 = vpop.permute.xlu0 %2171
  %2173 = vrot.lane.b32.xlu0 %v2084, 28
  %v2174 = vpop.permute.xlu0 %2173
  %2175 = vrot.lane.b32.xlu0 %v2085, 28
  %v2176 = vpop.permute.xlu0 %2175
  %2177 = vrot.lane.b32.xlu0 %v2086, 28
  %v2178 = vpop.permute.xlu0 %2177
  %2179 = vrot.lane.b32.xlu0 %v2087, 28
  %v2180 = vpop.permute.xlu0 %2179
  %2181 = vrot.lane.b32.xlu0 %v2088, 28
  %v2182 = vpop.permute.xlu0 %2181
  %2183 = vrot.lane.b32.xlu0 %v2089, 28
  %v2184 = vpop.permute.xlu0 %2183
  %2185 = vrot.lane.b32.xlu0 %v2090, 28
  %v2186 = vpop.permute.xlu0 %2185
  %vm2219 = vcmask 261344
  %2220 = vst.msk [vmem:[#allocation3] sm:$0xff] %vm2219, %v2124
  %2221 = vst.msk [vmem:[#allocation3 + $0x8] sm:$0xff] %vm2219, %v2126
  %2222 = vst.msk [vmem:[#allocation3 + $0x10] sm:$0xff] %vm2219, %v2128
  %2223 = vst.msk [vmem:[#allocation3 + $0x18] sm:$0xff] %vm2219, %v2130
  %2224 = vst.msk [vmem:[#allocation3 + $0x20] sm:$0xff] %vm2219, %v2132
  %2225 = vst.msk [vmem:[#allocation3 + $0x28] sm:$0xff] %vm2219, %v2134
  %2226 = vst.msk [vmem:[#allocation3 + $0x30] sm:$0xff] %vm2219, %v2136
  %2227 = vst.msk [vmem:[#allocation3 + $0x38] sm:$0xff] %vm2219, %v2138
  %2228 = vst.msk [vmem:[#allocation3 + $0x40] sm:$0xff] %vm2219, %v2140
  %2229 = vst.msk [vmem:[#allocation3 + $0x48] sm:$0xff] %vm2219, %v2142
  %2230 = vst.msk [vmem:[#allocation3 + $0x50] sm:$0xff] %vm2219, %v2144
  %2231 = vst.msk [vmem:[#allocation3 + $0x58] sm:$0xff] %vm2219, %v2146
  %2232 = vst.msk [vmem:[#allocation3 + $0x60] sm:$0xff] %vm2219, %v2148
  %2233 = vst.msk [vmem:[#allocation3 + $0x68] sm:$0xff] %vm2219, %v2150
  %2234 = vst.msk [vmem:[#allocation3 + $0x70] sm:$0xff] %vm2219, %v2152
  %2235 = vst.msk [vmem:[#allocation3 + $0x78] sm:$0xff] %vm2219, %v2154
  %2236 = vst.msk [vmem:[#allocation3 + $0x80] sm:$0xff] %vm2219, %v2156
  %2237 = vst.msk [vmem:[#allocation3 + $0x88] sm:$0xff] %vm2219, %v2158
  %2238 = vst.msk [vmem:[#allocation3 + $0x90] sm:$0xff] %vm2219, %v2160
  %2239 = vst.msk [vmem:[#allocation3 + $0x98] sm:$0xff] %vm2219, %v2162
  %2240 = vst.msk [vmem:[#allocation3 + $0xa0] sm:$0xff] %vm2219, %v2164
  %2241 = vst.msk [vmem:[#allocation3 + $0xa8] sm:$0xff] %vm2219, %v2166
  %2242 = vst.msk [vmem:[#allocation3 + $0xb0] sm:$0xff] %vm2219, %v2168
  %2243 = vst.msk [vmem:[#allocation3 + $0xb8] sm:$0xff] %vm2219, %v2170
  %2244 = vst.msk [vmem:[#allocation3 + $0xc0] sm:$0xff] %vm2219, %v2172
  %2245 = vst.msk [vmem:[#allocation3 + $0xc8] sm:$0xff] %vm2219, %v2174
  %2246 = vst.msk [vmem:[#allocation3 + $0xd0] sm:$0xff] %vm2219, %v2176
  %2247 = vst.msk [vmem:[#allocation3 + $0xd8] sm:$0xff] %vm2219, %v2178
  %2248 = vst.msk [vmem:[#allocation3 + $0xe0] sm:$0xff] %vm2219, %v2180
  %2249 = vst.msk [vmem:[#allocation3 + $0xe8] sm:$0xff] %vm2219, %v2182
  %2250 = vst.msk [vmem:[#allocation3 + $0xf0] sm:$0xff] %vm2219, %v2184
  %2251 = vst.msk [vmem:[#allocation3 + $0xf8] sm:$0xff] %vm2219, %v2186
  %v2252 = vld [vmem:[%s1737 + $0x2] sm:$0xff]
  %v2253 = vld [vmem:[%s1737 + $0xa] sm:$0xff]
  %v2254 = vld [vmem:[%s1737 + $0x1a] sm:$0xff]
  %v2255 = vld [vmem:[%s1737 + $0x22] sm:$0xff]
  %v2256 = vld [vmem:[%s1737 + $0x32] sm:$0xff]
  %v2257 = vld [vmem:[%s1737 + $0x3a] sm:$0xff]
  %v2258 = vld [vmem:[%s1737 + $0x4a] sm:$0xff]
  %v2259 = vld [vmem:[%s1737 + $0x52] sm:$0xff]
  %v2260 = vld [vmem:[%s1737 + $0x62] sm:$0xff]
  %v2261 = vld [vmem:[%s1737 + $0x6a] sm:$0xff]
  %v2262 = vld [vmem:[%s1737 + $0x7a] sm:$0xff]
  %v2263 = vld [vmem:[%s1737 + $0x82] sm:$0xff]
  %v2264 = vld [vmem:[%s1737 + $0x92] sm:$0xff]
  %v2265 = vld [vmem:[%s1737 + $0x9a] sm:$0xff]
  %v2266 = vld [vmem:[%s1737 + $0xaa] sm:$0xff]
  %v2267 = vld [vmem:[%s1737 + $0xb2] sm:$0xff]
  %v2268 = vld [vmem:[%s1737 + $0xc2] sm:$0xff]
  %v2269 = vld [vmem:[%s1737 + $0xca] sm:$0xff]
  %v2270 = vld [vmem:[%s1737 + $0xda] sm:$0xff]
  %v2271 = vld [vmem:[%s1737 + $0xe2] sm:$0xff]
  %v2272 = vld [vmem:[%s1737 + $0xf2] sm:$0xff]
  %v2273 = vld [vmem:[%s1737 + $0xfa] sm:$0xff]
  %v2274 = vld [vmem:[%s1737 + $0x10a] sm:$0xff]
  %v2275 = vld [vmem:[%s1737 + $0x112] sm:$0xff]
  %v2276 = vld [vmem:[%s1737 + $0x122] sm:$0xff]
  %v2277 = vld [vmem:[%s1737 + $0x12a] sm:$0xff]
  %v2278 = vld [vmem:[%s1737 + $0x13a] sm:$0xff]
  %v2279 = vld [vmem:[%s1737 + $0x142] sm:$0xff]
  %v2280 = vld [vmem:[%s1737 + $0x152] sm:$0xff]
  %v2281 = vld [vmem:[%s1737 + $0x15a] sm:$0xff]
  %v2282 = vld [vmem:[%s1737 + $0x16a] sm:$0xff]
  %v2283 = vld [vmem:[%s1737 + $0x172] sm:$0xff]
  %v2284 = vld [vmem:[%s1737 + $0x1b2] sm:$0xff]
  %v2285 = vld [vmem:[%s1737 + $0x1ba] sm:$0xff]
  %v2286 = vld [vmem:[%s1737 + $0x1ca] sm:$0xff]
  %v2287 = vld [vmem:[%s1737 + $0x1d2] sm:$0xff]
  %v2288 = vld [vmem:[%s1737 + $0x1e2] sm:$0xff]
  %v2289 = vld [vmem:[%s1737 + $0x1ea] sm:$0xff]
  %v2290 = vld [vmem:[%s1737 + $0x1fa] sm:$0xff]
  %v2291 = vld [vmem:[%s1737 + $0x202] sm:$0xff]
  %v2292 = vld [vmem:[%s1737 + $0x212] sm:$0xff]
  %v2293 = vld [vmem:[%s1737 + $0x21a] sm:$0xff]
  %v2294 = vld [vmem:[%s1737 + $0x22a] sm:$0xff]
  %v2295 = vld [vmem:[%s1737 + $0x232] sm:$0xff]
  %v2296 = vld [vmem:[%s1737 + $0x242] sm:$0xff]
  %v2297 = vld [vmem:[%s1737 + $0x24a] sm:$0xff]
  %v2298 = vld [vmem:[%s1737 + $0x25a] sm:$0xff]
  %v2299 = vld [vmem:[%s1737 + $0x262] sm:$0xff]
  %v2300 = vld [vmem:[%s1737 + $0x272] sm:$0xff]
  %v2301 = vld [vmem:[%s1737 + $0x27a] sm:$0xff]
  %v2302 = vld [vmem:[%s1737 + $0x28a] sm:$0xff]
  %v2303 = vld [vmem:[%s1737 + $0x292] sm:$0xff]
  %v2304 = vld [vmem:[%s1737 + $0x2a2] sm:$0xff]
  %v2305 = vld [vmem:[%s1737 + $0x2aa] sm:$0xff]
  %v2306 = vld [vmem:[%s1737 + $0x2ba] sm:$0xff]
  %v2307 = vld [vmem:[%s1737 + $0x2c2] sm:$0xff]
  %v2308 = vld [vmem:[%s1737 + $0x2d2] sm:$0xff]
  %v2309 = vld [vmem:[%s1737 + $0x2da] sm:$0xff]
  %v2310 = vld [vmem:[%s1737 + $0x2ea] sm:$0xff]
  %v2311 = vld [vmem:[%s1737 + $0x2f2] sm:$0xff]
  %v2312 = vld [vmem:[%s1737 + $0x302] sm:$0xff]
  %v2313 = vld [vmem:[%s1737 + $0x30a] sm:$0xff]
  %v2314 = vld [vmem:[%s1737 + $0x31a] sm:$0xff]
  %v2315 = vld [vmem:[%s1737 + $0x322] sm:$0xff]
  %v2316 = vpack.c.bf16 %v2253, %v2252
  %v2317 = vpack.c.bf16 %v2255, %v2254
  %v2318 = vpack.c.bf16 %v2257, %v2256
  %v2319 = vpack.c.bf16 %v2259, %v2258
  %v2320 = vpack.c.bf16 %v2261, %v2260
  %v2321 = vpack.c.bf16 %v2263, %v2262
  %v2322 = vpack.c.bf16 %v2265, %v2264
  %v2323 = vpack.c.bf16 %v2267, %v2266
  %v2324 = vpack.c.bf16 %v2269, %v2268
  %v2325 = vpack.c.bf16 %v2271, %v2270
  %v2326 = vpack.c.bf16 %v2273, %v2272
  %v2327 = vpack.c.bf16 %v2275, %v2274
  %v2328 = vpack.c.bf16 %v2277, %v2276
  %v2329 = vpack.c.bf16 %v2279, %v2278
  %v2330 = vpack.c.bf16 %v2281, %v2280
  %v2331 = vpack.c.bf16 %v2283, %v2282
  %v2332 = vpack.c.bf16 %v2285, %v2284
  %v2333 = vpack.c.bf16 %v2287, %v2286
  %v2334 = vpack.c.bf16 %v2289, %v2288
  %v2335 = vpack.c.bf16 %v2291, %v2290
  %v2336 = vpack.c.bf16 %v2293, %v2292
  %v2337 = vpack.c.bf16 %v2295, %v2294
  %v2338 = vpack.c.bf16 %v2297, %v2296
  %v2339 = vpack.c.bf16 %v2299, %v2298
  %v2340 = vpack.c.bf16 %v2301, %v2300
  %v2341 = vpack.c.bf16 %v2303, %v2302
  %v2342 = vpack.c.bf16 %v2305, %v2304
  %v2343 = vpack.c.bf16 %v2307, %v2306
  %v2344 = vpack.c.bf16 %v2309, %v2308
  %v2345 = vpack.c.bf16 %v2311, %v2310
  %v2346 = vpack.c.bf16 %v2313, %v2312
  %v2347 = vpack.c.bf16 %v2315, %v2314
  %2380 = vrot.lane.b32.xlu0 %v2316, 32
  %v2381 = vpop.permute.xlu0 %2380
  %2382 = vrot.lane.b32.xlu0 %v2317, 32
  %v2383 = vpop.permute.xlu0 %2382
  %2384 = vrot.lane.b32.xlu0 %v2318, 32
  %v2385 = vpop.permute.xlu0 %2384
  %2386 = vrot.lane.b32.xlu0 %v2319, 32
  %v2387 = vpop.permute.xlu0 %2386
  %2388 = vrot.lane.b32.xlu0 %v2320, 32
  %v2389 = vpop.permute.xlu0 %2388
  %2390 = vrot.lane.b32.xlu0 %v2321, 32
  %v2391 = vpop.permute.xlu0 %2390
  %2392 = vrot.lane.b32.xlu0 %v2322, 32
  %v2393 = vpop.permute.xlu0 %2392
  %2394 = vrot.lane.b32.xlu0 %v2323, 32
  %v2395 = vpop.permute.xlu0 %2394
  %2396 = vrot.lane.b32.xlu0 %v2324, 32
  %v2397 = vpop.permute.xlu0 %2396
  %2398 = vrot.lane.b32.xlu0 %v2325, 32
  %v2399 = vpop.permute.xlu0 %2398
  %2400 = vrot.lane.b32.xlu0 %v2326, 32
  %v2401 = vpop.permute.xlu0 %2400
  %2402 = vrot.lane.b32.xlu0 %v2327, 32
  %v2403 = vpop.permute.xlu0 %2402
  %2404 = vrot.lane.b32.xlu0 %v2328, 32
  %v2405 = vpop.permute.xlu0 %2404
  %2406 = vrot.lane.b32.xlu0 %v2329, 32
  %v2407 = vpop.permute.xlu0 %2406
  %2408 = vrot.lane.b32.xlu0 %v2330, 32
  %v2409 = vpop.permute.xlu0 %2408
  %2410 = vrot.lane.b32.xlu0 %v2331, 32
  %v2411 = vpop.permute.xlu0 %2410
  %2412 = vrot.lane.b32.xlu0 %v2332, 32
  %v2413 = vpop.permute.xlu0 %2412
  %2414 = vrot.lane.b32.xlu0 %v2333, 32
  %v2415 = vpop.permute.xlu0 %2414
  %2416 = vrot.lane.b32.xlu0 %v2334, 32
  %v2417 = vpop.permute.xlu0 %2416
  %2418 = vrot.lane.b32.xlu0 %v2335, 32
  %v2419 = vpop.permute.xlu0 %2418
  %2420 = vrot.lane.b32.xlu0 %v2336, 32
  %v2421 = vpop.permute.xlu0 %2420
  %2422 = vrot.lane.b32.xlu0 %v2337, 32
  %v2423 = vpop.permute.xlu0 %2422
  %2424 = vrot.lane.b32.xlu0 %v2338, 32
  %v2425 = vpop.permute.xlu0 %2424
  %2426 = vrot.lane.b32.xlu0 %v2339, 32
  %v2427 = vpop.permute.xlu0 %2426
  %2428 = vrot.lane.b32.xlu0 %v2340, 32
  %v2429 = vpop.permute.xlu0 %2428
  %2430 = vrot.lane.b32.xlu0 %v2341, 32
  %v2431 = vpop.permute.xlu0 %2430
  %2432 = vrot.lane.b32.xlu0 %v2342, 32
  %v2433 = vpop.permute.xlu0 %2432
  %2434 = vrot.lane.b32.xlu0 %v2343, 32
  %v2435 = vpop.permute.xlu0 %2434
  %2436 = vrot.lane.b32.xlu0 %v2344, 32
  %v2437 = vpop.permute.xlu0 %2436
  %2438 = vrot.lane.b32.xlu0 %v2345, 32
  %v2439 = vpop.permute.xlu0 %2438
  %2440 = vrot.lane.b32.xlu0 %v2346, 32
  %v2441 = vpop.permute.xlu0 %2440
  %2442 = vrot.lane.b32.xlu0 %v2347, 32
  %v2443 = vpop.permute.xlu0 %2442
  %vm2476 = vcmask 294144
  %2477 = vst.msk [vmem:[#allocation3] sm:$0xff] %vm2476, %v2381
  %2478 = vst.msk [vmem:[#allocation3 + $0x8] sm:$0xff] %vm2476, %v2383
  %2479 = vst.msk [vmem:[#allocation3 + $0x10] sm:$0xff] %vm2476, %v2385
  %2480 = vst.msk [vmem:[#allocation3 + $0x18] sm:$0xff] %vm2476, %v2387
  %2481 = vst.msk [vmem:[#allocation3 + $0x20] sm:$0xff] %vm2476, %v2389
  %2482 = vst.msk [vmem:[#allocation3 + $0x28] sm:$0xff] %vm2476, %v2391
  %2483 = vst.msk [vmem:[#allocation3 + $0x30] sm:$0xff] %vm2476, %v2393
  %2484 = vst.msk [vmem:[#allocation3 + $0x38] sm:$0xff] %vm2476, %v2395
  %2485 = vst.msk [vmem:[#allocation3 + $0x40] sm:$0xff] %vm2476, %v2397
  %2486 = vst.msk [vmem:[#allocation3 + $0x48] sm:$0xff] %vm2476, %v2399
  %2487 = vst.msk [vmem:[#allocation3 + $0x50] sm:$0xff] %vm2476, %v2401
  %2488 = vst.msk [vmem:[#allocation3 + $0x58] sm:$0xff] %vm2476, %v2403
  %2489 = vst.msk [vmem:[#allocation3 + $0x60] sm:$0xff] %vm2476, %v2405
  %2490 = vst.msk [vmem:[#allocation3 + $0x68] sm:$0xff] %vm2476, %v2407
  %2491 = vst.msk [vmem:[#allocation3 + $0x70] sm:$0xff] %vm2476, %v2409
  %2492 = vst.msk [vmem:[#allocation3 + $0x78] sm:$0xff] %vm2476, %v2411
  %2493 = vst.msk [vmem:[#allocation3 + $0x80] sm:$0xff] %vm2476, %v2413
  %2494 = vst.msk [vmem:[#allocation3 + $0x88] sm:$0xff] %vm2476, %v2415
  %2495 = vst.msk [vmem:[#allocation3 + $0x90] sm:$0xff] %vm2476, %v2417
  %2496 = vst.msk [vmem:[#allocation3 + $0x98] sm:$0xff] %vm2476, %v2419
  %2497 = vst.msk [vmem:[#allocation3 + $0xa0] sm:$0xff] %vm2476, %v2421
  %2498 = vst.msk [vmem:[#allocation3 + $0xa8] sm:$0xff] %vm2476, %v2423
  %2499 = vst.msk [vmem:[#allocation3 + $0xb0] sm:$0xff] %vm2476, %v2425
  %2500 = vst.msk [vmem:[#allocation3 + $0xb8] sm:$0xff] %vm2476, %v2427
  %2501 = vst.msk [vmem:[#allocation3 + $0xc0] sm:$0xff] %vm2476, %v2429
  %2502 = vst.msk [vmem:[#allocation3 + $0xc8] sm:$0xff] %vm2476, %v2431
  %2503 = vst.msk [vmem:[#allocation3 + $0xd0] sm:$0xff] %vm2476, %v2433
  %2504 = vst.msk [vmem:[#allocation3 + $0xd8] sm:$0xff] %vm2476, %v2435
  %2505 = vst.msk [vmem:[#allocation3 + $0xe0] sm:$0xff] %vm2476, %v2437
  %2506 = vst.msk [vmem:[#allocation3 + $0xe8] sm:$0xff] %vm2476, %v2439
  %2507 = vst.msk [vmem:[#allocation3 + $0xf0] sm:$0xff] %vm2476, %v2441
  %2508 = vst.msk [vmem:[#allocation3 + $0xf8] sm:$0xff] %vm2476, %v2443
  %v2509 = vld [vmem:[#allocation3] sm:$0xff]
  %v2510 = vld [vmem:[#allocation3 + $0x8] sm:$0xff]
  %v2511 = vld [vmem:[#allocation3 + $0x10] sm:$0xff]
  %v2512 = vld [vmem:[#allocation3 + $0x18] sm:$0xff]
  %v2513 = vld [vmem:[#allocation3 + $0x20] sm:$0xff]
  %v2514 = vld [vmem:[#allocation3 + $0x28] sm:$0xff]
  %v2515 = vld [vmem:[#allocation3 + $0x30] sm:$0xff]
  %v2516 = vld [vmem:[#allocation3 + $0x38] sm:$0xff]
  %v2517 = vld [vmem:[#allocation3 + $0x40] sm:$0xff]
  %v2518 = vld [vmem:[#allocation3 + $0x48] sm:$0xff]
  %v2519 = vld [vmem:[#allocation3 + $0x50] sm:$0xff]
  %v2520 = vld [vmem:[#allocation3 + $0x58] sm:$0xff]
  %v2521 = vld [vmem:[#allocation3 + $0x60] sm:$0xff]
  %v2522 = vld [vmem:[#allocation3 + $0x68] sm:$0xff]
  %v2523 = vld [vmem:[#allocation3 + $0x70] sm:$0xff]
  %v2524 = vld [vmem:[#allocation3 + $0x78] sm:$0xff]
  %v2525 = vld [vmem:[#allocation3 + $0x80] sm:$0xff]
  %v2526 = vld [vmem:[#allocation3 + $0x88] sm:$0xff]
  %v2527 = vld [vmem:[#allocation3 + $0x90] sm:$0xff]
  %v2528 = vld [vmem:[#allocation3 + $0x98] sm:$0xff]
  %v2529 = vld [vmem:[#allocation3 + $0xa0] sm:$0xff]
  %v2530 = vld [vmem:[#allocation3 + $0xa8] sm:$0xff]
  %v2531 = vld [vmem:[#allocation3 + $0xb0] sm:$0xff]
  %v2532 = vld [vmem:[#allocation3 + $0xb8] sm:$0xff]
  %v2533 = vld [vmem:[#allocation3 + $0xc0] sm:$0xff]
  %v2534 = vld [vmem:[#allocation3 + $0xc8] sm:$0xff]
  %v2535 = vld [vmem:[#allocation3 + $0xd0] sm:$0xff]
  %v2536 = vld [vmem:[#allocation3 + $0xd8] sm:$0xff]
  %v2537 = vld [vmem:[#allocation3 + $0xe0] sm:$0xff]
  %v2538 = vld [vmem:[#allocation3 + $0xe8] sm:$0xff]
  %v2539 = vld [vmem:[#allocation3 + $0xf0] sm:$0xff]
  %v2540 = vld [vmem:[#allocation3 + $0xf8] sm:$0xff]
  %v2541 = vld [vmem:[%s1] sm:$0xf]
  %v2542 = vld [vmem:[%s1 + $0x4] sm:$0xf]
  %v2543 = vld [vmem:[%s1 + $0x8] sm:$0xf]
  %v2544 = vld [vmem:[%s1 + $0xc] sm:$0xf]
  %v2545 = vld [vmem:[%s1 + $0x10] sm:$0x3]
  %v2551 = vunpack.c.l.b16 %v2541
  %v2552 = vunpack.c.l.b16 %v2542
  %v2553 = vunpack.c.l.b16 %v2543
  %v2554 = vunpack.c.l.b16 %v2544
  %v2555 = vunpack.c.l.b16 %v2545
  %v2556 = vpack.c.b16 %v2552, %v2551
  %v2557 = vpack.c.b16 %v2554, %v2553
  %v2558 = vpack.c.b16 %v2555, %v2555
  %vm2561 = vcmask 293888
  %v2563 = vsel %vm2561, %v2509, 0
  %v2566 = vsel %vm2561, %v2510, 0
  %v2569 = vsel %vm2561, %v2511, 0
  %v2572 = vsel %vm2561, %v2512, 0
  %v2575 = vsel %vm2561, %v2513, 0
  %v2578 = vsel %vm2561, %v2514, 0
  %v2581 = vsel %vm2561, %v2515, 0
  %v2584 = vsel %vm2561, %v2516, 0
  %v2587 = vsel %vm2561, %v2517, 0
  %v2590 = vsel %vm2561, %v2518, 0
  %v2593 = vsel %vm2561, %v2519, 0
  %v2596 = vsel %vm2561, %v2520, 0
  %v2599 = vsel %vm2561, %v2521, 0
  %v2602 = vsel %vm2561, %v2522, 0
  %v2605 = vsel %vm2561, %v2523, 0
  %v2608 = vsel %vm2561, %v2524, 0
  %v2611 = vsel %vm2561, %v2525, 0
  %v2614 = vsel %vm2561, %v2526, 0
  %v2617 = vsel %vm2561, %v2527, 0
  %v2620 = vsel %vm2561, %v2528, 0
  %v2623 = vsel %vm2561, %v2529, 0
  %v2626 = vsel %vm2561, %v2530, 0
  %v2629 = vsel %vm2561, %v2531, 0
  %v2632 = vsel %vm2561, %v2532, 0
  %v2635 = vsel %vm2561, %v2533, 0
  %v2638 = vsel %vm2561, %v2534, 0
  %v2641 = vsel %vm2561, %v2535, 0
  %v2644 = vsel %vm2561, %v2536, 0
  %v2647 = vsel %vm2561, %v2537, 0
  %v2650 = vsel %vm2561, %v2538, 0
  %v2653 = vsel %vm2561, %v2539, 0
  %v2656 = vsel %vm2561, %v2540, 0
  %vm2658 = vcmask 1041408
  %v2660 = vsel %vm2658, %v2558, 0
  %2662 = vmatprep.subr.bf16.mxu0 0
  %2663 = vmatpush1.bf16.msra.mxu0 %v2556
  %2664 = vmatprep.subr.bf16.mxu0 0
  %2665 = vmatpush1.bf16.msra.mxu0 %v2557
  %2666 = vmatprep.subr.bf16.mxu0 0
  %2667 = vmatpush1.bf16.msra.mxu0 %v2660
  %2668 = vmatprep.subr.bf16.mxu0 0
  %2669 = vmatpush1.bf16.msra.mxu0 0
  %2670 = vmatprep.subr.bf16.mxu0 0
  %2671 = vmatpush1.bf16.msra.mxu0 0
  %2672 = vmatprep.subr.bf16.mxu0 0
  %2673 = vmatpush1.bf16.msra.mxu0 0
  %2674 = vmatprep.subr.bf16.mxu0 0
  %2675 = vmatpush1.bf16.msra.mxu0 0
  %2676 = vmatprep.subr.bf16.mxu0 0
  %2677 = vmatpush1.bf16.msra.mxu0 0
  %2678 = vmatprep.subr.bf16.mxu0 0
  %2679 = vmatpush1.bf16.msra.mxu0 0
  %2680 = vmatprep.subr.bf16.mxu0 0
  %2681 = vmatpush1.bf16.msra.mxu0 0
  %2682 = vmatprep.subr.bf16.mxu0 0
  %2683 = vmatpush1.bf16.msra.mxu0 0
  %2684 = vmatprep.subr.bf16.mxu0 0
  %2685 = vmatpush1.bf16.msra.mxu0 0
  %2686 = vmatprep.subr.bf16.mxu0 0
  %2687 = vmatpush1.bf16.msra.mxu0 0
  %2688 = vmatprep.subr.bf16.mxu0 0
  %2689 = vmatpush1.bf16.msra.mxu0 0
  %2690 = vmatprep.subr.bf16.mxu0 0
  %2691 = vmatpush1.bf16.msra.mxu0 0
  %2692 = vmatprep.subr.bf16.mxu0 0
  %2693 = vmatpush1.bf16.msra.mxu0 0
  %2694 = vmatprep.mubr.bf16.mxu0 0
  %2695 = vmatmul.mubr.bf16.gmra.mrb[0].mxu0 %v2563
  %v2696 = vpop.f32.mrb[0].mxu0
  %v2697 = vadd.f32 0.0, %v2696
  %v2698 = vpop.f32.mrb[0].mxu0
  %v2699 = vpop.f32.mrb[0].mxu0
  %v2700 = vadd.f32 0.0, %v2699
  %v2701 = vpop.f32.mrb[0].mxu0
  %2702 = vmatprep.mubr.bf16.mxu0 0
  %2703 = vmatmul.mubr.bf16.gmra.mrb[0].mxu0 %v2566
  %v2704 = vpop.f32.mrb[0].mxu0
  %v2705 = vadd.f32 0.0, %v2704
  %v2706 = vpop.f32.mrb[0].mxu0
  %v2707 = vpop.f32.mrb[0].mxu0
  %v2708 = vadd.f32 0.0, %v2707
  %v2709 = vpop.f32.mrb[0].mxu0
  %2710 = vmatprep.mubr.bf16.mxu0 0
  %2711 = vmatmul.mubr.bf16.gmra.mrb[0].mxu0 %v2569
  %v2712 = vpop.f32.mrb[0].mxu0
  %v2713 = vadd.f32 0.0, %v2712
  %v2714 = vpop.f32.mrb[0].mxu0
  %v2715 = vpop.f32.mrb[0].mxu0
  %v2716 = vadd.f32 0.0, %v2715
  %v2717 = vpop.f32.mrb[0].mxu0
  %2718 = vmatprep.mubr.bf16.mxu0 0
  %2719 = vmatmul.mubr.bf16.gmra.mrb[0].mxu0 %v2572
  %v2720 = vpop.f32.mrb[0].mxu0
  %v2721 = vadd.f32 0.0, %v2720
  %v2722 = vpop.f32.mrb[0].mxu0
  %v2723 = vpop.f32.mrb[0].mxu0
  %v2724 = vadd.f32 0.0, %v2723
  %v2725 = vpop.f32.mrb[0].mxu0
  %2726 = vmatprep.mubr.bf16.mxu0 0
  %2727 = vmatmul.mubr.bf16.gmra.mrb[0].mxu0 %v2575
  %v2728 = vpop.f32.mrb[0].mxu0
  %v2729 = vadd.f32 0.0, %v2728
  %v2730 = vpop.f32.mrb[0].mxu0
  %v2731 = vpop.f32.mrb[0].mxu0
  %v2732 = vadd.f32 0.0, %v2731
  %v2733 = vpop.f32.mrb[0].mxu0
  %2734 = vmatprep.mubr.bf16.mxu0 0
  %2735 = vmatmul.mubr.bf16.gmra.mrb[0].mxu0 %v2578
  %v2736 = vpop.f32.mrb[0].mxu0
  %v2737 = vadd.f32 0.0, %v2736
  %v2738 = vpop.f32.mrb[0].mxu0
  %v2739 = vpop.f32.mrb[0].mxu0
  %v2740 = vadd.f32 0.0, %v2739
  %v2741 = vpop.f32.mrb[0].mxu0
  %2742 = vmatprep.mubr.bf16.mxu0 0
  %2743 = vmatmul.mubr.bf16.gmra.mrb[0].mxu0 %v2581
  %v2744 = vpop.f32.mrb[0].mxu0
  %v2745 = vadd.f32 0.0, %v2744
  %v2746 = vpop.f32.mrb[0].mxu0
  %v2747 = vpop.f32.mrb[0].mxu0
  %v2748 = vadd.f32 0.0, %v2747
  %v2749 = vpop.f32.mrb[0].mxu0
  %2750 = vmatprep.mubr.bf16.mxu0 0
  %2751 = vmatmul.mubr.bf16.gmra.mrb[0].mxu0 %v2584
  %v2752 = vpop.f32.mrb[0].mxu0
  %v2753 = vadd.f32 0.0, %v2752
  %v2754 = vpop.f32.mrb[0].mxu0
  %v2755 = vpop.f32.mrb[0].mxu0
  %v2756 = vadd.f32 0.0, %v2755
  %v2757 = vpop.f32.mrb[0].mxu0
  %2758 = vmatprep.mubr.bf16.mxu0 0
  %2759 = vmatmul.mubr.bf16.gmra.mrb[0].mxu0 %v2587
  %v2760 = vpop.f32.mrb[0].mxu0
  %v2761 = vadd.f32 0.0, %v2760
  %v2762 = vpop.f32.mrb[0].mxu0
  %v2763 = vpop.f32.mrb[0].mxu0
  %v2764 = vadd.f32 0.0, %v2763
  %v2765 = vpop.f32.mrb[0].mxu0
  %2766 = vmatprep.mubr.bf16.mxu0 0
  %2767 = vmatmul.mubr.bf16.gmra.mrb[0].mxu0 %v2590
  %v2768 = vpop.f32.mrb[0].mxu0
  %v2769 = vadd.f32 0.0, %v2768
  %v2770 = vpop.f32.mrb[0].mxu0
  %v2771 = vpop.f32.mrb[0].mxu0
  %v2772 = vadd.f32 0.0, %v2771
  %v2773 = vpop.f32.mrb[0].mxu0
  %2774 = vmatprep.mubr.bf16.mxu0 0
  %2775 = vmatmul.mubr.bf16.gmra.mrb[0].mxu0 %v2593
  %v2776 = vpop.f32.mrb[0].mxu0
  %v2777 = vadd.f32 0.0, %v2776
  %v2778 = vpop.f32.mrb[0].mxu0
  %v2779 = vpop.f32.mrb[0].mxu0
  %v2780 = vadd.f32 0.0, %v2779
  %v2781 = vpop.f32.mrb[0].mxu0
  %2782 = vmatprep.mubr.bf16.mxu0 0
  %2783 = vmatmul.mubr.bf16.gmra.mrb[0].mxu0 %v2596
  %v2784 = vpop.f32.mrb[0].mxu0
  %v2785 = vadd.f32 0.0, %v2784
  %v2786 = vpop.f32.mrb[0].mxu0
  %v2787 = vpop.f32.mrb[0].mxu0
  %v2788 = vadd.f32 0.0, %v2787
  %v2789 = vpop.f32.mrb[0].mxu0
  %2790 = vmatprep.mubr.bf16.mxu0 0
  %2791 = vmatmul.mubr.bf16.gmra.mrb[0].mxu0 %v2599
  %v2792 = vpop.f32.mrb[0].mxu0
  %v2793 = vadd.f32 0.0, %v2792
  %v2794 = vpop.f32.mrb[0].mxu0
  %v2795 = vpop.f32.mrb[0].mxu0
  %v2796 = vadd.f32 0.0, %v2795
  %v2797 = vpop.f32.mrb[0].mxu0
  %2798 = vmatprep.mubr.bf16.mxu0 0
  %2799 = vmatmul.mubr.bf16.gmra.mrb[0].mxu0 %v2602
  %v2800 = vpop.f32.mrb[0].mxu0
  %v2801 = vadd.f32 0.0, %v2800
  %v2802 = vpop.f32.mrb[0].mxu0
  %v2803 = vpop.f32.mrb[0].mxu0
  %v2804 = vadd.f32 0.0, %v2803
  %v2805 = vpop.f32.mrb[0].mxu0
  %2806 = vmatprep.mubr.bf16.mxu0 0
  %2807 = vmatmul.mubr.bf16.gmra.mrb[0].mxu0 %v2605
  %v2808 = vpop.f32.mrb[0].mxu0
  %v2809 = vadd.f32 0.0, %v2808
  %v2810 = vpop.f32.mrb[0].mxu0
  %v2811 = vpop.f32.mrb[0].mxu0
  %v2812 = vadd.f32 0.0, %v2811
  %v2813 = vpop.f32.mrb[0].mxu0
  %2814 = vmatprep.mubr.bf16.mxu0 0
  %2815 = vmatmul.mubr.bf16.gmra.mrb[0].mxu0 %v2608
  %v2816 = vpop.f32.mrb[0].mxu0
  %v2817 = vadd.f32 0.0, %v2816
  %v2818 = vpop.f32.mrb[0].mxu0
  %v2819 = vpop.f32.mrb[0].mxu0
  %v2820 = vadd.f32 0.0, %v2819
  %v2821 = vpop.f32.mrb[0].mxu0
  %2822 = vmatprep.mubr.bf16.mxu0 0
  %2823 = vmatmul.mubr.bf16.gmra.mrb[0].mxu0 %v2611
  %v2824 = vpop.f32.mrb[0].mxu0
  %v2825 = vadd.f32 0.0, %v2824
  %v2826 = vpop.f32.mrb[0].mxu0
  %v2827 = vpop.f32.mrb[0].mxu0
  %v2828 = vadd.f32 0.0, %v2827
  %v2829 = vpop.f32.mrb[0].mxu0
  %2830 = vmatprep.mubr.bf16.mxu0 0
  %2831 = vmatmul.mubr.bf16.gmra.mrb[0].mxu0 %v2614
  %v2832 = vpop.f32.mrb[0].mxu0
  %v2833 = vadd.f32 0.0, %v2832
  %v2834 = vpop.f32.mrb[0].mxu0
  %v2835 = vpop.f32.mrb[0].mxu0
  %v2836 = vadd.f32 0.0, %v2835
  %v2837 = vpop.f32.mrb[0].mxu0
  %2838 = vmatprep.mubr.bf16.mxu0 0
  %2839 = vmatmul.mubr.bf16.gmra.mrb[0].mxu0 %v2617
  %v2840 = vpop.f32.mrb[0].mxu0
  %v2841 = vadd.f32 0.0, %v2840
  %v2842 = vpop.f32.mrb[0].mxu0
  %v2843 = vpop.f32.mrb[0].mxu0
  %v2844 = vadd.f32 0.0, %v2843
  %v2845 = vpop.f32.mrb[0].mxu0
  %2846 = vmatprep.mubr.bf16.mxu0 0
  %2847 = vmatmul.mubr.bf16.gmra.mrb[0].mxu0 %v2620
  %v2848 = vpop.f32.mrb[0].mxu0
  %v2849 = vadd.f32 0.0, %v2848
  %v2850 = vpop.f32.mrb[0].mxu0
  %v2851 = vpop.f32.mrb[0].mxu0
  %v2852 = vadd.f32 0.0, %v2851
  %v2853 = vpop.f32.mrb[0].mxu0
  %2854 = vmatprep.mubr.bf16.mxu0 0
  %2855 = vmatmul.mubr.bf16.gmra.mrb[0].mxu0 %v2623
  %v2856 = vpop.f32.mrb[0].mxu0
  %v2857 = vadd.f32 0.0, %v2856
  %v2858 = vpop.f32.mrb[0].mxu0
  %v2859 = vpop.f32.mrb[0].mxu0
  %v2860 = vadd.f32 0.0, %v2859
  %v2861 = vpop.f32.mrb[0].mxu0
  %2862 = vmatprep.mubr.bf16.mxu0 0
  %2863 = vmatmul.mubr.bf16.gmra.mrb[0].mxu0 %v2626
  %v2864 = vpop.f32.mrb[0].mxu0
  %v2865 = vadd.f32 0.0, %v2864
  %v2866 = vpop.f32.mrb[0].mxu0
  %v2867 = vpop.f32.mrb[0].mxu0
  %v2868 = vadd.f32 0.0, %v2867
  %v2869 = vpop.f32.mrb[0].mxu0
  %2870 = vmatprep.mubr.bf16.mxu0 0
  %2871 = vmatmul.mubr.bf16.gmra.mrb[0].mxu0 %v2629
  %v2872 = vpop.f32.mrb[0].mxu0
  %v2873 = vadd.f32 0.0, %v2872
  %v2874 = vpop.f32.mrb[0].mxu0
  %v2875 = vpop.f32.mrb[0].mxu0
  %v2876 = vadd.f32 0.0, %v2875
  %v2877 = vpop.f32.mrb[0].mxu0
  %2878 = vmatprep.mubr.bf16.mxu0 0
  %2879 = vmatmul.mubr.bf16.gmra.mrb[0].mxu0 %v2632
  %v2880 = vpop.f32.mrb[0].mxu0
  %v2881 = vadd.f32 0.0, %v2880
  %v2882 = vpop.f32.mrb[0].mxu0
  %v2883 = vpop.f32.mrb[0].mxu0
  %v2884 = vadd.f32 0.0, %v2883
  %v2885 = vpop.f32.mrb[0].mxu0
  %2886 = vmatprep.mubr.bf16.mxu0 0
  %2887 = vmatmul.mubr.bf16.gmra.mrb[0].mxu0 %v2635
  %v2888 = vpop.f32.mrb[0].mxu0
  %v2889 = vadd.f32 0.0, %v2888
  %v2890 = vpop.f32.mrb[0].mxu0
  %v2891 = vpop.f32.mrb[0].mxu0
  %v2892 = vadd.f32 0.0, %v2891
  %v2893 = vpop.f32.mrb[0].mxu0
  %2894 = vmatprep.mubr.bf16.mxu0 0
  %2895 = vmatmul.mubr.bf16.gmra.mrb[0].mxu0 %v2638
  %v2896 = vpop.f32.mrb[0].mxu0
  %v2897 = vadd.f32 0.0, %v2896
  %v2898 = vpop.f32.mrb[0].mxu0
  %v2899 = vpop.f32.mrb[0].mxu0
  %v2900 = vadd.f32 0.0, %v2899
  %v2901 = vpop.f32.mrb[0].mxu0
  %2902 = vmatprep.mubr.bf16.mxu0 0
  %2903 = vmatmul.mubr.bf16.gmra.mrb[0].mxu0 %v2641
  %v2904 = vpop.f32.mrb[0].mxu0
  %v2905 = vadd.f32 0.0, %v2904
  %v2906 = vpop.f32.mrb[0].mxu0
  %v2907 = vpop.f32.mrb[0].mxu0
  %v2908 = vadd.f32 0.0, %v2907
  %v2909 = vpop.f32.mrb[0].mxu0
  %2910 = vmatprep.mubr.bf16.mxu0 0
  %2911 = vmatmul.mubr.bf16.gmra.mrb[0].mxu0 %v2644
  %v2912 = vpop.f32.mrb[0].mxu0
  %v2913 = vadd.f32 0.0, %v2912
  %v2914 = vpop.f32.mrb[0].mxu0
  %v2915 = vpop.f32.mrb[0].mxu0
  %v2916 = vadd.f32 0.0, %v2915
  %v2917 = vpop.f32.mrb[0].mxu0
  %2918 = vmatprep.mubr.bf16.mxu0 0
  %2919 = vmatmul.mubr.bf16.gmra.mrb[0].mxu0 %v2647
  %v2920 = vpop.f32.mrb[0].mxu0
  %v2921 = vadd.f32 0.0, %v2920
  %v2922 = vpop.f32.mrb[0].mxu0
  %v2923 = vpop.f32.mrb[0].mxu0
  %v2924 = vadd.f32 0.0, %v2923
  %v2925 = vpop.f32.mrb[0].mxu0
  %2926 = vmatprep.mubr.bf16.mxu0 0
  %2927 = vmatmul.mubr.bf16.gmra.mrb[0].mxu0 %v2650
  %v2928 = vpop.f32.mrb[0].mxu0
  %v2929 = vadd.f32 0.0, %v2928
  %v2930 = vpop.f32.mrb[0].mxu0
  %v2931 = vpop.f32.mrb[0].mxu0
  %v2932 = vadd.f32 0.0, %v2931
  %v2933 = vpop.f32.mrb[0].mxu0
  %2934 = vmatprep.mubr.bf16.mxu0 0
  %2935 = vmatmul.mubr.bf16.gmra.mrb[0].mxu0 %v2653
  %v2936 = vpop.f32.mrb[0].mxu0
  %v2937 = vadd.f32 0.0, %v2936
  %v2938 = vpop.f32.mrb[0].mxu0
  %v2939 = vpop.f32.mrb[0].mxu0
  %v2940 = vadd.f32 0.0, %v2939
  %v2941 = vpop.f32.mrb[0].mxu0
  %2942 = vmatprep.mubr.bf16.mxu0 0
  %2943 = vmatmul.mubr.bf16.gmra.mrb[0].mxu0 %v2656
  %v2944 = vpop.f32.mrb[0].mxu0
  %v2945 = vadd.f32 0.0, %v2944
  %v2946 = vpop.f32.mrb[0].mxu0
  %v2947 = vpop.f32.mrb[0].mxu0
  %v2948 = vadd.f32 0.0, %v2947
  %v2949 = vpop.f32.mrb[0].mxu0
  %2950 = vdwg.mxu0
  %v2951 = vsel %vm21, %v2697, 0.0
  %v2952 = vsel %vm21, %v2700, 0.0
  %v2953 = vadd.f32 %v2951, %v2952
  %v2954 = vsel %vm21, %v2705, 0.0
  %v2955 = vadd.f32 %v2953, %v2954
  %v2956 = vsel %vm21, %v2708, 0.0
  %v2957 = vadd.f32 %v2955, %v2956
  %v2958 = vsel %vm21, %v2713, 0.0
  %v2959 = vadd.f32 %v2957, %v2958
  %v2960 = vsel %vm21, %v2716, 0.0
  %v2961 = vadd.f32 %v2959, %v2960
  %v2962 = vsel %vm21, %v2721, 0.0
  %v2963 = vadd.f32 %v2961, %v2962
  %v2964 = vsel %vm21, %v2724, 0.0
  %v2965 = vadd.f32 %v2963, %v2964
  %v2966 = vsel %vm21, %v2729, 0.0
  %v2967 = vadd.f32 %v2965, %v2966
  %v2968 = vsel %vm21, %v2732, 0.0
  %v2969 = vadd.f32 %v2967, %v2968
  %v2970 = vsel %vm21, %v2737, 0.0
  %v2971 = vadd.f32 %v2969, %v2970
  %v2972 = vsel %vm21, %v2740, 0.0
  %v2973 = vadd.f32 %v2971, %v2972
  %v2974 = vsel %vm21, %v2745, 0.0
  %v2975 = vadd.f32 %v2973, %v2974
  %v2976 = vsel %vm21, %v2748, 0.0
  %v2977 = vadd.f32 %v2975, %v2976
  %v2978 = vsel %vm21, %v2753, 0.0
  %v2979 = vadd.f32 %v2977, %v2978
  %v2980 = vsel %vm21, %v2756, 0.0
  %v2981 = vadd.f32 %v2979, %v2980
  %v2982 = vsel %vm21, %v2761, 0.0
  %v2983 = vadd.f32 %v2981, %v2982
  %v2984 = vsel %vm21, %v2764, 0.0
  %v2985 = vadd.f32 %v2983, %v2984
  %v2986 = vsel %vm21, %v2769, 0.0
  %v2987 = vadd.f32 %v2985, %v2986
  %v2988 = vsel %vm21, %v2772, 0.0
  %v2989 = vadd.f32 %v2987, %v2988
  %v2990 = vsel %vm21, %v2777, 0.0
  %v2991 = vadd.f32 %v2989, %v2990
  %v2992 = vsel %vm21, %v2780, 0.0
  %v2993 = vadd.f32 %v2991, %v2992
  %v2994 = vsel %vm21, %v2785, 0.0
  %v2995 = vadd.f32 %v2993, %v2994
  %v2996 = vsel %vm21, %v2788, 0.0
  %v2997 = vadd.f32 %v2995, %v2996
  %v2998 = vsel %vm21, %v2793, 0.0
  %v2999 = vadd.f32 %v2997, %v2998
  %v3000 = vsel %vm21, %v2796, 0.0
  %v3001 = vadd.f32 %v2999, %v3000
  %v3002 = vsel %vm21, %v2801, 0.0
  %v3003 = vadd.f32 %v3001, %v3002
  %v3004 = vsel %vm21, %v2804, 0.0
  %v3005 = vadd.f32 %v3003, %v3004
  %v3006 = vsel %vm21, %v2809, 0.0
  %v3007 = vadd.f32 %v3005, %v3006
  %v3008 = vsel %vm21, %v2812, 0.0
  %v3009 = vadd.f32 %v3007, %v3008
  %v3010 = vsel %vm21, %v2817, 0.0
  %v3011 = vadd.f32 %v3009, %v3010
  %v3012 = vsel %vm21, %v2820, 0.0
  %v3013 = vadd.f32 %v3011, %v3012
  %v3014 = vsel %vm21, %v2825, 0.0
  %v3015 = vadd.f32 %v3013, %v3014
  %v3016 = vsel %vm21, %v2828, 0.0
  %v3017 = vadd.f32 %v3015, %v3016
  %v3018 = vsel %vm21, %v2833, 0.0
  %v3019 = vadd.f32 %v3017, %v3018
  %v3020 = vsel %vm21, %v2836, 0.0
  %v3021 = vadd.f32 %v3019, %v3020
  %v3022 = vsel %vm21, %v2841, 0.0
  %v3023 = vadd.f32 %v3021, %v3022
  %v3024 = vsel %vm21, %v2844, 0.0
  %v3025 = vadd.f32 %v3023, %v3024
  %v3026 = vsel %vm21, %v2849, 0.0
  %v3027 = vadd.f32 %v3025, %v3026
  %v3028 = vsel %vm21, %v2852, 0.0
  %v3029 = vadd.f32 %v3027, %v3028
  %v3030 = vsel %vm21, %v2857, 0.0
  %v3031 = vadd.f32 %v3029, %v3030
  %v3032 = vsel %vm21, %v2860, 0.0
  %v3033 = vadd.f32 %v3031, %v3032
  %v3034 = vsel %vm21, %v2865, 0.0
  %v3035 = vadd.f32 %v3033, %v3034
  %v3036 = vsel %vm21, %v2868, 0.0
  %v3037 = vadd.f32 %v3035, %v3036
  %v3038 = vsel %vm21, %v2873, 0.0
  %v3039 = vadd.f32 %v3037, %v3038
  %v3040 = vsel %vm21, %v2876, 0.0
  %v3041 = vadd.f32 %v3039, %v3040
  %v3042 = vsel %vm21, %v2881, 0.0
  %v3043 = vadd.f32 %v3041, %v3042
  %v3044 = vsel %vm21, %v2884, 0.0
  %v3045 = vadd.f32 %v3043, %v3044
  %v3046 = vsel %vm21, %v2889, 0.0
  %v3047 = vadd.f32 %v3045, %v3046
  %v3048 = vsel %vm21, %v2892, 0.0
  %v3049 = vadd.f32 %v3047, %v3048
  %v3050 = vsel %vm21, %v2897, 0.0
  %v3051 = vadd.f32 %v3049, %v3050
  %v3052 = vsel %vm21, %v2900, 0.0
  %v3053 = vadd.f32 %v3051, %v3052
  %v3054 = vsel %vm21, %v2905, 0.0
  %v3055 = vadd.f32 %v3053, %v3054
  %v3056 = vsel %vm21, %v2908, 0.0
  %v3057 = vadd.f32 %v3055, %v3056
  %v3058 = vsel %vm21, %v2913, 0.0
  %v3059 = vadd.f32 %v3057, %v3058
  %v3060 = vsel %vm21, %v2916, 0.0
  %v3061 = vadd.f32 %v3059, %v3060
  %v3062 = vsel %vm21, %v2921, 0.0
  %v3063 = vadd.f32 %v3061, %v3062
  %v3064 = vsel %vm21, %v2924, 0.0
  %v3065 = vadd.f32 %v3063, %v3064
  %v3066 = vsel %vm21, %v2929, 0.0
  %v3067 = vadd.f32 %v3065, %v3066
  %v3068 = vsel %vm21, %v2932, 0.0
  %v3069 = vadd.f32 %v3067, %v3068
  %v3070 = vsel %vm21, %v2937, 0.0
  %v3071 = vadd.f32 %v3069, %v3070
  %v3072 = vsel %vm21, %v2940, 0.0
  %v3073 = vadd.f32 %v3071, %v3072
  %v3074 = vsel %vm21, %v2945, 0.0
  %v3075 = vadd.f32 %v3073, %v3074
  %v3076 = vsel %vm21, %v2948, 0.0
  %v3077 = vadd.f32 %v3075, %v3076
  %v3078 = vrot.slane %v3077, 4
  %v3079 = vadd.f32 %v3077, %v3078
  %v3080 = vrot.slane %v3079, 2
  %v3081 = vadd.f32 %v3079, %v3080
  %v3082 = vrot.slane %v3081, 1
  %v3083 = vadd.f32 %v3081, %v3082
  %v3084 = vmul.f32 %v3083, 0.001953125
  %v3085 = vmul.f32 %v2697, %v2697
  %v3086 = vmul.f32 %v2700, %v2700
  %v3087 = vmul.f32 %v2705, %v2705
  %v3088 = vmul.f32 %v2708, %v2708
  %v3089 = vmul.f32 %v2713, %v2713
  %v3090 = vmul.f32 %v2716, %v2716
  %v3091 = vmul.f32 %v2721, %v2721
  %v3092 = vmul.f32 %v2724, %v2724
  %v3093 = vmul.f32 %v2729, %v2729
  %v3094 = vmul.f32 %v2732, %v2732
  %v3095 = vmul.f32 %v2737, %v2737
  %v3096 = vmul.f32 %v2740, %v2740
  %v3097 = vmul.f32 %v2745, %v2745
  %v3098 = vmul.f32 %v2748, %v2748
  %v3099 = vmul.f32 %v2753, %v2753
  %v3100 = vmul.f32 %v2756, %v2756
  %v3101 = vmul.f32 %v2761, %v2761
  %v3102 = vmul.f32 %v2764, %v2764
  %v3103 = vmul.f32 %v2769, %v2769
  %v3104 = vmul.f32 %v2772, %v2772
  %v3105 = vmul.f32 %v2777, %v2777
  %v3106 = vmul.f32 %v2780, %v2780
  %v3107 = vmul.f32 %v2785, %v2785
  %v3108 = vmul.f32 %v2788, %v2788
  %v3109 = vmul.f32 %v2793, %v2793
  %v3110 = vmul.f32 %v2796, %v2796
  %v3111 = vmul.f32 %v2801, %v2801
  %v3112 = vmul.f32 %v2804, %v2804
  %v3113 = vmul.f32 %v2809, %v2809
  %v3114 = vmul.f32 %v2812, %v2812
  %v3115 = vmul.f32 %v2817, %v2817
  %v3116 = vmul.f32 %v2820, %v2820
  %v3117 = vmul.f32 %v2825, %v2825
  %v3118 = vmul.f32 %v2828, %v2828
  %v3119 = vmul.f32 %v2833, %v2833
  %v3120 = vmul.f32 %v2836, %v2836
  %v3121 = vmul.f32 %v2841, %v2841
  %v3122 = vmul.f32 %v2844, %v2844
  %v3123 = vmul.f32 %v2849, %v2849
  %v3124 = vmul.f32 %v2852, %v2852
  %v3125 = vmul.f32 %v2857, %v2857
  %v3126 = vmul.f32 %v2860, %v2860
  %v3127 = vmul.f32 %v2865, %v2865
  %v3128 = vmul.f32 %v2868, %v2868
  %v3129 = vmul.f32 %v2873, %v2873
  %v3130 = vmul.f32 %v2876, %v2876
  %v3131 = vmul.f32 %v2881, %v2881
  %v3132 = vmul.f32 %v2884, %v2884
  %v3133 = vmul.f32 %v2889, %v2889
  %v3134 = vmul.f32 %v2892, %v2892
  %v3135 = vmul.f32 %v2897, %v2897
  %v3136 = vmul.f32 %v2900, %v2900
  %v3137 = vmul.f32 %v2905, %v2905
  %v3138 = vmul.f32 %v2908, %v2908
  %v3139 = vmul.f32 %v2913, %v2913
  %v3140 = vmul.f32 %v2916, %v2916
  %v3141 = vmul.f32 %v2921, %v2921
  %v3142 = vmul.f32 %v2924, %v2924
  %v3143 = vmul.f32 %v2929, %v2929
  %v3144 = vmul.f32 %v2932, %v2932
  %v3145 = vmul.f32 %v2937, %v2937
  %v3146 = vmul.f32 %v2940, %v2940
  %v3147 = vmul.f32 %v2945, %v2945
  %v3148 = vmul.f32 %v2948, %v2948
  %v3149 = vsel %vm21, %v3085, 0.0
  %v3150 = vsel %vm21, %v3086, 0.0
  %v3151 = vadd.f32 %v3149, %v3150
  %v3152 = vsel %vm21, %v3087, 0.0
  %v3153 = vadd.f32 %v3151, %v3152
  %v3154 = vsel %vm21, %v3088, 0.0
  %v3155 = vadd.f32 %v3153, %v3154
  %v3156 = vsel %vm21, %v3089, 0.0
  %v3157 = vadd.f32 %v3155, %v3156
  %v3158 = vsel %vm21, %v3090, 0.0
  %v3159 = vadd.f32 %v3157, %v3158
  %v3160 = vsel %vm21, %v3091, 0.0
  %v3161 = vadd.f32 %v3159, %v3160
  %v3162 = vsel %vm21, %v3092, 0.0
  %v3163 = vadd.f32 %v3161, %v3162
  %v3164 = vsel %vm21, %v3093, 0.0
  %v3165 = vadd.f32 %v3163, %v3164
  %v3166 = vsel %vm21, %v3094, 0.0
  %v3167 = vadd.f32 %v3165, %v3166
  %v3168 = vsel %vm21, %v3095, 0.0
  %v3169 = vadd.f32 %v3167, %v3168
  %v3170 = vsel %vm21, %v3096, 0.0
  %v3171 = vadd.f32 %v3169, %v3170
  %v3172 = vsel %vm21, %v3097, 0.0
  %v3173 = vadd.f32 %v3171, %v3172
  %v3174 = vsel %vm21, %v3098, 0.0
  %v3175 = vadd.f32 %v3173, %v3174
  %v3176 = vsel %vm21, %v3099, 0.0
  %v3177 = vadd.f32 %v3175, %v3176
  %v3178 = vsel %vm21, %v3100, 0.0
  %v3179 = vadd.f32 %v3177, %v3178
  %v3180 = vsel %vm21, %v3101, 0.0
  %v3181 = vadd.f32 %v3179, %v3180
  %v3182 = vsel %vm21, %v3102, 0.0
  %v3183 = vadd.f32 %v3181, %v3182
  %v3184 = vsel %vm21, %v3103, 0.0
  %v3185 = vadd.f32 %v3183, %v3184
  %v3186 = vsel %vm21, %v3104, 0.0
  %v3187 = vadd.f32 %v3185, %v3186
  %v3188 = vsel %vm21, %v3105, 0.0
  %v3189 = vadd.f32 %v3187, %v3188
  %v3190 = vsel %vm21, %v3106, 0.0
  %v3191 = vadd.f32 %v3189, %v3190
  %v3192 = vsel %vm21, %v3107, 0.0
  %v3193 = vadd.f32 %v3191, %v3192
  %v3194 = vsel %vm21, %v3108, 0.0
  %v3195 = vadd.f32 %v3193, %v3194
  %v3196 = vsel %vm21, %v3109, 0.0
  %v3197 = vadd.f32 %v3195, %v3196
  %v3198 = vsel %vm21, %v3110, 0.0
  %v3199 = vadd.f32 %v3197, %v3198
  %v3200 = vsel %vm21, %v3111, 0.0
  %v3201 = vadd.f32 %v3199, %v3200
  %v3202 = vsel %vm21, %v3112, 0.0
  %v3203 = vadd.f32 %v3201, %v3202
  %v3204 = vsel %vm21, %v3113, 0.0
  %v3205 = vadd.f32 %v3203, %v3204
  %v3206 = vsel %vm21, %v3114, 0.0
  %v3207 = vadd.f32 %v3205, %v3206
  %v3208 = vsel %vm21, %v3115, 0.0
  %v3209 = vadd.f32 %v3207, %v3208
  %v3210 = vsel %vm21, %v3116, 0.0
  %v3211 = vadd.f32 %v3209, %v3210
  %v3212 = vsel %vm21, %v3117, 0.0
  %v3213 = vadd.f32 %v3211, %v3212
  %v3214 = vsel %vm21, %v3118, 0.0
  %v3215 = vadd.f32 %v3213, %v3214
  %v3216 = vsel %vm21, %v3119, 0.0
  %v3217 = vadd.f32 %v3215, %v3216
  %v3218 = vsel %vm21, %v3120, 0.0
  %v3219 = vadd.f32 %v3217, %v3218
  %v3220 = vsel %vm21, %v3121, 0.0
  %v3221 = vadd.f32 %v3219, %v3220
  %v3222 = vsel %vm21, %v3122, 0.0
  %v3223 = vadd.f32 %v3221, %v3222
  %v3224 = vsel %vm21, %v3123, 0.0
  %v3225 = vadd.f32 %v3223, %v3224
  %v3226 = vsel %vm21, %v3124, 0.0
  %v3227 = vadd.f32 %v3225, %v3226
  %v3228 = vsel %vm21, %v3125, 0.0
  %v3229 = vadd.f32 %v3227, %v3228
  %v3230 = vsel %vm21, %v3126, 0.0
  %v3231 = vadd.f32 %v3229, %v3230
  %v3232 = vsel %vm21, %v3127, 0.0
  %v3233 = vadd.f32 %v3231, %v3232
  %v3234 = vsel %vm21, %v3128, 0.0
  %v3235 = vadd.f32 %v3233, %v3234
  %v3236 = vsel %vm21, %v3129, 0.0
  %v3237 = vadd.f32 %v3235, %v3236
  %v3238 = vsel %vm21, %v3130, 0.0
  %v3239 = vadd.f32 %v3237, %v3238
  %v3240 = vsel %vm21, %v3131, 0.0
  %v3241 = vadd.f32 %v3239, %v3240
  %v3242 = vsel %vm21, %v3132, 0.0
  %v3243 = vadd.f32 %v3241, %v3242
  %v3244 = vsel %vm21, %v3133, 0.0
  %v3245 = vadd.f32 %v3243, %v3244
  %v3246 = vsel %vm21, %v3134, 0.0
  %v3247 = vadd.f32 %v3245, %v3246
  %v3248 = vsel %vm21, %v3135, 0.0
  %v3249 = vadd.f32 %v3247, %v3248
  %v3250 = vsel %vm21, %v3136, 0.0
  %v3251 = vadd.f32 %v3249, %v3250
  %v3252 = vsel %vm21, %v3137, 0.0
  %v3253 = vadd.f32 %v3251, %v3252
  %v3254 = vsel %vm21, %v3138, 0.0
  %v3255 = vadd.f32 %v3253, %v3254
  %v3256 = vsel %vm21, %v3139, 0.0
  %v3257 = vadd.f32 %v3255, %v3256
  %v3258 = vsel %vm21, %v3140, 0.0
  %v3259 = vadd.f32 %v3257, %v3258
  %v3260 = vsel %vm21, %v3141, 0.0
  %v3261 = vadd.f32 %v3259, %v3260
  %v3262 = vsel %vm21, %v3142, 0.0
  %v3263 = vadd.f32 %v3261, %v3262
  %v3264 = vsel %vm21, %v3143, 0.0
  %v3265 = vadd.f32 %v3263, %v3264
  %v3266 = vsel %vm21, %v3144, 0.0
  %v3267 = vadd.f32 %v3265, %v3266
  %v3268 = vsel %vm21, %v3145, 0.0
  %v3269 = vadd.f32 %v3267, %v3268
  %v3270 = vsel %vm21, %v3146, 0.0
  %v3271 = vadd.f32 %v3269, %v3270
  %v3272 = vsel %vm21, %v3147, 0.0
  %v3273 = vadd.f32 %v3271, %v3272
  %v3274 = vsel %vm21, %v3148, 0.0
  %v3275 = vadd.f32 %v3273, %v3274
  %v3276 = vrot.slane %v3275, 4
  %v3277 = vadd.f32 %v3275, %v3276
  %v3278 = vrot.slane %v3277, 2
  %v3279 = vadd.f32 %v3277, %v3278
  %v3280 = vrot.slane %v3279, 1
  %v3281 = vadd.f32 %v3279, %v3280
  %v3282 = vmul.f32 %v3281, 0.001953125
  %v3283 = vmul.f32 %v3084, %v3084
  %v3284 = vsub.f32 %v3282, %v3283
  %v3285 = vld [vmem:[%s2] sm:$0x1]
  %v3286 = vadd.f32 %v3284, 1e-05
  %v3287 = vrsqrt.pop %v3286
  %v3288 = vmul.f32 %v3285, %v3287
  %v3289 = vld [vmem:[%s3] sm:$0x1]
  %v3290 = vmul.f32 %v3084, %v3288
  %v3291 = vsub.f32 %v3289, %v3290
  %v3293 = vlaneseq
  %v3294 = vshrl.u32 %v3293, 7
  %v3295 = vsub.s32 0, %v3294
  %v3296 = vrot.slane %v3288, %v3295
  %v3298 = vmul.f32 %v2697, %v3296
  %v3299 = vmul.f32 %v2700, %v3296
  %v3300 = vmul.f32 %v2705, %v3296
  %v3301 = vmul.f32 %v2708, %v3296
  %v3302 = vmul.f32 %v2713, %v3296
  %v3303 = vmul.f32 %v2716, %v3296
  %v3304 = vmul.f32 %v2721, %v3296
  %v3305 = vmul.f32 %v2724, %v3296
  %v3306 = vmul.f32 %v2729, %v3296
  %v3307 = vmul.f32 %v2732, %v3296
  %v3308 = vmul.f32 %v2737, %v3296
  %v3309 = vmul.f32 %v2740, %v3296
  %v3310 = vmul.f32 %v2745, %v3296
  %v3311 = vmul.f32 %v2748, %v3296
  %v3312 = vmul.f32 %v2753, %v3296
  %v3313 = vmul.f32 %v2756, %v3296
  %v3314 = vmul.f32 %v2761, %v3296
  %v3315 = vmul.f32 %v2764, %v3296
  %v3316 = vmul.f32 %v2769, %v3296
  %v3317 = vmul.f32 %v2772, %v3296
  %v3318 = vmul.f32 %v2777, %v3296
  %v3319 = vmul.f32 %v2780, %v3296
  %v3320 = vmul.f32 %v2785, %v3296
  %v3321 = vmul.f32 %v2788, %v3296
  %v3322 = vmul.f32 %v2793, %v3296
  %v3323 = vmul.f32 %v2796, %v3296
  %v3324 = vmul.f32 %v2801, %v3296
  %v3325 = vmul.f32 %v2804, %v3296
  %v3326 = vmul.f32 %v2809, %v3296
  %v3327 = vmul.f32 %v2812, %v3296
  %v3328 = vmul.f32 %v2817, %v3296
  %v3329 = vmul.f32 %v2820, %v3296
  %v3330 = vmul.f32 %v2825, %v3296
  %v3331 = vmul.f32 %v2828, %v3296
  %v3332 = vmul.f32 %v2833, %v3296
  %v3333 = vmul.f32 %v2836, %v3296
  %v3334 = vmul.f32 %v2841, %v3296
  %v3335 = vmul.f32 %v2844, %v3296
  %v3336 = vmul.f32 %v2849, %v3296
  %v3337 = vmul.f32 %v2852, %v3296
  %v3338 = vmul.f32 %v2857, %v3296
  %v3339 = vmul.f32 %v2860, %v3296
  %v3340 = vmul.f32 %v2865, %v3296
  %v3341 = vmul.f32 %v2868, %v3296
  %v3342 = vmul.f32 %v2873, %v3296
  %v3343 = vmul.f32 %v2876, %v3296
  %v3344 = vmul.f32 %v2881, %v3296
  %v3345 = vmul.f32 %v2884, %v3296
  %v3346 = vmul.f32 %v2889, %v3296
  %v3347 = vmul.f32 %v2892, %v3296
  %v3348 = vmul.f32 %v2897, %v3296
  %v3349 = vmul.f32 %v2900, %v3296
  %v3350 = vmul.f32 %v2905, %v3296
  %v3351 = vmul.f32 %v2908, %v3296
  %v3352 = vmul.f32 %v2913, %v3296
  %v3353 = vmul.f32 %v2916, %v3296
  %v3354 = vmul.f32 %v2921, %v3296
  %v3355 = vmul.f32 %v2924, %v3296
  %v3356 = vmul.f32 %v2929, %v3296
  %v3357 = vmul.f32 %v2932, %v3296
  %v3358 = vmul.f32 %v2937, %v3296
  %v3359 = vmul.f32 %v2940, %v3296
  %v3360 = vmul.f32 %v2945, %v3296
  %v3361 = vmul.f32 %v2948, %v3296
  %v3363 = vlaneseq
  %v3364 = vshrl.u32 %v3363, 7
  %v3365 = vsub.s32 0, %v3364
  %v3366 = vrot.slane %v3291, %v3365
  %v3368 = vadd.f32 %v3298, %v3366
  %v3369 = vadd.f32 %v3299, %v3366
  %v3370 = vadd.f32 %v3300, %v3366
  %v3371 = vadd.f32 %v3301, %v3366
  %v3372 = vadd.f32 %v3302, %v3366
  %v3373 = vadd.f32 %v3303, %v3366
  %v3374 = vadd.f32 %v3304, %v3366
  %v3375 = vadd.f32 %v3305, %v3366
  %v3376 = vadd.f32 %v3306, %v3366
  %v3377 = vadd.f32 %v3307, %v3366
  %v3378 = vadd.f32 %v3308, %v3366
  %v3379 = vadd.f32 %v3309, %v3366
  %v3380 = vadd.f32 %v3310, %v3366
  %v3381 = vadd.f32 %v3311, %v3366
  %v3382 = vadd.f32 %v3312, %v3366
  %v3383 = vadd.f32 %v3313, %v3366
  %v3384 = vadd.f32 %v3314, %v3366
  %v3385 = vadd.f32 %v3315, %v3366
  %v3386 = vadd.f32 %v3316, %v3366
  %v3387 = vadd.f32 %v3317, %v3366
  %v3388 = vadd.f32 %v3318, %v3366
  %v3389 = vadd.f32 %v3319, %v3366
  %v3390 = vadd.f32 %v3320, %v3366
  %v3391 = vadd.f32 %v3321, %v3366
  %v3392 = vadd.f32 %v3322, %v3366
  %v3393 = vadd.f32 %v3323, %v3366
  %v3394 = vadd.f32 %v3324, %v3366
  %v3395 = vadd.f32 %v3325, %v3366
  %v3396 = vadd.f32 %v3326, %v3366
  %v3397 = vadd.f32 %v3327, %v3366
  %v3398 = vadd.f32 %v3328, %v3366
  %v3399 = vadd.f32 %v3329, %v3366
  %v3400 = vadd.f32 %v3330, %v3366
  %v3401 = vadd.f32 %v3331, %v3366
  %v3402 = vadd.f32 %v3332, %v3366
  %v3403 = vadd.f32 %v3333, %v3366
  %v3404 = vadd.f32 %v3334, %v3366
  %v3405 = vadd.f32 %v3335, %v3366
  %v3406 = vadd.f32 %v3336, %v3366
  %v3407 = vadd.f32 %v3337, %v3366
  %v3408 = vadd.f32 %v3338, %v3366
  %v3409 = vadd.f32 %v3339, %v3366
  %v3410 = vadd.f32 %v3340, %v3366
  %v3411 = vadd.f32 %v3341, %v3366
  %v3412 = vadd.f32 %v3342, %v3366
  %v3413 = vadd.f32 %v3343, %v3366
  %v3414 = vadd.f32 %v3344, %v3366
  %v3415 = vadd.f32 %v3345, %v3366
  %v3416 = vadd.f32 %v3346, %v3366
  %v3417 = vadd.f32 %v3347, %v3366
  %v3418 = vadd.f32 %v3348, %v3366
  %v3419 = vadd.f32 %v3349, %v3366
  %v3420 = vadd.f32 %v3350, %v3366
  %v3421 = vadd.f32 %v3351, %v3366
  %v3422 = vadd.f32 %v3352, %v3366
  %v3423 = vadd.f32 %v3353, %v3366
  %v3424 = vadd.f32 %v3354, %v3366
  %v3425 = vadd.f32 %v3355, %v3366
  %v3426 = vadd.f32 %v3356, %v3366
  %v3427 = vadd.f32 %v3357, %v3366
  %v3428 = vadd.f32 %v3358, %v3366
  %v3429 = vadd.f32 %v3359, %v3366
  %v3430 = vadd.f32 %v3360, %v3366
  %v3431 = vadd.f32 %v3361, %v3366
  %v3432 = vld [vmem:[%s4] sm:$0xff]
  %v3433 = vld [vmem:[%s4 + $0x8] sm:$0xff]
  %v3434 = vld [vmem:[%s4 + $0x10] sm:$0xff]
  %v3435 = vld [vmem:[%s4 + $0x18] sm:$0xff]
  %v3436 = vld [vmem:[%s4 + $0x20] sm:$0xff]
  %v3437 = vld [vmem:[%s4 + $0x28] sm:$0xff]
  %v3438 = vld [vmem:[%s4 + $0x30] sm:$0xff]
  %v3439 = vld [vmem:[%s4 + $0x38] sm:$0xff]
  %v3440 = vld [vmem:[%s4 + $0x40] sm:$0xff]
  %v3441 = vld [vmem:[%s4 + $0x48] sm:$0xff]
  %v3442 = vld [vmem:[%s4 + $0x50] sm:$0xff]
  %v3443 = vld [vmem:[%s4 + $0x58] sm:$0xff]
  %v3444 = vld [vmem:[%s4 + $0x60] sm:$0xff]
  %v3445 = vld [vmem:[%s4 + $0x68] sm:$0xff]
  %v3446 = vld [vmem:[%s4 + $0x70] sm:$0xff]
  %v3447 = vld [vmem:[%s4 + $0x78] sm:$0xff]
  %v3448 = vld [vmem:[%s4 + $0x80] sm:$0xff]
  %v3449 = vld [vmem:[%s4 + $0x88] sm:$0xff]
  %v3450 = vld [vmem:[%s4 + $0x90] sm:$0xff]
  %v3451 = vld [vmem:[%s4 + $0x98] sm:$0xff]
  %v3452 = vld [vmem:[%s4 + $0xa0] sm:$0xff]
  %v3453 = vld [vmem:[%s4 + $0xa8] sm:$0xff]
  %v3454 = vld [vmem:[%s4 + $0xb0] sm:$0xff]
  %v3455 = vld [vmem:[%s4 + $0xb8] sm:$0xff]
  %v3456 = vld [vmem:[%s4 + $0xc0] sm:$0xff]
  %v3457 = vld [vmem:[%s4 + $0xc8] sm:$0xff]
  %v3458 = vld [vmem:[%s4 + $0xd0] sm:$0xff]
  %v3459 = vld [vmem:[%s4 + $0xd8] sm:$0xff]
  %v3460 = vld [vmem:[%s4 + $0xe0] sm:$0xff]
  %v3461 = vld [vmem:[%s4 + $0xe8] sm:$0xff]
  %v3462 = vld [vmem:[%s4 + $0xf0] sm:$0xff]
  %v3463 = vld [vmem:[%s4 + $0xf8] sm:$0xff]
  %v3464 = vld [vmem:[%s4 + $0x100] sm:$0xff]
  %v3465 = vld [vmem:[%s4 + $0x108] sm:$0xff]
  %v3466 = vld [vmem:[%s4 + $0x110] sm:$0xff]
  %v3467 = vld [vmem:[%s4 + $0x118] sm:$0xff]
  %v3468 = vld [vmem:[%s4 + $0x120] sm:$0xff]
  %v3469 = vld [vmem:[%s4 + $0x128] sm:$0xff]
  %v3470 = vld [vmem:[%s4 + $0x130] sm:$0xff]
  %v3471 = vld [vmem:[%s4 + $0x138] sm:$0xff]
  %v3472 = vld [vmem:[%s4 + $0x140] sm:$0xff]
  %v3473 = vld [vmem:[%s4 + $0x148] sm:$0xff]
  %v3474 = vld [vmem:[%s4 + $0x150] sm:$0xff]
  %v3475 = vld [vmem:[%s4 + $0x158] sm:$0xff]
  %v3476 = vld [vmem:[%s4 + $0x160] sm:$0xff]
  %v3477 = vld [vmem:[%s4 + $0x168] sm:$0xff]
  %v3478 = vld [vmem:[%s4 + $0x170] sm:$0xff]
  %v3479 = vld [vmem:[%s4 + $0x178] sm:$0xff]
  %v3480 = vld [vmem:[%s4 + $0x180] sm:$0xff]
  %v3481 = vld [vmem:[%s4 + $0x188] sm:$0xff]
  %v3482 = vld [vmem:[%s4 + $0x190] sm:$0xff]
  %v3483 = vld [vmem:[%s4 + $0x198] sm:$0xff]
  %v3484 = vld [vmem:[%s4 + $0x1a0] sm:$0xff]
  %v3485 = vld [vmem:[%s4 + $0x1a8] sm:$0xff]
  %v3486 = vld [vmem:[%s4 + $0x1b0] sm:$0xff]
  %v3487 = vld [vmem:[%s4 + $0x1b8] sm:$0xff]
  %v3488 = vld [vmem:[%s4 + $0x1c0] sm:$0xff]
  %v3489 = vld [vmem:[%s4 + $0x1c8] sm:$0xff]
  %v3490 = vld [vmem:[%s4 + $0x1d0] sm:$0xff]
  %v3491 = vld [vmem:[%s4 + $0x1d8] sm:$0xff]
  %v3492 = vld [vmem:[%s4 + $0x1e0] sm:$0xff]
  %v3493 = vld [vmem:[%s4 + $0x1e8] sm:$0xff]
  %v3494 = vld [vmem:[%s4 + $0x1f0] sm:$0xff]
  %v3495 = vld [vmem:[%s4 + $0x1f8] sm:$0xff]
  %v3496 = vadd.f32 %v3432, %v3368
  %v3497 = vadd.f32 %v3433, %v3369
  %v3498 = vadd.f32 %v3434, %v3370
  %v3499 = vadd.f32 %v3435, %v3371
  %v3500 = vadd.f32 %v3436, %v3372
  %v3501 = vadd.f32 %v3437, %v3373
  %v3502 = vadd.f32 %v3438, %v3374
  %v3503 = vadd.f32 %v3439, %v3375
  %v3504 = vadd.f32 %v3440, %v3376
  %v3505 = vadd.f32 %v3441, %v3377
  %v3506 = vadd.f32 %v3442, %v3378
  %v3507 = vadd.f32 %v3443, %v3379
  %v3508 = vadd.f32 %v3444, %v3380
  %v3509 = vadd.f32 %v3445, %v3381
  %v3510 = vadd.f32 %v3446, %v3382
  %v3511 = vadd.f32 %v3447, %v3383
  %v3512 = vadd.f32 %v3448, %v3384
  %v3513 = vadd.f32 %v3449, %v3385
  %v3514 = vadd.f32 %v3450, %v3386
  %v3515 = vadd.f32 %v3451, %v3387
  %v3516 = vadd.f32 %v3452, %v3388
  %v3517 = vadd.f32 %v3453, %v3389
  %v3518 = vadd.f32 %v3454, %v3390
  %v3519 = vadd.f32 %v3455, %v3391
  %v3520 = vadd.f32 %v3456, %v3392
  %v3521 = vadd.f32 %v3457, %v3393
  %v3522 = vadd.f32 %v3458, %v3394
  %v3523 = vadd.f32 %v3459, %v3395
  %v3524 = vadd.f32 %v3460, %v3396
  %v3525 = vadd.f32 %v3461, %v3397
  %v3526 = vadd.f32 %v3462, %v3398
  %v3527 = vadd.f32 %v3463, %v3399
  %v3528 = vadd.f32 %v3464, %v3400
  %v3529 = vadd.f32 %v3465, %v3401
  %v3530 = vadd.f32 %v3466, %v3402
  %v3531 = vadd.f32 %v3467, %v3403
  %v3532 = vadd.f32 %v3468, %v3404
  %v3533 = vadd.f32 %v3469, %v3405
  %v3534 = vadd.f32 %v3470, %v3406
  %v3535 = vadd.f32 %v3471, %v3407
  %v3536 = vadd.f32 %v3472, %v3408
  %v3537 = vadd.f32 %v3473, %v3409
  %v3538 = vadd.f32 %v3474, %v3410
  %v3539 = vadd.f32 %v3475, %v3411
  %v3540 = vadd.f32 %v3476, %v3412
  %v3541 = vadd.f32 %v3477, %v3413
  %v3542 = vadd.f32 %v3478, %v3414
  %v3543 = vadd.f32 %v3479, %v3415
  %v3544 = vadd.f32 %v3480, %v3416
  %v3545 = vadd.f32 %v3481, %v3417
  %v3546 = vadd.f32 %v3482, %v3418
  %v3547 = vadd.f32 %v3483, %v3419
  %v3548 = vadd.f32 %v3484, %v3420
  %v3549 = vadd.f32 %v3485, %v3421
  %v3550 = vadd.f32 %v3486, %v3422
  %v3551 = vadd.f32 %v3487, %v3423
  %v3552 = vadd.f32 %v3488, %v3424
  %v3553 = vadd.f32 %v3489, %v3425
  %v3554 = vadd.f32 %v3490, %v3426
  %v3555 = vadd.f32 %v3491, %v3427
  %v3556 = vadd.f32 %v3492, %v3428
  %v3557 = vadd.f32 %v3493, %v3429
  %v3558 = vadd.f32 %v3494, %v3430
  %v3559 = vadd.f32 %v3495, %v3431
  %3560 = vst.msk [vmem:[%s5] sm:$0xff] %vm21, %v3496
  %3561 = vst.msk [vmem:[%s5 + $0x8] sm:$0xff] %vm21, %v3497
  %3562 = vst.msk [vmem:[%s5 + $0x10] sm:$0xff] %vm21, %v3498
  %3563 = vst.msk [vmem:[%s5 + $0x18] sm:$0xff] %vm21, %v3499
  %3564 = vst.msk [vmem:[%s5 + $0x20] sm:$0xff] %vm21, %v3500
  %3565 = vst.msk [vmem:[%s5 + $0x28] sm:$0xff] %vm21, %v3501
  %3566 = vst.msk [vmem:[%s5 + $0x30] sm:$0xff] %vm21, %v3502
  %3567 = vst.msk [vmem:[%s5 + $0x38] sm:$0xff] %vm21, %v3503
  %3568 = vst.msk [vmem:[%s5 + $0x40] sm:$0xff] %vm21, %v3504
  %3569 = vst.msk [vmem:[%s5 + $0x48] sm:$0xff] %vm21, %v3505
  %3570 = vst.msk [vmem:[%s5 + $0x50] sm:$0xff] %vm21, %v3506
  %3571 = vst.msk [vmem:[%s5 + $0x58] sm:$0xff] %vm21, %v3507
  %3572 = vst.msk [vmem:[%s5 + $0x60] sm:$0xff] %vm21, %v3508
  %3573 = vst.msk [vmem:[%s5 + $0x68] sm:$0xff] %vm21, %v3509
  %3574 = vst.msk [vmem:[%s5 + $0x70] sm:$0xff] %vm21, %v3510
  %3575 = vst.msk [vmem:[%s5 + $0x78] sm:$0xff] %vm21, %v3511
  %3576 = vst.msk [vmem:[%s5 + $0x80] sm:$0xff] %vm21, %v3512
  %3577 = vst.msk [vmem:[%s5 + $0x88] sm:$0xff] %vm21, %v3513
  %3578 = vst.msk [vmem:[%s5 + $0x90] sm:$0xff] %vm21, %v3514
  %3579 = vst.msk [vmem:[%s5 + $0x98] sm:$0xff] %vm21, %v3515
  %3580 = vst.msk [vmem:[%s5 + $0xa0] sm:$0xff] %vm21, %v3516
  %3581 = vst.msk [vmem:[%s5 + $0xa8] sm:$0xff] %vm21, %v3517
  %3582 = vst.msk [vmem:[%s5 + $0xb0] sm:$0xff] %vm21, %v3518
  %3583 = vst.msk [vmem:[%s5 + $0xb8] sm:$0xff] %vm21, %v3519
  %3584 = vst.msk [vmem:[%s5 + $0xc0] sm:$0xff] %vm21, %v3520
  %3585 = vst.msk [vmem:[%s5 + $0xc8] sm:$0xff] %vm21, %v3521
  %3586 = vst.msk [vmem:[%s5 + $0xd0] sm:$0xff] %vm21, %v3522
  %3587 = vst.msk [vmem:[%s5 + $0xd8] sm:$0xff] %vm21, %v3523
  %3588 = vst.msk [vmem:[%s5 + $0xe0] sm:$0xff] %vm21, %v3524
  %3589 = vst.msk [vmem:[%s5 + $0xe8] sm:$0xff] %vm21, %v3525
  %3590 = vst.msk [vmem:[%s5 + $0xf0] sm:$0xff] %vm21, %v3526
  %3591 = vst.msk [vmem:[%s5 + $0xf8] sm:$0xff] %vm21, %v3527
  %3592 = vst.msk [vmem:[%s5 + $0x100] sm:$0xff] %vm21, %v3528
  %3593 = vst.msk [vmem:[%s5 + $0x108] sm:$0xff] %vm21, %v3529
  %3594 = vst.msk [vmem:[%s5 + $0x110] sm:$0xff] %vm21, %v3530
  %3595 = vst.msk [vmem:[%s5 + $0x118] sm:$0xff] %vm21, %v3531
  %3596 = vst.msk [vmem:[%s5 + $0x120] sm:$0xff] %vm21, %v3532
  %3597 = vst.msk [vmem:[%s5 + $0x128] sm:$0xff] %vm21, %v3533
  %3598 = vst.msk [vmem:[%s5 + $0x130] sm:$0xff] %vm21, %v3534
  %3599 = vst.msk [vmem:[%s5 + $0x138] sm:$0xff] %vm21, %v3535
  %3600 = vst.msk [vmem:[%s5 + $0x140] sm:$0xff] %vm21, %v3536
  %3601 = vst.msk [vmem:[%s5 + $0x148] sm:$0xff] %vm21, %v3537
  %3602 = vst.msk [vmem:[%s5 + $0x150] sm:$0xff] %vm21, %v3538
  %3603 = vst.msk [vmem:[%s5 + $0x158] sm:$0xff] %vm21, %v3539
  %3604 = vst.msk [vmem:[%s5 + $0x160] sm:$0xff] %vm21, %v3540
  %3605 = vst.msk [vmem:[%s5 + $0x168] sm:$0xff] %vm21, %v3541
  %3606 = vst.msk [vmem:[%s5 + $0x170] sm:$0xff] %vm21, %v3542
  %3607 = vst.msk [vmem:[%s5 + $0x178] sm:$0xff] %vm21, %v3543
  %3608 = vst.msk [vmem:[%s5 + $0x180] sm:$0xff] %vm21, %v3544
  %3609 = vst.msk [vmem:[%s5 + $0x188] sm:$0xff] %vm21, %v3545
  %3610 = vst.msk [vmem:[%s5 + $0x190] sm:$0xff] %vm21, %v3546
  %3611 = vst.msk [vmem:[%s5 + $0x198] sm:$0xff] %vm21, %v3547
  %3612 = vst.msk [vmem:[%s5 + $0x1a0] sm:$0xff] %vm21, %v3548
  %3613 = vst.msk [vmem:[%s5 + $0x1a8] sm:$0xff] %vm21, %v3549
  %3614 = vst.msk [vmem:[%s5 + $0x1b0] sm:$0xff] %vm21, %v3550
  %3615 = vst.msk [vmem:[%s5 + $0x1b8] sm:$0xff] %vm21, %v3551
  %3616 = vst.msk [vmem:[%s5 + $0x1c0] sm:$0xff] %vm21, %v3552
  %3617 = vst.msk [vmem:[%s5 + $0x1c8] sm:$0xff] %vm21, %v3553
  %3618 = vst.msk [vmem:[%s5 + $0x1d0] sm:$0xff] %vm21, %v3554
  %3619 = vst.msk [vmem:[%s5 + $0x1d8] sm:$0xff] %vm21, %v3555
  %3620 = vst.msk [vmem:[%s5 + $0x1e0] sm:$0xff] %vm21, %v3556
  %3621 = vst.msk [vmem:[%s5 + $0x1e8] sm:$0xff] %vm21, %v3557
  %3622 = vst.msk [vmem:[%s5 + $0x1f0] sm:$0xff] %vm21, %v3558
  %3623 = vst.msk [vmem:[%s5 + $0x1f8] sm:$0xff] %vm21, %v3559
  // Predicated region
  $region22: #{residual_block.3} parent=0 // pred_check
    _
  $region23: #{residual_block.3} parent=0 // pred_check_branch
    %3625 = sbr.rel (0) target = $region25
  $region24: #{residual_block.3} parent=0 // pred_region
    _
  $region25: #{residual_block.3} parent=0 // pred_fallthru
    _
  // Predicated region
  $region26: #{residual_block.3} parent=0 // pred_check
    _
  $region27: #{residual_block.3} parent=0 // pred_check_branch
    %3627 = sbr.rel (0) target = $region29
  $region28: #{residual_block.3} parent=0 // pred_region
    _
  $region29: #{residual_block.3} parent=0 // pred_fallthru
    _

</llo_original>
